<compile_context>
chip_gen: v7x
topology: tpu7x:2x2x1
jax: 0.10.0
libtpu: 0.0.40
codegen_flags: <defaults>
</compile_context>

<pallas_src>
import functools

import jax
import jax.numpy as jnp
from jax.experimental import pallas as pl
from jax.experimental.pallas import tpu as pltpu


# MXU operand dtype (accumulation stays f32 via preferred_element_type).
MXU_DTYPE = jnp.bfloat16
# Inter-kernel activation storage dtype (halves HBM round-trip bytes).
ACT_DTYPE = jnp.bfloat16
LN_EPS = 1e-5


# ----------------------------------------------------------------------------
# In-kernel math helpers
# ----------------------------------------------------------------------------
def _dot(a, b):
    """(M, K) @ (K, N) on the MXU, bf16 operands, f32 accumulation.

    Callers pre-cast operands to bf16 once; the astype here is then a no-op.
    """
    return jax.lax.dot_general(
        a.astype(MXU_DTYPE), b.astype(MXU_DTYPE),
        dimension_numbers=(((1,), (0,)), ((), ())),
        preferred_element_type=jnp.float32)


def _ln(x, g, b):
    """LayerNorm over the last dim; x/g/b already f32."""
    mean = jnp.mean(x, axis=-1, keepdims=True)
    var = jnp.mean(jnp.square(x - mean), axis=-1, keepdims=True)
    return (x - mean) * jax.lax.rsqrt(var + LN_EPS) * g + b


def _f32(ref):
    return ref[...].astype(jnp.float32)


# ----------------------------------------------------------------------------
# Fused Pallas kernels
# ----------------------------------------------------------------------------
def _block_kernel(xq_ref, xf_ref, ln1g_ref, ln1b_ref,
                  wq_ref, bq_ref, wkv_ref, bkv_ref,
                  wproj_ref, bproj_ref, ln2g_ref, ln2b_ref,
                  wfc1_ref, bfc1_ref, wfc2_ref, bfc2_ref,
                  o_ref, *, num_heads):
    """One full transformer block for one (batch, query-row-tile) grid point.

    xq_ref: (1, tq, C) query-row tile of x.
    xf_ref: (1, L, C)  full sequence of the same batch element (for K/V).
    """
    xq = xq_ref[0].astype(jnp.float32)                   # (tq, C)
    xf = xf_ref[0].astype(jnp.float32)                   # (L, C)
    tq, C = xq.shape
    L = xf.shape[0]
    d = C // num_heads
    scale = float(d) ** -0.5

    ln1g = _f32(ln1g_ref)
    ln1b = _f32(ln1b_ref)

    # ---- MHSA: LN1 + fused QKV + batched-head attention + out-proj ---------
    hq = _ln(xq, ln1g, ln1b).astype(MXU_DTYPE)            # (tq, C) bf16, cast once
    hf = _ln(xf, ln1g, ln1b).astype(MXU_DTYPE)            # (L, C)  bf16

    q = _dot(hq, wq_ref[...]) + _f32(bq_ref)              # (tq, C)   one matmul
    kv = _dot(hf, wkv_ref[...]) + _f32(bkv_ref)           # (L, 2C)   one matmul
    k = kv[:, :C]
    v = kv[:, C:]

    # Head split: static lane slices stacked on a leading head axis.
    q_h = jnp.stack([q[:, h * d:(h + 1) * d] for h in range(num_heads)],
                    axis=0).astype(MXU_DTYPE)             # (H, tq, d)
    k_h = jnp.stack([k[:, h * d:(h + 1) * d] for h in range(num_heads)],
                    axis=0).astype(MXU_DTYPE)             # (H, L, d)
    v_h = jnp.stack([v[:, h * d:(h + 1) * d] for h in range(num_heads)],
                    axis=0).astype(MXU_DTYPE)             # (H, L, d)

    # Scores: single dot_general with heads as a batch dim -> (H, tq, L).
    s = jax.lax.dot_general(
        q_h, k_h, dimension_numbers=(((2,), (2,)), ((0,), (0,))),
        preferred_element_type=jnp.float32) * scale
    m = jnp.max(s, axis=-1, keepdims=True)
    p = jnp.exp(s - m)
    p = p / jnp.sum(p, axis=-1, keepdims=True)            # exact softmax

    # PV: single batched dot_general -> (H, tq, d).
    ctx = jax.lax.dot_general(
        p.astype(MXU_DTYPE), v_h,
        dimension_numbers=(((2,), (1,)), ((0,), (0,))),
        preferred_element_type=jnp.float32)

    # Merge heads with one lane concat, then ONE (tq,C)@(C,C) out-projection.
    ctx = jnp.concatenate([ctx[h] for h in range(num_heads)],
                          axis=-1).astype(MXU_DTYPE)       # (tq, C)
    x = xq + _dot(ctx, wproj_ref[...]) + _f32(bproj_ref)   # residual fused

    # ---- MLP: LN2 + fc1 + GELU + fc2, residual fused -----------------------
    h2 = _ln(x, _f32(ln2g_ref), _f32(ln2b_ref)).astype(MXU_DTYPE)
    h2 = _dot(h2, wfc1_ref[...]) + _f32(bfc1_ref)
    # TODO(synk): PyTorch nn.GELU defaults to the exact erf form; the tanh
    # approximation is used here.
    h2 = jax.nn.gelu(h2, approximate=True).astype(MXU_DTYPE)
    x = x + _dot(h2, wfc2_ref[...]) + _f32(bfc2_ref)

    o_ref[0] = x.astype(o_ref.dtype)


def _embed_kernel(x_ref, w_ref, b_ref, g_ref, bb_ref, o_ref):
    """Patch-embed conv-as-matmul + bias + LayerNorm."""
    t = _dot(x_ref[...].astype(MXU_DTYPE), w_ref[...]) + _f32(b_ref)
    t = _ln(t, _f32(g_ref), _f32(bb_ref))
    o_ref[...] = t.astype(o_ref.dtype)


def _merge_kernel(x_ref, g_ref, bb_ref, w_ref, b_ref, o_ref):
    """Patch merging: LayerNorm(4C) + linear 4C -> 2C."""
    t = _ln(_f32(x_ref), _f32(g_ref), _f32(bb_ref)).astype(MXU_DTYPE)
    o_ref[...] = (_dot(t, w_ref[...]) + _f32(b_ref)).astype(o_ref.dtype)


def _linear_kernel(x_ref, w_ref, b_ref, o_ref):
    """Plain matmul + bias (patch-expand projection)."""
    t = _dot(x_ref[...].astype(MXU_DTYPE), w_ref[...]) + _f32(b_ref)
    o_ref[...] = t.astype(o_ref.dtype)


def _skip_kernel(u_ref, e_ref, g_ref, bb_ref, wu_ref, we_ref, b_ref, o_ref):
    """LN(up-sampled tokens) + concat-back linear, expressed as two matmuls."""
    u = _ln(_f32(u_ref), _f32(g_ref), _f32(bb_ref)).astype(MXU_DTYPE)
    e = e_ref[...].astype(MXU_DTYPE)
    out = _dot(u, wu_ref[...]) + _dot(e, we_ref[...]) + _f32(b_ref)
    o_ref[...] = out.astype(o_ref.dtype)


def _up_head_kernel(x_ref, wu_ref, bu_ref, g_ref, bb_ref, wh_ref, bh_ref,
                    o_ref, *, num_chunks):
    """Final 4x patch-expand + per-pixel LayerNorm + classification head.

    All num_chunks per-pixel logits are assembled in registers and stored with
    ONE lane-dense write of shape (tm, num_chunks * num_classes)."""
    x = x_ref[...].astype(MXU_DTYPE)                       # (tm, C)
    g = _f32(g_ref)
    bb = _f32(bb_ref)
    wh = wh_ref[...]
    bh = _f32(bh_ref)
    outs = []
    for c in range(num_chunks):
        f = _dot(x, wu_ref[c]) + bu_ref[c].astype(jnp.float32)     # (tm, C)
        f = _ln(f, g, bb).astype(MXU_DTYPE)
        outs.append(_dot(f, wh) + bh)                              # (tm, ncls)
    o_ref[...] = jnp.concatenate(outs, axis=-1).astype(o_ref.dtype)


# ----------------------------------------------------------------------------
# pallas_call wrappers
# ----------------------------------------------------------------------------
def _const_map(ndim):
    return lambda *g: (0,) * ndim


def _pick_tile(m, cap=1024):
    t = cap
    while t >= 8:
        if m % t == 0:
            return t
        t //= 2
    return m


def _row_call(kernel, row_inputs, aux_inputs, out_cols, out_dtype):
    """M-tiled, megacore-parallel launch of a row-wise fused kernel."""
    M = row_inputs[0].shape[0]
    tm = _pick_tile(M, cap=1024)
    in_specs = [pl.BlockSpec((tm, r.shape[1]), lambda i: (i, 0)) for r in row_inputs]
    in_specs += [pl.BlockSpec(a.shape, _const_map(a.ndim)) for a in aux_inputs]
    return pl.pallas_call(
        kernel,
        out_shape=jax.ShapeDtypeStruct((M, out_cols), out_dtype),
        grid=(M // tm,),
        in_specs=in_specs,
        out_specs=pl.BlockSpec((tm, out_cols), lambda i: (i, 0)),
        compiler_params=pltpu.CompilerParams(dimension_semantics=("parallel",)),
    )(*row_inputs, *aux_inputs)


def transformer_block(x, p, num_heads):
    """x: (B, L, C) -> (B, L, C); one fused pallas_call, grid (B, L/tq)."""
    B, L, C = x.shape
    tq = _pick_tile(L, cap=256)
    n_q = L // tq
    kern = functools.partial(_block_kernel, num_heads=num_heads)
    aux = [p["ln1_g"], p["ln1_b"], p["w_q"], p["b_q"], p["w_kv"], p["b_kv"],
           p["w_proj"], p["b_proj"], p["ln2_g"], p["ln2_b"],
           p["w_fc1"], p["b_fc1"], p["w_fc2"], p["b_fc2"]]
    in_specs = [pl.BlockSpec((1, tq, C), lambda b, q: (b, q, 0)),   # query tile
                pl.BlockSpec((1, L, C), lambda b, q: (b, 0, 0))]    # full seq (K/V)
    in_specs += [pl.BlockSpec(a.shape, _const_map(a.ndim)) for a in aux]
    return pl.pallas_call(
        kern,
        out_shape=jax.ShapeDtypeStruct((B, L, C), x.dtype),
        grid=(B, n_q),
        in_specs=in_specs,
        out_specs=pl.BlockSpec((1, tq, C), lambda b, q: (b, q, 0)),
        compiler_params=pltpu.CompilerParams(
            dimension_semantics=("parallel", "parallel"),
            vmem_limit_bytes=32 * 1024 * 1024),
    )(x, x, *aux)


# ----------------------------------------------------------------------------
# Forward pass (glue is reshape/transpose only; all compute in Pallas)
# ----------------------------------------------------------------------------
def udit_forward(prep, x, *, patch_size, num_classes, embed_dim, num_heads):
    B, Cin, H, W = x.shape
    Hp, Wp = H // patch_size, W // patch_size
    L = Hp * Wp
    E = embed_dim

    # --- patch embed: conv(k=4,s=4)-as-matmul + LN (fused) -------------------
    xp = x.reshape(B, Cin, Hp, patch_size, Wp, patch_size)
    xp = jnp.transpose(xp, (0, 2, 4, 1, 3, 5)).reshape(
        B * L, Cin * patch_size * patch_size)
    pe = prep["patch_embed"]
    tok = _row_call(_embed_kernel, [xp], [pe["w"], pe["b"], pe["ln_g"], pe["ln_b"]],
                    out_cols=E, out_dtype=ACT_DTYPE)
    tok = tok.reshape(B, L, E)

    # --- encoder block -------------------------------------------------------
    e0 = transformer_block(tok, prep["enc0"], num_heads)

    # --- patch merging: reshape/transpose glue + fused LN+linear -------------
    xg = e0.reshape(B, Hp // 2, 2, Wp // 2, 2, E)
    xg = jnp.transpose(xg, (0, 1, 3, 4, 2, 5)).reshape(
        B * (Hp // 2) * (Wp // 2), 4 * E)
    mg = prep["merge"]
    d1 = _row_call(_merge_kernel, [xg], [mg["ln_g"], mg["ln_b"], mg["w"], mg["b"]],
                   out_cols=2 * E, out_dtype=ACT_DTYPE)
    d1 = d1.reshape(B, (Hp // 2) * (Wp // 2), 2 * E)

    # --- bottleneck block ----------------------------------------------------
    b1 = transformer_block(d1, prep["bottleneck"], num_heads)

    # --- patch expand: linear 2E -> 4E, spatial rearrangement in XLA ---------
    ex = prep["expand"]
    u = _row_call(_linear_kernel, [b1.reshape(B * (Hp // 2) * (Wp // 2), 2 * E)],
                  [ex["w"], ex["b"]], out_cols=4 * E, out_dtype=ACT_DTYPE)
    u = u.reshape(B, Hp // 2, Wp // 2, 2, 2, E)
    u = jnp.transpose(u, (0, 1, 3, 2, 4, 5)).reshape(B * L, E)

    # --- skip connection: LN(expand) + concat-back linear (fused) ------------
    cb = prep["concat_back"]
    u0 = _row_call(_skip_kernel, [u, e0.reshape(B * L, E)],
                   [ex["ln_g"], ex["ln_b"], cb["w_u"], cb["w_e"], cb["b"]],
                   out_cols=E, out_dtype=ACT_DTYPE)
    u0 = u0.reshape(B, L, E)

    # --- decoder block -------------------------------------------------------
    d0 = transformer_block(u0, prep["dec0"], num_heads)

    # --- final 4x expand + LN + per-pixel head (fused, lane-dense output) ----
    up, hd = prep["up4"], prep["head"]
    s = patch_size
    kern = functools.partial(_up_head_kernel, num_chunks=s * s)
    logits = _row_call(kern, [d0.reshape(B * L, E)],
                       [up["w"], up["b"], up["ln_g"], up["ln_b"], hd["w"], hd["b"]],
                       out_cols=s * s * num_classes, out_dtype=jnp.float32)
    logits = logits.reshape(B, Hp, Wp, s, s, num_classes)
    logits = jnp.transpose(logits, (0, 1, 3, 2, 4, 5)).reshape(B, H, W, num_classes)
    return jnp.transpose(logits, (0, 3, 1, 2))                       # NCHW


def ldtunet_forward(prep, x, *, patch_size=4, num_classes=4,
                    embed_dim=32, num_heads=4):
    # LDTUnet.forward: grayscale -> 3 channels
    if x.shape[1] == 1:
        x = jnp.tile(x, (1, 3, 1, 1))
    return udit_forward(prep, x, patch_size=patch_size, num_classes=num_classes,
                        embed_dim=embed_dim, num_heads=num_heads)


# ----------------------------------------------------------------------------
# Deterministic parameter initialization + kernel-layout preparation
# ----------------------------------------------------------------------------
def init_params(key, *, patch_size=4, in_chans=3, num_classes=4,
                embed_dim=32, mlp_ratio=4):
    keys = iter(jax.random.split(key, 64))

    def dense(fan_in, fan_out):
        w = jax.random.normal(next(keys), (fan_in, fan_out), jnp.float32) * 0.02
        b = jnp.zeros((1, fan_out), jnp.float32)
        return w, b

    def ln(c):
        return jnp.ones((1, c), jnp.float32), jnp.zeros((1, c), jnp.float32)

    def block(c):
        w_qkv, b_qkv = dense(c, 3 * c)
        w_proj, b_proj = dense(c, c)
        w_fc1, b_fc1 = dense(c, mlp_ratio * c)
        w_fc2, b_fc2 = dense(mlp_ratio * c, c)
        ln1_g, ln1_b = ln(c)
        ln2_g, ln2_b = ln(c)
        return dict(w_qkv=w_qkv, b_qkv=b_qkv, w_proj=w_proj, b_proj=b_proj,
                    w_fc1=w_fc1, b_fc1=b_fc1, w_fc2=w_fc2, b_fc2=b_fc2,
                    ln1_g=ln1_g, ln1_b=ln1_b, ln2_g=ln2_g, ln2_b=ln2_b)

    params = {}

    pe_w, pe_b = dense(in_chans * patch_size * patch_size, embed_dim)
    pe_g, pe_lb = ln(embed_dim)
    params["patch_embed"] = dict(w=pe_w, b=pe_b, ln_g=pe_g, ln_b=pe_lb)

    params["enc0"] = block(embed_dim)

    mg_g, mg_b = ln(4 * embed_dim)
    mw, mb = dense(4 * embed_dim, 2 * embed_dim)
    params["merge"] = dict(ln_g=mg_g, ln_b=mg_b, w=mw, b=mb)

    params["bottleneck"] = block(2 * embed_dim)

    ew, eb = dense(2 * embed_dim, 4 * embed_dim)      # C -> 2C  (C = 2*embed_dim)
    eg, elb = ln(embed_dim)
    params["expand"] = dict(w=ew, b=eb, ln_g=eg, ln_b=elb)

    cw, cb = dense(2 * embed_dim, embed_dim)
    params["concat_back"] = dict(w=cw, b=cb)

    params["dec0"] = block(embed_dim)

    uw, ub = dense(embed_dim, patch_size * patch_size * embed_dim)
    ug, ulb = ln(embed_dim)
    params["up4"] = dict(w=uw, b=ub, ln_g=ug, ln_b=ulb)

    hw, hb = dense(embed_dim, num_classes)
    params["head"] = dict(w=hw, b=hb)

    return params


def _prep_block(p):
    """Layouts consumed by the fused block kernel; matmul weights pre-cast bf16."""
    C = p["ln1_g"].shape[-1]
    w_qkv, b_qkv = p["w_qkv"], p["b_qkv"]
    return dict(
        ln1_g=p["ln1_g"], ln1_b=p["ln1_b"],
        w_q=w_qkv[:, :C].astype(MXU_DTYPE), b_q=b_qkv[:, :C],
        w_kv=w_qkv[:, C:].astype(MXU_DTYPE), b_kv=b_qkv[:, C:],
        w_proj=p["w_proj"].astype(MXU_DTYPE), b_proj=p["b_proj"],
        ln2_g=p["ln2_g"], ln2_b=p["ln2_b"],
        w_fc1=p["w_fc1"].astype(MXU_DTYPE), b_fc1=p["b_fc1"],
        w_fc2=p["w_fc2"].astype(MXU_DTYPE), b_fc2=p["b_fc2"])


def prepare_params(params, *, num_heads, patch_size, embed_dim):
    """One-time reshape / bf16 cast of weights into the fused-kernel layouts."""
    del num_heads  # head split is done with static lane slices in-kernel
    s2 = patch_size * patch_size
    E = embed_dim
    cw = params["concat_back"]["w"]
    pe = params["patch_embed"]
    mg = params["merge"]
    ex = params["expand"]
    return {
        "patch_embed": dict(w=pe["w"].astype(MXU_DTYPE), b=pe["b"],
                            ln_g=pe["ln_g"], ln_b=pe["ln_b"]),
        "enc0": _prep_block(params["enc0"]),
        "merge": dict(ln_g=mg["ln_g"], ln_b=mg["ln_b"],
                      w=mg["w"].astype(MXU_DTYPE), b=mg["b"]),
        "bottleneck": _prep_block(params["bottleneck"]),
        "expand": dict(w=ex["w"].astype(MXU_DTYPE), b=ex["b"],
                       ln_g=ex["ln_g"], ln_b=ex["ln_b"]),
        "concat_back": dict(w_u=cw[:E].astype(MXU_DTYPE),
                            w_e=cw[E:].astype(MXU_DTYPE),
                            b=params["concat_back"]["b"]),
        "dec0": _prep_block(params["dec0"]),
        "up4": dict(
            w=jnp.transpose(params["up4"]["w"].reshape(E, s2, E),
                            (1, 0, 2)).astype(MXU_DTYPE),
            b=params["up4"]["b"].reshape(s2, 1, E),
            ln_g=params["up4"]["ln_g"], ln_b=params["up4"]["ln_b"]),
        "head": dict(w=params["head"]["w"].astype(MXU_DTYPE),
                     b=params["head"]["b"]),
    }


# ----------------------------------------------------------------------------
if __name__ == "__main__":
    IMG_SIZE = 16
    NUM_CLASSES = 4
    EMBED_DIM = 32
    NUM_HEADS = 4
    PATCH_SIZE = 4

    key = jax.random.PRNGKey(0)
    pkey, xkey = jax.random.split(key)
    params = init_params(pkey, patch_size=PATCH_SIZE, in_chans=3,
                         num_classes=NUM_CLASSES, embed_dim=EMBED_DIM)
    prep = prepare_params(params, num_heads=NUM_HEADS, patch_size=PATCH_SIZE,
                          embed_dim=EMBED_DIM)

    # Grayscale input -> exercises the 1->3 channel repeat branch in LDTUnet.forward
    x = jax.random.normal(xkey, (2, 1, IMG_SIZE, IMG_SIZE), jnp.float32)

    fwd = jax.jit(functools.partial(ldtunet_forward, patch_size=PATCH_SIZE,
                                    num_classes=NUM_CLASSES, embed_dim=EMBED_DIM,
                                    num_heads=NUM_HEADS))
    logits = fwd(prep, x)
    jax.block_until_ready(logits)

    assert logits.shape == (2, NUM_CLASSES, IMG_SIZE, IMG_SIZE), logits.shape
    assert bool(jnp.all(jnp.isfinite(logits)))
    print("KERNEL_OK")
</pallas_src>

<mosaic_0001>
module attributes {stable_mosaic.version = 11 : i64} {
  func.func @_embed_kernel(%arg0: i32, %arg1: memref<32x48xf32, #tpu.memory_space<vmem>>, %arg2: memref<48x32xbf16, #tpu.memory_space<vmem>>, %arg3: memref<1x32xf32, #tpu.memory_space<vmem>>, %arg4: memref<1x32xf32, #tpu.memory_space<vmem>>, %arg5: memref<1x32xf32, #tpu.memory_space<vmem>>, %arg6: memref<32x32xbf16, #tpu.memory_space<vmem>>) attributes {dimension_semantics = [#tpu.dimension_semantics<parallel>], iteration_bounds = array<i64: 1>, scalar_prefetch = 0 : i64, scratch_operands = 0 : i64, tpu.core_type = #tpu.core_type<tc>, window_params = [{transform_indices = @transform_0, window_bounds = array<i64: 32, 48>}, {pipeline_mode = #tpu.pipeline_mode<synchronous>, transform_indices = @transform_1, window_bounds = array<i64: 48, 32>}, {pipeline_mode = #tpu.pipeline_mode<synchronous>, transform_indices = @transform_2, window_bounds = array<i64: 1, 32>}, {pipeline_mode = #tpu.pipeline_mode<synchronous>, transform_indices = @transform_3, window_bounds = array<i64: 1, 32>}, {pipeline_mode = #tpu.pipeline_mode<synchronous>, transform_indices = @transform_4, window_bounds = array<i64: 1, 32>}, {transform_indices = @transform_5, window_bounds = array<i64: 32, 32>}]} {
    %c0 = arith.constant 0 : index
    %c0_0 = arith.constant 0 : index
    %0 = vector.load %arg1[%c0, %c0_0] : memref<32x48xf32, #tpu.memory_space<vmem>>, vector<32x48xf32>
    %1 = arith.truncf %0 : vector<32x48xf32> to vector<32x48xbf16>
    %c0_1 = arith.constant 0 : index
    %c0_2 = arith.constant 0 : index
    %2 = vector.load %arg2[%c0_1, %c0_2] : memref<48x32xbf16, #tpu.memory_space<vmem>>, vector<48x32xbf16>
    %cst = arith.constant dense<0.000000e+00> : vector<32x32xf32>
    %3 = tpu.matmul %1, %2, %cst {dimension_numbers = #tpu.dot_dimension_numbers<[1], [0], [0], [1], [0, 0, 1, 1], [], []>} : vector<32x48xbf16>, vector<48x32xbf16>, vector<32x32xf32> -> vector<32x32xf32>
    %c0_3 = arith.constant 0 : index
    %c0_4 = arith.constant 0 : index
    %4 = vector.load %arg3[%c0_3, %c0_4] : memref<1x32xf32, #tpu.memory_space<vmem>>, vector<1x32xf32>
    %5 = vector.broadcast %4 : vector<1x32xf32> to vector<32x32xf32>
    %6 = arith.addf %3, %5 : vector<32x32xf32>
    %c0_5 = arith.constant 0 : index
    %c0_6 = arith.constant 0 : index
    %7 = vector.load %arg4[%c0_5, %c0_6] : memref<1x32xf32, #tpu.memory_space<vmem>>, vector<1x32xf32>
    %c0_7 = arith.constant 0 : index
    %c0_8 = arith.constant 0 : index
    %8 = vector.load %arg5[%c0_7, %c0_8] : memref<1x32xf32, #tpu.memory_space<vmem>>, vector<1x32xf32>
    %cst_9 = arith.constant dense<0.000000e+00> : vector<32xf32>
    %9 = vector.multi_reduction <add>, %6, %cst_9 [1] : vector<32x32xf32> to vector<32xf32>
    %10 = vector.shape_cast %9 : vector<32xf32> to vector<32x1xf32>
    %cst_10 = arith.constant 3.200000e+01 : f32
    %11 = vector.broadcast %cst_10 : f32 to vector<32x1xf32>
    %12 = arith.divf %10, %11 : vector<32x1xf32>
    %13 = vector.broadcast %12 : vector<32x1xf32> to vector<32x32xf32>
    %14 = arith.subf %6, %13 : vector<32x32xf32>
    %15 = arith.mulf %14, %14 : vector<32x32xf32>
    %cst_11 = arith.constant dense<0.000000e+00> : vector<32xf32>
    %16 = vector.multi_reduction <add>, %15, %cst_11 [1] : vector<32x32xf32> to vector<32xf32>
    %17 = vector.shape_cast %16 : vector<32xf32> to vector<32x1xf32>
    %cst_12 = arith.constant 3.200000e+01 : f32
    %18 = vector.broadcast %cst_12 : f32 to vector<32x1xf32>
    %19 = arith.divf %17, %18 : vector<32x1xf32>
    %20 = vector.broadcast %12 : vector<32x1xf32> to vector<32x32xf32>
    %21 = arith.subf %6, %20 : vector<32x32xf32>
    %cst_13 = arith.constant 9.99999974E-6 : f32
    %22 = vector.broadcast %cst_13 : f32 to vector<32x1xf32>
    %23 = arith.addf %19, %22 : vector<32x1xf32>
    %24 = math.rsqrt %23 : vector<32x1xf32>
    %25 = vector.broadcast %24 : vector<32x1xf32> to vector<32x32xf32>
    %26 = arith.mulf %21, %25 : vector<32x32xf32>
    %27 = vector.broadcast %7 : vector<1x32xf32> to vector<32x32xf32>
    %28 = arith.mulf %26, %27 : vector<32x32xf32>
    %29 = vector.broadcast %8 : vector<1x32xf32> to vector<32x32xf32>
    %30 = arith.addf %28, %29 : vector<32x32xf32>
    %31 = arith.truncf %30 : vector<32x32xf32> to vector<32x32xbf16>
    %c0_14 = arith.constant 0 : index
    %c0_15 = arith.constant 0 : index
    %32 = vector.load %arg6[%c0_14, %c0_15] : memref<32x32xbf16, #tpu.memory_space<vmem>>, vector<32x32xbf16>
    tpu.vector_store %arg6[%c0_14, %c0_15], %31 {strides = array<i32>} : memref<32x32xbf16, #tpu.memory_space<vmem>>, vector<32x32xbf16>,
    return
  }
  func.func @transform_0(%arg0: i32) -> (i32, i32) {
    %c0_i32 = arith.constant 0 : i32
    %c0_i32_0 = arith.constant 0 : i32
    return %arg0, %c0_i32 : i32, i32
  }
  func.func @transform_1(%arg0: i32) -> (i32, i32) {
    %c0_i32 = arith.constant 0 : i32
    %c0_i32_0 = arith.constant 0 : i32
    %c0_i32_1 = arith.constant 0 : i32
    return %c0_i32, %c0_i32_0 : i32, i32
  }
  func.func @transform_2(%arg0: i32) -> (i32, i32) {
    %c0_i32 = arith.constant 0 : i32
    %c0_i32_0 = arith.constant 0 : i32
    %c0_i32_1 = arith.constant 0 : i32
    return %c0_i32, %c0_i32_0 : i32, i32
  }
  func.func @transform_3(%arg0: i32) -> (i32, i32) {
    %c0_i32 = arith.constant 0 : i32
    %c0_i32_0 = arith.constant 0 : i32
    %c0_i32_1 = arith.constant 0 : i32
    return %c0_i32, %c0_i32_0 : i32, i32
  }
  func.func @transform_4(%arg0: i32) -> (i32, i32) {
    %c0_i32 = arith.constant 0 : i32
    %c0_i32_0 = arith.constant 0 : i32
    %c0_i32_1 = arith.constant 0 : i32
    return %c0_i32, %c0_i32_0 : i32, i32
  }
  func.func @transform_5(%arg0: i32) -> (i32, i32) {
    %c0_i32 = arith.constant 0 : i32
    %c0_i32_0 = arith.constant 0 : i32
    return %arg0, %c0_i32 : i32, i32
  }
}

module attributes {stable_mosaic.version = 11 : i64} {
  func.func @_block_kernel(%arg0: i32, %arg1: i32, %arg2: memref<1x16x32xbf16, #tpu.memory_space<vmem>>, %arg3: memref<1x16x32xbf16, #tpu.memory_space<vmem>>, %arg4: memref<1x32xf32, #tpu.memory_space<vmem>>, %arg5: memref<1x32xf32, #tpu.memory_space<vmem>>, %arg6: memref<32x32xbf16, #tpu.memory_space<vmem>>, %arg7: memref<1x32xf32, #tpu.memory_space<vmem>>, %arg8: memref<32x64xbf16, #tpu.memory_space<vmem>>, %arg9: memref<1x64xf32, #tpu.memory_space<vmem>>, %arg10: memref<32x32xbf16, #tpu.memory_space<vmem>>, %arg11: memref<1x32xf32, #tpu.memory_space<vmem>>, %arg12: memref<1x32xf32, #tpu.memory_space<vmem>>, %arg13: memref<1x32xf32, #tpu.memory_space<vmem>>, %arg14: memref<32x128xbf16, #tpu.memory_space<vmem>>, %arg15: memref<1x128xf32, #tpu.memory_space<vmem>>, %arg16: memref<128x32xbf16, #tpu.memory_space<vmem>>, %arg17: memref<1x32xf32, #tpu.memory_space<vmem>>, %arg18: memref<1x16x32xbf16, #tpu.memory_space<vmem>>) attributes {dimension_semantics = [#tpu.dimension_semantics<parallel>, #tpu.dimension_semantics<parallel>], iteration_bounds = array<i64: 2, 1>, scalar_prefetch = 0 : i64, scratch_operands = 0 : i64, tpu.core_type = #tpu.core_type<tc>, window_params = [{transform_indices = @transform_0, window_bounds = array<i64: 1, 16, 32>}, {transform_indices = @transform_1, window_bounds = array<i64: 1, 16, 32>}, {pipeline_mode = #tpu.pipeline_mode<synchronous>, transform_indices = @transform_2, window_bounds = array<i64: 1, 32>}, {pipeline_mode = #tpu.pipeline_mode<synchronous>, transform_indices = @transform_3, window_bounds = array<i64: 1, 32>}, {pipeline_mode = #tpu.pipeline_mode<synchronous>, transform_indices = @transform_4, window_bounds = array<i64: 32, 32>}, {pipeline_mode = #tpu.pipeline_mode<synchronous>, transform_indices = @transform_5, window_bounds = array<i64: 1, 32>}, {pipeline_mode = #tpu.pipeline_mode<synchronous>, transform_indices = @transform_6, window_bounds = array<i64: 32, 64>}, {pipeline_mode = #tpu.pipeline_mode<synchronous>, transform_indices = @transform_7, window_bounds = array<i64: 1, 64>}, {pipeline_mode = #tpu.pipeline_mode<synchronous>, transform_indices = @transform_8, window_bounds = array<i64: 32, 32>}, {pipeline_mode = #tpu.pipeline_mode<synchronous>, transform_indices = @transform_9, window_bounds = array<i64: 1, 32>}, {pipeline_mode = #tpu.pipeline_mode<synchronous>, transform_indices = @transform_10, window_bounds = array<i64: 1, 32>}, {pipeline_mode = #tpu.pipeline_mode<synchronous>, transform_indices = @transform_11, window_bounds = array<i64: 1, 32>}, {pipeline_mode = #tpu.pipeline_mode<synchronous>, transform_indices = @transform_12, window_bounds = array<i64: 32, 128>}, {pipeline_mode = #tpu.pipeline_mode<synchronous>, transform_indices = @transform_13, window_bounds = array<i64: 1, 128>}, {pipeline_mode = #tpu.pipeline_mode<synchronous>, transform_indices = @transform_14, window_bounds = array<i64: 128, 32>}, {pipeline_mode = #tpu.pipeline_mode<synchronous>, transform_indices = @transform_15, window_bounds = array<i64: 1, 32>}, {transform_indices = @transform_16, window_bounds = array<i64: 1, 16, 32>}]} {
    %c0 = arith.constant 0 : index
    %c0_0 = arith.constant 0 : index
    %c0_1 = arith.constant 0 : index
    %0 = vector.load %arg2[%c0, %c0_0, %c0_1] : memref<1x16x32xbf16, #tpu.memory_space<vmem>>, vector<1x16x32xbf16>
    %1 = vector.shape_cast %0 : vector<1x16x32xbf16> to vector<16x32xbf16>
    %2 = arith.extf %1 : vector<16x32xbf16> to vector<16x32xf32>
    %c0_2 = arith.constant 0 : index
    %c0_3 = arith.constant 0 : index
    %c0_4 = arith.constant 0 : index
    %3 = vector.load %arg3[%c0_2, %c0_3, %c0_4] : memref<1x16x32xbf16, #tpu.memory_space<vmem>>, vector<1x16x32xbf16>
    %4 = vector.shape_cast %3 : vector<1x16x32xbf16> to vector<16x32xbf16>
    %5 = arith.extf %4 : vector<16x32xbf16> to vector<16x32xf32>
    %c0_5 = arith.constant 0 : index
    %c0_6 = arith.constant 0 : index
    %6 = vector.load %arg4[%c0_5, %c0_6] : memref<1x32xf32, #tpu.memory_space<vmem>>, vector<1x32xf32>
    %c0_7 = arith.constant 0 : index
    %c0_8 = arith.constant 0 : index
    %7 = vector.load %arg5[%c0_7, %c0_8] : memref<1x32xf32, #tpu.memory_space<vmem>>, vector<1x32xf32>
    %cst = arith.constant dense<0.000000e+00> : vector<16xf32>
    %8 = vector.multi_reduction <add>, %2, %cst [1] : vector<16x32xf32> to vector<16xf32>
    %9 = vector.shape_cast %8 : vector<16xf32> to vector<16x1xf32>
    %cst_9 = arith.constant 3.200000e+01 : f32
    %10 = vector.broadcast %cst_9 : f32 to vector<16x1xf32>
    %11 = arith.divf %9, %10 : vector<16x1xf32>
    %12 = vector.broadcast %11 : vector<16x1xf32> to vector<16x32xf32>
    %13 = arith.subf %2, %12 : vector<16x32xf32>
    %14 = arith.mulf %13, %13 : vector<16x32xf32>
    %cst_10 = arith.constant dense<0.000000e+00> : vector<16xf32>
    %15 = vector.multi_reduction <add>, %14, %cst_10 [1] : vector<16x32xf32> to vector<16xf32>
    %16 = vector.shape_cast %15 : vector<16xf32> to vector<16x1xf32>
    %cst_11 = arith.constant 3.200000e+01 : f32
    %17 = vector.broadcast %cst_11 : f32 to vector<16x1xf32>
    %18 = arith.divf %16, %17 : vector<16x1xf32>
    %19 = vector.broadcast %11 : vector<16x1xf32> to vector<16x32xf32>
    %20 = arith.subf %2, %19 : vector<16x32xf32>
    %cst_12 = arith.constant 9.99999974E-6 : f32
    %21 = vector.broadcast %cst_12 : f32 to vector<16x1xf32>
    %22 = arith.addf %18, %21 : vector<16x1xf32>
    %23 = math.rsqrt %22 : vector<16x1xf32>
    %24 = vector.broadcast %23 : vector<16x1xf32> to vector<16x32xf32>
    %25 = arith.mulf %20, %24 : vector<16x32xf32>
    %26 = vector.broadcast %6 : vector<1x32xf32> to vector<16x32xf32>
    %27 = arith.mulf %25, %26 : vector<16x32xf32>
    %28 = vector.broadcast %7 : vector<1x32xf32> to vector<16x32xf32>
    %29 = arith.addf %27, %28 : vector<16x32xf32>
    %30 = arith.truncf %29 : vector<16x32xf32> to vector<16x32xbf16>
    %cst_13 = arith.constant dense<0.000000e+00> : vector<16xf32>
    %31 = vector.multi_reduction <add>, %5, %cst_13 [1] : vector<16x32xf32> to vector<16xf32>
    %32 = vector.shape_cast %31 : vector<16xf32> to vector<16x1xf32>
    %cst_14 = arith.constant 3.200000e+01 : f32
    %33 = vector.broadcast %cst_14 : f32 to vector<16x1xf32>
    %34 = arith.divf %32, %33 : vector<16x1xf32>
    %35 = vector.broadcast %34 : vector<16x1xf32> to vector<16x32xf32>
    %36 = arith.subf %5, %35 : vector<16x32xf32>
    %37 = arith.mulf %36, %36 : vector<16x32xf32>
    %cst_15 = arith.constant dense<0.000000e+00> : vector<16xf32>
    %38 = vector.multi_reduction <add>, %37, %cst_15 [1] : vector<16x32xf32> to vector<16xf32>
    %39 = vector.shape_cast %38 : vector<16xf32> to vector<16x1xf32>
    %cst_16 = arith.constant 3.200000e+01 : f32
    %40 = vector.broadcast %cst_16 : f32 to vector<16x1xf32>
    %41 = arith.divf %39, %40 : vector<16x1xf32>
    %42 = vector.broadcast %34 : vector<16x1xf32> to vector<16x32xf32>
    %43 = arith.subf %5, %42 : vector<16x32xf32>
    %cst_17 = arith.constant 9.99999974E-6 : f32
    %44 = vector.broadcast %cst_17 : f32 to vector<16x1xf32>
    %45 = arith.addf %41, %44 : vector<16x1xf32>
    %46 = math.rsqrt %45 : vector<16x1xf32>
    %47 = vector.broadcast %46 : vector<16x1xf32> to vector<16x32xf32>
    %48 = arith.mulf %43, %47 : vector<16x32xf32>
    %49 = vector.broadcast %6 : vector<1x32xf32> to vector<16x32xf32>
    %50 = arith.mulf %48, %49 : vector<16x32xf32>
    %51 = vector.broadcast %7 : vector<1x32xf32> to vector<16x32xf32>
    %52 = arith.addf %50, %51 : vector<16x32xf32>
    %53 = arith.truncf %52 : vector<16x32xf32> to vector<16x32xbf16>
    %c0_18 = arith.constant 0 : index
    %c0_19 = arith.constant 0 : index
    %54 = vector.load %arg6[%c0_18, %c0_19] : memref<32x32xbf16, #tpu.memory_space<vmem>>, vector<32x32xbf16>
    %cst_20 = arith.constant dense<0.000000e+00> : vector<16x32xf32>
    %55 = tpu.matmul %30, %54, %cst_20 {dimension_numbers = #tpu.dot_dimension_numbers<[1], [0], [0], [1], [0, 0, 1, 1], [], []>} : vector<16x32xbf16>, vector<32x32xbf16>, vector<16x32xf32> -> vector<16x32xf32>
    %c0_21 = arith.constant 0 : index
    %c0_22 = arith.constant 0 : index
    %56 = vector.load %arg7[%c0_21, %c0_22] : memref<1x32xf32, #tpu.memory_space<vmem>>, vector<1x32xf32>
    %57 = vector.broadcast %56 : vector<1x32xf32> to vector<16x32xf32>
    %58 = arith.addf %55, %57 : vector<16x32xf32>
    %c0_23 = arith.constant 0 : index
    %c0_24 = arith.constant 0 : index
    %59 = vector.load %arg8[%c0_23, %c0_24] : memref<32x64xbf16, #tpu.memory_space<vmem>>, vector<32x64xbf16>
    %cst_25 = arith.constant dense<0.000000e+00> : vector<16x64xf32>
    %60 = tpu.matmul %53, %59, %cst_25 {dimension_numbers = #tpu.dot_dimension_numbers<[1], [0], [0], [1], [0, 0, 1, 1], [], []>} : vector<16x32xbf16>, vector<32x64xbf16>, vector<16x64xf32> -> vector<16x64xf32>
    %c0_26 = arith.constant 0 : index
    %c0_27 = arith.constant 0 : index
    %61 = vector.load %arg9[%c0_26, %c0_27] : memref<1x64xf32, #tpu.memory_space<vmem>>, vector<1x64xf32>
    %62 = vector.broadcast %61 : vector<1x64xf32> to vector<16x64xf32>
    %63 = arith.addf %60, %62 : vector<16x64xf32>
    %64 = vector.extract_strided_slice %63 {offsets = [0, 0], sizes = [16, 32], strides = [1, 1]} : vector<16x64xf32> to vector<16x32xf32>
    %65 = vector.extract_strided_slice %63 {offsets = [0, 32], sizes = [16, 32], strides = [1, 1]} : vector<16x64xf32> to vector<16x32xf32>
    %66 = vector.extract_strided_slice %58 {offsets = [0, 0], sizes = [16, 8], strides = [1, 1]} : vector<16x32xf32> to vector<16x8xf32>
    %67 = vector.extract_strided_slice %58 {offsets = [0, 8], sizes = [16, 8], strides = [1, 1]} : vector<16x32xf32> to vector<16x8xf32>
    %68 = vector.extract_strided_slice %58 {offsets = [0, 16], sizes = [16, 8], strides = [1, 1]} : vector<16x32xf32> to vector<16x8xf32>
    %69 = vector.extract_strided_slice %58 {offsets = [0, 24], sizes = [16, 8], strides = [1, 1]} : vector<16x32xf32> to vector<16x8xf32>
    %70 = vector.shape_cast %66 : vector<16x8xf32> to vector<1x16x8xf32>
    %71 = vector.shape_cast %67 : vector<16x8xf32> to vector<1x16x8xf32>
    %72 = vector.shape_cast %68 : vector<16x8xf32> to vector<1x16x8xf32>
    %73 = vector.shape_cast %69 : vector<16x8xf32> to vector<1x16x8xf32>
    %74 = tpu.concatenate %70, %71, %72, %73 in 0 : vector<1x16x8xf32>, vector<1x16x8xf32>, vector<1x16x8xf32>, vector<1x16x8xf32> -> vector<4x16x8xf32>
    %75 = arith.truncf %74 : vector<4x16x8xf32> to vector<4x16x8xbf16>
    %76 = vector.extract_strided_slice %64 {offsets = [0, 0], sizes = [16, 8], strides = [1, 1]} : vector<16x32xf32> to vector<16x8xf32>
    %77 = vector.extract_strided_slice %64 {offsets = [0, 8], sizes = [16, 8], strides = [1, 1]} : vector<16x32xf32> to vector<16x8xf32>
    %78 = vector.extract_strided_slice %64 {offsets = [0, 16], sizes = [16, 8], strides = [1, 1]} : vector<16x32xf32> to vector<16x8xf32>
    %79 = vector.extract_strided_slice %64 {offsets = [0, 24], sizes = [16, 8], strides = [1, 1]} : vector<16x32xf32> to vector<16x8xf32>
    %80 = vector.shape_cast %76 : vector<16x8xf32> to vector<1x16x8xf32>
    %81 = vector.shape_cast %77 : vector<16x8xf32> to vector<1x16x8xf32>
    %82 = vector.shape_cast %78 : vector<16x8xf32> to vector<1x16x8xf32>
    %83 = vector.shape_cast %79 : vector<16x8xf32> to vector<1x16x8xf32>
    %84 = tpu.concatenate %80, %81, %82, %83 in 0 : vector<1x16x8xf32>, vector<1x16x8xf32>, vector<1x16x8xf32>, vector<1x16x8xf32> -> vector<4x16x8xf32>
    %85 = arith.truncf %84 : vector<4x16x8xf32> to vector<4x16x8xbf16>
    %86 = vector.extract_strided_slice %65 {offsets = [0, 0], sizes = [16, 8], strides = [1, 1]} : vector<16x32xf32> to vector<16x8xf32>
    %87 = vector.extract_strided_slice %65 {offsets = [0, 8], sizes = [16, 8], strides = [1, 1]} : vector<16x32xf32> to vector<16x8xf32>
    %88 = vector.extract_strided_slice %65 {offsets = [0, 16], sizes = [16, 8], strides = [1, 1]} : vector<16x32xf32> to vector<16x8xf32>
    %89 = vector.extract_strided_slice %65 {offsets = [0, 24], sizes = [16, 8], strides = [1, 1]} : vector<16x32xf32> to vector<16x8xf32>
    %90 = vector.shape_cast %86 : vector<16x8xf32> to vector<1x16x8xf32>
    %91 = vector.shape_cast %87 : vector<16x8xf32> to vector<1x16x8xf32>
    %92 = vector.shape_cast %88 : vector<16x8xf32> to vector<1x16x8xf32>
    %93 = vector.shape_cast %89 : vector<16x8xf32> to vector<1x16x8xf32>
    %94 = tpu.concatenate %90, %91, %92, %93 in 0 : vector<1x16x8xf32>, vector<1x16x8xf32>, vector<1x16x8xf32>, vector<1x16x8xf32> -> vector<4x16x8xf32>
    %95 = arith.truncf %94 : vector<4x16x8xf32> to vector<4x16x8xbf16>
    %cst_28 = arith.constant dense<0.000000e+00> : vector<4x16x16xf32>
    %96 = tpu.matmul %75, %85, %cst_28 {dimension_numbers = #tpu.dot_dimension_numbers<[2], [2], [1], [1], [0, 0, 0, 1, 1, 1], [0], [0]>} : vector<4x16x8xbf16>, vector<4x16x8xbf16>, vector<4x16x16xf32> -> vector<4x16x16xf32>
    %cst_29 = arith.constant 0.353553385 : f32
    %97 = vector.broadcast %cst_29 : f32 to vector<4x16x16xf32>
    %98 = arith.mulf %96, %97 : vector<4x16x16xf32>
    %cst_30 = arith.constant dense<0xFF800000> : vector<4x16xf32>
    %99 = vector.multi_reduction <maximumf>, %98, %cst_30 [2] : vector<4x16x16xf32> to vector<4x16xf32>
    %100 = vector.shape_cast %99 : vector<4x16xf32> to vector<4x16x1xf32>
    %101 = vector.broadcast %100 : vector<4x16x1xf32> to vector<4x16x16xf32>
    %102 = arith.subf %98, %101 : vector<4x16x16xf32>
    %103 = math.exp %102 : vector<4x16x16xf32>
    %cst_31 = arith.constant dense<0.000000e+00> : vector<4x16xf32>
    %104 = vector.multi_reduction <add>, %103, %cst_31 [2] : vector<4x16x16xf32> to vector<4x16xf32>
    %105 = vector.shape_cast %104 : vector<4x16xf32> to vector<4x16x1xf32>
    %106 = vector.broadcast %105 : vector<4x16x1xf32> to vector<4x16x16xf32>
    %107 = arith.divf %103, %106 : vector<4x16x16xf32>
    %108 = arith.truncf %107 : vector<4x16x16xf32> to vector<4x16x16xbf16>
    %cst_32 = arith.constant dense<0.000000e+00> : vector<4x16x8xf32>
    %109 = tpu.matmul %108, %95, %cst_32 {dimension_numbers = #tpu.dot_dimension_numbers<[2], [1], [1], [2], [0, 0, 0, 1, 1, 2], [0], [0]>} : vector<4x16x16xbf16>, vector<4x16x8xbf16>, vector<4x16x8xf32> -> vector<4x16x8xf32>
    %110 = vector.extract_strided_slice %109 {offsets = [0, 0, 0], sizes = [1, 16, 8], strides = [1, 1, 1]} : vector<4x16x8xf32> to vector<1x16x8xf32>
    %111 = vector.shape_cast %110 : vector<1x16x8xf32> to vector<16x8xf32>
    %112 = vector.extract_strided_slice %109 {offsets = [1, 0, 0], sizes = [1, 16, 8], strides = [1, 1, 1]} : vector<4x16x8xf32> to vector<1x16x8xf32>
    %113 = vector.shape_cast %112 : vector<1x16x8xf32> to vector<16x8xf32>
    %114 = vector.extract_strided_slice %109 {offsets = [2, 0, 0], sizes = [1, 16, 8], strides = [1, 1, 1]} : vector<4x16x8xf32> to vector<1x16x8xf32>
    %115 = vector.shape_cast %114 : vector<1x16x8xf32> to vector<16x8xf32>
    %116 = vector.extract_strided_slice %109 {offsets = [3, 0, 0], sizes = [1, 16, 8], strides = [1, 1, 1]} : vector<4x16x8xf32> to vector<1x16x8xf32>
    %117 = vector.shape_cast %116 : vector<1x16x8xf32> to vector<16x8xf32>
    %118 = tpu.concatenate %111, %113, %115, %117 in 1 : vector<16x8xf32>, vector<16x8xf32>, vector<16x8xf32>, vector<16x8xf32> -> vector<16x32xf32>
    %119 = arith.truncf %118 : vector<16x32xf32> to vector<16x32xbf16>
    %c0_33 = arith.constant 0 : index
    %c0_34 = arith.constant 0 : index
    %120 = vector.load %arg10[%c0_33, %c0_34] : memref<32x32xbf16, #tpu.memory_space<vmem>>, vector<32x32xbf16>
    %cst_35 = arith.constant dense<0.000000e+00> : vector<16x32xf32>
    %121 = tpu.matmul %119, %120, %cst_35 {dimension_numbers = #tpu.dot_dimension_numbers<[1], [0], [0], [1], [0, 0, 1, 1], [], []>} : vector<16x32xbf16>, vector<32x32xbf16>, vector<16x32xf32> -> vector<16x32xf32>
    %122 = arith.addf %2, %121 : vector<16x32xf32>
    %c0_36 = arith.constant 0 : index
    %c0_37 = arith.constant 0 : index
    %123 = vector.load %arg11[%c0_36, %c0_37] : memref<1x32xf32, #tpu.memory_space<vmem>>, vector<1x32xf32>
    %124 = vector.broadcast %123 : vector<1x32xf32> to vector<16x32xf32>
    %125 = arith.addf %122, %124 : vector<16x32xf32>
    %c0_38 = arith.constant 0 : index
    %c0_39 = arith.constant 0 : index
    %126 = vector.load %arg12[%c0_38, %c0_39] : memref<1x32xf32, #tpu.memory_space<vmem>>, vector<1x32xf32>
    %c0_40 = arith.constant 0 : index
    %c0_41 = arith.constant 0 : index
    %127 = vector.load %arg13[%c0_40, %c0_41] : memref<1x32xf32, #tpu.memory_space<vmem>>, vector<1x32xf32>
    %cst_42 = arith.constant dense<0.000000e+00> : vector<16xf32>
    %128 = vector.multi_reduction <add>, %125, %cst_42 [1] : vector<16x32xf32> to vector<16xf32>
    %129 = vector.shape_cast %128 : vector<16xf32> to vector<16x1xf32>
    %cst_43 = arith.constant 3.200000e+01 : f32
    %130 = vector.broadcast %cst_43 : f32 to vector<16x1xf32>
    %131 = arith.divf %129, %130 : vector<16x1xf32>
    %132 = vector.broadcast %131 : vector<16x1xf32> to vector<16x32xf32>
    %133 = arith.subf %125, %132 : vector<16x32xf32>
    %134 = arith.mulf %133, %133 : vector<16x32xf32>
    %cst_44 = arith.constant dense<0.000000e+00> : vector<16xf32>
    %135 = vector.multi_reduction <add>, %134, %cst_44 [1] : vector<16x32xf32> to vector<16xf32>
    %136 = vector.shape_cast %135 : vector<16xf32> to vector<16x1xf32>
    %cst_45 = arith.constant 3.200000e+01 : f32
    %137 = vector.broadcast %cst_45 : f32 to vector<16x1xf32>
    %138 = arith.divf %136, %137 : vector<16x1xf32>
    %139 = vector.broadcast %131 : vector<16x1xf32> to vector<16x32xf32>
    %140 = arith.subf %125, %139 : vector<16x32xf32>
    %cst_46 = arith.constant 9.99999974E-6 : f32
    %141 = vector.broadcast %cst_46 : f32 to vector<16x1xf32>
    %142 = arith.addf %138, %141 : vector<16x1xf32>
    %143 = math.rsqrt %142 : vector<16x1xf32>
    %144 = vector.broadcast %143 : vector<16x1xf32> to vector<16x32xf32>
    %145 = arith.mulf %140, %144 : vector<16x32xf32>
    %146 = vector.broadcast %126 : vector<1x32xf32> to vector<16x32xf32>
    %147 = arith.mulf %145, %146 : vector<16x32xf32>
    %148 = vector.broadcast %127 : vector<1x32xf32> to vector<16x32xf32>
    %149 = arith.addf %147, %148 : vector<16x32xf32>
    %150 = arith.truncf %149 : vector<16x32xf32> to vector<16x32xbf16>
    %c0_47 = arith.constant 0 : index
    %c0_48 = arith.constant 0 : index
    %151 = vector.load %arg14[%c0_47, %c0_48] : memref<32x128xbf16, #tpu.memory_space<vmem>>, vector<32x128xbf16>
    %cst_49 = arith.constant dense<0.000000e+00> : vector<16x128xf32>
    %152 = tpu.matmul %150, %151, %cst_49 {dimension_numbers = #tpu.dot_dimension_numbers<[1], [0], [0], [1], [0, 0, 1, 1], [], []>} : vector<16x32xbf16>, vector<32x128xbf16>, vector<16x128xf32> -> vector<16x128xf32>
    %c0_50 = arith.constant 0 : index
    %c0_51 = arith.constant 0 : index
    %153 = vector.load %arg15[%c0_50, %c0_51] : memref<1x128xf32, #tpu.memory_space<vmem>>, vector<1x128xf32>
    %154 = vector.broadcast %153 : vector<1x128xf32> to vector<16x128xf32>
    %155 = arith.addf %152, %154 : vector<16x128xf32>
    %156 = arith.mulf %155, %155 : vector<16x128xf32>
    %157 = arith.mulf %155, %156 : vector<16x128xf32>
    %cst_52 = arith.constant 4.471500e-02 : f32
    %158 = vector.broadcast %cst_52 : f32 to vector<16x128xf32>
    %159 = arith.mulf %158, %157 : vector<16x128xf32>
    %160 = arith.addf %155, %159 : vector<16x128xf32>
    %cst_53 = arith.constant 0.797884583 : f32
    %161 = vector.broadcast %cst_53 : f32 to vector<16x128xf32>
    %162 = arith.mulf %161, %160 : vector<16x128xf32>
    %163 = math.tanh %162 : vector<16x128xf32>
    %cst_54 = arith.constant 1.000000e+00 : f32
    %164 = vector.broadcast %cst_54 : f32 to vector<16x128xf32>
    %165 = arith.addf %164, %163 : vector<16x128xf32>
    %cst_55 = arith.constant 5.000000e-01 : f32
    %166 = vector.broadcast %cst_55 : f32 to vector<16x128xf32>
    %167 = arith.mulf %166, %165 : vector<16x128xf32>
    %168 = arith.mulf %155, %167 : vector<16x128xf32>
    %169 = arith.truncf %168 : vector<16x128xf32> to vector<16x128xbf16>
    %c0_56 = arith.constant 0 : index
    %c0_57 = arith.constant 0 : index
    %170 = vector.load %arg16[%c0_56, %c0_57] : memref<128x32xbf16, #tpu.memory_space<vmem>>, vector<128x32xbf16>
    %cst_58 = arith.constant dense<0.000000e+00> : vector<16x32xf32>
    %171 = tpu.matmul %169, %170, %cst_58 {dimension_numbers = #tpu.dot_dimension_numbers<[1], [0], [0], [1], [0, 0, 1, 1], [], []>} : vector<16x128xbf16>, vector<128x32xbf16>, vector<16x32xf32> -> vector<16x32xf32>
    %172 = arith.addf %125, %171 : vector<16x32xf32>
    %c0_59 = arith.constant 0 : index
    %c0_60 = arith.constant 0 : index
    %173 = vector.load %arg17[%c0_59, %c0_60] : memref<1x32xf32, #tpu.memory_space<vmem>>, vector<1x32xf32>
    %174 = vector.broadcast %173 : vector<1x32xf32> to vector<16x32xf32>
    %175 = arith.addf %172, %174 : vector<16x32xf32>
    %176 = arith.truncf %175 : vector<16x32xf32> to vector<16x32xbf16>
    %c0_61 = arith.constant 0 : index
    %c0_62 = arith.constant 0 : index
    %c0_63 = arith.constant 0 : index
    %177 = vector.load %arg18[%c0_61, %c0_62, %c0_63] : memref<1x16x32xbf16, #tpu.memory_space<vmem>>, vector<1x16x32xbf16>
    %178 = vector.shape_cast %177 : vector<1x16x32xbf16> to vector<16x32xbf16>
    %179 = vector.shape_cast %176 : vector<16x32xbf16> to vector<1x16x32xbf16>
    tpu.vector_store %arg18[%c0_61, %c0_62, %c0_63], %179 {strides = array<i32>} : memref<1x16x32xbf16, #tpu.memory_space<vmem>>, vector<1x16x32xbf16>,
    return
  }
  func.func @transform_0(%arg0: i32, %arg1: i32) -> (i32, i32, i32) {
    %c0_i32 = arith.constant 0 : i32
    %c0_i32_0 = arith.constant 0 : i32
    return %arg0, %arg1, %c0_i32 : i32, i32, i32
  }
  func.func @transform_1(%arg0: i32, %arg1: i32) -> (i32, i32, i32) {
    %c0_i32 = arith.constant 0 : i32
    %c0_i32_0 = arith.constant 0 : i32
    %c0_i32_1 = arith.constant 0 : i32
    return %arg0, %c0_i32, %c0_i32_0 : i32, i32, i32
  }
  func.func @transform_2(%arg0: i32, %arg1: i32) -> (i32, i32) {
    %c0_i32 = arith.constant 0 : i32
    %c0_i32_0 = arith.constant 0 : i32
    %c0_i32_1 = arith.constant 0 : i32
    return %c0_i32, %c0_i32_0 : i32, i32
  }
  func.func @transform_3(%arg0: i32, %arg1: i32) -> (i32, i32) {
    %c0_i32 = arith.constant 0 : i32
    %c0_i32_0 = arith.constant 0 : i32
    %c0_i32_1 = arith.constant 0 : i32
    return %c0_i32, %c0_i32_0 : i32, i32
  }
  func.func @transform_4(%arg0: i32, %arg1: i32) -> (i32, i32) {
    %c0_i32 = arith.constant 0 : i32
    %c0_i32_0 = arith.constant 0 : i32
    %c0_i32_1 = arith.constant 0 : i32
    return %c0_i32, %c0_i32_0 : i32, i32
  }
  func.func @transform_5(%arg0: i32, %arg1: i32) -> (i32, i32) {
    %c0_i32 = arith.constant 0 : i32
    %c0_i32_0 = arith.constant 0 : i32
    %c0_i32_1 = arith.constant 0 : i32
    return %c0_i32, %c0_i32_0 : i32, i32
  }
  func.func @transform_6(%arg0: i32, %arg1: i32) -> (i32, i32) {
    %c0_i32 = arith.constant 0 : i32
    %c0_i32_0 = arith.constant 0 : i32
    %c0_i32_1 = arith.constant 0 : i32
    return %c0_i32, %c0_i32_0 : i32, i32
  }
  func.func @transform_7(%arg0: i32, %arg1: i32) -> (i32, i32) {
    %c0_i32 = arith.constant 0 : i32
    %c0_i32_0 = arith.constant 0 : i32
    %c0_i32_1 = arith.constant 0 : i32
    return %c0_i32, %c0_i32_0 : i32, i32
  }
  func.func @transform_8(%arg0: i32, %arg1: i32) -> (i32, i32) {
    %c0_i32 = arith.constant 0 : i32
    %c0_i32_0 = arith.constant 0 : i32
    %c0_i32_1 = arith.constant 0 : i32
    return %c0_i32, %c0_i32_0 : i32, i32
  }
  func.func @transform_9(%arg0: i32, %arg1: i32) -> (i32, i32) {
    %c0_i32 = arith.constant 0 : i32
    %c0_i32_0 = arith.constant 0 : i32
    %c0_i32_1 = arith.constant 0 : i32
    return %c0_i32, %c0_i32_0 : i32, i32
  }
  func.func @transform_10(%arg0: i32, %arg1: i32) -> (i32, i32) {
    %c0_i32 = arith.constant 0 : i32
    %c0_i32_0 = arith.constant 0 : i32
    %c0_i32_1 = arith.constant 0 : i32
    return %c0_i32, %c0_i32_0 : i32, i32
  }
  func.func @transform_11(%arg0: i32, %arg1: i32) -> (i32, i32) {
    %c0_i32 = arith.constant 0 : i32
    %c0_i32_0 = arith.constant 0 : i32
    %c0_i32_1 = arith.constant 0 : i32
    return %c0_i32, %c0_i32_0 : i32, i32
  }
  func.func @transform_12(%arg0: i32, %arg1: i32) -> (i32, i32) {
    %c0_i32 = arith.constant 0 : i32
    %c0_i32_0 = arith.constant 0 : i32
    %c0_i32_1 = arith.constant 0 : i32
    return %c0_i32, %c0_i32_0 : i32, i32
  }
  func.func @transform_13(%arg0: i32, %arg1: i32) -> (i32, i32) {
    %c0_i32 = arith.constant 0 : i32
    %c0_i32_0 = arith.constant 0 : i32
    %c0_i32_1 = arith.constant 0 : i32
    return %c0_i32, %c0_i32_0 : i32, i32
  }
  func.func @transform_14(%arg0: i32, %arg1: i32) -> (i32, i32) {
    %c0_i32 = arith.constant 0 : i32
    %c0_i32_0 = arith.constant 0 : i32
    %c0_i32_1 = arith.constant 0 : i32
    return %c0_i32, %c0_i32_0 : i32, i32
  }
  func.func @transform_15(%arg0: i32, %arg1: i32) -> (i32, i32) {
    %c0_i32 = arith.constant 0 : i32
    %c0_i32_0 = arith.constant 0 : i32
    %c0_i32_1 = arith.constant 0 : i32
    return %c0_i32, %c0_i32_0 : i32, i32
  }
  func.func @transform_16(%arg0: i32, %arg1: i32) -> (i32, i32, i32) {
    %c0_i32 = arith.constant 0 : i32
    %c0_i32_0 = arith.constant 0 : i32
    return %arg0, %arg1, %c0_i32 : i32, i32, i32
  }
}

module attributes {stable_mosaic.version = 11 : i64} {
  func.func @_merge_kernel(%arg0: i32, %arg1: memref<8x128xbf16, #tpu.memory_space<vmem>>, %arg2: memref<1x128xf32, #tpu.memory_space<vmem>>, %arg3: memref<1x128xf32, #tpu.memory_space<vmem>>, %arg4: memref<128x64xbf16, #tpu.memory_space<vmem>>, %arg5: memref<1x64xf32, #tpu.memory_space<vmem>>, %arg6: memref<8x64xbf16, #tpu.memory_space<vmem>>) attributes {dimension_semantics = [#tpu.dimension_semantics<parallel>], iteration_bounds = array<i64: 1>, scalar_prefetch = 0 : i64, scratch_operands = 0 : i64, tpu.core_type = #tpu.core_type<tc>, window_params = [{transform_indices = @transform_0, window_bounds = array<i64: 8, 128>}, {pipeline_mode = #tpu.pipeline_mode<synchronous>, transform_indices = @transform_1, window_bounds = array<i64: 1, 128>}, {pipeline_mode = #tpu.pipeline_mode<synchronous>, transform_indices = @transform_2, window_bounds = array<i64: 1, 128>}, {pipeline_mode = #tpu.pipeline_mode<synchronous>, transform_indices = @transform_3, window_bounds = array<i64: 128, 64>}, {pipeline_mode = #tpu.pipeline_mode<synchronous>, transform_indices = @transform_4, window_bounds = array<i64: 1, 64>}, {transform_indices = @transform_5, window_bounds = array<i64: 8, 64>}]} {
    %c0 = arith.constant 0 : index
    %c0_0 = arith.constant 0 : index
    %0 = vector.load %arg1[%c0, %c0_0] : memref<8x128xbf16, #tpu.memory_space<vmem>>, vector<8x128xbf16>
    %1 = arith.extf %0 : vector<8x128xbf16> to vector<8x128xf32>
    %c0_1 = arith.constant 0 : index
    %c0_2 = arith.constant 0 : index
    %2 = vector.load %arg2[%c0_1, %c0_2] : memref<1x128xf32, #tpu.memory_space<vmem>>, vector<1x128xf32>
    %c0_3 = arith.constant 0 : index
    %c0_4 = arith.constant 0 : index
    %3 = vector.load %arg3[%c0_3, %c0_4] : memref<1x128xf32, #tpu.memory_space<vmem>>, vector<1x128xf32>
    %cst = arith.constant dense<0.000000e+00> : vector<8xf32>
    %4 = vector.multi_reduction <add>, %1, %cst [1] : vector<8x128xf32> to vector<8xf32>
    %5 = vector.shape_cast %4 : vector<8xf32> to vector<8x1xf32>
    %cst_5 = arith.constant 1.280000e+02 : f32
    %6 = vector.broadcast %cst_5 : f32 to vector<8x1xf32>
    %7 = arith.divf %5, %6 : vector<8x1xf32>
    %8 = vector.broadcast %7 : vector<8x1xf32> to vector<8x128xf32>
    %9 = arith.subf %1, %8 : vector<8x128xf32>
    %10 = arith.mulf %9, %9 : vector<8x128xf32>
    %cst_6 = arith.constant dense<0.000000e+00> : vector<8xf32>
    %11 = vector.multi_reduction <add>, %10, %cst_6 [1] : vector<8x128xf32> to vector<8xf32>
    %12 = vector.shape_cast %11 : vector<8xf32> to vector<8x1xf32>
    %cst_7 = arith.constant 1.280000e+02 : f32
    %13 = vector.broadcast %cst_7 : f32 to vector<8x1xf32>
    %14 = arith.divf %12, %13 : vector<8x1xf32>
    %15 = vector.broadcast %7 : vector<8x1xf32> to vector<8x128xf32>
    %16 = arith.subf %1, %15 : vector<8x128xf32>
    %cst_8 = arith.constant 9.99999974E-6 : f32
    %17 = vector.broadcast %cst_8 : f32 to vector<8x1xf32>
    %18 = arith.addf %14, %17 : vector<8x1xf32>
    %19 = math.rsqrt %18 : vector<8x1xf32>
    %20 = vector.broadcast %19 : vector<8x1xf32> to vector<8x128xf32>
    %21 = arith.mulf %16, %20 : vector<8x128xf32>
    %22 = vector.broadcast %2 : vector<1x128xf32> to vector<8x128xf32>
    %23 = arith.mulf %21, %22 : vector<8x128xf32>
    %24 = vector.broadcast %3 : vector<1x128xf32> to vector<8x128xf32>
    %25 = arith.addf %23, %24 : vector<8x128xf32>
    %26 = arith.truncf %25 : vector<8x128xf32> to vector<8x128xbf16>
    %c0_9 = arith.constant 0 : index
    %c0_10 = arith.constant 0 : index
    %27 = vector.load %arg4[%c0_9, %c0_10] : memref<128x64xbf16, #tpu.memory_space<vmem>>, vector<128x64xbf16>
    %cst_11 = arith.constant dense<0.000000e+00> : vector<8x64xf32>
    %28 = tpu.matmul %26, %27, %cst_11 {dimension_numbers = #tpu.dot_dimension_numbers<[1], [0], [0], [1], [0, 0, 1, 1], [], []>} : vector<8x128xbf16>, vector<128x64xbf16>, vector<8x64xf32> -> vector<8x64xf32>
    %c0_12 = arith.constant 0 : index
    %c0_13 = arith.constant 0 : index
    %29 = vector.load %arg5[%c0_12, %c0_13] : memref<1x64xf32, #tpu.memory_space<vmem>>, vector<1x64xf32>
    %30 = vector.broadcast %29 : vector<1x64xf32> to vector<8x64xf32>
    %31 = arith.addf %28, %30 : vector<8x64xf32>
    %32 = arith.truncf %31 : vector<8x64xf32> to vector<8x64xbf16>
    %c0_14 = arith.constant 0 : index
    %c0_15 = arith.constant 0 : index
    %33 = vector.load %arg6[%c0_14, %c0_15] : memref<8x64xbf16, #tpu.memory_space<vmem>>, vector<8x64xbf16>
    tpu.vector_store %arg6[%c0_14, %c0_15], %32 {strides = array<i32>} : memref<8x64xbf16, #tpu.memory_space<vmem>>, vector<8x64xbf16>,
    return
  }
  func.func @transform_0(%arg0: i32) -> (i32, i32) {
    %c0_i32 = arith.constant 0 : i32
    %c0_i32_0 = arith.constant 0 : i32
    return %arg0, %c0_i32 : i32, i32
  }
  func.func @transform_1(%arg0: i32) -> (i32, i32) {
    %c0_i32 = arith.constant 0 : i32
    %c0_i32_0 = arith.constant 0 : i32
    %c0_i32_1 = arith.constant 0 : i32
    return %c0_i32, %c0_i32_0 : i32, i32
  }
  func.func @transform_2(%arg0: i32) -> (i32, i32) {
    %c0_i32 = arith.constant 0 : i32
    %c0_i32_0 = arith.constant 0 : i32
    %c0_i32_1 = arith.constant 0 : i32
    return %c0_i32, %c0_i32_0 : i32, i32
  }
  func.func @transform_3(%arg0: i32) -> (i32, i32) {
    %c0_i32 = arith.constant 0 : i32
    %c0_i32_0 = arith.constant 0 : i32
    %c0_i32_1 = arith.constant 0 : i32
    return %c0_i32, %c0_i32_0 : i32, i32
  }
  func.func @transform_4(%arg0: i32) -> (i32, i32) {
    %c0_i32 = arith.constant 0 : i32
    %c0_i32_0 = arith.constant 0 : i32
    %c0_i32_1 = arith.constant 0 : i32
    return %c0_i32, %c0_i32_0 : i32, i32
  }
  func.func @transform_5(%arg0: i32) -> (i32, i32) {
    %c0_i32 = arith.constant 0 : i32
    %c0_i32_0 = arith.constant 0 : i32
    return %arg0, %c0_i32 : i32, i32
  }
}

module attributes {stable_mosaic.version = 11 : i64} {
  func.func @_block_kernel(%arg0: i32, %arg1: i32, %arg2: memref<1x4x64xbf16, #tpu.memory_space<vmem>>, %arg3: memref<1x4x64xbf16, #tpu.memory_space<vmem>>, %arg4: memref<1x64xf32, #tpu.memory_space<vmem>>, %arg5: memref<1x64xf32, #tpu.memory_space<vmem>>, %arg6: memref<64x64xbf16, #tpu.memory_space<vmem>>, %arg7: memref<1x64xf32, #tpu.memory_space<vmem>>, %arg8: memref<64x128xbf16, #tpu.memory_space<vmem>>, %arg9: memref<1x128xf32, #tpu.memory_space<vmem>>, %arg10: memref<64x64xbf16, #tpu.memory_space<vmem>>, %arg11: memref<1x64xf32, #tpu.memory_space<vmem>>, %arg12: memref<1x64xf32, #tpu.memory_space<vmem>>, %arg13: memref<1x64xf32, #tpu.memory_space<vmem>>, %arg14: memref<64x256xbf16, #tpu.memory_space<vmem>>, %arg15: memref<1x256xf32, #tpu.memory_space<vmem>>, %arg16: memref<256x64xbf16, #tpu.memory_space<vmem>>, %arg17: memref<1x64xf32, #tpu.memory_space<vmem>>, %arg18: memref<1x4x64xbf16, #tpu.memory_space<vmem>>) attributes {dimension_semantics = [#tpu.dimension_semantics<parallel>, #tpu.dimension_semantics<parallel>], iteration_bounds = array<i64: 2, 1>, scalar_prefetch = 0 : i64, scratch_operands = 0 : i64, tpu.core_type = #tpu.core_type<tc>, window_params = [{transform_indices = @transform_0, window_bounds = array<i64: 1, 4, 64>}, {transform_indices = @transform_1, window_bounds = array<i64: 1, 4, 64>}, {pipeline_mode = #tpu.pipeline_mode<synchronous>, transform_indices = @transform_2, window_bounds = array<i64: 1, 64>}, {pipeline_mode = #tpu.pipeline_mode<synchronous>, transform_indices = @transform_3, window_bounds = array<i64: 1, 64>}, {pipeline_mode = #tpu.pipeline_mode<synchronous>, transform_indices = @transform_4, window_bounds = array<i64: 64, 64>}, {pipeline_mode = #tpu.pipeline_mode<synchronous>, transform_indices = @transform_5, window_bounds = array<i64: 1, 64>}, {pipeline_mode = #tpu.pipeline_mode<synchronous>, transform_indices = @transform_6, window_bounds = array<i64: 64, 128>}, {pipeline_mode = #tpu.pipeline_mode<synchronous>, transform_indices = @transform_7, window_bounds = array<i64: 1, 128>}, {pipeline_mode = #tpu.pipeline_mode<synchronous>, transform_indices = @transform_8, window_bounds = array<i64: 64, 64>}, {pipeline_mode = #tpu.pipeline_mode<synchronous>, transform_indices = @transform_9, window_bounds = array<i64: 1, 64>}, {pipeline_mode = #tpu.pipeline_mode<synchronous>, transform_indices = @transform_10, window_bounds = array<i64: 1, 64>}, {pipeline_mode = #tpu.pipeline_mode<synchronous>, transform_indices = @transform_11, window_bounds = array<i64: 1, 64>}, {pipeline_mode = #tpu.pipeline_mode<synchronous>, transform_indices = @transform_12, window_bounds = array<i64: 64, 256>}, {pipeline_mode = #tpu.pipeline_mode<synchronous>, transform_indices = @transform_13, window_bounds = array<i64: 1, 256>}, {pipeline_mode = #tpu.pipeline_mode<synchronous>, transform_indices = @transform_14, window_bounds = array<i64: 256, 64>}, {pipeline_mode = #tpu.pipeline_mode<synchronous>, transform_indices = @transform_15, window_bounds = array<i64: 1, 64>}, {transform_indices = @transform_16, window_bounds = array<i64: 1, 4, 64>}]} {
    %c0 = arith.constant 0 : index
    %c0_0 = arith.constant 0 : index
    %c0_1 = arith.constant 0 : index
    %0 = vector.load %arg2[%c0, %c0_0, %c0_1] : memref<1x4x64xbf16, #tpu.memory_space<vmem>>, vector<1x4x64xbf16>
    %1 = vector.shape_cast %0 : vector<1x4x64xbf16> to vector<4x64xbf16>
    %2 = arith.extf %1 : vector<4x64xbf16> to vector<4x64xf32>
    %c0_2 = arith.constant 0 : index
    %c0_3 = arith.constant 0 : index
    %c0_4 = arith.constant 0 : index
    %3 = vector.load %arg3[%c0_2, %c0_3, %c0_4] : memref<1x4x64xbf16, #tpu.memory_space<vmem>>, vector<1x4x64xbf16>
    %4 = vector.shape_cast %3 : vector<1x4x64xbf16> to vector<4x64xbf16>
    %5 = arith.extf %4 : vector<4x64xbf16> to vector<4x64xf32>
    %c0_5 = arith.constant 0 : index
    %c0_6 = arith.constant 0 : index
    %6 = vector.load %arg4[%c0_5, %c0_6] : memref<1x64xf32, #tpu.memory_space<vmem>>, vector<1x64xf32>
    %c0_7 = arith.constant 0 : index
    %c0_8 = arith.constant 0 : index
    %7 = vector.load %arg5[%c0_7, %c0_8] : memref<1x64xf32, #tpu.memory_space<vmem>>, vector<1x64xf32>
    %cst = arith.constant dense<0.000000e+00> : vector<4xf32>
    %8 = vector.multi_reduction <add>, %2, %cst [1] : vector<4x64xf32> to vector<4xf32>
    %9 = vector.shape_cast %8 : vector<4xf32> to vector<4x1xf32>
    %cst_9 = arith.constant 6.400000e+01 : f32
    %10 = vector.broadcast %cst_9 : f32 to vector<4x1xf32>
    %11 = arith.divf %9, %10 : vector<4x1xf32>
    %12 = vector.broadcast %11 : vector<4x1xf32> to vector<4x64xf32>
    %13 = arith.subf %2, %12 : vector<4x64xf32>
    %14 = arith.mulf %13, %13 : vector<4x64xf32>
    %cst_10 = arith.constant dense<0.000000e+00> : vector<4xf32>
    %15 = vector.multi_reduction <add>, %14, %cst_10 [1] : vector<4x64xf32> to vector<4xf32>
    %16 = vector.shape_cast %15 : vector<4xf32> to vector<4x1xf32>
    %cst_11 = arith.constant 6.400000e+01 : f32
    %17 = vector.broadcast %cst_11 : f32 to vector<4x1xf32>
    %18 = arith.divf %16, %17 : vector<4x1xf32>
    %19 = vector.broadcast %11 : vector<4x1xf32> to vector<4x64xf32>
    %20 = arith.subf %2, %19 : vector<4x64xf32>
    %cst_12 = arith.constant 9.99999974E-6 : f32
    %21 = vector.broadcast %cst_12 : f32 to vector<4x1xf32>
    %22 = arith.addf %18, %21 : vector<4x1xf32>
    %23 = math.rsqrt %22 : vector<4x1xf32>
    %24 = vector.broadcast %23 : vector<4x1xf32> to vector<4x64xf32>
    %25 = arith.mulf %20, %24 : vector<4x64xf32>
    %26 = vector.broadcast %6 : vector<1x64xf32> to vector<4x64xf32>
    %27 = arith.mulf %25, %26 : vector<4x64xf32>
    %28 = vector.broadcast %7 : vector<1x64xf32> to vector<4x64xf32>
    %29 = arith.addf %27, %28 : vector<4x64xf32>
    %30 = arith.truncf %29 : vector<4x64xf32> to vector<4x64xbf16>
    %cst_13 = arith.constant dense<0.000000e+00> : vector<4xf32>
    %31 = vector.multi_reduction <add>, %5, %cst_13 [1] : vector<4x64xf32> to vector<4xf32>
    %32 = vector.shape_cast %31 : vector<4xf32> to vector<4x1xf32>
    %cst_14 = arith.constant 6.400000e+01 : f32
    %33 = vector.broadcast %cst_14 : f32 to vector<4x1xf32>
    %34 = arith.divf %32, %33 : vector<4x1xf32>
    %35 = vector.broadcast %34 : vector<4x1xf32> to vector<4x64xf32>
    %36 = arith.subf %5, %35 : vector<4x64xf32>
    %37 = arith.mulf %36, %36 : vector<4x64xf32>
    %cst_15 = arith.constant dense<0.000000e+00> : vector<4xf32>
    %38 = vector.multi_reduction <add>, %37, %cst_15 [1] : vector<4x64xf32> to vector<4xf32>
    %39 = vector.shape_cast %38 : vector<4xf32> to vector<4x1xf32>
    %cst_16 = arith.constant 6.400000e+01 : f32
    %40 = vector.broadcast %cst_16 : f32 to vector<4x1xf32>
    %41 = arith.divf %39, %40 : vector<4x1xf32>
    %42 = vector.broadcast %34 : vector<4x1xf32> to vector<4x64xf32>
    %43 = arith.subf %5, %42 : vector<4x64xf32>
    %cst_17 = arith.constant 9.99999974E-6 : f32
    %44 = vector.broadcast %cst_17 : f32 to vector<4x1xf32>
    %45 = arith.addf %41, %44 : vector<4x1xf32>
    %46 = math.rsqrt %45 : vector<4x1xf32>
    %47 = vector.broadcast %46 : vector<4x1xf32> to vector<4x64xf32>
    %48 = arith.mulf %43, %47 : vector<4x64xf32>
    %49 = vector.broadcast %6 : vector<1x64xf32> to vector<4x64xf32>
    %50 = arith.mulf %48, %49 : vector<4x64xf32>
    %51 = vector.broadcast %7 : vector<1x64xf32> to vector<4x64xf32>
    %52 = arith.addf %50, %51 : vector<4x64xf32>
    %53 = arith.truncf %52 : vector<4x64xf32> to vector<4x64xbf16>
    %c0_18 = arith.constant 0 : index
    %c0_19 = arith.constant 0 : index
    %54 = vector.load %arg6[%c0_18, %c0_19] : memref<64x64xbf16, #tpu.memory_space<vmem>>, vector<64x64xbf16>
    %cst_20 = arith.constant dense<0.000000e+00> : vector<4x64xf32>
    %55 = tpu.matmul %30, %54, %cst_20 {dimension_numbers = #tpu.dot_dimension_numbers<[1], [0], [0], [1], [0, 0, 1, 1], [], []>} : vector<4x64xbf16>, vector<64x64xbf16>, vector<4x64xf32> -> vector<4x64xf32>
    %c0_21 = arith.constant 0 : index
    %c0_22 = arith.constant 0 : index
    %56 = vector.load %arg7[%c0_21, %c0_22] : memref<1x64xf32, #tpu.memory_space<vmem>>, vector<1x64xf32>
    %57 = vector.broadcast %56 : vector<1x64xf32> to vector<4x64xf32>
    %58 = arith.addf %55, %57 : vector<4x64xf32>
    %c0_23 = arith.constant 0 : index
    %c0_24 = arith.constant 0 : index
    %59 = vector.load %arg8[%c0_23, %c0_24] : memref<64x128xbf16, #tpu.memory_space<vmem>>, vector<64x128xbf16>
    %cst_25 = arith.constant dense<0.000000e+00> : vector<4x128xf32>
    %60 = tpu.matmul %53, %59, %cst_25 {dimension_numbers = #tpu.dot_dimension_numbers<[1], [0], [0], [1], [0, 0, 1, 1], [], []>} : vector<4x64xbf16>, vector<64x128xbf16>, vector<4x128xf32> -> vector<4x128xf32>
    %c0_26 = arith.constant 0 : index
    %c0_27 = arith.constant 0 : index
    %61 = vector.load %arg9[%c0_26, %c0_27] : memref<1x128xf32, #tpu.memory_space<vmem>>, vector<1x128xf32>
    %62 = vector.broadcast %61 : vector<1x128xf32> to vector<4x128xf32>
    %63 = arith.addf %60, %62 : vector<4x128xf32>
    %64 = vector.extract_strided_slice %63 {offsets = [0, 0], sizes = [4, 64], strides = [1, 1]} : vector<4x128xf32> to vector<4x64xf32>
    %65 = vector.extract_strided_slice %63 {offsets = [0, 64], sizes = [4, 64], strides = [1, 1]} : vector<4x128xf32> to vector<4x64xf32>
    %66 = vector.extract_strided_slice %58 {offsets = [0, 0], sizes = [4, 16], strides = [1, 1]} : vector<4x64xf32> to vector<4x16xf32>
    %67 = vector.extract_strided_slice %58 {offsets = [0, 16], sizes = [4, 16], strides = [1, 1]} : vector<4x64xf32> to vector<4x16xf32>
    %68 = vector.extract_strided_slice %58 {offsets = [0, 32], sizes = [4, 16], strides = [1, 1]} : vector<4x64xf32> to vector<4x16xf32>
    %69 = vector.extract_strided_slice %58 {offsets = [0, 48], sizes = [4, 16], strides = [1, 1]} : vector<4x64xf32> to vector<4x16xf32>
    %70 = vector.shape_cast %66 : vector<4x16xf32> to vector<1x4x16xf32>
    %71 = vector.shape_cast %67 : vector<4x16xf32> to vector<1x4x16xf32>
    %72 = vector.shape_cast %68 : vector<4x16xf32> to vector<1x4x16xf32>
    %73 = vector.shape_cast %69 : vector<4x16xf32> to vector<1x4x16xf32>
    %74 = tpu.concatenate %70, %71, %72, %73 in 0 : vector<1x4x16xf32>, vector<1x4x16xf32>, vector<1x4x16xf32>, vector<1x4x16xf32> -> vector<4x4x16xf32>
    %75 = arith.truncf %74 : vector<4x4x16xf32> to vector<4x4x16xbf16>
    %76 = vector.extract_strided_slice %64 {offsets = [0, 0], sizes = [4, 16], strides = [1, 1]} : vector<4x64xf32> to vector<4x16xf32>
    %77 = vector.extract_strided_slice %64 {offsets = [0, 16], sizes = [4, 16], strides = [1, 1]} : vector<4x64xf32> to vector<4x16xf32>
    %78 = vector.extract_strided_slice %64 {offsets = [0, 32], sizes = [4, 16], strides = [1, 1]} : vector<4x64xf32> to vector<4x16xf32>
    %79 = vector.extract_strided_slice %64 {offsets = [0, 48], sizes = [4, 16], strides = [1, 1]} : vector<4x64xf32> to vector<4x16xf32>
    %80 = vector.shape_cast %76 : vector<4x16xf32> to vector<1x4x16xf32>
    %81 = vector.shape_cast %77 : vector<4x16xf32> to vector<1x4x16xf32>
    %82 = vector.shape_cast %78 : vector<4x16xf32> to vector<1x4x16xf32>
    %83 = vector.shape_cast %79 : vector<4x16xf32> to vector<1x4x16xf32>
    %84 = tpu.concatenate %80, %81, %82, %83 in 0 : vector<1x4x16xf32>, vector<1x4x16xf32>, vector<1x4x16xf32>, vector<1x4x16xf32> -> vector<4x4x16xf32>
    %85 = arith.truncf %84 : vector<4x4x16xf32> to vector<4x4x16xbf16>
    %86 = vector.extract_strided_slice %65 {offsets = [0, 0], sizes = [4, 16], strides = [1, 1]} : vector<4x64xf32> to vector<4x16xf32>
    %87 = vector.extract_strided_slice %65 {offsets = [0, 16], sizes = [4, 16], strides = [1, 1]} : vector<4x64xf32> to vector<4x16xf32>
    %88 = vector.extract_strided_slice %65 {offsets = [0, 32], sizes = [4, 16], strides = [1, 1]} : vector<4x64xf32> to vector<4x16xf32>
    %89 = vector.extract_strided_slice %65 {offsets = [0, 48], sizes = [4, 16], strides = [1, 1]} : vector<4x64xf32> to vector<4x16xf32>
    %90 = vector.shape_cast %86 : vector<4x16xf32> to vector<1x4x16xf32>
    %91 = vector.shape_cast %87 : vector<4x16xf32> to vector<1x4x16xf32>
    %92 = vector.shape_cast %88 : vector<4x16xf32> to vector<1x4x16xf32>
    %93 = vector.shape_cast %89 : vector<4x16xf32> to vector<1x4x16xf32>
    %94 = tpu.concatenate %90, %91, %92, %93 in 0 : vector<1x4x16xf32>, vector<1x4x16xf32>, vector<1x4x16xf32>, vector<1x4x16xf32> -> vector<4x4x16xf32>
    %95 = arith.truncf %94 : vector<4x4x16xf32> to vector<4x4x16xbf16>
    %cst_28 = arith.constant dense<0.000000e+00> : vector<4x4x4xf32>
    %96 = tpu.matmul %75, %85, %cst_28 {dimension_numbers = #tpu.dot_dimension_numbers<[2], [2], [1], [1], [0, 0, 0, 1, 1, 1], [0], [0]>} : vector<4x4x16xbf16>, vector<4x4x16xbf16>, vector<4x4x4xf32> -> vector<4x4x4xf32>
    %cst_29 = arith.constant 2.500000e-01 : f32
    %97 = vector.broadcast %cst_29 : f32 to vector<4x4x4xf32>
    %98 = arith.mulf %96, %97 : vector<4x4x4xf32>
    %cst_30 = arith.constant dense<0xFF800000> : vector<4x4xf32>
    %99 = vector.multi_reduction <maximumf>, %98, %cst_30 [2] : vector<4x4x4xf32> to vector<4x4xf32>
    %100 = vector.shape_cast %99 : vector<4x4xf32> to vector<4x4x1xf32>
    %101 = vector.broadcast %100 : vector<4x4x1xf32> to vector<4x4x4xf32>
    %102 = arith.subf %98, %101 : vector<4x4x4xf32>
    %103 = math.exp %102 : vector<4x4x4xf32>
    %cst_31 = arith.constant dense<0.000000e+00> : vector<4x4xf32>
    %104 = vector.multi_reduction <add>, %103, %cst_31 [2] : vector<4x4x4xf32> to vector<4x4xf32>
    %105 = vector.shape_cast %104 : vector<4x4xf32> to vector<4x4x1xf32>
    %106 = vector.broadcast %105 : vector<4x4x1xf32> to vector<4x4x4xf32>
    %107 = arith.divf %103, %106 : vector<4x4x4xf32>
    %108 = arith.truncf %107 : vector<4x4x4xf32> to vector<4x4x4xbf16>
    %cst_32 = arith.constant dense<0.000000e+00> : vector<4x4x16xf32>
    %109 = tpu.matmul %108, %95, %cst_32 {dimension_numbers = #tpu.dot_dimension_numbers<[2], [1], [1], [2], [0, 0, 0, 1, 1, 2], [0], [0]>} : vector<4x4x4xbf16>, vector<4x4x16xbf16>, vector<4x4x16xf32> -> vector<4x4x16xf32>
    %110 = vector.extract_strided_slice %109 {offsets = [0, 0, 0], sizes = [1, 4, 16], strides = [1, 1, 1]} : vector<4x4x16xf32> to vector<1x4x16xf32>
    %111 = vector.shape_cast %110 : vector<1x4x16xf32> to vector<4x16xf32>
    %112 = vector.extract_strided_slice %109 {offsets = [1, 0, 0], sizes = [1, 4, 16], strides = [1, 1, 1]} : vector<4x4x16xf32> to vector<1x4x16xf32>
    %113 = vector.shape_cast %112 : vector<1x4x16xf32> to vector<4x16xf32>
    %114 = vector.extract_strided_slice %109 {offsets = [2, 0, 0], sizes = [1, 4, 16], strides = [1, 1, 1]} : vector<4x4x16xf32> to vector<1x4x16xf32>
    %115 = vector.shape_cast %114 : vector<1x4x16xf32> to vector<4x16xf32>
    %116 = vector.extract_strided_slice %109 {offsets = [3, 0, 0], sizes = [1, 4, 16], strides = [1, 1, 1]} : vector<4x4x16xf32> to vector<1x4x16xf32>
    %117 = vector.shape_cast %116 : vector<1x4x16xf32> to vector<4x16xf32>
    %118 = tpu.concatenate %111, %113, %115, %117 in 1 : vector<4x16xf32>, vector<4x16xf32>, vector<4x16xf32>, vector<4x16xf32> -> vector<4x64xf32>
    %119 = arith.truncf %118 : vector<4x64xf32> to vector<4x64xbf16>
    %c0_33 = arith.constant 0 : index
    %c0_34 = arith.constant 0 : index
    %120 = vector.load %arg10[%c0_33, %c0_34] : memref<64x64xbf16, #tpu.memory_space<vmem>>, vector<64x64xbf16>
    %cst_35 = arith.constant dense<0.000000e+00> : vector<4x64xf32>
    %121 = tpu.matmul %119, %120, %cst_35 {dimension_numbers = #tpu.dot_dimension_numbers<[1], [0], [0], [1], [0, 0, 1, 1], [], []>} : vector<4x64xbf16>, vector<64x64xbf16>, vector<4x64xf32> -> vector<4x64xf32>
    %122 = arith.addf %2, %121 : vector<4x64xf32>
    %c0_36 = arith.constant 0 : index
    %c0_37 = arith.constant 0 : index
    %123 = vector.load %arg11[%c0_36, %c0_37] : memref<1x64xf32, #tpu.memory_space<vmem>>, vector<1x64xf32>
    %124 = vector.broadcast %123 : vector<1x64xf32> to vector<4x64xf32>
    %125 = arith.addf %122, %124 : vector<4x64xf32>
    %c0_38 = arith.constant 0 : index
    %c0_39 = arith.constant 0 : index
    %126 = vector.load %arg12[%c0_38, %c0_39] : memref<1x64xf32, #tpu.memory_space<vmem>>, vector<1x64xf32>
    %c0_40 = arith.constant 0 : index
    %c0_41 = arith.constant 0 : index
    %127 = vector.load %arg13[%c0_40, %c0_41] : memref<1x64xf32, #tpu.memory_space<vmem>>, vector<1x64xf32>
    %cst_42 = arith.constant dense<0.000000e+00> : vector<4xf32>
    %128 = vector.multi_reduction <add>, %125, %cst_42 [1] : vector<4x64xf32> to vector<4xf32>
    %129 = vector.shape_cast %128 : vector<4xf32> to vector<4x1xf32>
    %cst_43 = arith.constant 6.400000e+01 : f32
    %130 = vector.broadcast %cst_43 : f32 to vector<4x1xf32>
    %131 = arith.divf %129, %130 : vector<4x1xf32>
    %132 = vector.broadcast %131 : vector<4x1xf32> to vector<4x64xf32>
    %133 = arith.subf %125, %132 : vector<4x64xf32>
    %134 = arith.mulf %133, %133 : vector<4x64xf32>
    %cst_44 = arith.constant dense<0.000000e+00> : vector<4xf32>
    %135 = vector.multi_reduction <add>, %134, %cst_44 [1] : vector<4x64xf32> to vector<4xf32>
    %136 = vector.shape_cast %135 : vector<4xf32> to vector<4x1xf32>
    %cst_45 = arith.constant 6.400000e+01 : f32
    %137 = vector.broadcast %cst_45 : f32 to vector<4x1xf32>
    %138 = arith.divf %136, %137 : vector<4x1xf32>
    %139 = vector.broadcast %131 : vector<4x1xf32> to vector<4x64xf32>
    %140 = arith.subf %125, %139 : vector<4x64xf32>
    %cst_46 = arith.constant 9.99999974E-6 : f32
    %141 = vector.broadcast %cst_46 : f32 to vector<4x1xf32>
    %142 = arith.addf %138, %141 : vector<4x1xf32>
    %143 = math.rsqrt %142 : vector<4x1xf32>
    %144 = vector.broadcast %143 : vector<4x1xf32> to vector<4x64xf32>
    %145 = arith.mulf %140, %144 : vector<4x64xf32>
    %146 = vector.broadcast %126 : vector<1x64xf32> to vector<4x64xf32>
    %147 = arith.mulf %145, %146 : vector<4x64xf32>
    %148 = vector.broadcast %127 : vector<1x64xf32> to vector<4x64xf32>
    %149 = arith.addf %147, %148 : vector<4x64xf32>
    %150 = arith.truncf %149 : vector<4x64xf32> to vector<4x64xbf16>
    %c0_47 = arith.constant 0 : index
    %c0_48 = arith.constant 0 : index
    %151 = vector.load %arg14[%c0_47, %c0_48] : memref<64x256xbf16, #tpu.memory_space<vmem>>, vector<64x256xbf16>
    %cst_49 = arith.constant dense<0.000000e+00> : vector<4x256xf32>
    %152 = tpu.matmul %150, %151, %cst_49 {dimension_numbers = #tpu.dot_dimension_numbers<[1], [0], [0], [1], [0, 0, 1, 1], [], []>} : vector<4x64xbf16>, vector<64x256xbf16>, vector<4x256xf32> -> vector<4x256xf32>
    %c0_50 = arith.constant 0 : index
    %c0_51 = arith.constant 0 : index
    %153 = vector.load %arg15[%c0_50, %c0_51] : memref<1x256xf32, #tpu.memory_space<vmem>>, vector<1x256xf32>
    %154 = vector.broadcast %153 : vector<1x256xf32> to vector<4x256xf32>
    %155 = arith.addf %152, %154 : vector<4x256xf32>
    %156 = arith.mulf %155, %155 : vector<4x256xf32>
    %157 = arith.mulf %155, %156 : vector<4x256xf32>
    %cst_52 = arith.constant 4.471500e-02 : f32
    %158 = vector.broadcast %cst_52 : f32 to vector<4x256xf32>
    %159 = arith.mulf %158, %157 : vector<4x256xf32>
    %160 = arith.addf %155, %159 : vector<4x256xf32>
    %cst_53 = arith.constant 0.797884583 : f32
    %161 = vector.broadcast %cst_53 : f32 to vector<4x256xf32>
    %162 = arith.mulf %161, %160 : vector<4x256xf32>
    %163 = math.tanh %162 : vector<4x256xf32>
    %cst_54 = arith.constant 1.000000e+00 : f32
    %164 = vector.broadcast %cst_54 : f32 to vector<4x256xf32>
    %165 = arith.addf %164, %163 : vector<4x256xf32>
    %cst_55 = arith.constant 5.000000e-01 : f32
    %166 = vector.broadcast %cst_55 : f32 to vector<4x256xf32>
    %167 = arith.mulf %166, %165 : vector<4x256xf32>
    %168 = arith.mulf %155, %167 : vector<4x256xf32>
    %169 = arith.truncf %168 : vector<4x256xf32> to vector<4x256xbf16>
    %c0_56 = arith.constant 0 : index
    %c0_57 = arith.constant 0 : index
    %170 = vector.load %arg16[%c0_56, %c0_57] : memref<256x64xbf16, #tpu.memory_space<vmem>>, vector<256x64xbf16>
    %cst_58 = arith.constant dense<0.000000e+00> : vector<4x64xf32>
    %171 = tpu.matmul %169, %170, %cst_58 {dimension_numbers = #tpu.dot_dimension_numbers<[1], [0], [0], [1], [0, 0, 1, 1], [], []>} : vector<4x256xbf16>, vector<256x64xbf16>, vector<4x64xf32> -> vector<4x64xf32>
    %172 = arith.addf %125, %171 : vector<4x64xf32>
    %c0_59 = arith.constant 0 : index
    %c0_60 = arith.constant 0 : index
    %173 = vector.load %arg17[%c0_59, %c0_60] : memref<1x64xf32, #tpu.memory_space<vmem>>, vector<1x64xf32>
    %174 = vector.broadcast %173 : vector<1x64xf32> to vector<4x64xf32>
    %175 = arith.addf %172, %174 : vector<4x64xf32>
    %176 = arith.truncf %175 : vector<4x64xf32> to vector<4x64xbf16>
    %c0_61 = arith.constant 0 : index
    %c0_62 = arith.constant 0 : index
    %c0_63 = arith.constant 0 : index
    %177 = vector.load %arg18[%c0_61, %c0_62, %c0_63] : memref<1x4x64xbf16, #tpu.memory_space<vmem>>, vector<1x4x64xbf16>
    %178 = vector.shape_cast %177 : vector<1x4x64xbf16> to vector<4x64xbf16>
    %179 = vector.shape_cast %176 : vector<4x64xbf16> to vector<1x4x64xbf16>
    tpu.vector_store %arg18[%c0_61, %c0_62, %c0_63], %179 {strides = array<i32>} : memref<1x4x64xbf16, #tpu.memory_space<vmem>>, vector<1x4x64xbf16>,
    return
  }
  func.func @transform_0(%arg0: i32, %arg1: i32) -> (i32, i32, i32) {
    %c0_i32 = arith.constant 0 : i32
    %c0_i32_0 = arith.constant 0 : i32
    return %arg0, %arg1, %c0_i32 : i32, i32, i32
  }
  func.func @transform_1(%arg0: i32, %arg1: i32) -> (i32, i32, i32) {
    %c0_i32 = arith.constant 0 : i32
    %c0_i32_0 = arith.constant 0 : i32
    %c0_i32_1 = arith.constant 0 : i32
    return %arg0, %c0_i32, %c0_i32_0 : i32, i32, i32
  }
  func.func @transform_2(%arg0: i32, %arg1: i32) -> (i32, i32) {
    %c0_i32 = arith.constant 0 : i32
    %c0_i32_0 = arith.constant 0 : i32
    %c0_i32_1 = arith.constant 0 : i32
    return %c0_i32, %c0_i32_0 : i32, i32
  }
  func.func @transform_3(%arg0: i32, %arg1: i32) -> (i32, i32) {
    %c0_i32 = arith.constant 0 : i32
    %c0_i32_0 = arith.constant 0 : i32
    %c0_i32_1 = arith.constant 0 : i32
    return %c0_i32, %c0_i32_0 : i32, i32
  }
  func.func @transform_4(%arg0: i32, %arg1: i32) -> (i32, i32) {
    %c0_i32 = arith.constant 0 : i32
    %c0_i32_0 = arith.constant 0 : i32
    %c0_i32_1 = arith.constant 0 : i32
    return %c0_i32, %c0_i32_0 : i32, i32
  }
  func.func @transform_5(%arg0: i32, %arg1: i32) -> (i32, i32) {
    %c0_i32 = arith.constant 0 : i32
    %c0_i32_0 = arith.constant 0 : i32
    %c0_i32_1 = arith.constant 0 : i32
    return %c0_i32, %c0_i32_0 : i32, i32
  }
  func.func @transform_6(%arg0: i32, %arg1: i32) -> (i32, i32) {
    %c0_i32 = arith.constant 0 : i32
    %c0_i32_0 = arith.constant 0 : i32
    %c0_i32_1 = arith.constant 0 : i32
    return %c0_i32, %c0_i32_0 : i32, i32
  }
  func.func @transform_7(%arg0: i32, %arg1: i32) -> (i32, i32) {
    %c0_i32 = arith.constant 0 : i32
    %c0_i32_0 = arith.constant 0 : i32
    %c0_i32_1 = arith.constant 0 : i32
    return %c0_i32, %c0_i32_0 : i32, i32
  }
  func.func @transform_8(%arg0: i32, %arg1: i32) -> (i32, i32) {
    %c0_i32 = arith.constant 0 : i32
    %c0_i32_0 = arith.constant 0 : i32
    %c0_i32_1 = arith.constant 0 : i32
    return %c0_i32, %c0_i32_0 : i32, i32
  }
  func.func @transform_9(%arg0: i32, %arg1: i32) -> (i32, i32) {
    %c0_i32 = arith.constant 0 : i32
    %c0_i32_0 = arith.constant 0 : i32
    %c0_i32_1 = arith.constant 0 : i32
    return %c0_i32, %c0_i32_0 : i32, i32
  }
  func.func @transform_10(%arg0: i32, %arg1: i32) -> (i32, i32) {
    %c0_i32 = arith.constant 0 : i32
    %c0_i32_0 = arith.constant 0 : i32
    %c0_i32_1 = arith.constant 0 : i32
    return %c0_i32, %c0_i32_0 : i32, i32
  }
  func.func @transform_11(%arg0: i32, %arg1: i32) -> (i32, i32) {
    %c0_i32 = arith.constant 0 : i32
    %c0_i32_0 = arith.constant 0 : i32
    %c0_i32_1 = arith.constant 0 : i32
    return %c0_i32, %c0_i32_0 : i32, i32
  }
  func.func @transform_12(%arg0: i32, %arg1: i32) -> (i32, i32) {
    %c0_i32 = arith.constant 0 : i32
    %c0_i32_0 = arith.constant 0 : i32
    %c0_i32_1 = arith.constant 0 : i32
    return %c0_i32, %c0_i32_0 : i32, i32
  }
  func.func @transform_13(%arg0: i32, %arg1: i32) -> (i32, i32) {
    %c0_i32 = arith.constant 0 : i32
    %c0_i32_0 = arith.constant 0 : i32
    %c0_i32_1 = arith.constant 0 : i32
    return %c0_i32, %c0_i32_0 : i32, i32
  }
  func.func @transform_14(%arg0: i32, %arg1: i32) -> (i32, i32) {
    %c0_i32 = arith.constant 0 : i32
    %c0_i32_0 = arith.constant 0 : i32
    %c0_i32_1 = arith.constant 0 : i32
    return %c0_i32, %c0_i32_0 : i32, i32
  }
  func.func @transform_15(%arg0: i32, %arg1: i32) -> (i32, i32) {
    %c0_i32 = arith.constant 0 : i32
    %c0_i32_0 = arith.constant 0 : i32
    %c0_i32_1 = arith.constant 0 : i32
    return %c0_i32, %c0_i32_0 : i32, i32
  }
  func.func @transform_16(%arg0: i32, %arg1: i32) -> (i32, i32, i32) {
    %c0_i32 = arith.constant 0 : i32
    %c0_i32_0 = arith.constant 0 : i32
    return %arg0, %arg1, %c0_i32 : i32, i32, i32
  }
}

module attributes {stable_mosaic.version = 11 : i64} {
  func.func @_skip_kernel(%arg0: i32, %arg1: memref<32x32xbf16, #tpu.memory_space<vmem>>, %arg2: memref<32x32xbf16, #tpu.memory_space<vmem>>, %arg3: memref<1x32xf32, #tpu.memory_space<vmem>>, %arg4: memref<1x32xf32, #tpu.memory_space<vmem>>, %arg5: memref<32x32xbf16, #tpu.memory_space<vmem>>, %arg6: memref<32x32xbf16, #tpu.memory_space<vmem>>, %arg7: memref<1x32xf32, #tpu.memory_space<vmem>>, %arg8: memref<32x32xbf16, #tpu.memory_space<vmem>>) attributes {dimension_semantics = [#tpu.dimension_semantics<parallel>], iteration_bounds = array<i64: 1>, scalar_prefetch = 0 : i64, scratch_operands = 0 : i64, tpu.core_type = #tpu.core_type<tc>, window_params = [{transform_indices = @transform_0, window_bounds = array<i64: 32, 32>}, {transform_indices = @transform_1, window_bounds = array<i64: 32, 32>}, {pipeline_mode = #tpu.pipeline_mode<synchronous>, transform_indices = @transform_2, window_bounds = array<i64: 1, 32>}, {pipeline_mode = #tpu.pipeline_mode<synchronous>, transform_indices = @transform_3, window_bounds = array<i64: 1, 32>}, {pipeline_mode = #tpu.pipeline_mode<synchronous>, transform_indices = @transform_4, window_bounds = array<i64: 32, 32>}, {pipeline_mode = #tpu.pipeline_mode<synchronous>, transform_indices = @transform_5, window_bounds = array<i64: 32, 32>}, {pipeline_mode = #tpu.pipeline_mode<synchronous>, transform_indices = @transform_6, window_bounds = array<i64: 1, 32>}, {transform_indices = @transform_7, window_bounds = array<i64: 32, 32>}]} {
    %c0 = arith.constant 0 : index
    %c0_0 = arith.constant 0 : index
    %0 = vector.load %arg1[%c0, %c0_0] : memref<32x32xbf16, #tpu.memory_space<vmem>>, vector<32x32xbf16>
    %1 = arith.extf %0 : vector<32x32xbf16> to vector<32x32xf32>
    %c0_1 = arith.constant 0 : index
    %c0_2 = arith.constant 0 : index
    %2 = vector.load %arg3[%c0_1, %c0_2] : memref<1x32xf32, #tpu.memory_space<vmem>>, vector<1x32xf32>
    %c0_3 = arith.constant 0 : index
    %c0_4 = arith.constant 0 : index
    %3 = vector.load %arg4[%c0_3, %c0_4] : memref<1x32xf32, #tpu.memory_space<vmem>>, vector<1x32xf32>
    %cst = arith.constant dense<0.000000e+00> : vector<32xf32>
    %4 = vector.multi_reduction <add>, %1, %cst [1] : vector<32x32xf32> to vector<32xf32>
    %5 = vector.shape_cast %4 : vector<32xf32> to vector<32x1xf32>
    %cst_5 = arith.constant 3.200000e+01 : f32
    %6 = vector.broadcast %cst_5 : f32 to vector<32x1xf32>
    %7 = arith.divf %5, %6 : vector<32x1xf32>
    %8 = vector.broadcast %7 : vector<32x1xf32> to vector<32x32xf32>
    %9 = arith.subf %1, %8 : vector<32x32xf32>
    %10 = arith.mulf %9, %9 : vector<32x32xf32>
    %cst_6 = arith.constant dense<0.000000e+00> : vector<32xf32>
    %11 = vector.multi_reduction <add>, %10, %cst_6 [1] : vector<32x32xf32> to vector<32xf32>
    %12 = vector.shape_cast %11 : vector<32xf32> to vector<32x1xf32>
    %cst_7 = arith.constant 3.200000e+01 : f32
    %13 = vector.broadcast %cst_7 : f32 to vector<32x1xf32>
    %14 = arith.divf %12, %13 : vector<32x1xf32>
    %15 = vector.broadcast %7 : vector<32x1xf32> to vector<32x32xf32>
    %16 = arith.subf %1, %15 : vector<32x32xf32>
    %cst_8 = arith.constant 9.99999974E-6 : f32
    %17 = vector.broadcast %cst_8 : f32 to vector<32x1xf32>
    %18 = arith.addf %14, %17 : vector<32x1xf32>
    %19 = math.rsqrt %18 : vector<32x1xf32>
    %20 = vector.broadcast %19 : vector<32x1xf32> to vector<32x32xf32>
    %21 = arith.mulf %16, %20 : vector<32x32xf32>
    %22 = vector.broadcast %2 : vector<1x32xf32> to vector<32x32xf32>
    %23 = arith.mulf %21, %22 : vector<32x32xf32>
    %24 = vector.broadcast %3 : vector<1x32xf32> to vector<32x32xf32>
    %25 = arith.addf %23, %24 : vector<32x32xf32>
    %26 = arith.truncf %25 : vector<32x32xf32> to vector<32x32xbf16>
    %c0_9 = arith.constant 0 : index
    %c0_10 = arith.constant 0 : index
    %27 = vector.load %arg2[%c0_9, %c0_10] : memref<32x32xbf16, #tpu.memory_space<vmem>>, vector<32x32xbf16>
    %c0_11 = arith.constant 0 : index
    %c0_12 = arith.constant 0 : index
    %28 = vector.load %arg5[%c0_11, %c0_12] : memref<32x32xbf16, #tpu.memory_space<vmem>>, vector<32x32xbf16>
    %cst_13 = arith.constant dense<0.000000e+00> : vector<32x32xf32>
    %29 = tpu.matmul %26, %28, %cst_13 {dimension_numbers = #tpu.dot_dimension_numbers<[1], [0], [0], [1], [0, 0, 1, 1], [], []>} : vector<32x32xbf16>, vector<32x32xbf16>, vector<32x32xf32> -> vector<32x32xf32>
    %c0_14 = arith.constant 0 : index
    %c0_15 = arith.constant 0 : index
    %30 = vector.load %arg6[%c0_14, %c0_15] : memref<32x32xbf16, #tpu.memory_space<vmem>>, vector<32x32xbf16>
    %cst_16 = arith.constant dense<0.000000e+00> : vector<32x32xf32>
    %31 = tpu.matmul %27, %30, %cst_16 {dimension_numbers = #tpu.dot_dimension_numbers<[1], [0], [0], [1], [0, 0, 1, 1], [], []>} : vector<32x32xbf16>, vector<32x32xbf16>, vector<32x32xf32> -> vector<32x32xf32>
    %32 = arith.addf %29, %31 : vector<32x32xf32>
    %c0_17 = arith.constant 0 : index
    %c0_18 = arith.constant 0 : index
    %33 = vector.load %arg7[%c0_17, %c0_18] : memref<1x32xf32, #tpu.memory_space<vmem>>, vector<1x32xf32>
    %34 = vector.broadcast %33 : vector<1x32xf32> to vector<32x32xf32>
    %35 = arith.addf %32, %34 : vector<32x32xf32>
    %36 = arith.truncf %35 : vector<32x32xf32> to vector<32x32xbf16>
    %c0_19 = arith.constant 0 : index
    %c0_20 = arith.constant 0 : index
    %37 = vector.load %arg8[%c0_19, %c0_20] : memref<32x32xbf16, #tpu.memory_space<vmem>>, vector<32x32xbf16>
    tpu.vector_store %arg8[%c0_19, %c0_20], %36 {strides = array<i32>} : memref<32x32xbf16, #tpu.memory_space<vmem>>, vector<32x32xbf16>,
    return
  }
  func.func @transform_0(%arg0: i32) -> (i32, i32) {
    %c0_i32 = arith.constant 0 : i32
    %c0_i32_0 = arith.constant 0 : i32
    return %arg0, %c0_i32 : i32, i32
  }
  func.func @transform_1(%arg0: i32) -> (i32, i32) {
    %c0_i32 = arith.constant 0 : i32
    %c0_i32_0 = arith.constant 0 : i32
    return %arg0, %c0_i32 : i32, i32
  }
  func.func @transform_2(%arg0: i32) -> (i32, i32) {
    %c0_i32 = arith.constant 0 : i32
    %c0_i32_0 = arith.constant 0 : i32
    %c0_i32_1 = arith.constant 0 : i32
    return %c0_i32, %c0_i32_0 : i32, i32
  }
  func.func @transform_3(%arg0: i32) -> (i32, i32) {
    %c0_i32 = arith.constant 0 : i32
    %c0_i32_0 = arith.constant 0 : i32
    %c0_i32_1 = arith.constant 0 : i32
    return %c0_i32, %c0_i32_0 : i32, i32
  }
  func.func @transform_4(%arg0: i32) -> (i32, i32) {
    %c0_i32 = arith.constant 0 : i32
    %c0_i32_0 = arith.constant 0 : i32
    %c0_i32_1 = arith.constant 0 : i32
    return %c0_i32, %c0_i32_0 : i32, i32
  }
  func.func @transform_5(%arg0: i32) -> (i32, i32) {
    %c0_i32 = arith.constant 0 : i32
    %c0_i32_0 = arith.constant 0 : i32
    %c0_i32_1 = arith.constant 0 : i32
    return %c0_i32, %c0_i32_0 : i32, i32
  }
  func.func @transform_6(%arg0: i32) -> (i32, i32) {
    %c0_i32 = arith.constant 0 : i32
    %c0_i32_0 = arith.constant 0 : i32
    %c0_i32_1 = arith.constant 0 : i32
    return %c0_i32, %c0_i32_0 : i32, i32
  }
  func.func @transform_7(%arg0: i32) -> (i32, i32) {
    %c0_i32 = arith.constant 0 : i32
    %c0_i32_0 = arith.constant 0 : i32
    return %arg0, %c0_i32 : i32, i32
  }
}

module attributes {stable_mosaic.version = 11 : i64} {
  func.func @_linear_kernel(%arg0: i32, %arg1: memref<8x64xbf16, #tpu.memory_space<vmem>>, %arg2: memref<64x128xbf16, #tpu.memory_space<vmem>>, %arg3: memref<1x128xf32, #tpu.memory_space<vmem>>, %arg4: memref<8x128xbf16, #tpu.memory_space<vmem>>) attributes {dimension_semantics = [#tpu.dimension_semantics<parallel>], iteration_bounds = array<i64: 1>, scalar_prefetch = 0 : i64, scratch_operands = 0 : i64, tpu.core_type = #tpu.core_type<tc>, window_params = [{transform_indices = @transform_0, window_bounds = array<i64: 8, 64>}, {pipeline_mode = #tpu.pipeline_mode<synchronous>, transform_indices = @transform_1, window_bounds = array<i64: 64, 128>}, {pipeline_mode = #tpu.pipeline_mode<synchronous>, transform_indices = @transform_2, window_bounds = array<i64: 1, 128>}, {transform_indices = @transform_3, window_bounds = array<i64: 8, 128>}]} {
    %c0 = arith.constant 0 : index
    %c0_0 = arith.constant 0 : index
    %0 = vector.load %arg1[%c0, %c0_0] : memref<8x64xbf16, #tpu.memory_space<vmem>>, vector<8x64xbf16>
    %c0_1 = arith.constant 0 : index
    %c0_2 = arith.constant 0 : index
    %1 = vector.load %arg2[%c0_1, %c0_2] : memref<64x128xbf16, #tpu.memory_space<vmem>>, vector<64x128xbf16>
    %cst = arith.constant dense<0.000000e+00> : vector<8x128xf32>
    %2 = tpu.matmul %0, %1, %cst {dimension_numbers = #tpu.dot_dimension_numbers<[1], [0], [0], [1], [0, 0, 1, 1], [], []>} : vector<8x64xbf16>, vector<64x128xbf16>, vector<8x128xf32> -> vector<8x128xf32>
    %c0_3 = arith.constant 0 : index
    %c0_4 = arith.constant 0 : index
    %3 = vector.load %arg3[%c0_3, %c0_4] : memref<1x128xf32, #tpu.memory_space<vmem>>, vector<1x128xf32>
    %4 = vector.broadcast %3 : vector<1x128xf32> to vector<8x128xf32>
    %5 = arith.addf %2, %4 : vector<8x128xf32>
    %6 = arith.truncf %5 : vector<8x128xf32> to vector<8x128xbf16>
    %c0_5 = arith.constant 0 : index
    %c0_6 = arith.constant 0 : index
    %7 = vector.load %arg4[%c0_5, %c0_6] : memref<8x128xbf16, #tpu.memory_space<vmem>>, vector<8x128xbf16>
    tpu.vector_store %arg4[%c0_5, %c0_6], %6 {strides = array<i32>} : memref<8x128xbf16, #tpu.memory_space<vmem>>, vector<8x128xbf16>,
    return
  }
  func.func @transform_0(%arg0: i32) -> (i32, i32) {
    %c0_i32 = arith.constant 0 : i32
    %c0_i32_0 = arith.constant 0 : i32
    return %arg0, %c0_i32 : i32, i32
  }
  func.func @transform_1(%arg0: i32) -> (i32, i32) {
    %c0_i32 = arith.constant 0 : i32
    %c0_i32_0 = arith.constant 0 : i32
    %c0_i32_1 = arith.constant 0 : i32
    return %c0_i32, %c0_i32_0 : i32, i32
  }
  func.func @transform_2(%arg0: i32) -> (i32, i32) {
    %c0_i32 = arith.constant 0 : i32
    %c0_i32_0 = arith.constant 0 : i32
    %c0_i32_1 = arith.constant 0 : i32
    return %c0_i32, %c0_i32_0 : i32, i32
  }
  func.func @transform_3(%arg0: i32) -> (i32, i32) {
    %c0_i32 = arith.constant 0 : i32
    %c0_i32_0 = arith.constant 0 : i32
    return %arg0, %c0_i32 : i32, i32
  }
}

module attributes {stable_mosaic.version = 11 : i64} {
  func.func @_up_head_kernel(%arg0: i32, %arg1: memref<32x32xbf16, #tpu.memory_space<vmem>>, %arg2: memref<16x32x32xbf16, #tpu.memory_space<vmem>>, %arg3: memref<16x1x32xf32, #tpu.memory_space<vmem>>, %arg4: memref<1x32xf32, #tpu.memory_space<vmem>>, %arg5: memref<1x32xf32, #tpu.memory_space<vmem>>, %arg6: memref<32x4xbf16, #tpu.memory_space<vmem>>, %arg7: memref<1x4xf32, #tpu.memory_space<vmem>>, %arg8: memref<32x64xf32, #tpu.memory_space<vmem>>) attributes {dimension_semantics = [#tpu.dimension_semantics<parallel>], iteration_bounds = array<i64: 1>, scalar_prefetch = 0 : i64, scratch_operands = 0 : i64, tpu.core_type = #tpu.core_type<tc>, window_params = [{transform_indices = @transform_0, window_bounds = array<i64: 32, 32>}, {pipeline_mode = #tpu.pipeline_mode<synchronous>, transform_indices = @transform_1, window_bounds = array<i64: 16, 32, 32>}, {pipeline_mode = #tpu.pipeline_mode<synchronous>, transform_indices = @transform_2, window_bounds = array<i64: 16, 1, 32>}, {pipeline_mode = #tpu.pipeline_mode<synchronous>, transform_indices = @transform_3, window_bounds = array<i64: 1, 32>}, {pipeline_mode = #tpu.pipeline_mode<synchronous>, transform_indices = @transform_4, window_bounds = array<i64: 1, 32>}, {pipeline_mode = #tpu.pipeline_mode<synchronous>, transform_indices = @transform_5, window_bounds = array<i64: 32, 4>}, {pipeline_mode = #tpu.pipeline_mode<synchronous>, transform_indices = @transform_6, window_bounds = array<i64: 1, 4>}, {transform_indices = @transform_7, window_bounds = array<i64: 32, 64>}]} {
    %c0 = arith.constant 0 : index
    %c0_0 = arith.constant 0 : index
    %0 = vector.load %arg1[%c0, %c0_0] : memref<32x32xbf16, #tpu.memory_space<vmem>>, vector<32x32xbf16>
    %c0_1 = arith.constant 0 : index
    %c0_2 = arith.constant 0 : index
    %1 = vector.load %arg4[%c0_1, %c0_2] : memref<1x32xf32, #tpu.memory_space<vmem>>, vector<1x32xf32>
    %c0_3 = arith.constant 0 : index
    %c0_4 = arith.constant 0 : index
    %2 = vector.load %arg5[%c0_3, %c0_4] : memref<1x32xf32, #tpu.memory_space<vmem>>, vector<1x32xf32>
    %c0_5 = arith.constant 0 : index
    %c0_6 = arith.constant 0 : index
    %3 = vector.load %arg6[%c0_5, %c0_6] : memref<32x4xbf16, #tpu.memory_space<vmem>>, vector<32x4xbf16>
    %c0_7 = arith.constant 0 : index
    %c0_8 = arith.constant 0 : index
    %4 = vector.load %arg7[%c0_7, %c0_8] : memref<1x4xf32, #tpu.memory_space<vmem>>, vector<1x4xf32>
    %c0_9 = arith.constant 0 : index
    %c0_10 = arith.constant 0 : index
    %c0_11 = arith.constant 0 : index
    %5 = vector.load %arg2[%c0_9, %c0_10, %c0_11] : memref<16x32x32xbf16, #tpu.memory_space<vmem>>, vector<1x32x32xbf16>
    %6 = vector.shape_cast %5 : vector<1x32x32xbf16> to vector<32x32xbf16>
    %cst = arith.constant dense<0.000000e+00> : vector<32x32xf32>
    %7 = tpu.matmul %0, %6, %cst {dimension_numbers = #tpu.dot_dimension_numbers<[1], [0], [0], [1], [0, 0, 1, 1], [], []>} : vector<32x32xbf16>, vector<32x32xbf16>, vector<32x32xf32> -> vector<32x32xf32>
    %c0_12 = arith.constant 0 : index
    %c0_13 = arith.constant 0 : index
    %c0_14 = arith.constant 0 : index
    %8 = vector.load %arg3[%c0_12, %c0_13, %c0_14] : memref<16x1x32xf32, #tpu.memory_space<vmem>>, vector<1x1x32xf32>
    %9 = vector.shape_cast %8 : vector<1x1x32xf32> to vector<1x32xf32>
    %10 = vector.broadcast %9 : vector<1x32xf32> to vector<32x32xf32>
    %11 = arith.addf %7, %10 : vector<32x32xf32>
    %cst_15 = arith.constant dense<0.000000e+00> : vector<32xf32>
    %12 = vector.multi_reduction <add>, %11, %cst_15 [1] : vector<32x32xf32> to vector<32xf32>
    %13 = vector.shape_cast %12 : vector<32xf32> to vector<32x1xf32>
    %cst_16 = arith.constant 3.200000e+01 : f32
    %14 = vector.broadcast %cst_16 : f32 to vector<32x1xf32>
    %15 = arith.divf %13, %14 : vector<32x1xf32>
    %16 = vector.broadcast %15 : vector<32x1xf32> to vector<32x32xf32>
    %17 = arith.subf %11, %16 : vector<32x32xf32>
    %18 = arith.mulf %17, %17 : vector<32x32xf32>
    %cst_17 = arith.constant dense<0.000000e+00> : vector<32xf32>
    %19 = vector.multi_reduction <add>, %18, %cst_17 [1] : vector<32x32xf32> to vector<32xf32>
    %20 = vector.shape_cast %19 : vector<32xf32> to vector<32x1xf32>
    %cst_18 = arith.constant 3.200000e+01 : f32
    %21 = vector.broadcast %cst_18 : f32 to vector<32x1xf32>
    %22 = arith.divf %20, %21 : vector<32x1xf32>
    %23 = vector.broadcast %15 : vector<32x1xf32> to vector<32x32xf32>
    %24 = arith.subf %11, %23 : vector<32x32xf32>
    %cst_19 = arith.constant 9.99999974E-6 : f32
    %25 = vector.broadcast %cst_19 : f32 to vector<32x1xf32>
    %26 = arith.addf %22, %25 : vector<32x1xf32>
    %27 = math.rsqrt %26 : vector<32x1xf32>
    %28 = vector.broadcast %27 : vector<32x1xf32> to vector<32x32xf32>
    %29 = arith.mulf %24, %28 : vector<32x32xf32>
    %30 = vector.broadcast %1 : vector<1x32xf32> to vector<32x32xf32>
    %31 = arith.mulf %29, %30 : vector<32x32xf32>
    %32 = vector.broadcast %2 : vector<1x32xf32> to vector<32x32xf32>
    %33 = arith.addf %31, %32 : vector<32x32xf32>
    %34 = arith.truncf %33 : vector<32x32xf32> to vector<32x32xbf16>
    %cst_20 = arith.constant dense<0.000000e+00> : vector<32x4xf32>
    %35 = tpu.matmul %34, %3, %cst_20 {dimension_numbers = #tpu.dot_dimension_numbers<[1], [0], [0], [1], [0, 0, 1, 1], [], []>} : vector<32x32xbf16>, vector<32x4xbf16>, vector<32x4xf32> -> vector<32x4xf32>
    %36 = vector.broadcast %4 : vector<1x4xf32> to vector<32x4xf32>
    %37 = arith.addf %35, %36 : vector<32x4xf32>
    %c1 = arith.constant 1 : index
    %c0_21 = arith.constant 0 : index
    %c0_22 = arith.constant 0 : index
    %38 = vector.load %arg2[%c1, %c0_21, %c0_22] : memref<16x32x32xbf16, #tpu.memory_space<vmem>>, vector<1x32x32xbf16>
    %39 = vector.shape_cast %38 : vector<1x32x32xbf16> to vector<32x32xbf16>
    %cst_23 = arith.constant dense<0.000000e+00> : vector<32x32xf32>
    %40 = tpu.matmul %0, %39, %cst_23 {dimension_numbers = #tpu.dot_dimension_numbers<[1], [0], [0], [1], [0, 0, 1, 1], [], []>} : vector<32x32xbf16>, vector<32x32xbf16>, vector<32x32xf32> -> vector<32x32xf32>
    %c1_24 = arith.constant 1 : index
    %c0_25 = arith.constant 0 : index
    %c0_26 = arith.constant 0 : index
    %41 = vector.load %arg3[%c1_24, %c0_25, %c0_26] : memref<16x1x32xf32, #tpu.memory_space<vmem>>, vector<1x1x32xf32>
    %42 = vector.shape_cast %41 : vector<1x1x32xf32> to vector<1x32xf32>
    %43 = vector.broadcast %42 : vector<1x32xf32> to vector<32x32xf32>
    %44 = arith.addf %40, %43 : vector<32x32xf32>
    %cst_27 = arith.constant dense<0.000000e+00> : vector<32xf32>
    %45 = vector.multi_reduction <add>, %44, %cst_27 [1] : vector<32x32xf32> to vector<32xf32>
    %46 = vector.shape_cast %45 : vector<32xf32> to vector<32x1xf32>
    %cst_28 = arith.constant 3.200000e+01 : f32
    %47 = vector.broadcast %cst_28 : f32 to vector<32x1xf32>
    %48 = arith.divf %46, %47 : vector<32x1xf32>
    %49 = vector.broadcast %48 : vector<32x1xf32> to vector<32x32xf32>
    %50 = arith.subf %44, %49 : vector<32x32xf32>
    %51 = arith.mulf %50, %50 : vector<32x32xf32>
    %cst_29 = arith.constant dense<0.000000e+00> : vector<32xf32>
    %52 = vector.multi_reduction <add>, %51, %cst_29 [1] : vector<32x32xf32> to vector<32xf32>
    %53 = vector.shape_cast %52 : vector<32xf32> to vector<32x1xf32>
    %cst_30 = arith.constant 3.200000e+01 : f32
    %54 = vector.broadcast %cst_30 : f32 to vector<32x1xf32>
    %55 = arith.divf %53, %54 : vector<32x1xf32>
    %56 = vector.broadcast %48 : vector<32x1xf32> to vector<32x32xf32>
    %57 = arith.subf %44, %56 : vector<32x32xf32>
    %cst_31 = arith.constant 9.99999974E-6 : f32
    %58 = vector.broadcast %cst_31 : f32 to vector<32x1xf32>
    %59 = arith.addf %55, %58 : vector<32x1xf32>
    %60 = math.rsqrt %59 : vector<32x1xf32>
    %61 = vector.broadcast %60 : vector<32x1xf32> to vector<32x32xf32>
    %62 = arith.mulf %57, %61 : vector<32x32xf32>
    %63 = vector.broadcast %1 : vector<1x32xf32> to vector<32x32xf32>
    %64 = arith.mulf %62, %63 : vector<32x32xf32>
    %65 = vector.broadcast %2 : vector<1x32xf32> to vector<32x32xf32>
    %66 = arith.addf %64, %65 : vector<32x32xf32>
    %67 = arith.truncf %66 : vector<32x32xf32> to vector<32x32xbf16>
    %cst_32 = arith.constant dense<0.000000e+00> : vector<32x4xf32>
    %68 = tpu.matmul %67, %3, %cst_32 {dimension_numbers = #tpu.dot_dimension_numbers<[1], [0], [0], [1], [0, 0, 1, 1], [], []>} : vector<32x32xbf16>, vector<32x4xbf16>, vector<32x4xf32> -> vector<32x4xf32>
    %69 = vector.broadcast %4 : vector<1x4xf32> to vector<32x4xf32>
    %70 = arith.addf %68, %69 : vector<32x4xf32>
    %c2 = arith.constant 2 : index
    %c0_33 = arith.constant 0 : index
    %c0_34 = arith.constant 0 : index
    %71 = vector.load %arg2[%c2, %c0_33, %c0_34] : memref<16x32x32xbf16, #tpu.memory_space<vmem>>, vector<1x32x32xbf16>
    %72 = vector.shape_cast %71 : vector<1x32x32xbf16> to vector<32x32xbf16>
    %cst_35 = arith.constant dense<0.000000e+00> : vector<32x32xf32>
    %73 = tpu.matmul %0, %72, %cst_35 {dimension_numbers = #tpu.dot_dimension_numbers<[1], [0], [0], [1], [0, 0, 1, 1], [], []>} : vector<32x32xbf16>, vector<32x32xbf16>, vector<32x32xf32> -> vector<32x32xf32>
    %c2_36 = arith.constant 2 : index
    %c0_37 = arith.constant 0 : index
    %c0_38 = arith.constant 0 : index
    %74 = vector.load %arg3[%c2_36, %c0_37, %c0_38] : memref<16x1x32xf32, #tpu.memory_space<vmem>>, vector<1x1x32xf32>
    %75 = vector.shape_cast %74 : vector<1x1x32xf32> to vector<1x32xf32>
    %76 = vector.broadcast %75 : vector<1x32xf32> to vector<32x32xf32>
    %77 = arith.addf %73, %76 : vector<32x32xf32>
    %cst_39 = arith.constant dense<0.000000e+00> : vector<32xf32>
    %78 = vector.multi_reduction <add>, %77, %cst_39 [1] : vector<32x32xf32> to vector<32xf32>
    %79 = vector.shape_cast %78 : vector<32xf32> to vector<32x1xf32>
    %cst_40 = arith.constant 3.200000e+01 : f32
    %80 = vector.broadcast %cst_40 : f32 to vector<32x1xf32>
    %81 = arith.divf %79, %80 : vector<32x1xf32>
    %82 = vector.broadcast %81 : vector<32x1xf32> to vector<32x32xf32>
    %83 = arith.subf %77, %82 : vector<32x32xf32>
    %84 = arith.mulf %83, %83 : vector<32x32xf32>
    %cst_41 = arith.constant dense<0.000000e+00> : vector<32xf32>
    %85 = vector.multi_reduction <add>, %84, %cst_41 [1] : vector<32x32xf32> to vector<32xf32>
    %86 = vector.shape_cast %85 : vector<32xf32> to vector<32x1xf32>
    %cst_42 = arith.constant 3.200000e+01 : f32
    %87 = vector.broadcast %cst_42 : f32 to vector<32x1xf32>
    %88 = arith.divf %86, %87 : vector<32x1xf32>
    %89 = vector.broadcast %81 : vector<32x1xf32> to vector<32x32xf32>
    %90 = arith.subf %77, %89 : vector<32x32xf32>
    %cst_43 = arith.constant 9.99999974E-6 : f32
    %91 = vector.broadcast %cst_43 : f32 to vector<32x1xf32>
    %92 = arith.addf %88, %91 : vector<32x1xf32>
    %93 = math.rsqrt %92 : vector<32x1xf32>
    %94 = vector.broadcast %93 : vector<32x1xf32> to vector<32x32xf32>
    %95 = arith.mulf %90, %94 : vector<32x32xf32>
    %96 = vector.broadcast %1 : vector<1x32xf32> to vector<32x32xf32>
    %97 = arith.mulf %95, %96 : vector<32x32xf32>
    %98 = vector.broadcast %2 : vector<1x32xf32> to vector<32x32xf32>
    %99 = arith.addf %97, %98 : vector<32x32xf32>
    %100 = arith.truncf %99 : vector<32x32xf32> to vector<32x32xbf16>
    %cst_44 = arith.constant dense<0.000000e+00> : vector<32x4xf32>
    %101 = tpu.matmul %100, %3, %cst_44 {dimension_numbers = #tpu.dot_dimension_numbers<[1], [0], [0], [1], [0, 0, 1, 1], [], []>} : vector<32x32xbf16>, vector<32x4xbf16>, vector<32x4xf32> -> vector<32x4xf32>
    %102 = vector.broadcast %4 : vector<1x4xf32> to vector<32x4xf32>
    %103 = arith.addf %101, %102 : vector<32x4xf32>
    %c3 = arith.constant 3 : index
    %c0_45 = arith.constant 0 : index
    %c0_46 = arith.constant 0 : index
    %104 = vector.load %arg2[%c3, %c0_45, %c0_46] : memref<16x32x32xbf16, #tpu.memory_space<vmem>>, vector<1x32x32xbf16>
    %105 = vector.shape_cast %104 : vector<1x32x32xbf16> to vector<32x32xbf16>
    %cst_47 = arith.constant dense<0.000000e+00> : vector<32x32xf32>
    %106 = tpu.matmul %0, %105, %cst_47 {dimension_numbers = #tpu.dot_dimension_numbers<[1], [0], [0], [1], [0, 0, 1, 1], [], []>} : vector<32x32xbf16>, vector<32x32xbf16>, vector<32x32xf32> -> vector<32x32xf32>
    %c3_48 = arith.constant 3 : index
    %c0_49 = arith.constant 0 : index
    %c0_50 = arith.constant 0 : index
    %107 = vector.load %arg3[%c3_48, %c0_49, %c0_50] : memref<16x1x32xf32, #tpu.memory_space<vmem>>, vector<1x1x32xf32>
    %108 = vector.shape_cast %107 : vector<1x1x32xf32> to vector<1x32xf32>
    %109 = vector.broadcast %108 : vector<1x32xf32> to vector<32x32xf32>
    %110 = arith.addf %106, %109 : vector<32x32xf32>
    %cst_51 = arith.constant dense<0.000000e+00> : vector<32xf32>
    %111 = vector.multi_reduction <add>, %110, %cst_51 [1] : vector<32x32xf32> to vector<32xf32>
    %112 = vector.shape_cast %111 : vector<32xf32> to vector<32x1xf32>
    %cst_52 = arith.constant 3.200000e+01 : f32
    %113 = vector.broadcast %cst_52 : f32 to vector<32x1xf32>
    %114 = arith.divf %112, %113 : vector<32x1xf32>
    %115 = vector.broadcast %114 : vector<32x1xf32> to vector<32x32xf32>
    %116 = arith.subf %110, %115 : vector<32x32xf32>
    %117 = arith.mulf %116, %116 : vector<32x32xf32>
    %cst_53 = arith.constant dense<0.000000e+00> : vector<32xf32>
    %118 = vector.multi_reduction <add>, %117, %cst_53 [1] : vector<32x32xf32> to vector<32xf32>
    %119 = vector.shape_cast %118 : vector<32xf32> to vector<32x1xf32>
    %cst_54 = arith.constant 3.200000e+01 : f32
    %120 = vector.broadcast %cst_54 : f32 to vector<32x1xf32>
    %121 = arith.divf %119, %120 : vector<32x1xf32>
    %122 = vector.broadcast %114 : vector<32x1xf32> to vector<32x32xf32>
    %123 = arith.subf %110, %122 : vector<32x32xf32>
    %cst_55 = arith.constant 9.99999974E-6 : f32
    %124 = vector.broadcast %cst_55 : f32 to vector<32x1xf32>
    %125 = arith.addf %121, %124 : vector<32x1xf32>
    %126 = math.rsqrt %125 : vector<32x1xf32>
    %127 = vector.broadcast %126 : vector<32x1xf32> to vector<32x32xf32>
    %128 = arith.mulf %123, %127 : vector<32x32xf32>
    %129 = vector.broadcast %1 : vector<1x32xf32> to vector<32x32xf32>
    %130 = arith.mulf %128, %129 : vector<32x32xf32>
    %131 = vector.broadcast %2 : vector<1x32xf32> to vector<32x32xf32>
    %132 = arith.addf %130, %131 : vector<32x32xf32>
    %133 = arith.truncf %132 : vector<32x32xf32> to vector<32x32xbf16>
    %cst_56 = arith.constant dense<0.000000e+00> : vector<32x4xf32>
    %134 = tpu.matmul %133, %3, %cst_56 {dimension_numbers = #tpu.dot_dimension_numbers<[1], [0], [0], [1], [0, 0, 1, 1], [], []>} : vector<32x32xbf16>, vector<32x4xbf16>, vector<32x4xf32> -> vector<32x4xf32>
    %135 = vector.broadcast %4 : vector<1x4xf32> to vector<32x4xf32>
    %136 = arith.addf %134, %135 : vector<32x4xf32>
    %c4 = arith.constant 4 : index
    %c0_57 = arith.constant 0 : index
    %c0_58 = arith.constant 0 : index
    %137 = vector.load %arg2[%c4, %c0_57, %c0_58] : memref<16x32x32xbf16, #tpu.memory_space<vmem>>, vector<1x32x32xbf16>
    %138 = vector.shape_cast %137 : vector<1x32x32xbf16> to vector<32x32xbf16>
    %cst_59 = arith.constant dense<0.000000e+00> : vector<32x32xf32>
    %139 = tpu.matmul %0, %138, %cst_59 {dimension_numbers = #tpu.dot_dimension_numbers<[1], [0], [0], [1], [0, 0, 1, 1], [], []>} : vector<32x32xbf16>, vector<32x32xbf16>, vector<32x32xf32> -> vector<32x32xf32>
    %c4_60 = arith.constant 4 : index
    %c0_61 = arith.constant 0 : index
    %c0_62 = arith.constant 0 : index
    %140 = vector.load %arg3[%c4_60, %c0_61, %c0_62] : memref<16x1x32xf32, #tpu.memory_space<vmem>>, vector<1x1x32xf32>
    %141 = vector.shape_cast %140 : vector<1x1x32xf32> to vector<1x32xf32>
    %142 = vector.broadcast %141 : vector<1x32xf32> to vector<32x32xf32>
    %143 = arith.addf %139, %142 : vector<32x32xf32>
    %cst_63 = arith.constant dense<0.000000e+00> : vector<32xf32>
    %144 = vector.multi_reduction <add>, %143, %cst_63 [1] : vector<32x32xf32> to vector<32xf32>
    %145 = vector.shape_cast %144 : vector<32xf32> to vector<32x1xf32>
    %cst_64 = arith.constant 3.200000e+01 : f32
    %146 = vector.broadcast %cst_64 : f32 to vector<32x1xf32>
    %147 = arith.divf %145, %146 : vector<32x1xf32>
    %148 = vector.broadcast %147 : vector<32x1xf32> to vector<32x32xf32>
    %149 = arith.subf %143, %148 : vector<32x32xf32>
    %150 = arith.mulf %149, %149 : vector<32x32xf32>
    %cst_65 = arith.constant dense<0.000000e+00> : vector<32xf32>
    %151 = vector.multi_reduction <add>, %150, %cst_65 [1] : vector<32x32xf32> to vector<32xf32>
    %152 = vector.shape_cast %151 : vector<32xf32> to vector<32x1xf32>
    %cst_66 = arith.constant 3.200000e+01 : f32
    %153 = vector.broadcast %cst_66 : f32 to vector<32x1xf32>
    %154 = arith.divf %152, %153 : vector<32x1xf32>
    %155 = vector.broadcast %147 : vector<32x1xf32> to vector<32x32xf32>
    %156 = arith.subf %143, %155 : vector<32x32xf32>
    %cst_67 = arith.constant 9.99999974E-6 : f32
    %157 = vector.broadcast %cst_67 : f32 to vector<32x1xf32>
    %158 = arith.addf %154, %157 : vector<32x1xf32>
    %159 = math.rsqrt %158 : vector<32x1xf32>
    %160 = vector.broadcast %159 : vector<32x1xf32> to vector<32x32xf32>
    %161 = arith.mulf %156, %160 : vector<32x32xf32>
    %162 = vector.broadcast %1 : vector<1x32xf32> to vector<32x32xf32>
    %163 = arith.mulf %161, %162 : vector<32x32xf32>
    %164 = vector.broadcast %2 : vector<1x32xf32> to vector<32x32xf32>
    %165 = arith.addf %163, %164 : vector<32x32xf32>
    %166 = arith.truncf %165 : vector<32x32xf32> to vector<32x32xbf16>
    %cst_68 = arith.constant dense<0.000000e+00> : vector<32x4xf32>
    %167 = tpu.matmul %166, %3, %cst_68 {dimension_numbers = #tpu.dot_dimension_numbers<[1], [0], [0], [1], [0, 0, 1, 1], [], []>} : vector<32x32xbf16>, vector<32x4xbf16>, vector<32x4xf32> -> vector<32x4xf32>
    %168 = vector.broadcast %4 : vector<1x4xf32> to vector<32x4xf32>
    %169 = arith.addf %167, %168 : vector<32x4xf32>
    %c5 = arith.constant 5 : index
    %c0_69 = arith.constant 0 : index
    %c0_70 = arith.constant 0 : index
    %170 = vector.load %arg2[%c5, %c0_69, %c0_70] : memref<16x32x32xbf16, #tpu.memory_space<vmem>>, vector<1x32x32xbf16>
    %171 = vector.shape_cast %170 : vector<1x32x32xbf16> to vector<32x32xbf16>
    %cst_71 = arith.constant dense<0.000000e+00> : vector<32x32xf32>
    %172 = tpu.matmul %0, %171, %cst_71 {dimension_numbers = #tpu.dot_dimension_numbers<[1], [0], [0], [1], [0, 0, 1, 1], [], []>} : vector<32x32xbf16>, vector<32x32xbf16>, vector<32x32xf32> -> vector<32x32xf32>
    %c5_72 = arith.constant 5 : index
    %c0_73 = arith.constant 0 : index
    %c0_74 = arith.constant 0 : index
    %173 = vector.load %arg3[%c5_72, %c0_73, %c0_74] : memref<16x1x32xf32, #tpu.memory_space<vmem>>, vector<1x1x32xf32>
    %174 = vector.shape_cast %173 : vector<1x1x32xf32> to vector<1x32xf32>
    %175 = vector.broadcast %174 : vector<1x32xf32> to vector<32x32xf32>
    %176 = arith.addf %172, %175 : vector<32x32xf32>
    %cst_75 = arith.constant dense<0.000000e+00> : vector<32xf32>
    %177 = vector.multi_reduction <add>, %176, %cst_75 [1] : vector<32x32xf32> to vector<32xf32>
    %178 = vector.shape_cast %177 : vector<32xf32> to vector<32x1xf32>
    %cst_76 = arith.constant 3.200000e+01 : f32
    %179 = vector.broadcast %cst_76 : f32 to vector<32x1xf32>
    %180 = arith.divf %178, %179 : vector<32x1xf32>
    %181 = vector.broadcast %180 : vector<32x1xf32> to vector<32x32xf32>
    %182 = arith.subf %176, %181 : vector<32x32xf32>
    %183 = arith.mulf %182, %182 : vector<32x32xf32>
    %cst_77 = arith.constant dense<0.000000e+00> : vector<32xf32>
    %184 = vector.multi_reduction <add>, %183, %cst_77 [1] : vector<32x32xf32> to vector<32xf32>
    %185 = vector.shape_cast %184 : vector<32xf32> to vector<32x1xf32>
    %cst_78 = arith.constant 3.200000e+01 : f32
    %186 = vector.broadcast %cst_78 : f32 to vector<32x1xf32>
    %187 = arith.divf %185, %186 : vector<32x1xf32>
    %188 = vector.broadcast %180 : vector<32x1xf32> to vector<32x32xf32>
    %189 = arith.subf %176, %188 : vector<32x32xf32>
    %cst_79 = arith.constant 9.99999974E-6 : f32
    %190 = vector.broadcast %cst_79 : f32 to vector<32x1xf32>
    %191 = arith.addf %187, %190 : vector<32x1xf32>
    %192 = math.rsqrt %191 : vector<32x1xf32>
    %193 = vector.broadcast %192 : vector<32x1xf32> to vector<32x32xf32>
    %194 = arith.mulf %189, %193 : vector<32x32xf32>
    %195 = vector.broadcast %1 : vector<1x32xf32> to vector<32x32xf32>
    %196 = arith.mulf %194, %195 : vector<32x32xf32>
    %197 = vector.broadcast %2 : vector<1x32xf32> to vector<32x32xf32>
    %198 = arith.addf %196, %197 : vector<32x32xf32>
    %199 = arith.truncf %198 : vector<32x32xf32> to vector<32x32xbf16>
    %cst_80 = arith.constant dense<0.000000e+00> : vector<32x4xf32>
    %200 = tpu.matmul %199, %3, %cst_80 {dimension_numbers = #tpu.dot_dimension_numbers<[1], [0], [0], [1], [0, 0, 1, 1], [], []>} : vector<32x32xbf16>, vector<32x4xbf16>, vector<32x4xf32> -> vector<32x4xf32>
    %201 = vector.broadcast %4 : vector<1x4xf32> to vector<32x4xf32>
    %202 = arith.addf %200, %201 : vector<32x4xf32>
    %c6 = arith.constant 6 : index
    %c0_81 = arith.constant 0 : index
    %c0_82 = arith.constant 0 : index
    %203 = vector.load %arg2[%c6, %c0_81, %c0_82] : memref<16x32x32xbf16, #tpu.memory_space<vmem>>, vector<1x32x32xbf16>
    %204 = vector.shape_cast %203 : vector<1x32x32xbf16> to vector<32x32xbf16>
    %cst_83 = arith.constant dense<0.000000e+00> : vector<32x32xf32>
    %205 = tpu.matmul %0, %204, %cst_83 {dimension_numbers = #tpu.dot_dimension_numbers<[1], [0], [0], [1], [0, 0, 1, 1], [], []>} : vector<32x32xbf16>, vector<32x32xbf16>, vector<32x32xf32> -> vector<32x32xf32>
    %c6_84 = arith.constant 6 : index
    %c0_85 = arith.constant 0 : index
    %c0_86 = arith.constant 0 : index
    %206 = vector.load %arg3[%c6_84, %c0_85, %c0_86] : memref<16x1x32xf32, #tpu.memory_space<vmem>>, vector<1x1x32xf32>
    %207 = vector.shape_cast %206 : vector<1x1x32xf32> to vector<1x32xf32>
    %208 = vector.broadcast %207 : vector<1x32xf32> to vector<32x32xf32>
    %209 = arith.addf %205, %208 : vector<32x32xf32>
    %cst_87 = arith.constant dense<0.000000e+00> : vector<32xf32>
    %210 = vector.multi_reduction <add>, %209, %cst_87 [1] : vector<32x32xf32> to vector<32xf32>
    %211 = vector.shape_cast %210 : vector<32xf32> to vector<32x1xf32>
    %cst_88 = arith.constant 3.200000e+01 : f32
    %212 = vector.broadcast %cst_88 : f32 to vector<32x1xf32>
    %213 = arith.divf %211, %212 : vector<32x1xf32>
    %214 = vector.broadcast %213 : vector<32x1xf32> to vector<32x32xf32>
    %215 = arith.subf %209, %214 : vector<32x32xf32>
    %216 = arith.mulf %215, %215 : vector<32x32xf32>
    %cst_89 = arith.constant dense<0.000000e+00> : vector<32xf32>
    %217 = vector.multi_reduction <add>, %216, %cst_89 [1] : vector<32x32xf32> to vector<32xf32>
    %218 = vector.shape_cast %217 : vector<32xf32> to vector<32x1xf32>
    %cst_90 = arith.constant 3.200000e+01 : f32
    %219 = vector.broadcast %cst_90 : f32 to vector<32x1xf32>
    %220 = arith.divf %218, %219 : vector<32x1xf32>
    %221 = vector.broadcast %213 : vector<32x1xf32> to vector<32x32xf32>
    %222 = arith.subf %209, %221 : vector<32x32xf32>
    %cst_91 = arith.constant 9.99999974E-6 : f32
    %223 = vector.broadcast %cst_91 : f32 to vector<32x1xf32>
    %224 = arith.addf %220, %223 : vector<32x1xf32>
    %225 = math.rsqrt %224 : vector<32x1xf32>
    %226 = vector.broadcast %225 : vector<32x1xf32> to vector<32x32xf32>
    %227 = arith.mulf %222, %226 : vector<32x32xf32>
    %228 = vector.broadcast %1 : vector<1x32xf32> to vector<32x32xf32>
    %229 = arith.mulf %227, %228 : vector<32x32xf32>
    %230 = vector.broadcast %2 : vector<1x32xf32> to vector<32x32xf32>
    %231 = arith.addf %229, %230 : vector<32x32xf32>
    %232 = arith.truncf %231 : vector<32x32xf32> to vector<32x32xbf16>
    %cst_92 = arith.constant dense<0.000000e+00> : vector<32x4xf32>
    %233 = tpu.matmul %232, %3, %cst_92 {dimension_numbers = #tpu.dot_dimension_numbers<[1], [0], [0], [1], [0, 0, 1, 1], [], []>} : vector<32x32xbf16>, vector<32x4xbf16>, vector<32x4xf32> -> vector<32x4xf32>
    %234 = vector.broadcast %4 : vector<1x4xf32> to vector<32x4xf32>
    %235 = arith.addf %233, %234 : vector<32x4xf32>
    %c7 = arith.constant 7 : index
    %c0_93 = arith.constant 0 : index
    %c0_94 = arith.constant 0 : index
    %236 = vector.load %arg2[%c7, %c0_93, %c0_94] : memref<16x32x32xbf16, #tpu.memory_space<vmem>>, vector<1x32x32xbf16>
    %237 = vector.shape_cast %236 : vector<1x32x32xbf16> to vector<32x32xbf16>
    %cst_95 = arith.constant dense<0.000000e+00> : vector<32x32xf32>
    %238 = tpu.matmul %0, %237, %cst_95 {dimension_numbers = #tpu.dot_dimension_numbers<[1], [0], [0], [1], [0, 0, 1, 1], [], []>} : vector<32x32xbf16>, vector<32x32xbf16>, vector<32x32xf32> -> vector<32x32xf32>
    %c7_96 = arith.constant 7 : index
    %c0_97 = arith.constant 0 : index
    %c0_98 = arith.constant 0 : index
    %239 = vector.load %arg3[%c7_96, %c0_97, %c0_98] : memref<16x1x32xf32, #tpu.memory_space<vmem>>, vector<1x1x32xf32>
    %240 = vector.shape_cast %239 : vector<1x1x32xf32> to vector<1x32xf32>
    %241 = vector.broadcast %240 : vector<1x32xf32> to vector<32x32xf32>
    %242 = arith.addf %238, %241 : vector<32x32xf32>
    %cst_99 = arith.constant dense<0.000000e+00> : vector<32xf32>
    %243 = vector.multi_reduction <add>, %242, %cst_99 [1] : vector<32x32xf32> to vector<32xf32>
    %244 = vector.shape_cast %243 : vector<32xf32> to vector<32x1xf32>
    %cst_100 = arith.constant 3.200000e+01 : f32
    %245 = vector.broadcast %cst_100 : f32 to vector<32x1xf32>
    %246 = arith.divf %244, %245 : vector<32x1xf32>
    %247 = vector.broadcast %246 : vector<32x1xf32> to vector<32x32xf32>
    %248 = arith.subf %242, %247 : vector<32x32xf32>
    %249 = arith.mulf %248, %248 : vector<32x32xf32>
    %cst_101 = arith.constant dense<0.000000e+00> : vector<32xf32>
    %250 = vector.multi_reduction <add>, %249, %cst_101 [1] : vector<32x32xf32> to vector<32xf32>
    %251 = vector.shape_cast %250 : vector<32xf32> to vector<32x1xf32>
    %cst_102 = arith.constant 3.200000e+01 : f32
    %252 = vector.broadcast %cst_102 : f32 to vector<32x1xf32>
    %253 = arith.divf %251, %252 : vector<32x1xf32>
    %254 = vector.broadcast %246 : vector<32x1xf32> to vector<32x32xf32>
    %255 = arith.subf %242, %254 : vector<32x32xf32>
    %cst_103 = arith.constant 9.99999974E-6 : f32
    %256 = vector.broadcast %cst_103 : f32 to vector<32x1xf32>
    %257 = arith.addf %253, %256 : vector<32x1xf32>
    %258 = math.rsqrt %257 : vector<32x1xf32>
    %259 = vector.broadcast %258 : vector<32x1xf32> to vector<32x32xf32>
    %260 = arith.mulf %255, %259 : vector<32x32xf32>
    %261 = vector.broadcast %1 : vector<1x32xf32> to vector<32x32xf32>
    %262 = arith.mulf %260, %261 : vector<32x32xf32>
    %263 = vector.broadcast %2 : vector<1x32xf32> to vector<32x32xf32>
    %264 = arith.addf %262, %263 : vector<32x32xf32>
    %265 = arith.truncf %264 : vector<32x32xf32> to vector<32x32xbf16>
    %cst_104 = arith.constant dense<0.000000e+00> : vector<32x4xf32>
    %266 = tpu.matmul %265, %3, %cst_104 {dimension_numbers = #tpu.dot_dimension_numbers<[1], [0], [0], [1], [0, 0, 1, 1], [], []>} : vector<32x32xbf16>, vector<32x4xbf16>, vector<32x4xf32> -> vector<32x4xf32>
    %267 = vector.broadcast %4 : vector<1x4xf32> to vector<32x4xf32>
    %268 = arith.addf %266, %267 : vector<32x4xf32>
    %c8 = arith.constant 8 : index
    %c0_105 = arith.constant 0 : index
    %c0_106 = arith.constant 0 : index
    %269 = vector.load %arg2[%c8, %c0_105, %c0_106] : memref<16x32x32xbf16, #tpu.memory_space<vmem>>, vector<1x32x32xbf16>
    %270 = vector.shape_cast %269 : vector<1x32x32xbf16> to vector<32x32xbf16>
    %cst_107 = arith.constant dense<0.000000e+00> : vector<32x32xf32>
    %271 = tpu.matmul %0, %270, %cst_107 {dimension_numbers = #tpu.dot_dimension_numbers<[1], [0], [0], [1], [0, 0, 1, 1], [], []>} : vector<32x32xbf16>, vector<32x32xbf16>, vector<32x32xf32> -> vector<32x32xf32>
    %c8_108 = arith.constant 8 : index
    %c0_109 = arith.constant 0 : index
    %c0_110 = arith.constant 0 : index
    %272 = vector.load %arg3[%c8_108, %c0_109, %c0_110] : memref<16x1x32xf32, #tpu.memory_space<vmem>>, vector<1x1x32xf32>
    %273 = vector.shape_cast %272 : vector<1x1x32xf32> to vector<1x32xf32>
    %274 = vector.broadcast %273 : vector<1x32xf32> to vector<32x32xf32>
    %275 = arith.addf %271, %274 : vector<32x32xf32>
    %cst_111 = arith.constant dense<0.000000e+00> : vector<32xf32>
    %276 = vector.multi_reduction <add>, %275, %cst_111 [1] : vector<32x32xf32> to vector<32xf32>
    %277 = vector.shape_cast %276 : vector<32xf32> to vector<32x1xf32>
    %cst_112 = arith.constant 3.200000e+01 : f32
    %278 = vector.broadcast %cst_112 : f32 to vector<32x1xf32>
    %279 = arith.divf %277, %278 : vector<32x1xf32>
    %280 = vector.broadcast %279 : vector<32x1xf32> to vector<32x32xf32>
    %281 = arith.subf %275, %280 : vector<32x32xf32>
    %282 = arith.mulf %281, %281 : vector<32x32xf32>
    %cst_113 = arith.constant dense<0.000000e+00> : vector<32xf32>
    %283 = vector.multi_reduction <add>, %282, %cst_113 [1] : vector<32x32xf32> to vector<32xf32>
    %284 = vector.shape_cast %283 : vector<32xf32> to vector<32x1xf32>
    %cst_114 = arith.constant 3.200000e+01 : f32
    %285 = vector.broadcast %cst_114 : f32 to vector<32x1xf32>
    %286 = arith.divf %284, %285 : vector<32x1xf32>
    %287 = vector.broadcast %279 : vector<32x1xf32> to vector<32x32xf32>
    %288 = arith.subf %275, %287 : vector<32x32xf32>
    %cst_115 = arith.constant 9.99999974E-6 : f32
    %289 = vector.broadcast %cst_115 : f32 to vector<32x1xf32>
    %290 = arith.addf %286, %289 : vector<32x1xf32>
    %291 = math.rsqrt %290 : vector<32x1xf32>
    %292 = vector.broadcast %291 : vector<32x1xf32> to vector<32x32xf32>
    %293 = arith.mulf %288, %292 : vector<32x32xf32>
    %294 = vector.broadcast %1 : vector<1x32xf32> to vector<32x32xf32>
    %295 = arith.mulf %293, %294 : vector<32x32xf32>
    %296 = vector.broadcast %2 : vector<1x32xf32> to vector<32x32xf32>
    %297 = arith.addf %295, %296 : vector<32x32xf32>
    %298 = arith.truncf %297 : vector<32x32xf32> to vector<32x32xbf16>
    %cst_116 = arith.constant dense<0.000000e+00> : vector<32x4xf32>
    %299 = tpu.matmul %298, %3, %cst_116 {dimension_numbers = #tpu.dot_dimension_numbers<[1], [0], [0], [1], [0, 0, 1, 1], [], []>} : vector<32x32xbf16>, vector<32x4xbf16>, vector<32x4xf32> -> vector<32x4xf32>
    %300 = vector.broadcast %4 : vector<1x4xf32> to vector<32x4xf32>
    %301 = arith.addf %299, %300 : vector<32x4xf32>
    %c9 = arith.constant 9 : index
    %c0_117 = arith.constant 0 : index
    %c0_118 = arith.constant 0 : index
    %302 = vector.load %arg2[%c9, %c0_117, %c0_118] : memref<16x32x32xbf16, #tpu.memory_space<vmem>>, vector<1x32x32xbf16>
    %303 = vector.shape_cast %302 : vector<1x32x32xbf16> to vector<32x32xbf16>
    %cst_119 = arith.constant dense<0.000000e+00> : vector<32x32xf32>
    %304 = tpu.matmul %0, %303, %cst_119 {dimension_numbers = #tpu.dot_dimension_numbers<[1], [0], [0], [1], [0, 0, 1, 1], [], []>} : vector<32x32xbf16>, vector<32x32xbf16>, vector<32x32xf32> -> vector<32x32xf32>
    %c9_120 = arith.constant 9 : index
    %c0_121 = arith.constant 0 : index
    %c0_122 = arith.constant 0 : index
    %305 = vector.load %arg3[%c9_120, %c0_121, %c0_122] : memref<16x1x32xf32, #tpu.memory_space<vmem>>, vector<1x1x32xf32>
    %306 = vector.shape_cast %305 : vector<1x1x32xf32> to vector<1x32xf32>
    %307 = vector.broadcast %306 : vector<1x32xf32> to vector<32x32xf32>
    %308 = arith.addf %304, %307 : vector<32x32xf32>
    %cst_123 = arith.constant dense<0.000000e+00> : vector<32xf32>
    %309 = vector.multi_reduction <add>, %308, %cst_123 [1] : vector<32x32xf32> to vector<32xf32>
    %310 = vector.shape_cast %309 : vector<32xf32> to vector<32x1xf32>
    %cst_124 = arith.constant 3.200000e+01 : f32
    %311 = vector.broadcast %cst_124 : f32 to vector<32x1xf32>
    %312 = arith.divf %310, %311 : vector<32x1xf32>
    %313 = vector.broadcast %312 : vector<32x1xf32> to vector<32x32xf32>
    %314 = arith.subf %308, %313 : vector<32x32xf32>
    %315 = arith.mulf %314, %314 : vector<32x32xf32>
    %cst_125 = arith.constant dense<0.000000e+00> : vector<32xf32>
    %316 = vector.multi_reduction <add>, %315, %cst_125 [1] : vector<32x32xf32> to vector<32xf32>
    %317 = vector.shape_cast %316 : vector<32xf32> to vector<32x1xf32>
    %cst_126 = arith.constant 3.200000e+01 : f32
    %318 = vector.broadcast %cst_126 : f32 to vector<32x1xf32>
    %319 = arith.divf %317, %318 : vector<32x1xf32>
    %320 = vector.broadcast %312 : vector<32x1xf32> to vector<32x32xf32>
    %321 = arith.subf %308, %320 : vector<32x32xf32>
    %cst_127 = arith.constant 9.99999974E-6 : f32
    %322 = vector.broadcast %cst_127 : f32 to vector<32x1xf32>
    %323 = arith.addf %319, %322 : vector<32x1xf32>
    %324 = math.rsqrt %323 : vector<32x1xf32>
    %325 = vector.broadcast %324 : vector<32x1xf32> to vector<32x32xf32>
    %326 = arith.mulf %321, %325 : vector<32x32xf32>
    %327 = vector.broadcast %1 : vector<1x32xf32> to vector<32x32xf32>
    %328 = arith.mulf %326, %327 : vector<32x32xf32>
    %329 = vector.broadcast %2 : vector<1x32xf32> to vector<32x32xf32>
    %330 = arith.addf %328, %329 : vector<32x32xf32>
    %331 = arith.truncf %330 : vector<32x32xf32> to vector<32x32xbf16>
    %cst_128 = arith.constant dense<0.000000e+00> : vector<32x4xf32>
    %332 = tpu.matmul %331, %3, %cst_128 {dimension_numbers = #tpu.dot_dimension_numbers<[1], [0], [0], [1], [0, 0, 1, 1], [], []>} : vector<32x32xbf16>, vector<32x4xbf16>, vector<32x4xf32> -> vector<32x4xf32>
    %333 = vector.broadcast %4 : vector<1x4xf32> to vector<32x4xf32>
    %334 = arith.addf %332, %333 : vector<32x4xf32>
    %c10 = arith.constant 10 : index
    %c0_129 = arith.constant 0 : index
    %c0_130 = arith.constant 0 : index
    %335 = vector.load %arg2[%c10, %c0_129, %c0_130] : memref<16x32x32xbf16, #tpu.memory_space<vmem>>, vector<1x32x32xbf16>
    %336 = vector.shape_cast %335 : vector<1x32x32xbf16> to vector<32x32xbf16>
    %cst_131 = arith.constant dense<0.000000e+00> : vector<32x32xf32>
    %337 = tpu.matmul %0, %336, %cst_131 {dimension_numbers = #tpu.dot_dimension_numbers<[1], [0], [0], [1], [0, 0, 1, 1], [], []>} : vector<32x32xbf16>, vector<32x32xbf16>, vector<32x32xf32> -> vector<32x32xf32>
    %c10_132 = arith.constant 10 : index
    %c0_133 = arith.constant 0 : index
    %c0_134 = arith.constant 0 : index
    %338 = vector.load %arg3[%c10_132, %c0_133, %c0_134] : memref<16x1x32xf32, #tpu.memory_space<vmem>>, vector<1x1x32xf32>
    %339 = vector.shape_cast %338 : vector<1x1x32xf32> to vector<1x32xf32>
    %340 = vector.broadcast %339 : vector<1x32xf32> to vector<32x32xf32>
    %341 = arith.addf %337, %340 : vector<32x32xf32>
    %cst_135 = arith.constant dense<0.000000e+00> : vector<32xf32>
    %342 = vector.multi_reduction <add>, %341, %cst_135 [1] : vector<32x32xf32> to vector<32xf32>
    %343 = vector.shape_cast %342 : vector<32xf32> to vector<32x1xf32>
    %cst_136 = arith.constant 3.200000e+01 : f32
    %344 = vector.broadcast %cst_136 : f32 to vector<32x1xf32>
    %345 = arith.divf %343, %344 : vector<32x1xf32>
    %346 = vector.broadcast %345 : vector<32x1xf32> to vector<32x32xf32>
    %347 = arith.subf %341, %346 : vector<32x32xf32>
    %348 = arith.mulf %347, %347 : vector<32x32xf32>
    %cst_137 = arith.constant dense<0.000000e+00> : vector<32xf32>
    %349 = vector.multi_reduction <add>, %348, %cst_137 [1] : vector<32x32xf32> to vector<32xf32>
    %350 = vector.shape_cast %349 : vector<32xf32> to vector<32x1xf32>
    %cst_138 = arith.constant 3.200000e+01 : f32
    %351 = vector.broadcast %cst_138 : f32 to vector<32x1xf32>
    %352 = arith.divf %350, %351 : vector<32x1xf32>
    %353 = vector.broadcast %345 : vector<32x1xf32> to vector<32x32xf32>
    %354 = arith.subf %341, %353 : vector<32x32xf32>
    %cst_139 = arith.constant 9.99999974E-6 : f32
    %355 = vector.broadcast %cst_139 : f32 to vector<32x1xf32>
    %356 = arith.addf %352, %355 : vector<32x1xf32>
    %357 = math.rsqrt %356 : vector<32x1xf32>
    %358 = vector.broadcast %357 : vector<32x1xf32> to vector<32x32xf32>
    %359 = arith.mulf %354, %358 : vector<32x32xf32>
    %360 = vector.broadcast %1 : vector<1x32xf32> to vector<32x32xf32>
    %361 = arith.mulf %359, %360 : vector<32x32xf32>
    %362 = vector.broadcast %2 : vector<1x32xf32> to vector<32x32xf32>
    %363 = arith.addf %361, %362 : vector<32x32xf32>
    %364 = arith.truncf %363 : vector<32x32xf32> to vector<32x32xbf16>
    %cst_140 = arith.constant dense<0.000000e+00> : vector<32x4xf32>
    %365 = tpu.matmul %364, %3, %cst_140 {dimension_numbers = #tpu.dot_dimension_numbers<[1], [0], [0], [1], [0, 0, 1, 1], [], []>} : vector<32x32xbf16>, vector<32x4xbf16>, vector<32x4xf32> -> vector<32x4xf32>
    %366 = vector.broadcast %4 : vector<1x4xf32> to vector<32x4xf32>
    %367 = arith.addf %365, %366 : vector<32x4xf32>
    %c11 = arith.constant 11 : index
    %c0_141 = arith.constant 0 : index
    %c0_142 = arith.constant 0 : index
    %368 = vector.load %arg2[%c11, %c0_141, %c0_142] : memref<16x32x32xbf16, #tpu.memory_space<vmem>>, vector<1x32x32xbf16>
    %369 = vector.shape_cast %368 : vector<1x32x32xbf16> to vector<32x32xbf16>
    %cst_143 = arith.constant dense<0.000000e+00> : vector<32x32xf32>
    %370 = tpu.matmul %0, %369, %cst_143 {dimension_numbers = #tpu.dot_dimension_numbers<[1], [0], [0], [1], [0, 0, 1, 1], [], []>} : vector<32x32xbf16>, vector<32x32xbf16>, vector<32x32xf32> -> vector<32x32xf32>
    %c11_144 = arith.constant 11 : index
    %c0_145 = arith.constant 0 : index
    %c0_146 = arith.constant 0 : index
    %371 = vector.load %arg3[%c11_144, %c0_145, %c0_146] : memref<16x1x32xf32, #tpu.memory_space<vmem>>, vector<1x1x32xf32>
    %372 = vector.shape_cast %371 : vector<1x1x32xf32> to vector<1x32xf32>
    %373 = vector.broadcast %372 : vector<1x32xf32> to vector<32x32xf32>
    %374 = arith.addf %370, %373 : vector<32x32xf32>
    %cst_147 = arith.constant dense<0.000000e+00> : vector<32xf32>
    %375 = vector.multi_reduction <add>, %374, %cst_147 [1] : vector<32x32xf32> to vector<32xf32>
    %376 = vector.shape_cast %375 : vector<32xf32> to vector<32x1xf32>
    %cst_148 = arith.constant 3.200000e+01 : f32
    %377 = vector.broadcast %cst_148 : f32 to vector<32x1xf32>
    %378 = arith.divf %376, %377 : vector<32x1xf32>
    %379 = vector.broadcast %378 : vector<32x1xf32> to vector<32x32xf32>
    %380 = arith.subf %374, %379 : vector<32x32xf32>
    %381 = arith.mulf %380, %380 : vector<32x32xf32>
    %cst_149 = arith.constant dense<0.000000e+00> : vector<32xf32>
    %382 = vector.multi_reduction <add>, %381, %cst_149 [1] : vector<32x32xf32> to vector<32xf32>
    %383 = vector.shape_cast %382 : vector<32xf32> to vector<32x1xf32>
    %cst_150 = arith.constant 3.200000e+01 : f32
    %384 = vector.broadcast %cst_150 : f32 to vector<32x1xf32>
    %385 = arith.divf %383, %384 : vector<32x1xf32>
    %386 = vector.broadcast %378 : vector<32x1xf32> to vector<32x32xf32>
    %387 = arith.subf %374, %386 : vector<32x32xf32>
    %cst_151 = arith.constant 9.99999974E-6 : f32
    %388 = vector.broadcast %cst_151 : f32 to vector<32x1xf32>
    %389 = arith.addf %385, %388 : vector<32x1xf32>
    %390 = math.rsqrt %389 : vector<32x1xf32>
    %391 = vector.broadcast %390 : vector<32x1xf32> to vector<32x32xf32>
    %392 = arith.mulf %387, %391 : vector<32x32xf32>
    %393 = vector.broadcast %1 : vector<1x32xf32> to vector<32x32xf32>
    %394 = arith.mulf %392, %393 : vector<32x32xf32>
    %395 = vector.broadcast %2 : vector<1x32xf32> to vector<32x32xf32>
    %396 = arith.addf %394, %395 : vector<32x32xf32>
    %397 = arith.truncf %396 : vector<32x32xf32> to vector<32x32xbf16>
    %cst_152 = arith.constant dense<0.000000e+00> : vector<32x4xf32>
    %398 = tpu.matmul %397, %3, %cst_152 {dimension_numbers = #tpu.dot_dimension_numbers<[1], [0], [0], [1], [0, 0, 1, 1], [], []>} : vector<32x32xbf16>, vector<32x4xbf16>, vector<32x4xf32> -> vector<32x4xf32>
    %399 = vector.broadcast %4 : vector<1x4xf32> to vector<32x4xf32>
    %400 = arith.addf %398, %399 : vector<32x4xf32>
    %c12 = arith.constant 12 : index
    %c0_153 = arith.constant 0 : index
    %c0_154 = arith.constant 0 : index
    %401 = vector.load %arg2[%c12, %c0_153, %c0_154] : memref<16x32x32xbf16, #tpu.memory_space<vmem>>, vector<1x32x32xbf16>
    %402 = vector.shape_cast %401 : vector<1x32x32xbf16> to vector<32x32xbf16>
    %cst_155 = arith.constant dense<0.000000e+00> : vector<32x32xf32>
    %403 = tpu.matmul %0, %402, %cst_155 {dimension_numbers = #tpu.dot_dimension_numbers<[1], [0], [0], [1], [0, 0, 1, 1], [], []>} : vector<32x32xbf16>, vector<32x32xbf16>, vector<32x32xf32> -> vector<32x32xf32>
    %c12_156 = arith.constant 12 : index
    %c0_157 = arith.constant 0 : index
    %c0_158 = arith.constant 0 : index
    %404 = vector.load %arg3[%c12_156, %c0_157, %c0_158] : memref<16x1x32xf32, #tpu.memory_space<vmem>>, vector<1x1x32xf32>
    %405 = vector.shape_cast %404 : vector<1x1x32xf32> to vector<1x32xf32>
    %406 = vector.broadcast %405 : vector<1x32xf32> to vector<32x32xf32>
    %407 = arith.addf %403, %406 : vector<32x32xf32>
    %cst_159 = arith.constant dense<0.000000e+00> : vector<32xf32>
    %408 = vector.multi_reduction <add>, %407, %cst_159 [1] : vector<32x32xf32> to vector<32xf32>
    %409 = vector.shape_cast %408 : vector<32xf32> to vector<32x1xf32>
    %cst_160 = arith.constant 3.200000e+01 : f32
    %410 = vector.broadcast %cst_160 : f32 to vector<32x1xf32>
    %411 = arith.divf %409, %410 : vector<32x1xf32>
    %412 = vector.broadcast %411 : vector<32x1xf32> to vector<32x32xf32>
    %413 = arith.subf %407, %412 : vector<32x32xf32>
    %414 = arith.mulf %413, %413 : vector<32x32xf32>
    %cst_161 = arith.constant dense<0.000000e+00> : vector<32xf32>
    %415 = vector.multi_reduction <add>, %414, %cst_161 [1] : vector<32x32xf32> to vector<32xf32>
    %416 = vector.shape_cast %415 : vector<32xf32> to vector<32x1xf32>
    %cst_162 = arith.constant 3.200000e+01 : f32
    %417 = vector.broadcast %cst_162 : f32 to vector<32x1xf32>
    %418 = arith.divf %416, %417 : vector<32x1xf32>
    %419 = vector.broadcast %411 : vector<32x1xf32> to vector<32x32xf32>
    %420 = arith.subf %407, %419 : vector<32x32xf32>
    %cst_163 = arith.constant 9.99999974E-6 : f32
    %421 = vector.broadcast %cst_163 : f32 to vector<32x1xf32>
    %422 = arith.addf %418, %421 : vector<32x1xf32>
    %423 = math.rsqrt %422 : vector<32x1xf32>
    %424 = vector.broadcast %423 : vector<32x1xf32> to vector<32x32xf32>
    %425 = arith.mulf %420, %424 : vector<32x32xf32>
    %426 = vector.broadcast %1 : vector<1x32xf32> to vector<32x32xf32>
    %427 = arith.mulf %425, %426 : vector<32x32xf32>
    %428 = vector.broadcast %2 : vector<1x32xf32> to vector<32x32xf32>
    %429 = arith.addf %427, %428 : vector<32x32xf32>
    %430 = arith.truncf %429 : vector<32x32xf32> to vector<32x32xbf16>
    %cst_164 = arith.constant dense<0.000000e+00> : vector<32x4xf32>
    %431 = tpu.matmul %430, %3, %cst_164 {dimension_numbers = #tpu.dot_dimension_numbers<[1], [0], [0], [1], [0, 0, 1, 1], [], []>} : vector<32x32xbf16>, vector<32x4xbf16>, vector<32x4xf32> -> vector<32x4xf32>
    %432 = vector.broadcast %4 : vector<1x4xf32> to vector<32x4xf32>
    %433 = arith.addf %431, %432 : vector<32x4xf32>
    %c13 = arith.constant 13 : index
    %c0_165 = arith.constant 0 : index
    %c0_166 = arith.constant 0 : index
    %434 = vector.load %arg2[%c13, %c0_165, %c0_166] : memref<16x32x32xbf16, #tpu.memory_space<vmem>>, vector<1x32x32xbf16>
    %435 = vector.shape_cast %434 : vector<1x32x32xbf16> to vector<32x32xbf16>
    %cst_167 = arith.constant dense<0.000000e+00> : vector<32x32xf32>
    %436 = tpu.matmul %0, %435, %cst_167 {dimension_numbers = #tpu.dot_dimension_numbers<[1], [0], [0], [1], [0, 0, 1, 1], [], []>} : vector<32x32xbf16>, vector<32x32xbf16>, vector<32x32xf32> -> vector<32x32xf32>
    %c13_168 = arith.constant 13 : index
    %c0_169 = arith.constant 0 : index
    %c0_170 = arith.constant 0 : index
    %437 = vector.load %arg3[%c13_168, %c0_169, %c0_170] : memref<16x1x32xf32, #tpu.memory_space<vmem>>, vector<1x1x32xf32>
    %438 = vector.shape_cast %437 : vector<1x1x32xf32> to vector<1x32xf32>
    %439 = vector.broadcast %438 : vector<1x32xf32> to vector<32x32xf32>
    %440 = arith.addf %436, %439 : vector<32x32xf32>
    %cst_171 = arith.constant dense<0.000000e+00> : vector<32xf32>
    %441 = vector.multi_reduction <add>, %440, %cst_171 [1] : vector<32x32xf32> to vector<32xf32>
    %442 = vector.shape_cast %441 : vector<32xf32> to vector<32x1xf32>
    %cst_172 = arith.constant 3.200000e+01 : f32
    %443 = vector.broadcast %cst_172 : f32 to vector<32x1xf32>
    %444 = arith.divf %442, %443 : vector<32x1xf32>
    %445 = vector.broadcast %444 : vector<32x1xf32> to vector<32x32xf32>
    %446 = arith.subf %440, %445 : vector<32x32xf32>
    %447 = arith.mulf %446, %446 : vector<32x32xf32>
    %cst_173 = arith.constant dense<0.000000e+00> : vector<32xf32>
    %448 = vector.multi_reduction <add>, %447, %cst_173 [1] : vector<32x32xf32> to vector<32xf32>
    %449 = vector.shape_cast %448 : vector<32xf32> to vector<32x1xf32>
    %cst_174 = arith.constant 3.200000e+01 : f32
    %450 = vector.broadcast %cst_174 : f32 to vector<32x1xf32>
    %451 = arith.divf %449, %450 : vector<32x1xf32>
    %452 = vector.broadcast %444 : vector<32x1xf32> to vector<32x32xf32>
    %453 = arith.subf %440, %452 : vector<32x32xf32>
    %cst_175 = arith.constant 9.99999974E-6 : f32
    %454 = vector.broadcast %cst_175 : f32 to vector<32x1xf32>
    %455 = arith.addf %451, %454 : vector<32x1xf32>
    %456 = math.rsqrt %455 : vector<32x1xf32>
    %457 = vector.broadcast %456 : vector<32x1xf32> to vector<32x32xf32>
    %458 = arith.mulf %453, %457 : vector<32x32xf32>
    %459 = vector.broadcast %1 : vector<1x32xf32> to vector<32x32xf32>
    %460 = arith.mulf %458, %459 : vector<32x32xf32>
    %461 = vector.broadcast %2 : vector<1x32xf32> to vector<32x32xf32>
    %462 = arith.addf %460, %461 : vector<32x32xf32>
    %463 = arith.truncf %462 : vector<32x32xf32> to vector<32x32xbf16>
    %cst_176 = arith.constant dense<0.000000e+00> : vector<32x4xf32>
    %464 = tpu.matmul %463, %3, %cst_176 {dimension_numbers = #tpu.dot_dimension_numbers<[1], [0], [0], [1], [0, 0, 1, 1], [], []>} : vector<32x32xbf16>, vector<32x4xbf16>, vector<32x4xf32> -> vector<32x4xf32>
    %465 = vector.broadcast %4 : vector<1x4xf32> to vector<32x4xf32>
    %466 = arith.addf %464, %465 : vector<32x4xf32>
    %c14 = arith.constant 14 : index
    %c0_177 = arith.constant 0 : index
    %c0_178 = arith.constant 0 : index
    %467 = vector.load %arg2[%c14, %c0_177, %c0_178] : memref<16x32x32xbf16, #tpu.memory_space<vmem>>, vector<1x32x32xbf16>
    %468 = vector.shape_cast %467 : vector<1x32x32xbf16> to vector<32x32xbf16>
    %cst_179 = arith.constant dense<0.000000e+00> : vector<32x32xf32>
    %469 = tpu.matmul %0, %468, %cst_179 {dimension_numbers = #tpu.dot_dimension_numbers<[1], [0], [0], [1], [0, 0, 1, 1], [], []>} : vector<32x32xbf16>, vector<32x32xbf16>, vector<32x32xf32> -> vector<32x32xf32>
    %c14_180 = arith.constant 14 : index
    %c0_181 = arith.constant 0 : index
    %c0_182 = arith.constant 0 : index
    %470 = vector.load %arg3[%c14_180, %c0_181, %c0_182] : memref<16x1x32xf32, #tpu.memory_space<vmem>>, vector<1x1x32xf32>
    %471 = vector.shape_cast %470 : vector<1x1x32xf32> to vector<1x32xf32>
    %472 = vector.broadcast %471 : vector<1x32xf32> to vector<32x32xf32>
    %473 = arith.addf %469, %472 : vector<32x32xf32>
    %cst_183 = arith.constant dense<0.000000e+00> : vector<32xf32>
    %474 = vector.multi_reduction <add>, %473, %cst_183 [1] : vector<32x32xf32> to vector<32xf32>
    %475 = vector.shape_cast %474 : vector<32xf32> to vector<32x1xf32>
    %cst_184 = arith.constant 3.200000e+01 : f32
    %476 = vector.broadcast %cst_184 : f32 to vector<32x1xf32>
    %477 = arith.divf %475, %476 : vector<32x1xf32>
    %478 = vector.broadcast %477 : vector<32x1xf32> to vector<32x32xf32>
    %479 = arith.subf %473, %478 : vector<32x32xf32>
    %480 = arith.mulf %479, %479 : vector<32x32xf32>
    %cst_185 = arith.constant dense<0.000000e+00> : vector<32xf32>
    %481 = vector.multi_reduction <add>, %480, %cst_185 [1] : vector<32x32xf32> to vector<32xf32>
    %482 = vector.shape_cast %481 : vector<32xf32> to vector<32x1xf32>
    %cst_186 = arith.constant 3.200000e+01 : f32
    %483 = vector.broadcast %cst_186 : f32 to vector<32x1xf32>
    %484 = arith.divf %482, %483 : vector<32x1xf32>
    %485 = vector.broadcast %477 : vector<32x1xf32> to vector<32x32xf32>
    %486 = arith.subf %473, %485 : vector<32x32xf32>
    %cst_187 = arith.constant 9.99999974E-6 : f32
    %487 = vector.broadcast %cst_187 : f32 to vector<32x1xf32>
    %488 = arith.addf %484, %487 : vector<32x1xf32>
    %489 = math.rsqrt %488 : vector<32x1xf32>
    %490 = vector.broadcast %489 : vector<32x1xf32> to vector<32x32xf32>
    %491 = arith.mulf %486, %490 : vector<32x32xf32>
    %492 = vector.broadcast %1 : vector<1x32xf32> to vector<32x32xf32>
    %493 = arith.mulf %491, %492 : vector<32x32xf32>
    %494 = vector.broadcast %2 : vector<1x32xf32> to vector<32x32xf32>
    %495 = arith.addf %493, %494 : vector<32x32xf32>
    %496 = arith.truncf %495 : vector<32x32xf32> to vector<32x32xbf16>
    %cst_188 = arith.constant dense<0.000000e+00> : vector<32x4xf32>
    %497 = tpu.matmul %496, %3, %cst_188 {dimension_numbers = #tpu.dot_dimension_numbers<[1], [0], [0], [1], [0, 0, 1, 1], [], []>} : vector<32x32xbf16>, vector<32x4xbf16>, vector<32x4xf32> -> vector<32x4xf32>
    %498 = vector.broadcast %4 : vector<1x4xf32> to vector<32x4xf32>
    %499 = arith.addf %497, %498 : vector<32x4xf32>
    %c15 = arith.constant 15 : index
    %c0_189 = arith.constant 0 : index
    %c0_190 = arith.constant 0 : index
    %500 = vector.load %arg2[%c15, %c0_189, %c0_190] : memref<16x32x32xbf16, #tpu.memory_space<vmem>>, vector<1x32x32xbf16>
    %501 = vector.shape_cast %500 : vector<1x32x32xbf16> to vector<32x32xbf16>
    %cst_191 = arith.constant dense<0.000000e+00> : vector<32x32xf32>
    %502 = tpu.matmul %0, %501, %cst_191 {dimension_numbers = #tpu.dot_dimension_numbers<[1], [0], [0], [1], [0, 0, 1, 1], [], []>} : vector<32x32xbf16>, vector<32x32xbf16>, vector<32x32xf32> -> vector<32x32xf32>
    %c15_192 = arith.constant 15 : index
    %c0_193 = arith.constant 0 : index
    %c0_194 = arith.constant 0 : index
    %503 = vector.load %arg3[%c15_192, %c0_193, %c0_194] : memref<16x1x32xf32, #tpu.memory_space<vmem>>, vector<1x1x32xf32>
    %504 = vector.shape_cast %503 : vector<1x1x32xf32> to vector<1x32xf32>
    %505 = vector.broadcast %504 : vector<1x32xf32> to vector<32x32xf32>
    %506 = arith.addf %502, %505 : vector<32x32xf32>
    %cst_195 = arith.constant dense<0.000000e+00> : vector<32xf32>
    %507 = vector.multi_reduction <add>, %506, %cst_195 [1] : vector<32x32xf32> to vector<32xf32>
    %508 = vector.shape_cast %507 : vector<32xf32> to vector<32x1xf32>
    %cst_196 = arith.constant 3.200000e+01 : f32
    %509 = vector.broadcast %cst_196 : f32 to vector<32x1xf32>
    %510 = arith.divf %508, %509 : vector<32x1xf32>
    %511 = vector.broadcast %510 : vector<32x1xf32> to vector<32x32xf32>
    %512 = arith.subf %506, %511 : vector<32x32xf32>
    %513 = arith.mulf %512, %512 : vector<32x32xf32>
    %cst_197 = arith.constant dense<0.000000e+00> : vector<32xf32>
    %514 = vector.multi_reduction <add>, %513, %cst_197 [1] : vector<32x32xf32> to vector<32xf32>
    %515 = vector.shape_cast %514 : vector<32xf32> to vector<32x1xf32>
    %cst_198 = arith.constant 3.200000e+01 : f32
    %516 = vector.broadcast %cst_198 : f32 to vector<32x1xf32>
    %517 = arith.divf %515, %516 : vector<32x1xf32>
    %518 = vector.broadcast %510 : vector<32x1xf32> to vector<32x32xf32>
    %519 = arith.subf %506, %518 : vector<32x32xf32>
    %cst_199 = arith.constant 9.99999974E-6 : f32
    %520 = vector.broadcast %cst_199 : f32 to vector<32x1xf32>
    %521 = arith.addf %517, %520 : vector<32x1xf32>
    %522 = math.rsqrt %521 : vector<32x1xf32>
    %523 = vector.broadcast %522 : vector<32x1xf32> to vector<32x32xf32>
    %524 = arith.mulf %519, %523 : vector<32x32xf32>
    %525 = vector.broadcast %1 : vector<1x32xf32> to vector<32x32xf32>
    %526 = arith.mulf %524, %525 : vector<32x32xf32>
    %527 = vector.broadcast %2 : vector<1x32xf32> to vector<32x32xf32>
    %528 = arith.addf %526, %527 : vector<32x32xf32>
    %529 = arith.truncf %528 : vector<32x32xf32> to vector<32x32xbf16>
    %cst_200 = arith.constant dense<0.000000e+00> : vector<32x4xf32>
    %530 = tpu.matmul %529, %3, %cst_200 {dimension_numbers = #tpu.dot_dimension_numbers<[1], [0], [0], [1], [0, 0, 1, 1], [], []>} : vector<32x32xbf16>, vector<32x4xbf16>, vector<32x4xf32> -> vector<32x4xf32>
    %531 = vector.broadcast %4 : vector<1x4xf32> to vector<32x4xf32>
    %532 = arith.addf %530, %531 : vector<32x4xf32>
    %533 = tpu.concatenate %37, %70, %103, %136, %169, %202, %235, %268, %301, %334, %367, %400, %433, %466, %499, %532 in 1 : vector<32x4xf32>, vector<32x4xf32>, vector<32x4xf32>, vector<32x4xf32>, vector<32x4xf32>, vector<32x4xf32>, vector<32x4xf32>, vector<32x4xf32>, vector<32x4xf32>, vector<32x4xf32>, vector<32x4xf32>, vector<32x4xf32>, vector<32x4xf32>, vector<32x4xf32>, vector<32x4xf32>, vector<32x4xf32> -> vector<32x64xf32>
    %c0_201 = arith.constant 0 : index
    %c0_202 = arith.constant 0 : index
    %534 = vector.load %arg8[%c0_201, %c0_202] : memref<32x64xf32, #tpu.memory_space<vmem>>, vector<32x64xf32>
    tpu.vector_store %arg8[%c0_201, %c0_202], %533 {strides = array<i32>} : memref<32x64xf32, #tpu.memory_space<vmem>>, vector<32x64xf32>,
    return
  }
  func.func @transform_0(%arg0: i32) -> (i32, i32) {
    %c0_i32 = arith.constant 0 : i32
    %c0_i32_0 = arith.constant 0 : i32
    return %arg0, %c0_i32 : i32, i32
  }
  func.func @transform_1(%arg0: i32) -> (i32, i32, i32) {
    %c0_i32 = arith.constant 0 : i32
    %c0_i32_0 = arith.constant 0 : i32
    %c0_i32_1 = arith.constant 0 : i32
    %c0_i32_2 = arith.constant 0 : i32
    return %c0_i32, %c0_i32_0, %c0_i32_1 : i32, i32, i32
  }
  func.func @transform_2(%arg0: i32) -> (i32, i32, i32) {
    %c0_i32 = arith.constant 0 : i32
    %c0_i32_0 = arith.constant 0 : i32
    %c0_i32_1 = arith.constant 0 : i32
    %c0_i32_2 = arith.constant 0 : i32
    return %c0_i32, %c0_i32_0, %c0_i32_1 : i32, i32, i32
  }
  func.func @transform_3(%arg0: i32) -> (i32, i32) {
    %c0_i32 = arith.constant 0 : i32
    %c0_i32_0 = arith.constant 0 : i32
    %c0_i32_1 = arith.constant 0 : i32
    return %c0_i32, %c0_i32_0 : i32, i32
  }
  func.func @transform_4(%arg0: i32) -> (i32, i32) {
    %c0_i32 = arith.constant 0 : i32
    %c0_i32_0 = arith.constant 0 : i32
    %c0_i32_1 = arith.constant 0 : i32
    return %c0_i32, %c0_i32_0 : i32, i32
  }
  func.func @transform_5(%arg0: i32) -> (i32, i32) {
    %c0_i32 = arith.constant 0 : i32
    %c0_i32_0 = arith.constant 0 : i32
    %c0_i32_1 = arith.constant 0 : i32
    return %c0_i32, %c0_i32_0 : i32, i32
  }
  func.func @transform_6(%arg0: i32) -> (i32, i32) {
    %c0_i32 = arith.constant 0 : i32
    %c0_i32_0 = arith.constant 0 : i32
    %c0_i32_1 = arith.constant 0 : i32
    return %c0_i32, %c0_i32_0 : i32, i32
  }
  func.func @transform_7(%arg0: i32) -> (i32, i32) {
    %c0_i32 = arith.constant 0 : i32
    %c0_i32_0 = arith.constant 0 : i32
    return %arg0, %c0_i32 : i32, i32
  }
}

</mosaic_0001>

<llo_original>
// kernel: ldtunet_forward.10
$region0: #{ldtunet_forward.10}
  #allocation0 [shape = 'u32[]', space=smem, size = 0x4, offset = 0x4, fixed_abs, tag = 'smem constant byte address 0x4 - core index']
  #allocation1 [shape = 'u32[144,128]{1,0:T(1,128)}', space=vmem, size = 0x12000, scoped, tag = 'internal scratch']
  %s0 = inlined_call_operand.vmem [shape: bf16[8,128], index: 0, kind: input, shape index: {}]
  %s1 = inlined_call_operand.vmem [shape: f32[1,128], index: 1, kind: input, shape index: {}]
  %s2 = inlined_call_operand.vmem [shape: f32[1,128], index: 2, kind: input, shape index: {}]
  %s3 = inlined_call_operand.vmem [shape: bf16[128,64], index: 3, kind: input, shape index: {}]
  %s4 = inlined_call_operand.vmem [shape: f32[1,64], index: 4, kind: input, shape index: {}]
  %s5 = inlined_call_operand.vmem [shape: bf16[8,64], index: 5, kind: output, shape index: {}]
  %s6 = sld [smem:[#allocation0]]
  $region30: #{ldtunet_forward.10} parent=0
    _
  %s8 = ssub.s32 1, %s6
  %s9 = scalar_select 0, %s8, %s6
  // Predicated region
  $region2: #{ldtunet_forward.10} parent=0 // pred_check
    _
  $region3: #{ldtunet_forward.10} parent=0 // pred_check_branch
    %11 = sbr.rel (0) target = $region5
  $region4: #{ldtunet_forward.10} parent=0 // pred_region
    _
  $region5: #{ldtunet_forward.10} parent=0 // pred_fallthru
    _
  // Predicated region
  $region6: #{ldtunet_forward.10} parent=0 // pred_check
    _
  $region7: #{ldtunet_forward.10} parent=0 // pred_check_branch
    %13 = sbr.rel (0) target = $region9
  $region8: #{ldtunet_forward.10} parent=0 // pred_region
    _
  $region9: #{ldtunet_forward.10} parent=0 // pred_fallthru
    _
  // Predicated region
  $region10: #{ldtunet_forward.10} parent=0 // pred_check
    _
  $region11: #{ldtunet_forward.10} parent=0 // pred_check_branch
    %15 = sbr.rel (0) target = $region13
  $region12: #{ldtunet_forward.10} parent=0 // pred_region
    _
  $region13: #{ldtunet_forward.10} parent=0 // pred_fallthru
    _
  // Predicated region
  $region14: #{ldtunet_forward.10} parent=0 // pred_check
    _
  $region15: #{ldtunet_forward.10} parent=0 // pred_check_branch
    %17 = sbr.rel (0) target = $region17
  $region16: #{ldtunet_forward.10} parent=0 // pred_region
    _
  $region17: #{ldtunet_forward.10} parent=0 // pred_fallthru
    _
  // Predicated region
  $region18: #{ldtunet_forward.10} parent=0 // pred_check
    _
  $region19: #{ldtunet_forward.10} parent=0 // pred_check_branch
    %19 = sbr.rel (0) target = $region21
  $region20: #{ldtunet_forward.10} parent=0 // pred_region
    _
  $region21: #{ldtunet_forward.10} parent=0 // pred_fallthru
    _
  %v21 = vld [vmem:[%s0] sm:$0xf]
  %v22 = vunpack.c.l.bf16 %v21
  %v23 = vld [vmem:[%s1] sm:$0x1]
  %v24 = vld [vmem:[%s2] sm:$0x1]
  %25 = vadd.xlane.f32.xlu0 %v22
  %v26 = vpop.xlane.xlu0 %25
  %v27 = vrcp.pop 128.0
  %v28 = vmul.f32 %v26, %v27
  %v29 = vsub.f32 %v22, %v28
  %v30 = vmul.f32 %v29, %v29
  %31 = vadd.xlane.f32.xlu0 %v30
  %v32 = vpop.xlane.xlu0 %31
  %v33 = vmul.f32 %v32, %v27
  %v34 = vadd.f32 %v33, 1e-05
  %v35 = vrsqrt.pop %v34
  %v36 = vmul.f32 %v29, %v35
  %v38 = vlaneseq
  %v39 = vshrl.u32 %v38, 7
  %v40 = vsub.s32 0, %v39
  %v41 = vrot.slane %v23, %v40
  %v43 = vmul.f32 %v36, %v41
  %v45 = vlaneseq
  %v46 = vshrl.u32 %v45, 7
  %v47 = vsub.s32 0, %v46
  %v48 = vrot.slane %v24, %v47
  %v50 = vadd.f32 %v43, %v48
  %v51 = vpack.c.bf16 %v50, %v50
  %v52 = vld [vmem:[%s3] sm:$0xf]
  %v53 = vld [vmem:[%s3 + $0x4] sm:$0xf]
  %v54 = vld [vmem:[%s3 + $0x8] sm:$0xf]
  %v55 = vld [vmem:[%s3 + $0xc] sm:$0xf]
  %v56 = vld [vmem:[%s3 + $0x10] sm:$0xf]
  %v57 = vld [vmem:[%s3 + $0x14] sm:$0xf]
  %v58 = vld [vmem:[%s3 + $0x18] sm:$0xf]
  %v59 = vld [vmem:[%s3 + $0x1c] sm:$0xf]
  %v60 = vld [vmem:[%s3 + $0x20] sm:$0xf]
  %v61 = vld [vmem:[%s3 + $0x24] sm:$0xf]
  %v62 = vld [vmem:[%s3 + $0x28] sm:$0xf]
  %v63 = vld [vmem:[%s3 + $0x2c] sm:$0xf]
  %v64 = vld [vmem:[%s3 + $0x30] sm:$0xf]
  %v65 = vld [vmem:[%s3 + $0x34] sm:$0xf]
  %v66 = vld [vmem:[%s3 + $0x38] sm:$0xf]
  %v67 = vld [vmem:[%s3 + $0x3c] sm:$0xf]
  %v68 = vld [vmem:[%s4] sm:$0x1]
  %v70 = vlaneseq
  %v71 = vshrl.u32 %v70, 7
  %v72 = vsub.s32 0, %v71
  %v73 = vrot.slane %v68, %v72
  %v91 = vunpack.c.l.b16 %v52
  %v92 = vunpack.c.l.b16 %v53
  %v93 = vunpack.c.l.b16 %v54
  %v94 = vunpack.c.l.b16 %v55
  %v95 = vunpack.c.l.b16 %v56
  %v96 = vunpack.c.l.b16 %v57
  %v97 = vunpack.c.l.b16 %v58
  %v98 = vunpack.c.l.b16 %v59
  %v99 = vunpack.c.l.b16 %v60
  %v100 = vunpack.c.l.b16 %v61
  %v101 = vunpack.c.l.b16 %v62
  %v102 = vunpack.c.l.b16 %v63
  %v103 = vunpack.c.l.b16 %v64
  %v104 = vunpack.c.l.b16 %v65
  %v105 = vunpack.c.l.b16 %v66
  %v106 = vunpack.c.l.b16 %v67
  %v107 = vpack.c.b16 %v92, %v91
  %v108 = vpack.c.b16 %v94, %v93
  %v109 = vpack.c.b16 %v96, %v95
  %v110 = vpack.c.b16 %v98, %v97
  %v111 = vpack.c.b16 %v100, %v99
  %v112 = vpack.c.b16 %v102, %v101
  %v113 = vpack.c.b16 %v104, %v103
  %v114 = vpack.c.b16 %v106, %v105
  %123 = vmatprep.subr.bf16.mxu0 0
  %124 = vmatpush1.bf16.msra.mxu0 %v107
  %125 = vmatprep.subr.bf16.mxu0 0
  %126 = vmatpush1.bf16.msra.mxu0 %v108
  %127 = vmatprep.subr.bf16.mxu0 0
  %128 = vmatpush1.bf16.msra.mxu0 %v109
  %129 = vmatprep.subr.bf16.mxu0 0
  %130 = vmatpush1.bf16.msra.mxu0 %v110
  %131 = vmatprep.subr.bf16.mxu0 0
  %132 = vmatpush1.bf16.msra.mxu0 %v111
  %133 = vmatprep.subr.bf16.mxu0 0
  %134 = vmatpush1.bf16.msra.mxu0 %v112
  %135 = vmatprep.subr.bf16.mxu0 0
  %136 = vmatpush1.bf16.msra.mxu0 %v113
  %137 = vmatprep.subr.bf16.mxu0 0
  %138 = vmatpush1.bf16.msra.mxu0 %v114
  %139 = vmatprep.subr.bf16.mxu0 0
  %140 = vmatpush1.bf16.msra.mxu0 0
  %141 = vmatprep.subr.bf16.mxu0 0
  %142 = vmatpush1.bf16.msra.mxu0 0
  %143 = vmatprep.subr.bf16.mxu0 0
  %144 = vmatpush1.bf16.msra.mxu0 0
  %145 = vmatprep.subr.bf16.mxu0 0
  %146 = vmatpush1.bf16.msra.mxu0 0
  %147 = vmatprep.subr.bf16.mxu0 0
  %148 = vmatpush1.bf16.msra.mxu0 0
  %149 = vmatprep.subr.bf16.mxu0 0
  %150 = vmatpush1.bf16.msra.mxu0 0
  %151 = vmatprep.subr.bf16.mxu0 0
  %152 = vmatpush1.bf16.msra.mxu0 0
  %153 = vmatprep.subr.bf16.mxu0 0
  %154 = vmatpush1.bf16.msra.mxu0 0
  %155 = vmatprep.mubr.bf16.mxu0 0
  %156 = vmatmul.mubr.bf16.gmra.mrb[0].mxu0 %v51
  %v157 = vpop.f32.mrb[0].mxu0
  %v158 = vadd.f32 %v73, %v157
  %v159 = vpop.f32.mrb[0].mxu0
  %v160 = vpop.f32.mrb[0].mxu0
  %v161 = vpop.f32.mrb[0].mxu0
  %162 = vdwg.mxu0
  %v163 = vpack.c.bf16 %v158, %v158
  %vm164 = vcmask 519168
  %165 = vst.msk [vmem:[%s5] sm:$0xf] %vm164, %v163
  // Predicated region
  $region22: #{ldtunet_forward.10} parent=0 // pred_check
    _
  $region23: #{ldtunet_forward.10} parent=0 // pred_check_branch
    %167 = sbr.rel (0) target = $region25
  $region24: #{ldtunet_forward.10} parent=0 // pred_region
    _
  $region25: #{ldtunet_forward.10} parent=0 // pred_fallthru
    _
  // Predicated region
  $region26: #{ldtunet_forward.10} parent=0 // pred_check
    _
  $region27: #{ldtunet_forward.10} parent=0 // pred_check_branch
    %169 = sbr.rel (0) target = $region29
  $region28: #{ldtunet_forward.10} parent=0 // pred_region
    _
  $region29: #{ldtunet_forward.10} parent=0 // pred_fallthru
    _

// kernel: ldtunet_forward.8
$region0: #{ldtunet_forward.8}
  #allocation0 [shape = 'u32[]', space=smem, size = 0x4, offset = 0x4, fixed_abs, tag = 'smem constant byte address 0x4 - core index']
  #allocation1 [shape = 'u32[144,128]{1,0:T(1,128)}', space=vmem, size = 0x12000, scoped, tag = 'internal scratch']
  %s0 = inlined_call_operand.vmem [shape: f32[32,48], index: 0, kind: input, shape index: {}]
  %s1 = inlined_call_operand.vmem [shape: bf16[48,32], index: 1, kind: input, shape index: {}]
  %s2 = inlined_call_operand.vmem [shape: f32[1,32], index: 2, kind: input, shape index: {}]
  %s3 = inlined_call_operand.vmem [shape: f32[1,32], index: 3, kind: input, shape index: {}]
  %s4 = inlined_call_operand.vmem [shape: f32[1,32], index: 4, kind: input, shape index: {}]
  %s5 = inlined_call_operand.vmem [shape: bf16[32,32], index: 5, kind: output, shape index: {}]
  %s6 = sld [smem:[#allocation0]]
  $region30: #{ldtunet_forward.8} parent=0
    _
  %s8 = ssub.s32 1, %s6
  %s9 = scalar_select 0, %s8, %s6
  // Predicated region
  $region2: #{ldtunet_forward.8} parent=0 // pred_check
    _
  $region3: #{ldtunet_forward.8} parent=0 // pred_check_branch
    %11 = sbr.rel (0) target = $region5
  $region4: #{ldtunet_forward.8} parent=0 // pred_region
    _
  $region5: #{ldtunet_forward.8} parent=0 // pred_fallthru
    _
  // Predicated region
  $region6: #{ldtunet_forward.8} parent=0 // pred_check
    _
  $region7: #{ldtunet_forward.8} parent=0 // pred_check_branch
    %13 = sbr.rel (0) target = $region9
  $region8: #{ldtunet_forward.8} parent=0 // pred_region
    _
  $region9: #{ldtunet_forward.8} parent=0 // pred_fallthru
    _
  // Predicated region
  $region10: #{ldtunet_forward.8} parent=0 // pred_check
    _
  $region11: #{ldtunet_forward.8} parent=0 // pred_check_branch
    %15 = sbr.rel (0) target = $region13
  $region12: #{ldtunet_forward.8} parent=0 // pred_region
    _
  $region13: #{ldtunet_forward.8} parent=0 // pred_fallthru
    _
  // Predicated region
  $region14: #{ldtunet_forward.8} parent=0 // pred_check
    _
  $region15: #{ldtunet_forward.8} parent=0 // pred_check_branch
    %17 = sbr.rel (0) target = $region17
  $region16: #{ldtunet_forward.8} parent=0 // pred_region
    _
  $region17: #{ldtunet_forward.8} parent=0 // pred_fallthru
    _
  // Predicated region
  $region18: #{ldtunet_forward.8} parent=0 // pred_check
    _
  $region19: #{ldtunet_forward.8} parent=0 // pred_check_branch
    %19 = sbr.rel (0) target = $region21
  $region20: #{ldtunet_forward.8} parent=0 // pred_region
    _
  $region21: #{ldtunet_forward.8} parent=0 // pred_fallthru
    _
  %v21 = vld [vmem:[%s0] sm:$0xff]
  %v22 = vld [vmem:[%s0 + $0x8] sm:$0xff]
  %v23 = vld [vmem:[%s0 + $0x10] sm:$0xff]
  %v24 = vld [vmem:[%s0 + $0x18] sm:$0xff]
  %v25 = vpack.c.bf16 %v22, %v21
  %v26 = vpack.c.bf16 %v24, %v23
  %v27 = vld [vmem:[%s1] sm:$0xf]
  %v28 = vld [vmem:[%s1 + $0x4] sm:$0xf]
  %v29 = vld [vmem:[%s1 + $0x8] sm:$0xf]
  %v30 = vld [vmem:[%s1 + $0xc] sm:$0xf]
  %v31 = vld [vmem:[%s1 + $0x10] sm:$0xf]
  %v32 = vld [vmem:[%s1 + $0x14] sm:$0xf]
  %v33 = vld [vmem:[%s2] sm:$0x1]
  %v35 = vlaneseq
  %v36 = vshrl.u32 %v35, 7
  %v37 = vsub.s32 0, %v36
  %v38 = vrot.slane %v33, %v37
  %v46 = vunpack.c.l.b16 %v27
  %v47 = vunpack.c.l.b16 %v28
  %v48 = vunpack.c.l.b16 %v29
  %v49 = vunpack.c.l.b16 %v30
  %v50 = vunpack.c.l.b16 %v31
  %v51 = vunpack.c.l.b16 %v32
  %v52 = vpack.c.b16 %v47, %v46
  %v53 = vpack.c.b16 %v49, %v48
  %v54 = vpack.c.b16 %v51, %v50
  %vm58 = vcmask 392192
  %v60 = vsel %vm58, %v25, 0
  %v63 = vsel %vm58, %v26, 0
  %65 = vmatprep.subr.bf16.mxu0 0
  %66 = vmatpush1.bf16.msra.mxu0 %v52
  %67 = vmatprep.subr.bf16.mxu0 0
  %68 = vmatpush1.bf16.msra.mxu0 %v53
  %69 = vmatprep.subr.bf16.mxu0 0
  %70 = vmatpush1.bf16.msra.mxu0 %v54
  %71 = vmatprep.subr.bf16.mxu0 0
  %72 = vmatpush1.bf16.msra.mxu0 0
  %73 = vmatprep.subr.bf16.mxu0 0
  %74 = vmatpush1.bf16.msra.mxu0 0
  %75 = vmatprep.subr.bf16.mxu0 0
  %76 = vmatpush1.bf16.msra.mxu0 0
  %77 = vmatprep.subr.bf16.mxu0 0
  %78 = vmatpush1.bf16.msra.mxu0 0
  %79 = vmatprep.subr.bf16.mxu0 0
  %80 = vmatpush1.bf16.msra.mxu0 0
  %81 = vmatprep.subr.bf16.mxu0 0
  %82 = vmatpush1.bf16.msra.mxu0 0
  %83 = vmatprep.subr.bf16.mxu0 0
  %84 = vmatpush1.bf16.msra.mxu0 0
  %85 = vmatprep.subr.bf16.mxu0 0
  %86 = vmatpush1.bf16.msra.mxu0 0
  %87 = vmatprep.subr.bf16.mxu0 0
  %88 = vmatpush1.bf16.msra.mxu0 0
  %89 = vmatprep.subr.bf16.mxu0 0
  %90 = vmatpush1.bf16.msra.mxu0 0
  %91 = vmatprep.subr.bf16.mxu0 0
  %92 = vmatpush1.bf16.msra.mxu0 0
  %93 = vmatprep.subr.bf16.mxu0 0
  %94 = vmatpush1.bf16.msra.mxu0 0
  %95 = vmatprep.subr.bf16.mxu0 0
  %96 = vmatpush1.bf16.msra.mxu0 0
  %97 = vmatprep.mubr.bf16.mxu0 0
  %98 = vmatmul.mubr.bf16.gmra.mrb[0].mxu0 %v60
  %v99 = vpop.f32.mrb[0].mxu0
  %v100 = vadd.f32 %v38, %v99
  %v101 = vpop.f32.mrb[0].mxu0
  %v102 = vpop.f32.mrb[0].mxu0
  %v103 = vadd.f32 %v38, %v102
  %v104 = vpop.f32.mrb[0].mxu0
  %105 = vmatprep.mubr.bf16.mxu0 0
  %106 = vmatmul.mubr.bf16.gmra.mrb[0].mxu0 %v63
  %v107 = vpop.f32.mrb[0].mxu0
  %v108 = vadd.f32 %v38, %v107
  %v109 = vpop.f32.mrb[0].mxu0
  %v110 = vpop.f32.mrb[0].mxu0
  %v111 = vadd.f32 %v38, %v110
  %v112 = vpop.f32.mrb[0].mxu0
  %113 = vdwg.mxu0
  %v114 = vld [vmem:[%s3] sm:$0x1]
  %v115 = vld [vmem:[%s4] sm:$0x1]
  %vm116 = vcmask 261120
  %v117 = vsel %vm116, %v100, 0.0
  %118 = vadd.xlane.f32.xlu0 %v117
  %v119 = vpop.xlane.xlu0 %118
  %v120 = vsel %vm116, %v103, 0.0
  %121 = vadd.xlane.f32.xlu0 %v120
  %v122 = vpop.xlane.xlu0 %121
  %v123 = vsel %vm116, %v108, 0.0
  %124 = vadd.xlane.f32.xlu0 %v123
  %v125 = vpop.xlane.xlu0 %124
  %v126 = vsel %vm116, %v111, 0.0
  %127 = vadd.xlane.f32.xlu0 %v126
  %v128 = vpop.xlane.xlu0 %127
  %v129 = vrcp.pop 32.0
  %v130 = vmul.f32 %v119, %v129
  %v131 = vmul.f32 %v122, %v129
  %v132 = vmul.f32 %v125, %v129
  %v133 = vmul.f32 %v128, %v129
  %v134 = vsub.f32 %v100, %v130
  %v135 = vsub.f32 %v103, %v131
  %v136 = vsub.f32 %v108, %v132
  %v137 = vsub.f32 %v111, %v133
  %v138 = vmul.f32 %v134, %v134
  %v139 = vmul.f32 %v135, %v135
  %v140 = vmul.f32 %v136, %v136
  %v141 = vmul.f32 %v137, %v137
  %v142 = vsel %vm116, %v138, 0.0
  %143 = vadd.xlane.f32.xlu0 %v142
  %v144 = vpop.xlane.xlu0 %143
  %v145 = vsel %vm116, %v139, 0.0
  %146 = vadd.xlane.f32.xlu0 %v145
  %v147 = vpop.xlane.xlu0 %146
  %v148 = vsel %vm116, %v140, 0.0
  %149 = vadd.xlane.f32.xlu0 %v148
  %v150 = vpop.xlane.xlu0 %149
  %v151 = vsel %vm116, %v141, 0.0
  %152 = vadd.xlane.f32.xlu0 %v151
  %v153 = vpop.xlane.xlu0 %152
  %v154 = vmul.f32 %v144, %v129
  %v155 = vmul.f32 %v147, %v129
  %v156 = vmul.f32 %v150, %v129
  %v157 = vmul.f32 %v153, %v129
  %v158 = vadd.f32 %v154, 1e-05
  %v159 = vadd.f32 %v155, 1e-05
  %v160 = vadd.f32 %v156, 1e-05
  %v161 = vadd.f32 %v157, 1e-05
  %v162 = vrsqrt.pop %v158
  %v163 = vrsqrt.pop %v159
  %v164 = vrsqrt.pop %v160
  %v165 = vrsqrt.pop %v161
  %v166 = vmul.f32 %v134, %v162
  %v167 = vmul.f32 %v135, %v163
  %v168 = vmul.f32 %v136, %v164
  %v169 = vmul.f32 %v137, %v165
  %v171 = vlaneseq
  %v172 = vshrl.u32 %v171, 7
  %v173 = vsub.s32 0, %v172
  %v174 = vrot.slane %v114, %v173
  %v176 = vmul.f32 %v166, %v174
  %v177 = vmul.f32 %v167, %v174
  %v178 = vmul.f32 %v168, %v174
  %v179 = vmul.f32 %v169, %v174
  %v181 = vlaneseq
  %v182 = vshrl.u32 %v181, 7
  %v183 = vsub.s32 0, %v182
  %v184 = vrot.slane %v115, %v183
  %v186 = vadd.f32 %v176, %v184
  %v187 = vadd.f32 %v177, %v184
  %v188 = vadd.f32 %v178, %v184
  %v189 = vadd.f32 %v179, %v184
  %v190 = vpack.c.bf16 %v187, %v186
  %v191 = vpack.c.bf16 %v189, %v188
  %v194 = vunpack.c.l.b16 %v190
  %v195 = vunpack.c.h.b16 %v190
  %v196 = vunpack.c.l.b16 %v191
  %v197 = vunpack.c.h.b16 %v191
  %v198 = vpack.c.b16 %v194, %v194
  %v199 = vpack.c.b16 %v195, %v195
  %v200 = vpack.c.b16 %v196, %v196
  %v201 = vpack.c.b16 %v197, %v197
  %vm206 = vcmask 257024
  %207 = vst.msk [vmem:[%s5] sm:$0xf] %vm206, %v198
  %208 = vst.msk [vmem:[%s5 + $0x4] sm:$0xf] %vm206, %v199
  %209 = vst.msk [vmem:[%s5 + $0x8] sm:$0xf] %vm206, %v200
  %210 = vst.msk [vmem:[%s5 + $0xc] sm:$0xf] %vm206, %v201
  // Predicated region
  $region22: #{ldtunet_forward.8} parent=0 // pred_check
    _
  $region23: #{ldtunet_forward.8} parent=0 // pred_check_branch
    %212 = sbr.rel (0) target = $region25
  $region24: #{ldtunet_forward.8} parent=0 // pred_region
    _
  $region25: #{ldtunet_forward.8} parent=0 // pred_fallthru
    _
  // Predicated region
  $region26: #{ldtunet_forward.8} parent=0 // pred_check
    _
  $region27: #{ldtunet_forward.8} parent=0 // pred_check_branch
    %214 = sbr.rel (0) target = $region29
  $region28: #{ldtunet_forward.8} parent=0 // pred_region
    _
  $region29: #{ldtunet_forward.8} parent=0 // pred_fallthru
    _

// kernel: ldtunet_forward.9
$region0: #{ldtunet_forward.9}
  #allocation0 [shape = 'u32[]', space=smem, size = 0x4, offset = 0x4, fixed_abs, tag = 'smem constant byte address 0x4 - core index']
  #allocation1 [shape = 'u32[144,128]{1,0:T(1,128)}', space=vmem, size = 0x12000, scoped, tag = 'internal scratch']
  %s0 = inlined_call_operand.vmem [shape: bf16[2,16,32], index: 0, kind: input, shape index: {}, may-alias: {0,1}]
  %s1 = inlined_call_operand.vmem [shape: bf16[2,16,32], index: 1, kind: input, shape index: {}, may-alias: {0,1}]
  %s2 = inlined_call_operand.vmem [shape: f32[1,32], index: 2, kind: input, shape index: {}]
  %s3 = inlined_call_operand.vmem [shape: f32[1,32], index: 3, kind: input, shape index: {}]
  %s4 = inlined_call_operand.vmem [shape: bf16[32,32], index: 4, kind: input, shape index: {}]
  %s5 = inlined_call_operand.vmem [shape: f32[1,32], index: 5, kind: input, shape index: {}]
  %s6 = inlined_call_operand.vmem [shape: bf16[32,64], index: 6, kind: input, shape index: {}]
  %s7 = inlined_call_operand.vmem [shape: f32[1,64], index: 7, kind: input, shape index: {}]
  %s8 = inlined_call_operand.vmem [shape: bf16[32,32], index: 8, kind: input, shape index: {}]
  %s9 = inlined_call_operand.vmem [shape: f32[1,32], index: 9, kind: input, shape index: {}]
  %s10 = inlined_call_operand.vmem [shape: f32[1,32], index: 10, kind: input, shape index: {}]
  %s11 = inlined_call_operand.vmem [shape: f32[1,32], index: 11, kind: input, shape index: {}]
  %s12 = inlined_call_operand.vmem [shape: bf16[32,128], index: 12, kind: input, shape index: {}]
  %s13 = inlined_call_operand.vmem [shape: f32[1,128], index: 13, kind: input, shape index: {}]
  %s14 = inlined_call_operand.vmem [shape: bf16[128,32], index: 14, kind: input, shape index: {}]
  %s15 = inlined_call_operand.vmem [shape: f32[1,32], index: 15, kind: input, shape index: {}]
  %s16 = inlined_call_operand.vmem [shape: bf16[2,16,32], index: 16, kind: output, shape index: {}]
  %s17 = sld [smem:[#allocation0]]
  $region97: #{ldtunet_forward.9} parent=0
    _
  %s19 = ssub.s32 1, %s17
  %s20 = scalar_select 0, %s19, %s17
  loop: start=0, step=1, limit=4
  $region2: #{ldtunet_forward.9} parent=0 // loop_pre_header
    _
  $region3: #{ldtunet_forward.9} parent=0 // loop_header
    %s22 = sphi 0, %s26
    %p23 = scmp.ge.s32.totalorder %s22, 4
    %s29 = sphi 0, %s41
    %s30 = sphi 0, %s37
    %s31 = sphi 0, %s29
    %s32 = sphi 0, %s30
    %s33 = sphi 0, %s31
    %s34 = sphi 0, %s32
    %s46 = sphi 0, %s48
    %s49 = sphi 0, %s46
    %s50 = sphi 0, %s49
    %s66 = sphi 0, %s50
    %s72 = sphi 0, %s74
    %s75 = sphi 0, %s72
    %s76 = sphi 0, %s75
    %s92 = sphi 0, %s76
    %s96 = sphi 0, %s96
    %s98 = sphi 0, %s96
    %s99 = sphi 0, %s98
    %s113 = sphi 0, %s99
    %s117 = sphi 0, %s117
    %s119 = sphi 0, %s117
    %s120 = sphi 0, %s119
    %s134 = sphi 0, %s120
    %s138 = sphi 0, %s138
    %s140 = sphi 0, %s138
    %s141 = sphi 0, %s140
    %s155 = sphi 0, %s141
    %s159 = sphi 0, %s159
    %s161 = sphi 0, %s159
    %s162 = sphi 0, %s161
    %s176 = sphi 0, %s162
    %s180 = sphi 0, %s180
    %s182 = sphi 0, %s180
    %s183 = sphi 0, %s182
    %s197 = sphi 0, %s183
    %s201 = sphi 0, %s201
    %s203 = sphi 0, %s201
    %s204 = sphi 0, %s203
    %s218 = sphi 0, %s204
    %s222 = sphi 0, %s222
    %s224 = sphi 0, %s222
    %s225 = sphi 0, %s224
    %s239 = sphi 0, %s225
    %s243 = sphi 0, %s243
    %s245 = sphi 0, %s243
    %s246 = sphi 0, %s245
    %s260 = sphi 0, %s246
    %s264 = sphi 0, %s264
    %s266 = sphi 0, %s264
    %s267 = sphi 0, %s266
    %s281 = sphi 0, %s267
    %s285 = sphi 0, %s285
    %s287 = sphi 0, %s285
    %s288 = sphi 0, %s287
    %s302 = sphi 0, %s288
    %s306 = sphi 0, %s306
    %s308 = sphi 0, %s306
    %s309 = sphi 0, %s308
    %s323 = sphi 0, %s309
    %s327 = sphi 0, %s327
    %s329 = sphi 0, %s327
    %s330 = sphi 0, %s329
    %s344 = sphi 0, %s330
    %s348 = sphi 0, %s348
    %s350 = sphi 0, %s348
    %s351 = sphi 0, %s350
    %s365 = sphi 0, %s351
    %s369 = sphi 0, %s369
    %s371 = sphi 0, %s369
    %s372 = sphi 0, %s371
    %s386 = sphi 0, %s372
    %s394 = sphi 0, %s396
    %s397 = sphi 0, %s394
    %s398 = sphi 0, %s397
    %s414 = sphi 0, %s398
  $region4: #{ldtunet_forward.9} parent=0 // loop_header_branch
    %25 = sbr.rel (%p23) target = $region8
  $region5: #{ldtunet_forward.9} parent=0 // loop_body
    %s27 = ssub.s32 %s22, 1
    %s28 = ssub.s32 %s22, 2
    %s35 = sadd.s32 1, %s30
    %p36 = scmp.ge.s32.totalorder %s35, 1
    %s37 = scalar_select %p36, 0, %s35
    %s38 = sadd.s32 1, %s29
    %s39 = scalar_select %p36, %s38, %s29
    %p40 = scmp.ge.s32.totalorder %s39, 2
    %s41 = scalar_select %p40, 0, %s39
    %s42 = ssub.s32 %s29, %s41
    %s43 = ssub.s32 %s30, %s37
    %s44 = sor.u32 %s42, %s43
    %p45 = scmp.eq.s32.totalorder %s44, 0
    %s47 = sadd.s32 %s46, 1
    %s48 = scalar_select %p45, %s46, %s47
    %p51 = pneg %p45
    %p52 = scmp.eq.s32.totalorder %s22, 1
    %p53 = por %p51, %p52
    %p54 = scmp.ne.s32.totalorder %s46, %s49
    %p55 = scmp.eq.s32.totalorder %s22, 0
    %p56 = por %p54, %p55
    %p57 = scmp.ne.s32.totalorder %s46, %s49
    %p58 = scmp.eq.s32.totalorder %s27, 1
    %p59 = por %p57, %p58
    %p60 = scmp.ne.s32.totalorder %s49, %s50
    %p61 = scmp.eq.s32.totalorder %s27, 0
    %p62 = por %p60, %p61
    %p63 = scmp.ne.s32.totalorder %s49, %s50
    %p64 = scmp.eq.s32.totalorder %s28, 1
    %p65 = por %p63, %p64
    %p67 = scmp.ne.s32.totalorder %s50, %s66
    %p68 = scmp.eq.s32.totalorder %s28, 0
    %p69 = por %p67, %p68
    %s70 = ssub.s32 %s29, %s41
    %p71 = scmp.eq.s32.totalorder %s70, 0
    %s73 = sadd.s32 %s72, 1
    %s74 = scalar_select %p71, %s72, %s73
    %p77 = pneg %p71
    %p78 = scmp.eq.s32.totalorder %s22, 1
    %p79 = por %p77, %p78
    %p80 = scmp.ne.s32.totalorder %s72, %s75
    %p81 = scmp.eq.s32.totalorder %s22, 0
    %p82 = por %p80, %p81
    %p83 = scmp.ne.s32.totalorder %s72, %s75
    %p84 = scmp.eq.s32.totalorder %s27, 1
    %p85 = por %p83, %p84
    %p86 = scmp.ne.s32.totalorder %s75, %s76
    %p87 = scmp.eq.s32.totalorder %s27, 0
    %p88 = por %p86, %p87
    %p89 = scmp.ne.s32.totalorder %s75, %s76
    %p90 = scmp.eq.s32.totalorder %s28, 1
    %p91 = por %p89, %p90
    %p93 = scmp.ne.s32.totalorder %s76, %s92
    %p94 = scmp.eq.s32.totalorder %s28, 0
    %p95 = por %p93, %p94
    %s97 = sadd.s32 %s96, 1
    %p100 = scmp.eq.s32.totalorder %s22, 1
    %p101 = scmp.ne.s32.totalorder %s96, %s98
    %p102 = scmp.eq.s32.totalorder %s22, 0
    %p103 = por %p101, %p102
    %p104 = scmp.ne.s32.totalorder %s96, %s98
    %p105 = scmp.eq.s32.totalorder %s27, 1
    %p106 = por %p104, %p105
    %p107 = scmp.ne.s32.totalorder %s98, %s99
    %p108 = scmp.eq.s32.totalorder %s27, 0
    %p109 = por %p107, %p108
    %p110 = scmp.ne.s32.totalorder %s98, %s99
    %p111 = scmp.eq.s32.totalorder %s28, 1
    %p112 = por %p110, %p111
    %p114 = scmp.ne.s32.totalorder %s99, %s113
    %p115 = scmp.eq.s32.totalorder %s28, 0
    %p116 = por %p114, %p115
    %s118 = sadd.s32 %s117, 1
    %p121 = scmp.eq.s32.totalorder %s22, 1
    %p122 = scmp.ne.s32.totalorder %s117, %s119
    %p123 = scmp.eq.s32.totalorder %s22, 0
    %p124 = por %p122, %p123
    %p125 = scmp.ne.s32.totalorder %s117, %s119
    %p126 = scmp.eq.s32.totalorder %s27, 1
    %p127 = por %p125, %p126
    %p128 = scmp.ne.s32.totalorder %s119, %s120
    %p129 = scmp.eq.s32.totalorder %s27, 0
    %p130 = por %p128, %p129
    %p131 = scmp.ne.s32.totalorder %s119, %s120
    %p132 = scmp.eq.s32.totalorder %s28, 1
    %p133 = por %p131, %p132
    %p135 = scmp.ne.s32.totalorder %s120, %s134
    %p136 = scmp.eq.s32.totalorder %s28, 0
    %p137 = por %p135, %p136
    %s139 = sadd.s32 %s138, 1
    %p142 = scmp.eq.s32.totalorder %s22, 1
    %p143 = scmp.ne.s32.totalorder %s138, %s140
    %p144 = scmp.eq.s32.totalorder %s22, 0
    %p145 = por %p143, %p144
    %p146 = scmp.ne.s32.totalorder %s138, %s140
    %p147 = scmp.eq.s32.totalorder %s27, 1
    %p148 = por %p146, %p147
    %p149 = scmp.ne.s32.totalorder %s140, %s141
    %p150 = scmp.eq.s32.totalorder %s27, 0
    %p151 = por %p149, %p150
    %p152 = scmp.ne.s32.totalorder %s140, %s141
    %p153 = scmp.eq.s32.totalorder %s28, 1
    %p154 = por %p152, %p153
    %p156 = scmp.ne.s32.totalorder %s141, %s155
    %p157 = scmp.eq.s32.totalorder %s28, 0
    %p158 = por %p156, %p157
    %s160 = sadd.s32 %s159, 1
    %p163 = scmp.eq.s32.totalorder %s22, 1
    %p164 = scmp.ne.s32.totalorder %s159, %s161
    %p165 = scmp.eq.s32.totalorder %s22, 0
    %p166 = por %p164, %p165
    %p167 = scmp.ne.s32.totalorder %s159, %s161
    %p168 = scmp.eq.s32.totalorder %s27, 1
    %p169 = por %p167, %p168
    %p170 = scmp.ne.s32.totalorder %s161, %s162
    %p171 = scmp.eq.s32.totalorder %s27, 0
    %p172 = por %p170, %p171
    %p173 = scmp.ne.s32.totalorder %s161, %s162
    %p174 = scmp.eq.s32.totalorder %s28, 1
    %p175 = por %p173, %p174
    %p177 = scmp.ne.s32.totalorder %s162, %s176
    %p178 = scmp.eq.s32.totalorder %s28, 0
    %p179 = por %p177, %p178
    %s181 = sadd.s32 %s180, 1
    %p184 = scmp.eq.s32.totalorder %s22, 1
    %p185 = scmp.ne.s32.totalorder %s180, %s182
    %p186 = scmp.eq.s32.totalorder %s22, 0
    %p187 = por %p185, %p186
    %p188 = scmp.ne.s32.totalorder %s180, %s182
    %p189 = scmp.eq.s32.totalorder %s27, 1
    %p190 = por %p188, %p189
    %p191 = scmp.ne.s32.totalorder %s182, %s183
    %p192 = scmp.eq.s32.totalorder %s27, 0
    %p193 = por %p191, %p192
    %p194 = scmp.ne.s32.totalorder %s182, %s183
    %p195 = scmp.eq.s32.totalorder %s28, 1
    %p196 = por %p194, %p195
    %p198 = scmp.ne.s32.totalorder %s183, %s197
    %p199 = scmp.eq.s32.totalorder %s28, 0
    %p200 = por %p198, %p199
    %s202 = sadd.s32 %s201, 1
    %p205 = scmp.eq.s32.totalorder %s22, 1
    %p206 = scmp.ne.s32.totalorder %s201, %s203
    %p207 = scmp.eq.s32.totalorder %s22, 0
    %p208 = por %p206, %p207
    %p209 = scmp.ne.s32.totalorder %s201, %s203
    %p210 = scmp.eq.s32.totalorder %s27, 1
    %p211 = por %p209, %p210
    %p212 = scmp.ne.s32.totalorder %s203, %s204
    %p213 = scmp.eq.s32.totalorder %s27, 0
    %p214 = por %p212, %p213
    %p215 = scmp.ne.s32.totalorder %s203, %s204
    %p216 = scmp.eq.s32.totalorder %s28, 1
    %p217 = por %p215, %p216
    %p219 = scmp.ne.s32.totalorder %s204, %s218
    %p220 = scmp.eq.s32.totalorder %s28, 0
    %p221 = por %p219, %p220
    %s223 = sadd.s32 %s222, 1
    %p226 = scmp.eq.s32.totalorder %s22, 1
    %p227 = scmp.ne.s32.totalorder %s222, %s224
    %p228 = scmp.eq.s32.totalorder %s22, 0
    %p229 = por %p227, %p228
    %p230 = scmp.ne.s32.totalorder %s222, %s224
    %p231 = scmp.eq.s32.totalorder %s27, 1
    %p232 = por %p230, %p231
    %p233 = scmp.ne.s32.totalorder %s224, %s225
    %p234 = scmp.eq.s32.totalorder %s27, 0
    %p235 = por %p233, %p234
    %p236 = scmp.ne.s32.totalorder %s224, %s225
    %p237 = scmp.eq.s32.totalorder %s28, 1
    %p238 = por %p236, %p237
    %p240 = scmp.ne.s32.totalorder %s225, %s239
    %p241 = scmp.eq.s32.totalorder %s28, 0
    %p242 = por %p240, %p241
    %s244 = sadd.s32 %s243, 1
    %p247 = scmp.eq.s32.totalorder %s22, 1
    %p248 = scmp.ne.s32.totalorder %s243, %s245
    %p249 = scmp.eq.s32.totalorder %s22, 0
    %p250 = por %p248, %p249
    %p251 = scmp.ne.s32.totalorder %s243, %s245
    %p252 = scmp.eq.s32.totalorder %s27, 1
    %p253 = por %p251, %p252
    %p254 = scmp.ne.s32.totalorder %s245, %s246
    %p255 = scmp.eq.s32.totalorder %s27, 0
    %p256 = por %p254, %p255
    %p257 = scmp.ne.s32.totalorder %s245, %s246
    %p258 = scmp.eq.s32.totalorder %s28, 1
    %p259 = por %p257, %p258
    %p261 = scmp.ne.s32.totalorder %s246, %s260
    %p262 = scmp.eq.s32.totalorder %s28, 0
    %p263 = por %p261, %p262
    %s265 = sadd.s32 %s264, 1
    %p268 = scmp.eq.s32.totalorder %s22, 1
    %p269 = scmp.ne.s32.totalorder %s264, %s266
    %p270 = scmp.eq.s32.totalorder %s22, 0
    %p271 = por %p269, %p270
    %p272 = scmp.ne.s32.totalorder %s264, %s266
    %p273 = scmp.eq.s32.totalorder %s27, 1
    %p274 = por %p272, %p273
    %p275 = scmp.ne.s32.totalorder %s266, %s267
    %p276 = scmp.eq.s32.totalorder %s27, 0
    %p277 = por %p275, %p276
    %p278 = scmp.ne.s32.totalorder %s266, %s267
    %p279 = scmp.eq.s32.totalorder %s28, 1
    %p280 = por %p278, %p279
    %p282 = scmp.ne.s32.totalorder %s267, %s281
    %p283 = scmp.eq.s32.totalorder %s28, 0
    %p284 = por %p282, %p283
    %s286 = sadd.s32 %s285, 1
    %p289 = scmp.eq.s32.totalorder %s22, 1
    %p290 = scmp.ne.s32.totalorder %s285, %s287
    %p291 = scmp.eq.s32.totalorder %s22, 0
    %p292 = por %p290, %p291
    %p293 = scmp.ne.s32.totalorder %s285, %s287
    %p294 = scmp.eq.s32.totalorder %s27, 1
    %p295 = por %p293, %p294
    %p296 = scmp.ne.s32.totalorder %s287, %s288
    %p297 = scmp.eq.s32.totalorder %s27, 0
    %p298 = por %p296, %p297
    %p299 = scmp.ne.s32.totalorder %s287, %s288
    %p300 = scmp.eq.s32.totalorder %s28, 1
    %p301 = por %p299, %p300
    %p303 = scmp.ne.s32.totalorder %s288, %s302
    %p304 = scmp.eq.s32.totalorder %s28, 0
    %p305 = por %p303, %p304
    %s307 = sadd.s32 %s306, 1
    %p310 = scmp.eq.s32.totalorder %s22, 1
    %p311 = scmp.ne.s32.totalorder %s306, %s308
    %p312 = scmp.eq.s32.totalorder %s22, 0
    %p313 = por %p311, %p312
    %p314 = scmp.ne.s32.totalorder %s306, %s308
    %p315 = scmp.eq.s32.totalorder %s27, 1
    %p316 = por %p314, %p315
    %p317 = scmp.ne.s32.totalorder %s308, %s309
    %p318 = scmp.eq.s32.totalorder %s27, 0
    %p319 = por %p317, %p318
    %p320 = scmp.ne.s32.totalorder %s308, %s309
    %p321 = scmp.eq.s32.totalorder %s28, 1
    %p322 = por %p320, %p321
    %p324 = scmp.ne.s32.totalorder %s309, %s323
    %p325 = scmp.eq.s32.totalorder %s28, 0
    %p326 = por %p324, %p325
    %s328 = sadd.s32 %s327, 1
    %p331 = scmp.eq.s32.totalorder %s22, 1
    %p332 = scmp.ne.s32.totalorder %s327, %s329
    %p333 = scmp.eq.s32.totalorder %s22, 0
    %p334 = por %p332, %p333
    %p335 = scmp.ne.s32.totalorder %s327, %s329
    %p336 = scmp.eq.s32.totalorder %s27, 1
    %p337 = por %p335, %p336
    %p338 = scmp.ne.s32.totalorder %s329, %s330
    %p339 = scmp.eq.s32.totalorder %s27, 0
    %p340 = por %p338, %p339
    %p341 = scmp.ne.s32.totalorder %s329, %s330
    %p342 = scmp.eq.s32.totalorder %s28, 1
    %p343 = por %p341, %p342
    %p345 = scmp.ne.s32.totalorder %s330, %s344
    %p346 = scmp.eq.s32.totalorder %s28, 0
    %p347 = por %p345, %p346
    %s349 = sadd.s32 %s348, 1
    %p352 = scmp.eq.s32.totalorder %s22, 1
    %p353 = scmp.ne.s32.totalorder %s348, %s350
    %p354 = scmp.eq.s32.totalorder %s22, 0
    %p355 = por %p353, %p354
    %p356 = scmp.ne.s32.totalorder %s348, %s350
    %p357 = scmp.eq.s32.totalorder %s27, 1
    %p358 = por %p356, %p357
    %p359 = scmp.ne.s32.totalorder %s350, %s351
    %p360 = scmp.eq.s32.totalorder %s27, 0
    %p361 = por %p359, %p360
    %p362 = scmp.ne.s32.totalorder %s350, %s351
    %p363 = scmp.eq.s32.totalorder %s28, 1
    %p364 = por %p362, %p363
    %p366 = scmp.ne.s32.totalorder %s351, %s365
    %p367 = scmp.eq.s32.totalorder %s28, 0
    %p368 = por %p366, %p367
    %s370 = sadd.s32 %s369, 1
    %p373 = scmp.eq.s32.totalorder %s22, 1
    %p374 = scmp.ne.s32.totalorder %s369, %s371
    %p375 = scmp.eq.s32.totalorder %s22, 0
    %p376 = por %p374, %p375
    %p377 = scmp.ne.s32.totalorder %s369, %s371
    %p378 = scmp.eq.s32.totalorder %s27, 1
    %p379 = por %p377, %p378
    %p380 = scmp.ne.s32.totalorder %s371, %s372
    %p381 = scmp.eq.s32.totalorder %s27, 0
    %p382 = por %p380, %p381
    %p383 = scmp.ne.s32.totalorder %s371, %s372
    %p384 = scmp.eq.s32.totalorder %s28, 1
    %p385 = por %p383, %p384
    %p387 = scmp.ne.s32.totalorder %s372, %s386
    %p388 = scmp.eq.s32.totalorder %s28, 0
    %p389 = por %p387, %p388
    %s390 = ssub.s32 %s29, %s41
    %s391 = ssub.s32 %s30, %s37
    %s392 = sor.u32 %s390, %s391
    %p393 = scmp.eq.s32.totalorder %s392, 0
    %s395 = sadd.s32 %s394, 1
    %s396 = scalar_select %p393, %s394, %s395
    %p399 = pneg %p393
    %p400 = scmp.eq.s32.totalorder %s22, 1
    %p401 = por %p399, %p400
    %p402 = scmp.ne.s32.totalorder %s394, %s397
    %p403 = scmp.eq.s32.totalorder %s22, 0
    %p404 = por %p402, %p403
    %p405 = scmp.ne.s32.totalorder %s394, %s397
    %p406 = scmp.eq.s32.totalorder %s27, 1
    %p407 = por %p405, %p406
    %p408 = scmp.ne.s32.totalorder %s397, %s398
    %p409 = scmp.eq.s32.totalorder %s27, 0
    %p410 = por %p408, %p409
    %p411 = scmp.ne.s32.totalorder %s397, %s398
    %p412 = scmp.eq.s32.totalorder %s28, 1
    %p413 = por %p411, %p412
    %p415 = scmp.ne.s32.totalorder %s398, %s414
    %p416 = scmp.eq.s32.totalorder %s28, 0
    %p417 = por %p415, %p416
    %p418 = scmp.le.s32.totalorder 1, %s22
    %p419 = scmp.lt.s32.totalorder %s22, 3
    %p420 = pnand %p418, %p419
    %p421 = pneg %p420
    // Predicated region
    $region9: #{ldtunet_forward.9} parent=5 // pred_check
      _
    $region10: #{ldtunet_forward.9} parent=5 // pred_check_branch
      %423 = sbr.rel (%p420) target = $region12
    $region11: #{ldtunet_forward.9} parent=5 // pred_region
      %s424 = ssub.s32 %s22, 1
      // Predicated region
      $region13: #{ldtunet_forward.9} parent=11 // pred_check
        %p425 = pneg %p109
      $region14: #{ldtunet_forward.9} parent=11 // pred_check_branch
        %427 = sbr.rel (%p425) target = $region16
      $region15: #{ldtunet_forward.9} parent=11 // pred_region
        _
      $region16: #{ldtunet_forward.9} parent=11 // pred_fallthru
        _
      // Predicated region
      $region17: #{ldtunet_forward.9} parent=11 // pred_check
        %p428 = pneg %p130
      $region18: #{ldtunet_forward.9} parent=11 // pred_check_branch
        %430 = sbr.rel (%p428) target = $region20
      $region19: #{ldtunet_forward.9} parent=11 // pred_region
        _
      $region20: #{ldtunet_forward.9} parent=11 // pred_fallthru
        _
      // Predicated region
      $region21: #{ldtunet_forward.9} parent=11 // pred_check
        %p431 = pneg %p151
      $region22: #{ldtunet_forward.9} parent=11 // pred_check_branch
        %433 = sbr.rel (%p431) target = $region24
      $region23: #{ldtunet_forward.9} parent=11 // pred_region
        _
      $region24: #{ldtunet_forward.9} parent=11 // pred_fallthru
        _
      // Predicated region
      $region25: #{ldtunet_forward.9} parent=11 // pred_check
        %p434 = pneg %p172
      $region26: #{ldtunet_forward.9} parent=11 // pred_check_branch
        %436 = sbr.rel (%p434) target = $region28
      $region27: #{ldtunet_forward.9} parent=11 // pred_region
        _
      $region28: #{ldtunet_forward.9} parent=11 // pred_fallthru
        _
      // Predicated region
      $region29: #{ldtunet_forward.9} parent=11 // pred_check
        %p437 = pneg %p193
      $region30: #{ldtunet_forward.9} parent=11 // pred_check_branch
        %439 = sbr.rel (%p437) target = $region32
      $region31: #{ldtunet_forward.9} parent=11 // pred_region
        _
      $region32: #{ldtunet_forward.9} parent=11 // pred_fallthru
        _
      // Predicated region
      $region33: #{ldtunet_forward.9} parent=11 // pred_check
        %p440 = pneg %p214
      $region34: #{ldtunet_forward.9} parent=11 // pred_check_branch
        %442 = sbr.rel (%p440) target = $region36
      $region35: #{ldtunet_forward.9} parent=11 // pred_region
        _
      $region36: #{ldtunet_forward.9} parent=11 // pred_fallthru
        _
      // Predicated region
      $region37: #{ldtunet_forward.9} parent=11 // pred_check
        %p443 = pneg %p235
      $region38: #{ldtunet_forward.9} parent=11 // pred_check_branch
        %445 = sbr.rel (%p443) target = $region40
      $region39: #{ldtunet_forward.9} parent=11 // pred_region
        _
      $region40: #{ldtunet_forward.9} parent=11 // pred_fallthru
        _
      // Predicated region
      $region41: #{ldtunet_forward.9} parent=11 // pred_check
        %p446 = pneg %p256
      $region42: #{ldtunet_forward.9} parent=11 // pred_check_branch
        %448 = sbr.rel (%p446) target = $region44
      $region43: #{ldtunet_forward.9} parent=11 // pred_region
        _
      $region44: #{ldtunet_forward.9} parent=11 // pred_fallthru
        _
      // Predicated region
      $region45: #{ldtunet_forward.9} parent=11 // pred_check
        %p449 = pneg %p277
      $region46: #{ldtunet_forward.9} parent=11 // pred_check_branch
        %451 = sbr.rel (%p449) target = $region48
      $region47: #{ldtunet_forward.9} parent=11 // pred_region
        _
      $region48: #{ldtunet_forward.9} parent=11 // pred_fallthru
        _
      // Predicated region
      $region49: #{ldtunet_forward.9} parent=11 // pred_check
        %p452 = pneg %p298
      $region50: #{ldtunet_forward.9} parent=11 // pred_check_branch
        %454 = sbr.rel (%p452) target = $region52
      $region51: #{ldtunet_forward.9} parent=11 // pred_region
        _
      $region52: #{ldtunet_forward.9} parent=11 // pred_fallthru
        _
      // Predicated region
      $region53: #{ldtunet_forward.9} parent=11 // pred_check
        %p455 = pneg %p319
      $region54: #{ldtunet_forward.9} parent=11 // pred_check_branch
        %457 = sbr.rel (%p455) target = $region56
      $region55: #{ldtunet_forward.9} parent=11 // pred_region
        _
      $region56: #{ldtunet_forward.9} parent=11 // pred_fallthru
        _
      // Predicated region
      $region57: #{ldtunet_forward.9} parent=11 // pred_check
        %p458 = pneg %p340
      $region58: #{ldtunet_forward.9} parent=11 // pred_check_branch
        %460 = sbr.rel (%p458) target = $region60
      $region59: #{ldtunet_forward.9} parent=11 // pred_region
        _
      $region60: #{ldtunet_forward.9} parent=11 // pred_fallthru
        _
      // Predicated region
      $region61: #{ldtunet_forward.9} parent=11 // pred_check
        %p461 = pneg %p361
      $region62: #{ldtunet_forward.9} parent=11 // pred_check_branch
        %463 = sbr.rel (%p461) target = $region64
      $region63: #{ldtunet_forward.9} parent=11 // pred_region
        _
      $region64: #{ldtunet_forward.9} parent=11 // pred_fallthru
        _
      // Predicated region
      $region65: #{ldtunet_forward.9} parent=11 // pred_check
        %p464 = pneg %p382
      $region66: #{ldtunet_forward.9} parent=11 // pred_check_branch
        %466 = sbr.rel (%p464) target = $region68
      $region67: #{ldtunet_forward.9} parent=11 // pred_region
        _
      $region68: #{ldtunet_forward.9} parent=11 // pred_fallthru
        _
    $region12: #{ldtunet_forward.9} parent=5 // pred_fallthru
      _
    %p467 = scmp.lt.s32.totalorder %s22, 2
    // Predicated region
    $region69: #{ldtunet_forward.9} parent=5 // pred_check
      %p468 = pneg %p467
    $region70: #{ldtunet_forward.9} parent=5 // pred_check_branch
      %470 = sbr.rel (%p468) target = $region72
    $region71: #{ldtunet_forward.9} parent=5 // pred_region
      // Predicated region
      $region73: #{ldtunet_forward.9} parent=71 // pred_check
        %p471 = pneg %p56
      $region74: #{ldtunet_forward.9} parent=71 // pred_check_branch
        %473 = sbr.rel (%p471) target = $region76
      $region75: #{ldtunet_forward.9} parent=71 // pred_region
        %s474 = smul.u32 2, %s30
        %p475 = scmp.lt.s32.totalorder %s29, 1
        %s476 = scalar_select %p475, %s29, 1
        %p477 = scmp.lt.s32.totalorder %s474, 1
        %s478 = scalar_select %p477, %s474, 1
        %s479 = smul.addr %s476, 2
        %s480 = sadd.s32 %s478, %s479
        %s481 = smul.addr %s480, 4
        %s482 = scalar_lea.vmem %s0, %s481
        %s483 = smul.u32 2, %s30
      $region76: #{ldtunet_forward.9} parent=71 // pred_fallthru
        _
      // Predicated region
      $region77: #{ldtunet_forward.9} parent=71 // pred_check
        %p484 = pneg %p82
      $region78: #{ldtunet_forward.9} parent=71 // pred_check_branch
        %486 = sbr.rel (%p484) target = $region80
      $region79: #{ldtunet_forward.9} parent=71 // pred_region
        %p487 = scmp.lt.s32.totalorder %s29, 1
        %s488 = scalar_select %p487, %s29, 1
        %s489 = smul.addr %s488, 2
        %s490 = smul.addr %s489, 4
        %s491 = scalar_lea.vmem %s1, %s490
      $region80: #{ldtunet_forward.9} parent=71 // pred_fallthru
        _
    $region72: #{ldtunet_forward.9} parent=5 // pred_fallthru
      _
    %p492 = scmp.le.s32.totalorder 1, %s22
    %p493 = scmp.lt.s32.totalorder %s22, 3
    %p494 = pnand %p492, %p493
    %p495 = pneg %p494
    // Predicated region
    $region81: #{ldtunet_forward.9} parent=5 // pred_check
      _
    $region82: #{ldtunet_forward.9} parent=5 // pred_check_branch
      %497 = sbr.rel (%p494) target = $region84
    $region83: #{ldtunet_forward.9} parent=5 // pred_region
      %s498 = ssub.s32 %s22, 1
      %s499 = smul.u32 2, %s32
      %p500 = scmp.lt.s32.totalorder %s31, 1
      %s501 = scalar_select %p500, %s31, 1
      %p502 = scmp.lt.s32.totalorder %s499, 1
      %s503 = scalar_select %p502, %s499, 1
      %s504 = smul.addr %s501, 2
      %s505 = sadd.s32 %s503, %s504
      %s506 = smul.addr %s505, 4
      %s507 = scalar_lea.vmem %s0, %s506
      %p508 = pneg %p62
      %p509 = pneg %p59
      %p510 = scmp.lt.s32.totalorder %s31, 1
      %s511 = scalar_select %p510, %s31, 1
      %s512 = smul.addr %s511, 2
      %s513 = smul.addr %s512, 4
      %s514 = scalar_lea.vmem %s1, %s513
      %p515 = pneg %p88
      %p516 = pneg %p85
      %p517 = pneg %p109
      %p518 = pneg %p106
      %p519 = pneg %p130
      %p520 = pneg %p127
      %p521 = pneg %p151
      %p522 = pneg %p148
      %p523 = pneg %p172
      %p524 = pneg %p169
      %p525 = pneg %p193
      %p526 = pneg %p190
      %p527 = pneg %p214
      %p528 = pneg %p211
      %p529 = pneg %p235
      %p530 = pneg %p232
      %p531 = pneg %p256
      %p532 = pneg %p253
      %p533 = pneg %p277
      %p534 = pneg %p274
      %p535 = pneg %p298
      %p536 = pneg %p295
      %p537 = pneg %p319
      %p538 = pneg %p316
      %p539 = pneg %p340
      %p540 = pneg %p337
      %p541 = pneg %p361
      %p542 = pneg %p358
      %p543 = pneg %p382
      %p544 = pneg %p379
      %p545 = pneg %p410
      %p546 = pneg %p407
      %s547 = smul.u32 2, %s32
      %p548 = scmp.lt.s32.totalorder %s31, 1
      %s549 = scalar_select %p548, %s31, 1
      %p550 = scmp.lt.s32.totalorder %s547, 1
      %s551 = scalar_select %p550, %s547, 1
      %s552 = smul.addr %s549, 2
      %s553 = sadd.s32 %s551, %s552
      %s554 = smul.addr %s553, 4
      %s555 = scalar_lea.vmem %s16, %s554
      %s556 = smul.u32 2, %s32
      %p557 = scmp.lt.s32.totalorder %s31, 1
      %s558 = scalar_select %p557, %s31, 1
      %p559 = scmp.lt.s32.totalorder %s556, 1
      %s560 = scalar_select %p559, %s556, 1
      %s561 = smul.addr %s558, 2
      %s562 = sadd.s32 %s560, %s561
      %s563 = smul.addr %s562, 4
      %s564 = scalar_lea.vmem %s0, %s563
      %s565 = smul.u32 2, %s32
      %p566 = scmp.lt.s32.totalorder %s31, 1
      %s567 = scalar_select %p566, %s31, 1
      %s568 = smul.addr %s567, 2
      %s569 = smul.addr %s568, 4
      %s570 = scalar_lea.vmem %s1, %s569
      %s571 = smul.u32 2, %s32
      %p572 = scmp.lt.s32.totalorder %s31, 1
      %s573 = scalar_select %p572, %s31, 1
      %p574 = scmp.lt.s32.totalorder %s571, 1
      %s575 = scalar_select %p574, %s571, 1
      %s576 = smul.addr %s573, 2
      %s577 = sadd.s32 %s575, %s576
      %s578 = smul.addr %s577, 4
      %s579 = scalar_lea.vmem %s16, %s578
      %s580 = smul.u32 2, %s32
      %v582 = vld [vmem:[%s564] sm:$0xf]
      %v583 = vld [vmem:[%s564 + $0x4] sm:$0xf]
      %v584 = vunpack.c.l.bf16 %v582
      %v585 = vunpack.c.l.bf16 %v583
      %v586 = vld [vmem:[%s570] sm:$0xf]
      %v587 = vld [vmem:[%s570 + $0x4] sm:$0xf]
      %v588 = vunpack.c.l.bf16 %v586
      %v589 = vunpack.c.l.bf16 %v587
      %v590 = vld [vmem:[%s2] sm:$0x1]
      %v591 = vld [vmem:[%s3] sm:$0x1]
      %vm592 = vcmask 261120
      %v593 = vsel %vm592, %v584, 0.0
      %594 = vadd.xlane.f32.xlu0 %v593
      %v595 = vpop.xlane.xlu0 %594
      %v596 = vsel %vm592, %v585, 0.0
      %597 = vadd.xlane.f32.xlu0 %v596
      %v598 = vpop.xlane.xlu0 %597
      %v599 = vrcp.pop 32.0
      %v600 = vmul.f32 %v595, %v599
      %v601 = vmul.f32 %v598, %v599
      %v602 = vsub.f32 %v584, %v600
      %v603 = vsub.f32 %v585, %v601
      %v604 = vmul.f32 %v602, %v602
      %v605 = vmul.f32 %v603, %v603
      %v606 = vsel %vm592, %v604, 0.0
      %607 = vadd.xlane.f32.xlu0 %v606
      %v608 = vpop.xlane.xlu0 %607
      %v609 = vsel %vm592, %v605, 0.0
      %610 = vadd.xlane.f32.xlu0 %v609
      %v611 = vpop.xlane.xlu0 %610
      %v612 = vmul.f32 %v608, %v599
      %v613 = vmul.f32 %v611, %v599
      %v614 = vadd.f32 %v612, 1e-05
      %v615 = vadd.f32 %v613, 1e-05
      %v616 = vrsqrt.pop %v614
      %v617 = vrsqrt.pop %v615
      %v618 = vmul.f32 %v602, %v616
      %v619 = vmul.f32 %v603, %v617
      %v621 = vlaneseq
      %v622 = vshrl.u32 %v621, 7
      %v623 = vsub.s32 0, %v622
      %v624 = vrot.slane %v590, %v623
      %v626 = vmul.f32 %v618, %v624
      %v627 = vmul.f32 %v619, %v624
      %v629 = vlaneseq
      %v630 = vshrl.u32 %v629, 7
      %v631 = vsub.s32 0, %v630
      %v632 = vrot.slane %v591, %v631
      %v634 = vadd.f32 %v626, %v632
      %v635 = vadd.f32 %v627, %v632
      %v636 = vpack.c.bf16 %v635, %v634
      %v637 = vsel %vm592, %v588, 0.0
      %638 = vadd.xlane.f32.xlu0 %v637
      %v639 = vpop.xlane.xlu0 %638
      %v640 = vsel %vm592, %v589, 0.0
      %641 = vadd.xlane.f32.xlu0 %v640
      %v642 = vpop.xlane.xlu0 %641
      %v643 = vmul.f32 %v639, %v599
      %v644 = vmul.f32 %v642, %v599
      %v645 = vsub.f32 %v588, %v643
      %v646 = vsub.f32 %v589, %v644
      %v647 = vmul.f32 %v645, %v645
      %v648 = vmul.f32 %v646, %v646
      %v649 = vsel %vm592, %v647, 0.0
      %650 = vadd.xlane.f32.xlu0 %v649
      %v651 = vpop.xlane.xlu0 %650
      %v652 = vsel %vm592, %v648, 0.0
      %653 = vadd.xlane.f32.xlu0 %v652
      %v654 = vpop.xlane.xlu0 %653
      %v655 = vmul.f32 %v651, %v599
      %v656 = vmul.f32 %v654, %v599
      %v657 = vadd.f32 %v655, 1e-05
      %v658 = vadd.f32 %v656, 1e-05
      %v659 = vrsqrt.pop %v657
      %v660 = vrsqrt.pop %v658
      %v661 = vmul.f32 %v645, %v659
      %v662 = vmul.f32 %v646, %v660
      %v663 = vmul.f32 %v661, %v624
      %v664 = vmul.f32 %v662, %v624
      %v665 = vadd.f32 %v663, %v632
      %v666 = vadd.f32 %v664, %v632
      %v667 = vpack.c.bf16 %v666, %v665
      %v668 = vld [vmem:[%s4] sm:$0xf]
      %v669 = vld [vmem:[%s4 + $0x4] sm:$0xf]
      %v670 = vld [vmem:[%s4 + $0x8] sm:$0xf]
      %v671 = vld [vmem:[%s4 + $0xc] sm:$0xf]
      %v672 = vld [vmem:[%s5] sm:$0x1]
      %v674 = vlaneseq
      %v675 = vshrl.u32 %v674, 7
      %v676 = vsub.s32 0, %v675
      %v677 = vrot.slane %v672, %v676
      %v683 = vunpack.c.l.b16 %v668
      %v684 = vunpack.c.l.b16 %v669
      %v685 = vunpack.c.l.b16 %v670
      %v686 = vunpack.c.l.b16 %v671
      %v687 = vpack.c.b16 %v684, %v683
      %v688 = vpack.c.b16 %v686, %v685
      %v692 = vsel %vm592, %v636, 0
      %694 = vmatprep.subr.bf16.mxu0 0
      %695 = vmatpush1.bf16.msra.mxu0 %v687
      %696 = vmatprep.subr.bf16.mxu0 0
      %697 = vmatpush1.bf16.msra.mxu0 %v688
      %698 = vmatprep.subr.bf16.mxu0 0
      %699 = vmatpush1.bf16.msra.mxu0 0
      %700 = vmatprep.subr.bf16.mxu0 0
      %701 = vmatpush1.bf16.msra.mxu0 0
      %702 = vmatprep.subr.bf16.mxu0 0
      %703 = vmatpush1.bf16.msra.mxu0 0
      %704 = vmatprep.subr.bf16.mxu0 0
      %705 = vmatpush1.bf16.msra.mxu0 0
      %706 = vmatprep.subr.bf16.mxu0 0
      %707 = vmatpush1.bf16.msra.mxu0 0
      %708 = vmatprep.subr.bf16.mxu0 0
      %709 = vmatpush1.bf16.msra.mxu0 0
      %710 = vmatprep.subr.bf16.mxu0 0
      %711 = vmatpush1.bf16.msra.mxu0 0
      %712 = vmatprep.subr.bf16.mxu0 0
      %713 = vmatpush1.bf16.msra.mxu0 0
      %714 = vmatprep.subr.bf16.mxu0 0
      %715 = vmatpush1.bf16.msra.mxu0 0
      %716 = vmatprep.subr.bf16.mxu0 0
      %717 = vmatpush1.bf16.msra.mxu0 0
      %718 = vmatprep.subr.bf16.mxu0 0
      %719 = vmatpush1.bf16.msra.mxu0 0
      %720 = vmatprep.subr.bf16.mxu0 0
      %721 = vmatpush1.bf16.msra.mxu0 0
      %722 = vmatprep.subr.bf16.mxu0 0
      %723 = vmatpush1.bf16.msra.mxu0 0
      %724 = vmatprep.subr.bf16.mxu0 0
      %725 = vmatpush1.bf16.msra.mxu0 0
      %726 = vmatprep.mubr.bf16.mxu0 0
      %727 = vmatmul.mubr.bf16.gmra.mrb[0].mxu0 %v692
      %v728 = vpop.f32.mrb[0].mxu0
      %v729 = vadd.f32 %v677, %v728
      %v730 = vpop.f32.mrb[0].mxu0
      %v731 = vpop.f32.mrb[0].mxu0
      %v732 = vadd.f32 %v677, %v731
      %v733 = vpop.f32.mrb[0].mxu0
      %734 = vdwg.mxu0
      %v735 = vld [vmem:[%s6] sm:$0xf]
      %v736 = vld [vmem:[%s6 + $0x4] sm:$0xf]
      %v737 = vld [vmem:[%s6 + $0x8] sm:$0xf]
      %v738 = vld [vmem:[%s6 + $0xc] sm:$0xf]
      %v739 = vld [vmem:[%s7] sm:$0x1]
      %v741 = vlaneseq
      %v742 = vshrl.u32 %v741, 7
      %v743 = vsub.s32 0, %v742
      %v744 = vrot.slane %v739, %v743
      %v750 = vunpack.c.l.b16 %v735
      %v751 = vunpack.c.l.b16 %v736
      %v752 = vunpack.c.l.b16 %v737
      %v753 = vunpack.c.l.b16 %v738
      %v754 = vpack.c.b16 %v751, %v750
      %v755 = vpack.c.b16 %v753, %v752
      %v759 = vsel %vm592, %v667, 0
      %761 = vmatprep.subr.bf16.mxu0 0
      %762 = vmatpush1.bf16.msra.mxu0 %v754
      %763 = vmatprep.subr.bf16.mxu0 0
      %764 = vmatpush1.bf16.msra.mxu0 %v755
      %765 = vmatprep.subr.bf16.mxu0 0
      %766 = vmatpush1.bf16.msra.mxu0 0
      %767 = vmatprep.subr.bf16.mxu0 0
      %768 = vmatpush1.bf16.msra.mxu0 0
      %769 = vmatprep.subr.bf16.mxu0 0
      %770 = vmatpush1.bf16.msra.mxu0 0
      %771 = vmatprep.subr.bf16.mxu0 0
      %772 = vmatpush1.bf16.msra.mxu0 0
      %773 = vmatprep.subr.bf16.mxu0 0
      %774 = vmatpush1.bf16.msra.mxu0 0
      %775 = vmatprep.subr.bf16.mxu0 0
      %776 = vmatpush1.bf16.msra.mxu0 0
      %777 = vmatprep.subr.bf16.mxu0 0
      %778 = vmatpush1.bf16.msra.mxu0 0
      %779 = vmatprep.subr.bf16.mxu0 0
      %780 = vmatpush1.bf16.msra.mxu0 0
      %781 = vmatprep.subr.bf16.mxu0 0
      %782 = vmatpush1.bf16.msra.mxu0 0
      %783 = vmatprep.subr.bf16.mxu0 0
      %784 = vmatpush1.bf16.msra.mxu0 0
      %785 = vmatprep.subr.bf16.mxu0 0
      %786 = vmatpush1.bf16.msra.mxu0 0
      %787 = vmatprep.subr.bf16.mxu0 0
      %788 = vmatpush1.bf16.msra.mxu0 0
      %789 = vmatprep.subr.bf16.mxu0 0
      %790 = vmatpush1.bf16.msra.mxu0 0
      %791 = vmatprep.subr.bf16.mxu0 0
      %792 = vmatpush1.bf16.msra.mxu0 0
      %793 = vmatprep.mubr.bf16.mxu0 0
      %794 = vmatmul.mubr.bf16.gmra.mrb[0].mxu0 %v759
      %v795 = vpop.f32.mrb[0].mxu0
      %v796 = vadd.f32 %v744, %v795
      %v797 = vpop.f32.mrb[0].mxu0
      %v798 = vpop.f32.mrb[0].mxu0
      %v799 = vadd.f32 %v744, %v798
      %v800 = vpop.f32.mrb[0].mxu0
      %801 = vdwg.mxu0
      %804 = vrot.lane.b32.xlu0 %v729, 120
      %v805 = vpop.permute.xlu0 %804
      %806 = vrot.lane.b32.xlu0 %v732, 120
      %v807 = vpop.permute.xlu0 %806
      %810 = vrot.lane.b32.xlu0 %v729, 112
      %v811 = vpop.permute.xlu0 %810
      %812 = vrot.lane.b32.xlu0 %v732, 112
      %v813 = vpop.permute.xlu0 %812
      %816 = vrot.lane.b32.xlu0 %v729, 104
      %v817 = vpop.permute.xlu0 %816
      %818 = vrot.lane.b32.xlu0 %v732, 104
      %v819 = vpop.permute.xlu0 %818
      %v822 = vpack.c.bf16 %v732, %v729
      %v823 = vpack.c.bf16 %v807, %v805
      %v824 = vpack.c.bf16 %v813, %v811
      %v825 = vpack.c.bf16 %v819, %v817
      %828 = vrot.lane.b32.xlu0 %v796, 120
      %v829 = vpop.permute.xlu0 %828
      %830 = vrot.lane.b32.xlu0 %v799, 120
      %v831 = vpop.permute.xlu0 %830
      %834 = vrot.lane.b32.xlu0 %v796, 112
      %v835 = vpop.permute.xlu0 %834
      %836 = vrot.lane.b32.xlu0 %v799, 112
      %v837 = vpop.permute.xlu0 %836
      %840 = vrot.lane.b32.xlu0 %v796, 104
      %v841 = vpop.permute.xlu0 %840
      %842 = vrot.lane.b32.xlu0 %v799, 104
      %v843 = vpop.permute.xlu0 %842
      %v846 = vpack.c.bf16 %v799, %v796
      %v847 = vpack.c.bf16 %v831, %v829
      %v848 = vpack.c.bf16 %v837, %v835
      %v849 = vpack.c.bf16 %v843, %v841
      %vm850 = vcmask 64512
      %v852 = vsel %vm850, %v822, 0
      %v855 = vsel %vm850, %v846, 0
      %857 = vmatprep.subr.bf16.mxu0 0
      %858 = vmatpush1.bf16.xpose.msra.mxu0 %v855
      %859 = vmatprep.subr.bf16.mxu0 0
      %860 = vmatpush1.bf16.xpose.msra.mxu0 0
      %861 = vmatprep.subr.bf16.mxu0 0
      %862 = vmatpush1.bf16.xpose.msra.mxu0 0
      %863 = vmatprep.subr.bf16.mxu0 0
      %864 = vmatpush1.bf16.xpose.msra.mxu0 0
      %865 = vmatprep.subr.bf16.mxu0 0
      %866 = vmatpush1.bf16.xpose.msra.mxu0 0
      %867 = vmatprep.subr.bf16.mxu0 0
      %868 = vmatpush1.bf16.xpose.msra.mxu0 0
      %869 = vmatprep.subr.bf16.mxu0 0
      %870 = vmatpush1.bf16.xpose.msra.mxu0 0
      %871 = vmatprep.subr.bf16.mxu0 0
      %872 = vmatpush1.bf16.xpose.msra.mxu0 0
      %873 = vmatprep.subr.bf16.mxu0 0
      %874 = vmatpush1.bf16.xpose.msra.mxu0 0
      %875 = vmatprep.subr.bf16.mxu0 0
      %876 = vmatpush1.bf16.xpose.msra.mxu0 0
      %877 = vmatprep.subr.bf16.mxu0 0
      %878 = vmatpush1.bf16.xpose.msra.mxu0 0
      %879 = vmatprep.subr.bf16.mxu0 0
      %880 = vmatpush1.bf16.xpose.msra.mxu0 0
      %881 = vmatprep.subr.bf16.mxu0 0
      %882 = vmatpush1.bf16.xpose.msra.mxu0 0
      %883 = vmatprep.subr.bf16.mxu0 0
      %884 = vmatpush1.bf16.xpose.msra.mxu0 0
      %885 = vmatprep.subr.bf16.mxu0 0
      %886 = vmatpush1.bf16.xpose.msra.mxu0 0
      %887 = vmatprep.subr.bf16.mxu0 0
      %888 = vmatpush1.bf16.xpose.msra.mxu0 0
      %889 = vmatprep.mubr.bf16.mxu0 0
      %890 = vmatmul.mubr.bf16.gmra.mrb[0].mxu0 %v852
      %v891 = vpop.f32.mrb[0].mxu0
      %v892 = vadd.f32 0.0, %v891
      %v893 = vpop.f32.mrb[0].mxu0
      %v894 = vpop.f32.mrb[0].mxu0
      %v895 = vadd.f32 0.0, %v894
      %v896 = vpop.f32.mrb[0].mxu0
      %897 = vdwg.mxu0
      %v899 = vsel %vm850, %v823, 0
      %v902 = vsel %vm850, %v847, 0
      %904 = vmatprep.subr.bf16.mxu0 0
      %905 = vmatpush1.bf16.xpose.msra.mxu0 %v902
      %906 = vmatprep.subr.bf16.mxu0 0
      %907 = vmatpush1.bf16.xpose.msra.mxu0 0
      %908 = vmatprep.subr.bf16.mxu0 0
      %909 = vmatpush1.bf16.xpose.msra.mxu0 0
      %910 = vmatprep.subr.bf16.mxu0 0
      %911 = vmatpush1.bf16.xpose.msra.mxu0 0
      %912 = vmatprep.subr.bf16.mxu0 0
      %913 = vmatpush1.bf16.xpose.msra.mxu0 0
      %914 = vmatprep.subr.bf16.mxu0 0
      %915 = vmatpush1.bf16.xpose.msra.mxu0 0
      %916 = vmatprep.subr.bf16.mxu0 0
      %917 = vmatpush1.bf16.xpose.msra.mxu0 0
      %918 = vmatprep.subr.bf16.mxu0 0
      %919 = vmatpush1.bf16.xpose.msra.mxu0 0
      %920 = vmatprep.subr.bf16.mxu0 0
      %921 = vmatpush1.bf16.xpose.msra.mxu0 0
      %922 = vmatprep.subr.bf16.mxu0 0
      %923 = vmatpush1.bf16.xpose.msra.mxu0 0
      %924 = vmatprep.subr.bf16.mxu0 0
      %925 = vmatpush1.bf16.xpose.msra.mxu0 0
      %926 = vmatprep.subr.bf16.mxu0 0
      %927 = vmatpush1.bf16.xpose.msra.mxu0 0
      %928 = vmatprep.subr.bf16.mxu0 0
      %929 = vmatpush1.bf16.xpose.msra.mxu0 0
      %930 = vmatprep.subr.bf16.mxu0 0
      %931 = vmatpush1.bf16.xpose.msra.mxu0 0
      %932 = vmatprep.subr.bf16.mxu0 0
      %933 = vmatpush1.bf16.xpose.msra.mxu0 0
      %934 = vmatprep.subr.bf16.mxu0 0
      %935 = vmatpush1.bf16.xpose.msra.mxu0 0
      %936 = vmatprep.mubr.bf16.mxu0 0
      %937 = vmatmul.mubr.bf16.gmra.mrb[0].mxu0 %v899
      %v938 = vpop.f32.mrb[0].mxu0
      %v939 = vadd.f32 0.0, %v938
      %v940 = vpop.f32.mrb[0].mxu0
      %v941 = vpop.f32.mrb[0].mxu0
      %v942 = vadd.f32 0.0, %v941
      %v943 = vpop.f32.mrb[0].mxu0
      %944 = vdwg.mxu0
      %v946 = vsel %vm850, %v824, 0
      %v949 = vsel %vm850, %v848, 0
      %951 = vmatprep.subr.bf16.mxu0 0
      %952 = vmatpush1.bf16.xpose.msra.mxu0 %v949
      %953 = vmatprep.subr.bf16.mxu0 0
      %954 = vmatpush1.bf16.xpose.msra.mxu0 0
      %955 = vmatprep.subr.bf16.mxu0 0
      %956 = vmatpush1.bf16.xpose.msra.mxu0 0
      %957 = vmatprep.subr.bf16.mxu0 0
      %958 = vmatpush1.bf16.xpose.msra.mxu0 0
      %959 = vmatprep.subr.bf16.mxu0 0
      %960 = vmatpush1.bf16.xpose.msra.mxu0 0
      %961 = vmatprep.subr.bf16.mxu0 0
      %962 = vmatpush1.bf16.xpose.msra.mxu0 0
      %963 = vmatprep.subr.bf16.mxu0 0
      %964 = vmatpush1.bf16.xpose.msra.mxu0 0
      %965 = vmatprep.subr.bf16.mxu0 0
      %966 = vmatpush1.bf16.xpose.msra.mxu0 0
      %967 = vmatprep.subr.bf16.mxu0 0
      %968 = vmatpush1.bf16.xpose.msra.mxu0 0
      %969 = vmatprep.subr.bf16.mxu0 0
      %970 = vmatpush1.bf16.xpose.msra.mxu0 0
      %971 = vmatprep.subr.bf16.mxu0 0
      %972 = vmatpush1.bf16.xpose.msra.mxu0 0
      %973 = vmatprep.subr.bf16.mxu0 0
      %974 = vmatpush1.bf16.xpose.msra.mxu0 0
      %975 = vmatprep.subr.bf16.mxu0 0
      %976 = vmatpush1.bf16.xpose.msra.mxu0 0
      %977 = vmatprep.subr.bf16.mxu0 0
      %978 = vmatpush1.bf16.xpose.msra.mxu0 0
      %979 = vmatprep.subr.bf16.mxu0 0
      %980 = vmatpush1.bf16.xpose.msra.mxu0 0
      %981 = vmatprep.subr.bf16.mxu0 0
      %982 = vmatpush1.bf16.xpose.msra.mxu0 0
      %983 = vmatprep.mubr.bf16.mxu0 0
      %984 = vmatmul.mubr.bf16.gmra.mrb[0].mxu0 %v946
      %v985 = vpop.f32.mrb[0].mxu0
      %v986 = vadd.f32 0.0, %v985
      %v987 = vpop.f32.mrb[0].mxu0
      %v988 = vpop.f32.mrb[0].mxu0
      %v989 = vadd.f32 0.0, %v988
      %v990 = vpop.f32.mrb[0].mxu0
      %991 = vdwg.mxu0
      %v993 = vsel %vm850, %v825, 0
      %v996 = vsel %vm850, %v849, 0
      %998 = vmatprep.subr.bf16.mxu0 0
      %999 = vmatpush1.bf16.xpose.msra.mxu0 %v996
      %1000 = vmatprep.subr.bf16.mxu0 0
      %1001 = vmatpush1.bf16.xpose.msra.mxu0 0
      %1002 = vmatprep.subr.bf16.mxu0 0
      %1003 = vmatpush1.bf16.xpose.msra.mxu0 0
      %1004 = vmatprep.subr.bf16.mxu0 0
      %1005 = vmatpush1.bf16.xpose.msra.mxu0 0
      %1006 = vmatprep.subr.bf16.mxu0 0
      %1007 = vmatpush1.bf16.xpose.msra.mxu0 0
      %1008 = vmatprep.subr.bf16.mxu0 0
      %1009 = vmatpush1.bf16.xpose.msra.mxu0 0
      %1010 = vmatprep.subr.bf16.mxu0 0
      %1011 = vmatpush1.bf16.xpose.msra.mxu0 0
      %1012 = vmatprep.subr.bf16.mxu0 0
      %1013 = vmatpush1.bf16.xpose.msra.mxu0 0
      %1014 = vmatprep.subr.bf16.mxu0 0
      %1015 = vmatpush1.bf16.xpose.msra.mxu0 0
      %1016 = vmatprep.subr.bf16.mxu0 0
      %1017 = vmatpush1.bf16.xpose.msra.mxu0 0
      %1018 = vmatprep.subr.bf16.mxu0 0
      %1019 = vmatpush1.bf16.xpose.msra.mxu0 0
      %1020 = vmatprep.subr.bf16.mxu0 0
      %1021 = vmatpush1.bf16.xpose.msra.mxu0 0
      %1022 = vmatprep.subr.bf16.mxu0 0
      %1023 = vmatpush1.bf16.xpose.msra.mxu0 0
      %1024 = vmatprep.subr.bf16.mxu0 0
      %1025 = vmatpush1.bf16.xpose.msra.mxu0 0
      %1026 = vmatprep.subr.bf16.mxu0 0
      %1027 = vmatpush1.bf16.xpose.msra.mxu0 0
      %1028 = vmatprep.subr.bf16.mxu0 0
      %1029 = vmatpush1.bf16.xpose.msra.mxu0 0
      %1030 = vmatprep.mubr.bf16.mxu0 0
      %1031 = vmatmul.mubr.bf16.gmra.mrb[0].mxu0 %v993
      %v1032 = vpop.f32.mrb[0].mxu0
      %v1033 = vadd.f32 0.0, %v1032
      %v1034 = vpop.f32.mrb[0].mxu0
      %v1035 = vpop.f32.mrb[0].mxu0
      %v1036 = vadd.f32 0.0, %v1035
      %v1037 = vpop.f32.mrb[0].mxu0
      %1038 = vdwg.mxu0
      %v1039 = vmul.f32 %v892, 0.35355338
      %v1040 = vmul.f32 %v895, 0.35355338
      %v1041 = vmul.f32 %v939, 0.35355338
      %v1042 = vmul.f32 %v942, 0.35355338
      %v1043 = vmul.f32 %v986, 0.35355338
      %v1044 = vmul.f32 %v989, 0.35355338
      %v1045 = vmul.f32 %v1033, 0.35355338
      %v1046 = vmul.f32 %v1036, 0.35355338
      %vm1047 = vcmask 130048
      %v1048 = vsel %vm1047, %v1039, -inf
      %1049 = vmax.xlane.f32.xlu0 %v1048
      %v1050 = vpop.xlane.xlu0 %1049
      %v1051 = vsel %vm1047, %v1040, -inf
      %1052 = vmax.xlane.f32.xlu0 %v1051
      %v1053 = vpop.xlane.xlu0 %1052
      %v1054 = vsel %vm1047, %v1041, -inf
      %1055 = vmax.xlane.f32.xlu0 %v1054
      %v1056 = vpop.xlane.xlu0 %1055
      %v1057 = vsel %vm1047, %v1042, -inf
      %1058 = vmax.xlane.f32.xlu0 %v1057
      %v1059 = vpop.xlane.xlu0 %1058
      %v1060 = vsel %vm1047, %v1043, -inf
      %1061 = vmax.xlane.f32.xlu0 %v1060
      %v1062 = vpop.xlane.xlu0 %1061
      %v1063 = vsel %vm1047, %v1044, -inf
      %1064 = vmax.xlane.f32.xlu0 %v1063
      %v1065 = vpop.xlane.xlu0 %1064
      %v1066 = vsel %vm1047, %v1045, -inf
      %1067 = vmax.xlane.f32.xlu0 %v1066
      %v1068 = vpop.xlane.xlu0 %1067
      %v1069 = vsel %vm1047, %v1046, -inf
      %1070 = vmax.xlane.f32.xlu0 %v1069
      %v1071 = vpop.xlane.xlu0 %1070
      %v1072 = vsub.f32 %v1039, %v1050
      %v1073 = vsub.f32 %v1040, %v1053
      %v1074 = vsub.f32 %v1041, %v1056
      %v1075 = vsub.f32 %v1042, %v1059
      %v1076 = vsub.f32 %v1043, %v1062
      %v1077 = vsub.f32 %v1044, %v1065
      %v1078 = vsub.f32 %v1045, %v1068
      %v1079 = vsub.f32 %v1046, %v1071
      %v1080 = vmul.f32 %v1072, 1.442695
      %v1081 = vpow.pop %v1080
      %v1082 = vmul.f32 %v1073, 1.442695
      %v1083 = vpow.pop %v1082
      %v1084 = vmul.f32 %v1074, 1.442695
      %v1085 = vpow.pop %v1084
      %v1086 = vmul.f32 %v1075, 1.442695
      %v1087 = vpow.pop %v1086
      %v1088 = vmul.f32 %v1076, 1.442695
      %v1089 = vpow.pop %v1088
      %v1090 = vmul.f32 %v1077, 1.442695
      %v1091 = vpow.pop %v1090
      %v1092 = vmul.f32 %v1078, 1.442695
      %v1093 = vpow.pop %v1092
      %v1094 = vmul.f32 %v1079, 1.442695
      %v1095 = vpow.pop %v1094
      %v1096 = vsel %vm1047, %v1081, 0.0
      %1097 = vadd.xlane.f32.xlu0 %v1096
      %v1098 = vpop.xlane.xlu0 %1097
      %v1099 = vsel %vm1047, %v1083, 0.0
      %1100 = vadd.xlane.f32.xlu0 %v1099
      %v1101 = vpop.xlane.xlu0 %1100
      %v1102 = vsel %vm1047, %v1085, 0.0
      %1103 = vadd.xlane.f32.xlu0 %v1102
      %v1104 = vpop.xlane.xlu0 %1103
      %v1105 = vsel %vm1047, %v1087, 0.0
      %1106 = vadd.xlane.f32.xlu0 %v1105
      %v1107 = vpop.xlane.xlu0 %1106
      %v1108 = vsel %vm1047, %v1089, 0.0
      %1109 = vadd.xlane.f32.xlu0 %v1108
      %v1110 = vpop.xlane.xlu0 %1109
      %v1111 = vsel %vm1047, %v1091, 0.0
      %1112 = vadd.xlane.f32.xlu0 %v1111
      %v1113 = vpop.xlane.xlu0 %1112
      %v1114 = vsel %vm1047, %v1093, 0.0
      %1115 = vadd.xlane.f32.xlu0 %v1114
      %v1116 = vpop.xlane.xlu0 %1115
      %v1117 = vsel %vm1047, %v1095, 0.0
      %1118 = vadd.xlane.f32.xlu0 %v1117
      %v1119 = vpop.xlane.xlu0 %1118
      %v1120 = vrcp.pop %v1098
      %v1121 = vmul.f32 %v1081, %v1120
      %v1122 = vrcp.pop %v1101
      %v1123 = vmul.f32 %v1083, %v1122
      %v1124 = vrcp.pop %v1104
      %v1125 = vmul.f32 %v1085, %v1124
      %v1126 = vrcp.pop %v1107
      %v1127 = vmul.f32 %v1087, %v1126
      %v1128 = vrcp.pop %v1110
      %v1129 = vmul.f32 %v1089, %v1128
      %v1130 = vrcp.pop %v1113
      %v1131 = vmul.f32 %v1091, %v1130
      %v1132 = vrcp.pop %v1116
      %v1133 = vmul.f32 %v1093, %v1132
      %v1134 = vrcp.pop %v1119
      %v1135 = vmul.f32 %v1095, %v1134
      %v1136 = vpack.c.bf16 %v1123, %v1121
      %v1137 = vpack.c.bf16 %v1127, %v1125
      %v1138 = vpack.c.bf16 %v1131, %v1129
      %v1139 = vpack.c.bf16 %v1135, %v1133
      %1141 = vrot.lane.b32.xlu0 %v846, 96
      %v1142 = vpop.permute.xlu0 %1141
      %v1145 = vsel %vm1047, %v1136, 0
      %1147 = vmatprep.subr.bf16.mxu0 0
      %1148 = vmatpush1.bf16.msra.mxu0 %v1142
      %1149 = vmatprep.subr.bf16.mxu0 0
      %1150 = vmatpush1.bf16.msra.mxu0 0
      %1151 = vmatprep.subr.bf16.mxu0 0
      %1152 = vmatpush1.bf16.msra.mxu0 0
      %1153 = vmatprep.subr.bf16.mxu0 0
      %1154 = vmatpush1.bf16.msra.mxu0 0
      %1155 = vmatprep.subr.bf16.mxu0 0
      %1156 = vmatpush1.bf16.msra.mxu0 0
      %1157 = vmatprep.subr.bf16.mxu0 0
      %1158 = vmatpush1.bf16.msra.mxu0 0
      %1159 = vmatprep.subr.bf16.mxu0 0
      %1160 = vmatpush1.bf16.msra.mxu0 0
      %1161 = vmatprep.subr.bf16.mxu0 0
      %1162 = vmatpush1.bf16.msra.mxu0 0
      %1163 = vmatprep.subr.bf16.mxu0 0
      %1164 = vmatpush1.bf16.msra.mxu0 0
      %1165 = vmatprep.subr.bf16.mxu0 0
      %1166 = vmatpush1.bf16.msra.mxu0 0
      %1167 = vmatprep.subr.bf16.mxu0 0
      %1168 = vmatpush1.bf16.msra.mxu0 0
      %1169 = vmatprep.subr.bf16.mxu0 0
      %1170 = vmatpush1.bf16.msra.mxu0 0
      %1171 = vmatprep.subr.bf16.mxu0 0
      %1172 = vmatpush1.bf16.msra.mxu0 0
      %1173 = vmatprep.subr.bf16.mxu0 0
      %1174 = vmatpush1.bf16.msra.mxu0 0
      %1175 = vmatprep.subr.bf16.mxu0 0
      %1176 = vmatpush1.bf16.msra.mxu0 0
      %1177 = vmatprep.subr.bf16.mxu0 0
      %1178 = vmatpush1.bf16.msra.mxu0 0
      %1179 = vmatprep.mubr.bf16.mxu0 0
      %1180 = vmatmul.mubr.bf16.gmra.mrb[0].mxu0 %v1145
      %v1181 = vpop.f32.mrb[0].mxu0
      %v1182 = vadd.f32 0.0, %v1181
      %v1183 = vpop.f32.mrb[0].mxu0
      %v1184 = vpop.f32.mrb[0].mxu0
      %v1185 = vadd.f32 0.0, %v1184
      %v1186 = vpop.f32.mrb[0].mxu0
      %1187 = vdwg.mxu0
      %1189 = vrot.lane.b32.xlu0 %v847, 96
      %v1190 = vpop.permute.xlu0 %1189
      %v1193 = vsel %vm1047, %v1137, 0
      %1195 = vmatprep.subr.bf16.mxu0 0
      %1196 = vmatpush1.bf16.msra.mxu0 %v1190
      %1197 = vmatprep.subr.bf16.mxu0 0
      %1198 = vmatpush1.bf16.msra.mxu0 0
      %1199 = vmatprep.subr.bf16.mxu0 0
      %1200 = vmatpush1.bf16.msra.mxu0 0
      %1201 = vmatprep.subr.bf16.mxu0 0
      %1202 = vmatpush1.bf16.msra.mxu0 0
      %1203 = vmatprep.subr.bf16.mxu0 0
      %1204 = vmatpush1.bf16.msra.mxu0 0
      %1205 = vmatprep.subr.bf16.mxu0 0
      %1206 = vmatpush1.bf16.msra.mxu0 0
      %1207 = vmatprep.subr.bf16.mxu0 0
      %1208 = vmatpush1.bf16.msra.mxu0 0
      %1209 = vmatprep.subr.bf16.mxu0 0
      %1210 = vmatpush1.bf16.msra.mxu0 0
      %1211 = vmatprep.subr.bf16.mxu0 0
      %1212 = vmatpush1.bf16.msra.mxu0 0
      %1213 = vmatprep.subr.bf16.mxu0 0
      %1214 = vmatpush1.bf16.msra.mxu0 0
      %1215 = vmatprep.subr.bf16.mxu0 0
      %1216 = vmatpush1.bf16.msra.mxu0 0
      %1217 = vmatprep.subr.bf16.mxu0 0
      %1218 = vmatpush1.bf16.msra.mxu0 0
      %1219 = vmatprep.subr.bf16.mxu0 0
      %1220 = vmatpush1.bf16.msra.mxu0 0
      %1221 = vmatprep.subr.bf16.mxu0 0
      %1222 = vmatpush1.bf16.msra.mxu0 0
      %1223 = vmatprep.subr.bf16.mxu0 0
      %1224 = vmatpush1.bf16.msra.mxu0 0
      %1225 = vmatprep.subr.bf16.mxu0 0
      %1226 = vmatpush1.bf16.msra.mxu0 0
      %1227 = vmatprep.mubr.bf16.mxu0 0
      %1228 = vmatmul.mubr.bf16.gmra.mrb[0].mxu0 %v1193
      %v1229 = vpop.f32.mrb[0].mxu0
      %v1230 = vadd.f32 0.0, %v1229
      %v1231 = vpop.f32.mrb[0].mxu0
      %v1232 = vpop.f32.mrb[0].mxu0
      %v1233 = vadd.f32 0.0, %v1232
      %v1234 = vpop.f32.mrb[0].mxu0
      %1235 = vdwg.mxu0
      %1237 = vrot.lane.b32.xlu0 %v848, 96
      %v1238 = vpop.permute.xlu0 %1237
      %v1241 = vsel %vm1047, %v1138, 0
      %1243 = vmatprep.subr.bf16.mxu0 0
      %1244 = vmatpush1.bf16.msra.mxu0 %v1238
      %1245 = vmatprep.subr.bf16.mxu0 0
      %1246 = vmatpush1.bf16.msra.mxu0 0
      %1247 = vmatprep.subr.bf16.mxu0 0
      %1248 = vmatpush1.bf16.msra.mxu0 0
      %1249 = vmatprep.subr.bf16.mxu0 0
      %1250 = vmatpush1.bf16.msra.mxu0 0
      %1251 = vmatprep.subr.bf16.mxu0 0
      %1252 = vmatpush1.bf16.msra.mxu0 0
      %1253 = vmatprep.subr.bf16.mxu0 0
      %1254 = vmatpush1.bf16.msra.mxu0 0
      %1255 = vmatprep.subr.bf16.mxu0 0
      %1256 = vmatpush1.bf16.msra.mxu0 0
      %1257 = vmatprep.subr.bf16.mxu0 0
      %1258 = vmatpush1.bf16.msra.mxu0 0
      %1259 = vmatprep.subr.bf16.mxu0 0
      %1260 = vmatpush1.bf16.msra.mxu0 0
      %1261 = vmatprep.subr.bf16.mxu0 0
      %1262 = vmatpush1.bf16.msra.mxu0 0
      %1263 = vmatprep.subr.bf16.mxu0 0
      %1264 = vmatpush1.bf16.msra.mxu0 0
      %1265 = vmatprep.subr.bf16.mxu0 0
      %1266 = vmatpush1.bf16.msra.mxu0 0
      %1267 = vmatprep.subr.bf16.mxu0 0
      %1268 = vmatpush1.bf16.msra.mxu0 0
      %1269 = vmatprep.subr.bf16.mxu0 0
      %1270 = vmatpush1.bf16.msra.mxu0 0
      %1271 = vmatprep.subr.bf16.mxu0 0
      %1272 = vmatpush1.bf16.msra.mxu0 0
      %1273 = vmatprep.subr.bf16.mxu0 0
      %1274 = vmatpush1.bf16.msra.mxu0 0
      %1275 = vmatprep.mubr.bf16.mxu0 0
      %1276 = vmatmul.mubr.bf16.gmra.mrb[0].mxu0 %v1241
      %v1277 = vpop.f32.mrb[0].mxu0
      %v1278 = vadd.f32 0.0, %v1277
      %v1279 = vpop.f32.mrb[0].mxu0
      %v1280 = vpop.f32.mrb[0].mxu0
      %v1281 = vadd.f32 0.0, %v1280
      %v1282 = vpop.f32.mrb[0].mxu0
      %1283 = vdwg.mxu0
      %1285 = vrot.lane.b32.xlu0 %v849, 96
      %v1286 = vpop.permute.xlu0 %1285
      %v1289 = vsel %vm1047, %v1139, 0
      %1291 = vmatprep.subr.bf16.mxu0 0
      %1292 = vmatpush1.bf16.msra.mxu0 %v1286
      %1293 = vmatprep.subr.bf16.mxu0 0
      %1294 = vmatpush1.bf16.msra.mxu0 0
      %1295 = vmatprep.subr.bf16.mxu0 0
      %1296 = vmatpush1.bf16.msra.mxu0 0
      %1297 = vmatprep.subr.bf16.mxu0 0
      %1298 = vmatpush1.bf16.msra.mxu0 0
      %1299 = vmatprep.subr.bf16.mxu0 0
      %1300 = vmatpush1.bf16.msra.mxu0 0
      %1301 = vmatprep.subr.bf16.mxu0 0
      %1302 = vmatpush1.bf16.msra.mxu0 0
      %1303 = vmatprep.subr.bf16.mxu0 0
      %1304 = vmatpush1.bf16.msra.mxu0 0
      %1305 = vmatprep.subr.bf16.mxu0 0
      %1306 = vmatpush1.bf16.msra.mxu0 0
      %1307 = vmatprep.subr.bf16.mxu0 0
      %1308 = vmatpush1.bf16.msra.mxu0 0
      %1309 = vmatprep.subr.bf16.mxu0 0
      %1310 = vmatpush1.bf16.msra.mxu0 0
      %1311 = vmatprep.subr.bf16.mxu0 0
      %1312 = vmatpush1.bf16.msra.mxu0 0
      %1313 = vmatprep.subr.bf16.mxu0 0
      %1314 = vmatpush1.bf16.msra.mxu0 0
      %1315 = vmatprep.subr.bf16.mxu0 0
      %1316 = vmatpush1.bf16.msra.mxu0 0
      %1317 = vmatprep.subr.bf16.mxu0 0
      %1318 = vmatpush1.bf16.msra.mxu0 0
      %1319 = vmatprep.subr.bf16.mxu0 0
      %1320 = vmatpush1.bf16.msra.mxu0 0
      %1321 = vmatprep.subr.bf16.mxu0 0
      %1322 = vmatpush1.bf16.msra.mxu0 0
      %1323 = vmatprep.mubr.bf16.mxu0 0
      %1324 = vmatmul.mubr.bf16.gmra.mrb[0].mxu0 %v1289
      %v1325 = vpop.f32.mrb[0].mxu0
      %v1326 = vadd.f32 0.0, %v1325
      %v1327 = vpop.f32.mrb[0].mxu0
      %v1328 = vpop.f32.mrb[0].mxu0
      %v1329 = vadd.f32 0.0, %v1328
      %v1330 = vpop.f32.mrb[0].mxu0
      %1331 = vdwg.mxu0
      %1334 = vrot.lane.b32.xlu0 %v1230, 8
      %v1335 = vpop.permute.xlu0 %1334
      %1336 = vrot.lane.b32.xlu0 %v1233, 8
      %v1337 = vpop.permute.xlu0 %1336
      %1342 = vrot.lane.b32.xlu0 %v1278, 16
      %v1343 = vpop.permute.xlu0 %1342
      %1344 = vrot.lane.b32.xlu0 %v1281, 16
      %v1345 = vpop.permute.xlu0 %1344
      %1350 = vrot.lane.b32.xlu0 %v1326, 24
      %v1351 = vpop.permute.xlu0 %1350
      %1352 = vrot.lane.b32.xlu0 %v1329, 24
      %v1353 = vpop.permute.xlu0 %1352
      %v1356 = vsel %vm850, %v1182, %v1335
      %v1357 = vsel %vm850, %v1185, %v1337
      %v1358 = vsel %vm1047, %v1356, %v1343
      %v1359 = vsel %vm1047, %v1357, %v1345
      %vm1360 = vcmask 195584
      %v1361 = vsel %vm1360, %v1358, %v1351
      %v1362 = vsel %vm1360, %v1359, %v1353
      %v1363 = vpack.c.bf16 %v1362, %v1361
      %v1364 = vld [vmem:[%s8] sm:$0xf]
      %v1365 = vld [vmem:[%s8 + $0x4] sm:$0xf]
      %v1366 = vld [vmem:[%s8 + $0x8] sm:$0xf]
      %v1367 = vld [vmem:[%s8 + $0xc] sm:$0xf]
      %v1372 = vunpack.c.l.b16 %v1364
      %v1373 = vunpack.c.l.b16 %v1365
      %v1374 = vunpack.c.l.b16 %v1366
      %v1375 = vunpack.c.l.b16 %v1367
      %v1376 = vpack.c.b16 %v1373, %v1372
      %v1377 = vpack.c.b16 %v1375, %v1374
      %v1381 = vsel %vm592, %v1363, 0
      %1383 = vmatprep.subr.bf16.mxu0 0
      %1384 = vmatpush1.bf16.msra.mxu0 %v1376
      %1385 = vmatprep.subr.bf16.mxu0 0
      %1386 = vmatpush1.bf16.msra.mxu0 %v1377
      %1387 = vmatprep.subr.bf16.mxu0 0
      %1388 = vmatpush1.bf16.msra.mxu0 0
      %1389 = vmatprep.subr.bf16.mxu0 0
      %1390 = vmatpush1.bf16.msra.mxu0 0
      %1391 = vmatprep.subr.bf16.mxu0 0
      %1392 = vmatpush1.bf16.msra.mxu0 0
      %1393 = vmatprep.subr.bf16.mxu0 0
      %1394 = vmatpush1.bf16.msra.mxu0 0
      %1395 = vmatprep.subr.bf16.mxu0 0
      %1396 = vmatpush1.bf16.msra.mxu0 0
      %1397 = vmatprep.subr.bf16.mxu0 0
      %1398 = vmatpush1.bf16.msra.mxu0 0
      %1399 = vmatprep.subr.bf16.mxu0 0
      %1400 = vmatpush1.bf16.msra.mxu0 0
      %1401 = vmatprep.subr.bf16.mxu0 0
      %1402 = vmatpush1.bf16.msra.mxu0 0
      %1403 = vmatprep.subr.bf16.mxu0 0
      %1404 = vmatpush1.bf16.msra.mxu0 0
      %1405 = vmatprep.subr.bf16.mxu0 0
      %1406 = vmatpush1.bf16.msra.mxu0 0
      %1407 = vmatprep.subr.bf16.mxu0 0
      %1408 = vmatpush1.bf16.msra.mxu0 0
      %1409 = vmatprep.subr.bf16.mxu0 0
      %1410 = vmatpush1.bf16.msra.mxu0 0
      %1411 = vmatprep.subr.bf16.mxu0 0
      %1412 = vmatpush1.bf16.msra.mxu0 0
      %1413 = vmatprep.subr.bf16.mxu0 0
      %1414 = vmatpush1.bf16.msra.mxu0 0
      %1415 = vmatprep.mubr.bf16.mxu0 0
      %1416 = vmatmul.mubr.bf16.gmra.mrb[0].mxu0 %v1381
      %v1417 = vpop.f32.mrb[0].mxu0
      %v1418 = vadd.f32 0.0, %v1417
      %v1419 = vpop.f32.mrb[0].mxu0
      %v1420 = vpop.f32.mrb[0].mxu0
      %v1421 = vadd.f32 0.0, %v1420
      %v1422 = vpop.f32.mrb[0].mxu0
      %1423 = vdwg.mxu0
      %v1424 = vadd.f32 %v584, %v1418
      %v1425 = vadd.f32 %v585, %v1421
      %v1426 = vld [vmem:[%s9] sm:$0x1]
      %v1428 = vlaneseq
      %v1429 = vshrl.u32 %v1428, 7
      %v1430 = vsub.s32 0, %v1429
      %v1431 = vrot.slane %v1426, %v1430
      %v1433 = vadd.f32 %v1424, %v1431
      %v1434 = vadd.f32 %v1425, %v1431
      %v1435 = vld [vmem:[%s10] sm:$0x1]
      %v1436 = vld [vmem:[%s11] sm:$0x1]
      %v1437 = vsel %vm592, %v1433, 0.0
      %1438 = vadd.xlane.f32.xlu0 %v1437
      %v1439 = vpop.xlane.xlu0 %1438
      %v1440 = vsel %vm592, %v1434, 0.0
      %1441 = vadd.xlane.f32.xlu0 %v1440
      %v1442 = vpop.xlane.xlu0 %1441
      %v1443 = vmul.f32 %v1439, %v599
      %v1444 = vmul.f32 %v1442, %v599
      %v1445 = vsub.f32 %v1433, %v1443
      %v1446 = vsub.f32 %v1434, %v1444
      %v1447 = vmul.f32 %v1445, %v1445
      %v1448 = vmul.f32 %v1446, %v1446
      %v1449 = vsel %vm592, %v1447, 0.0
      %1450 = vadd.xlane.f32.xlu0 %v1449
      %v1451 = vpop.xlane.xlu0 %1450
      %v1452 = vsel %vm592, %v1448, 0.0
      %1453 = vadd.xlane.f32.xlu0 %v1452
      %v1454 = vpop.xlane.xlu0 %1453
      %v1455 = vmul.f32 %v1451, %v599
      %v1456 = vmul.f32 %v1454, %v599
      %v1457 = vadd.f32 %v1455, 1e-05
      %v1458 = vadd.f32 %v1456, 1e-05
      %v1459 = vrsqrt.pop %v1457
      %v1460 = vrsqrt.pop %v1458
      %v1461 = vmul.f32 %v1445, %v1459
      %v1462 = vmul.f32 %v1446, %v1460
      %v1464 = vlaneseq
      %v1465 = vshrl.u32 %v1464, 7
      %v1466 = vsub.s32 0, %v1465
      %v1467 = vrot.slane %v1435, %v1466
      %v1469 = vmul.f32 %v1461, %v1467
      %v1470 = vmul.f32 %v1462, %v1467
      %v1472 = vlaneseq
      %v1473 = vshrl.u32 %v1472, 7
      %v1474 = vsub.s32 0, %v1473
      %v1475 = vrot.slane %v1436, %v1474
      %v1477 = vadd.f32 %v1469, %v1475
      %v1478 = vadd.f32 %v1470, %v1475
      %v1479 = vpack.c.bf16 %v1478, %v1477
      %v1480 = vld [vmem:[%s12] sm:$0xf]
      %v1481 = vld [vmem:[%s12 + $0x4] sm:$0xf]
      %v1482 = vld [vmem:[%s12 + $0x8] sm:$0xf]
      %v1483 = vld [vmem:[%s12 + $0xc] sm:$0xf]
      %v1484 = vld [vmem:[%s13] sm:$0x1]
      %v1486 = vlaneseq
      %v1487 = vshrl.u32 %v1486, 7
      %v1488 = vsub.s32 0, %v1487
      %v1489 = vrot.slane %v1484, %v1488
      %v1495 = vunpack.c.l.b16 %v1480
      %v1496 = vunpack.c.l.b16 %v1481
      %v1497 = vunpack.c.l.b16 %v1482
      %v1498 = vunpack.c.l.b16 %v1483
      %v1499 = vpack.c.b16 %v1496, %v1495
      %v1500 = vpack.c.b16 %v1498, %v1497
      %v1504 = vsel %vm592, %v1479, 0
      %1506 = vmatprep.subr.bf16.mxu0 0
      %1507 = vmatpush1.bf16.msra.mxu0 %v1499
      %1508 = vmatprep.subr.bf16.mxu0 0
      %1509 = vmatpush1.bf16.msra.mxu0 %v1500
      %1510 = vmatprep.subr.bf16.mxu0 0
      %1511 = vmatpush1.bf16.msra.mxu0 0
      %1512 = vmatprep.subr.bf16.mxu0 0
      %1513 = vmatpush1.bf16.msra.mxu0 0
      %1514 = vmatprep.subr.bf16.mxu0 0
      %1515 = vmatpush1.bf16.msra.mxu0 0
      %1516 = vmatprep.subr.bf16.mxu0 0
      %1517 = vmatpush1.bf16.msra.mxu0 0
      %1518 = vmatprep.subr.bf16.mxu0 0
      %1519 = vmatpush1.bf16.msra.mxu0 0
      %1520 = vmatprep.subr.bf16.mxu0 0
      %1521 = vmatpush1.bf16.msra.mxu0 0
      %1522 = vmatprep.subr.bf16.mxu0 0
      %1523 = vmatpush1.bf16.msra.mxu0 0
      %1524 = vmatprep.subr.bf16.mxu0 0
      %1525 = vmatpush1.bf16.msra.mxu0 0
      %1526 = vmatprep.subr.bf16.mxu0 0
      %1527 = vmatpush1.bf16.msra.mxu0 0
      %1528 = vmatprep.subr.bf16.mxu0 0
      %1529 = vmatpush1.bf16.msra.mxu0 0
      %1530 = vmatprep.subr.bf16.mxu0 0
      %1531 = vmatpush1.bf16.msra.mxu0 0
      %1532 = vmatprep.subr.bf16.mxu0 0
      %1533 = vmatpush1.bf16.msra.mxu0 0
      %1534 = vmatprep.subr.bf16.mxu0 0
      %1535 = vmatpush1.bf16.msra.mxu0 0
      %1536 = vmatprep.subr.bf16.mxu0 0
      %1537 = vmatpush1.bf16.msra.mxu0 0
      %1538 = vmatprep.mubr.bf16.mxu0 0
      %1539 = vmatmul.mubr.bf16.gmra.mrb[0].mxu0 %v1504
      %v1540 = vpop.f32.mrb[0].mxu0
      %v1541 = vadd.f32 %v1489, %v1540
      %v1542 = vpop.f32.mrb[0].mxu0
      %v1543 = vpop.f32.mrb[0].mxu0
      %v1544 = vadd.f32 %v1489, %v1543
      %v1545 = vpop.f32.mrb[0].mxu0
      %1546 = vdwg.mxu0
      %v1547 = vmul.f32 %v1541, %v1541
      %v1548 = vmul.f32 %v1544, %v1544
      %v1549 = vmul.f32 %v1541, %v1547
      %v1550 = vmul.f32 %v1544, %v1548
      %v1551 = vmul.f32 %v1549, 0.044715
      %v1552 = vmul.f32 %v1550, 0.044715
      %v1553 = vadd.f32 %v1541, %v1551
      %v1554 = vadd.f32 %v1544, %v1552
      %v1555 = vmul.f32 %v1553, 0.7978846
      %v1556 = vmul.f32 %v1554, 0.7978846
      %v1557 = vtanh.pop %v1555
      %v1558 = vtanh.pop %v1556
      %v1559 = vadd.f32 %v1557, 1.0
      %v1560 = vadd.f32 %v1558, 1.0
      %v1561 = vmul.f32 %v1559, 0.5
      %v1562 = vmul.f32 %v1560, 0.5
      %v1563 = vmul.f32 %v1541, %v1561
      %v1564 = vmul.f32 %v1544, %v1562
      %v1565 = vpack.c.bf16 %v1564, %v1563
      %v1566 = vld [vmem:[%s14] sm:$0xf]
      %v1567 = vld [vmem:[%s14 + $0x4] sm:$0xf]
      %v1568 = vld [vmem:[%s14 + $0x8] sm:$0xf]
      %v1569 = vld [vmem:[%s14 + $0xc] sm:$0xf]
      %v1570 = vld [vmem:[%s14 + $0x10] sm:$0xf]
      %v1571 = vld [vmem:[%s14 + $0x14] sm:$0xf]
      %v1572 = vld [vmem:[%s14 + $0x18] sm:$0xf]
      %v1573 = vld [vmem:[%s14 + $0x1c] sm:$0xf]
      %v1574 = vld [vmem:[%s14 + $0x20] sm:$0xf]
      %v1575 = vld [vmem:[%s14 + $0x24] sm:$0xf]
      %v1576 = vld [vmem:[%s14 + $0x28] sm:$0xf]
      %v1577 = vld [vmem:[%s14 + $0x2c] sm:$0xf]
      %v1578 = vld [vmem:[%s14 + $0x30] sm:$0xf]
      %v1579 = vld [vmem:[%s14 + $0x34] sm:$0xf]
      %v1580 = vld [vmem:[%s14 + $0x38] sm:$0xf]
      %v1581 = vld [vmem:[%s14 + $0x3c] sm:$0xf]
      %v1598 = vunpack.c.l.b16 %v1566
      %v1599 = vunpack.c.l.b16 %v1567
      %v1600 = vunpack.c.l.b16 %v1568
      %v1601 = vunpack.c.l.b16 %v1569
      %v1602 = vunpack.c.l.b16 %v1570
      %v1603 = vunpack.c.l.b16 %v1571
      %v1604 = vunpack.c.l.b16 %v1572
      %v1605 = vunpack.c.l.b16 %v1573
      %v1606 = vunpack.c.l.b16 %v1574
      %v1607 = vunpack.c.l.b16 %v1575
      %v1608 = vunpack.c.l.b16 %v1576
      %v1609 = vunpack.c.l.b16 %v1577
      %v1610 = vunpack.c.l.b16 %v1578
      %v1611 = vunpack.c.l.b16 %v1579
      %v1612 = vunpack.c.l.b16 %v1580
      %v1613 = vunpack.c.l.b16 %v1581
      %v1614 = vpack.c.b16 %v1599, %v1598
      %v1615 = vpack.c.b16 %v1601, %v1600
      %v1616 = vpack.c.b16 %v1603, %v1602
      %v1617 = vpack.c.b16 %v1605, %v1604
      %v1618 = vpack.c.b16 %v1607, %v1606
      %v1619 = vpack.c.b16 %v1609, %v1608
      %v1620 = vpack.c.b16 %v1611, %v1610
      %v1621 = vpack.c.b16 %v1613, %v1612
      %1630 = vmatprep.subr.bf16.mxu0 0
      %1631 = vmatpush1.bf16.msra.mxu0 %v1614
      %1632 = vmatprep.subr.bf16.mxu0 0
      %1633 = vmatpush1.bf16.msra.mxu0 %v1615
      %1634 = vmatprep.subr.bf16.mxu0 0
      %1635 = vmatpush1.bf16.msra.mxu0 %v1616
      %1636 = vmatprep.subr.bf16.mxu0 0
      %1637 = vmatpush1.bf16.msra.mxu0 %v1617
      %1638 = vmatprep.subr.bf16.mxu0 0
      %1639 = vmatpush1.bf16.msra.mxu0 %v1618
      %1640 = vmatprep.subr.bf16.mxu0 0
      %1641 = vmatpush1.bf16.msra.mxu0 %v1619
      %1642 = vmatprep.subr.bf16.mxu0 0
      %1643 = vmatpush1.bf16.msra.mxu0 %v1620
      %1644 = vmatprep.subr.bf16.mxu0 0
      %1645 = vmatpush1.bf16.msra.mxu0 %v1621
      %1646 = vmatprep.subr.bf16.mxu0 0
      %1647 = vmatpush1.bf16.msra.mxu0 0
      %1648 = vmatprep.subr.bf16.mxu0 0
      %1649 = vmatpush1.bf16.msra.mxu0 0
      %1650 = vmatprep.subr.bf16.mxu0 0
      %1651 = vmatpush1.bf16.msra.mxu0 0
      %1652 = vmatprep.subr.bf16.mxu0 0
      %1653 = vmatpush1.bf16.msra.mxu0 0
      %1654 = vmatprep.subr.bf16.mxu0 0
      %1655 = vmatpush1.bf16.msra.mxu0 0
      %1656 = vmatprep.subr.bf16.mxu0 0
      %1657 = vmatpush1.bf16.msra.mxu0 0
      %1658 = vmatprep.subr.bf16.mxu0 0
      %1659 = vmatpush1.bf16.msra.mxu0 0
      %1660 = vmatprep.subr.bf16.mxu0 0
      %1661 = vmatpush1.bf16.msra.mxu0 0
      %1662 = vmatprep.mubr.bf16.mxu0 0
      %1663 = vmatmul.mubr.bf16.gmra.mrb[0].mxu0 %v1565
      %v1664 = vpop.f32.mrb[0].mxu0
      %v1665 = vadd.f32 0.0, %v1664
      %v1666 = vpop.f32.mrb[0].mxu0
      %v1667 = vpop.f32.mrb[0].mxu0
      %v1668 = vadd.f32 0.0, %v1667
      %v1669 = vpop.f32.mrb[0].mxu0
      %1670 = vdwg.mxu0
      %v1671 = vadd.f32 %v1433, %v1665
      %v1672 = vadd.f32 %v1434, %v1668
      %v1673 = vld [vmem:[%s15] sm:$0x1]
      %v1675 = vlaneseq
      %v1676 = vshrl.u32 %v1675, 7
      %v1677 = vsub.s32 0, %v1676
      %v1678 = vrot.slane %v1673, %v1677
      %v1680 = vadd.f32 %v1671, %v1678
      %v1681 = vadd.f32 %v1672, %v1678
      %v1682 = vpack.c.bf16 %v1681, %v1680
      %v1684 = vunpack.c.l.b16 %v1682
      %v1685 = vunpack.c.h.b16 %v1682
      %v1686 = vpack.c.b16 %v1684, %v1684
      %v1687 = vpack.c.b16 %v1685, %v1685
      %vm1690 = vcmask 257024
      %1691 = vst.msk [vmem:[%s579] sm:$0xf] %vm1690, %v1686
      %1692 = vst.msk [vmem:[%s579 + $0x4] sm:$0xf] %vm1690, %v1687
      %s1693 = smul.u32 2, %s32
      %p1694 = scmp.lt.s32.totalorder %s31, 1
      %s1695 = scalar_select %p1694, %s31, 1
      %p1696 = scmp.lt.s32.totalorder %s1693, 1
      %s1697 = scalar_select %p1696, %s1693, 1
      %s1698 = smul.addr %s1695, 2
      %s1699 = sadd.s32 %s1697, %s1698
      %s1700 = smul.addr %s1699, 4
      %s1701 = scalar_lea.vmem %s16, %s1700
      // Predicated region
      $region85: #{ldtunet_forward.9} parent=83 // pred_check
        %p1702 = pneg %p407
      $region86: #{ldtunet_forward.9} parent=83 // pred_check_branch
        %1704 = sbr.rel (%p1702) target = $region88
      $region87: #{ldtunet_forward.9} parent=83 // pred_region
        %s1705 = smul.u32 2, %s32
      $region88: #{ldtunet_forward.9} parent=83 // pred_fallthru
        _
    $region84: #{ldtunet_forward.9} parent=5 // pred_fallthru
      _
    %p1706 = scmp.le.s32.totalorder 2, %s22
    // Predicated region
    $region89: #{ldtunet_forward.9} parent=5 // pred_check
      %p1707 = pneg %p1706
    $region90: #{ldtunet_forward.9} parent=5 // pred_check_branch
      %1709 = sbr.rel (%p1707) target = $region92
    $region91: #{ldtunet_forward.9} parent=5 // pred_region
      %s1710 = ssub.s32 %s22, 2
      // Predicated region
      $region93: #{ldtunet_forward.9} parent=91 // pred_check
        %p1711 = pneg %p413
      $region94: #{ldtunet_forward.9} parent=91 // pred_check_branch
        %1713 = sbr.rel (%p1711) target = $region96
      $region95: #{ldtunet_forward.9} parent=91 // pred_region
        %s1714 = smul.u32 2, %s34
        %p1715 = scmp.lt.s32.totalorder %s33, 1
        %s1716 = scalar_select %p1715, %s33, 1
        %p1717 = scmp.lt.s32.totalorder %s1714, 1
        %s1718 = scalar_select %p1717, %s1714, 1
        %s1719 = smul.addr %s1716, 2
        %s1720 = sadd.s32 %s1718, %s1719
        %s1721 = smul.addr %s1720, 4
        %s1722 = scalar_lea.vmem %s16, %s1721
      $region96: #{ldtunet_forward.9} parent=91 // pred_fallthru
        _
    $region92: #{ldtunet_forward.9} parent=5 // pred_fallthru
      _
  $region6: #{ldtunet_forward.9} parent=0 // loop_footer
    %s26 = sadd.s32 1, %s22
  $region7: #{ldtunet_forward.9} parent=0 // loop_footer_branch
    %21 = sbr.rel target = $region3
  $region8: #{ldtunet_forward.9} parent=0 // loop_exit
    _

// kernel: ldtunet_forward.11
$region0: #{ldtunet_forward.11}
  #allocation0 [shape = 'u32[]', space=smem, size = 0x4, offset = 0x4, fixed_abs, tag = 'smem constant byte address 0x4 - core index']
  #allocation1 [shape = 'u32[144,128]{1,0:T(1,128)}', space=vmem, size = 0x12000, scoped, tag = 'internal scratch']
  %s0 = inlined_call_operand.vmem [shape: bf16[2,4,64], index: 0, kind: input, shape index: {}, may-alias: {0,1}]
  %s1 = inlined_call_operand.vmem [shape: bf16[2,4,64], index: 1, kind: input, shape index: {}, may-alias: {0,1}]
  %s2 = inlined_call_operand.vmem [shape: f32[1,64], index: 2, kind: input, shape index: {}]
  %s3 = inlined_call_operand.vmem [shape: f32[1,64], index: 3, kind: input, shape index: {}]
  %s4 = inlined_call_operand.vmem [shape: bf16[64,64], index: 4, kind: input, shape index: {}]
  %s5 = inlined_call_operand.vmem [shape: f32[1,64], index: 5, kind: input, shape index: {}]
  %s6 = inlined_call_operand.vmem [shape: bf16[64,128], index: 6, kind: input, shape index: {}]
  %s7 = inlined_call_operand.vmem [shape: f32[1,128], index: 7, kind: input, shape index: {}]
  %s8 = inlined_call_operand.vmem [shape: bf16[64,64], index: 8, kind: input, shape index: {}]
  %s9 = inlined_call_operand.vmem [shape: f32[1,64], index: 9, kind: input, shape index: {}]
  %s10 = inlined_call_operand.vmem [shape: f32[1,64], index: 10, kind: input, shape index: {}]
  %s11 = inlined_call_operand.vmem [shape: f32[1,64], index: 11, kind: input, shape index: {}]
  %s12 = inlined_call_operand.vmem [shape: bf16[64,256], index: 12, kind: input, shape index: {}]
  %s13 = inlined_call_operand.vmem [shape: f32[1,256], index: 13, kind: input, shape index: {}]
  %s14 = inlined_call_operand.vmem [shape: bf16[256,64], index: 14, kind: input, shape index: {}]
  %s15 = inlined_call_operand.vmem [shape: f32[1,64], index: 15, kind: input, shape index: {}]
  %s16 = inlined_call_operand.vmem [shape: bf16[2,4,64], index: 16, kind: output, shape index: {}]
  %s17 = sld [smem:[#allocation0]]
  $region97: #{ldtunet_forward.11} parent=0
    _
  %s19 = ssub.s32 1, %s17
  %s20 = scalar_select 0, %s19, %s17
  loop: start=0, step=1, limit=4
  $region2: #{ldtunet_forward.11} parent=0 // loop_pre_header
    _
  $region3: #{ldtunet_forward.11} parent=0 // loop_header
    %s22 = sphi 0, %s26
    %p23 = scmp.ge.s32.totalorder %s22, 4
    %s29 = sphi 0, %s41
    %s30 = sphi 0, %s37
    %s31 = sphi 0, %s29
    %s32 = sphi 0, %s30
    %s33 = sphi 0, %s31
    %s34 = sphi 0, %s32
    %s46 = sphi 0, %s48
    %s49 = sphi 0, %s46
    %s50 = sphi 0, %s49
    %s66 = sphi 0, %s50
    %s72 = sphi 0, %s74
    %s75 = sphi 0, %s72
    %s76 = sphi 0, %s75
    %s92 = sphi 0, %s76
    %s96 = sphi 0, %s96
    %s98 = sphi 0, %s96
    %s99 = sphi 0, %s98
    %s113 = sphi 0, %s99
    %s117 = sphi 0, %s117
    %s119 = sphi 0, %s117
    %s120 = sphi 0, %s119
    %s134 = sphi 0, %s120
    %s138 = sphi 0, %s138
    %s140 = sphi 0, %s138
    %s141 = sphi 0, %s140
    %s155 = sphi 0, %s141
    %s159 = sphi 0, %s159
    %s161 = sphi 0, %s159
    %s162 = sphi 0, %s161
    %s176 = sphi 0, %s162
    %s180 = sphi 0, %s180
    %s182 = sphi 0, %s180
    %s183 = sphi 0, %s182
    %s197 = sphi 0, %s183
    %s201 = sphi 0, %s201
    %s203 = sphi 0, %s201
    %s204 = sphi 0, %s203
    %s218 = sphi 0, %s204
    %s222 = sphi 0, %s222
    %s224 = sphi 0, %s222
    %s225 = sphi 0, %s224
    %s239 = sphi 0, %s225
    %s243 = sphi 0, %s243
    %s245 = sphi 0, %s243
    %s246 = sphi 0, %s245
    %s260 = sphi 0, %s246
    %s264 = sphi 0, %s264
    %s266 = sphi 0, %s264
    %s267 = sphi 0, %s266
    %s281 = sphi 0, %s267
    %s285 = sphi 0, %s285
    %s287 = sphi 0, %s285
    %s288 = sphi 0, %s287
    %s302 = sphi 0, %s288
    %s306 = sphi 0, %s306
    %s308 = sphi 0, %s306
    %s309 = sphi 0, %s308
    %s323 = sphi 0, %s309
    %s327 = sphi 0, %s327
    %s329 = sphi 0, %s327
    %s330 = sphi 0, %s329
    %s344 = sphi 0, %s330
    %s348 = sphi 0, %s348
    %s350 = sphi 0, %s348
    %s351 = sphi 0, %s350
    %s365 = sphi 0, %s351
    %s369 = sphi 0, %s369
    %s371 = sphi 0, %s369
    %s372 = sphi 0, %s371
    %s386 = sphi 0, %s372
    %s394 = sphi 0, %s396
    %s397 = sphi 0, %s394
    %s398 = sphi 0, %s397
    %s414 = sphi 0, %s398
  $region4: #{ldtunet_forward.11} parent=0 // loop_header_branch
    %25 = sbr.rel (%p23) target = $region8
  $region5: #{ldtunet_forward.11} parent=0 // loop_body
    %s27 = ssub.s32 %s22, 1
    %s28 = ssub.s32 %s22, 2
    %s35 = sadd.s32 1, %s30
    %p36 = scmp.ge.s32.totalorder %s35, 1
    %s37 = scalar_select %p36, 0, %s35
    %s38 = sadd.s32 1, %s29
    %s39 = scalar_select %p36, %s38, %s29
    %p40 = scmp.ge.s32.totalorder %s39, 2
    %s41 = scalar_select %p40, 0, %s39
    %s42 = ssub.s32 %s29, %s41
    %s43 = ssub.s32 %s30, %s37
    %s44 = sor.u32 %s42, %s43
    %p45 = scmp.eq.s32.totalorder %s44, 0
    %s47 = sadd.s32 %s46, 1
    %s48 = scalar_select %p45, %s46, %s47
    %p51 = pneg %p45
    %p52 = scmp.eq.s32.totalorder %s22, 1
    %p53 = por %p51, %p52
    %p54 = scmp.ne.s32.totalorder %s46, %s49
    %p55 = scmp.eq.s32.totalorder %s22, 0
    %p56 = por %p54, %p55
    %p57 = scmp.ne.s32.totalorder %s46, %s49
    %p58 = scmp.eq.s32.totalorder %s27, 1
    %p59 = por %p57, %p58
    %p60 = scmp.ne.s32.totalorder %s49, %s50
    %p61 = scmp.eq.s32.totalorder %s27, 0
    %p62 = por %p60, %p61
    %p63 = scmp.ne.s32.totalorder %s49, %s50
    %p64 = scmp.eq.s32.totalorder %s28, 1
    %p65 = por %p63, %p64
    %p67 = scmp.ne.s32.totalorder %s50, %s66
    %p68 = scmp.eq.s32.totalorder %s28, 0
    %p69 = por %p67, %p68
    %s70 = ssub.s32 %s29, %s41
    %p71 = scmp.eq.s32.totalorder %s70, 0
    %s73 = sadd.s32 %s72, 1
    %s74 = scalar_select %p71, %s72, %s73
    %p77 = pneg %p71
    %p78 = scmp.eq.s32.totalorder %s22, 1
    %p79 = por %p77, %p78
    %p80 = scmp.ne.s32.totalorder %s72, %s75
    %p81 = scmp.eq.s32.totalorder %s22, 0
    %p82 = por %p80, %p81
    %p83 = scmp.ne.s32.totalorder %s72, %s75
    %p84 = scmp.eq.s32.totalorder %s27, 1
    %p85 = por %p83, %p84
    %p86 = scmp.ne.s32.totalorder %s75, %s76
    %p87 = scmp.eq.s32.totalorder %s27, 0
    %p88 = por %p86, %p87
    %p89 = scmp.ne.s32.totalorder %s75, %s76
    %p90 = scmp.eq.s32.totalorder %s28, 1
    %p91 = por %p89, %p90
    %p93 = scmp.ne.s32.totalorder %s76, %s92
    %p94 = scmp.eq.s32.totalorder %s28, 0
    %p95 = por %p93, %p94
    %s97 = sadd.s32 %s96, 1
    %p100 = scmp.eq.s32.totalorder %s22, 1
    %p101 = scmp.ne.s32.totalorder %s96, %s98
    %p102 = scmp.eq.s32.totalorder %s22, 0
    %p103 = por %p101, %p102
    %p104 = scmp.ne.s32.totalorder %s96, %s98
    %p105 = scmp.eq.s32.totalorder %s27, 1
    %p106 = por %p104, %p105
    %p107 = scmp.ne.s32.totalorder %s98, %s99
    %p108 = scmp.eq.s32.totalorder %s27, 0
    %p109 = por %p107, %p108
    %p110 = scmp.ne.s32.totalorder %s98, %s99
    %p111 = scmp.eq.s32.totalorder %s28, 1
    %p112 = por %p110, %p111
    %p114 = scmp.ne.s32.totalorder %s99, %s113
    %p115 = scmp.eq.s32.totalorder %s28, 0
    %p116 = por %p114, %p115
    %s118 = sadd.s32 %s117, 1
    %p121 = scmp.eq.s32.totalorder %s22, 1
    %p122 = scmp.ne.s32.totalorder %s117, %s119
    %p123 = scmp.eq.s32.totalorder %s22, 0
    %p124 = por %p122, %p123
    %p125 = scmp.ne.s32.totalorder %s117, %s119
    %p126 = scmp.eq.s32.totalorder %s27, 1
    %p127 = por %p125, %p126
    %p128 = scmp.ne.s32.totalorder %s119, %s120
    %p129 = scmp.eq.s32.totalorder %s27, 0
    %p130 = por %p128, %p129
    %p131 = scmp.ne.s32.totalorder %s119, %s120
    %p132 = scmp.eq.s32.totalorder %s28, 1
    %p133 = por %p131, %p132
    %p135 = scmp.ne.s32.totalorder %s120, %s134
    %p136 = scmp.eq.s32.totalorder %s28, 0
    %p137 = por %p135, %p136
    %s139 = sadd.s32 %s138, 1
    %p142 = scmp.eq.s32.totalorder %s22, 1
    %p143 = scmp.ne.s32.totalorder %s138, %s140
    %p144 = scmp.eq.s32.totalorder %s22, 0
    %p145 = por %p143, %p144
    %p146 = scmp.ne.s32.totalorder %s138, %s140
    %p147 = scmp.eq.s32.totalorder %s27, 1
    %p148 = por %p146, %p147
    %p149 = scmp.ne.s32.totalorder %s140, %s141
    %p150 = scmp.eq.s32.totalorder %s27, 0
    %p151 = por %p149, %p150
    %p152 = scmp.ne.s32.totalorder %s140, %s141
    %p153 = scmp.eq.s32.totalorder %s28, 1
    %p154 = por %p152, %p153
    %p156 = scmp.ne.s32.totalorder %s141, %s155
    %p157 = scmp.eq.s32.totalorder %s28, 0
    %p158 = por %p156, %p157
    %s160 = sadd.s32 %s159, 1
    %p163 = scmp.eq.s32.totalorder %s22, 1
    %p164 = scmp.ne.s32.totalorder %s159, %s161
    %p165 = scmp.eq.s32.totalorder %s22, 0
    %p166 = por %p164, %p165
    %p167 = scmp.ne.s32.totalorder %s159, %s161
    %p168 = scmp.eq.s32.totalorder %s27, 1
    %p169 = por %p167, %p168
    %p170 = scmp.ne.s32.totalorder %s161, %s162
    %p171 = scmp.eq.s32.totalorder %s27, 0
    %p172 = por %p170, %p171
    %p173 = scmp.ne.s32.totalorder %s161, %s162
    %p174 = scmp.eq.s32.totalorder %s28, 1
    %p175 = por %p173, %p174
    %p177 = scmp.ne.s32.totalorder %s162, %s176
    %p178 = scmp.eq.s32.totalorder %s28, 0
    %p179 = por %p177, %p178
    %s181 = sadd.s32 %s180, 1
    %p184 = scmp.eq.s32.totalorder %s22, 1
    %p185 = scmp.ne.s32.totalorder %s180, %s182
    %p186 = scmp.eq.s32.totalorder %s22, 0
    %p187 = por %p185, %p186
    %p188 = scmp.ne.s32.totalorder %s180, %s182
    %p189 = scmp.eq.s32.totalorder %s27, 1
    %p190 = por %p188, %p189
    %p191 = scmp.ne.s32.totalorder %s182, %s183
    %p192 = scmp.eq.s32.totalorder %s27, 0
    %p193 = por %p191, %p192
    %p194 = scmp.ne.s32.totalorder %s182, %s183
    %p195 = scmp.eq.s32.totalorder %s28, 1
    %p196 = por %p194, %p195
    %p198 = scmp.ne.s32.totalorder %s183, %s197
    %p199 = scmp.eq.s32.totalorder %s28, 0
    %p200 = por %p198, %p199
    %s202 = sadd.s32 %s201, 1
    %p205 = scmp.eq.s32.totalorder %s22, 1
    %p206 = scmp.ne.s32.totalorder %s201, %s203
    %p207 = scmp.eq.s32.totalorder %s22, 0
    %p208 = por %p206, %p207
    %p209 = scmp.ne.s32.totalorder %s201, %s203
    %p210 = scmp.eq.s32.totalorder %s27, 1
    %p211 = por %p209, %p210
    %p212 = scmp.ne.s32.totalorder %s203, %s204
    %p213 = scmp.eq.s32.totalorder %s27, 0
    %p214 = por %p212, %p213
    %p215 = scmp.ne.s32.totalorder %s203, %s204
    %p216 = scmp.eq.s32.totalorder %s28, 1
    %p217 = por %p215, %p216
    %p219 = scmp.ne.s32.totalorder %s204, %s218
    %p220 = scmp.eq.s32.totalorder %s28, 0
    %p221 = por %p219, %p220
    %s223 = sadd.s32 %s222, 1
    %p226 = scmp.eq.s32.totalorder %s22, 1
    %p227 = scmp.ne.s32.totalorder %s222, %s224
    %p228 = scmp.eq.s32.totalorder %s22, 0
    %p229 = por %p227, %p228
    %p230 = scmp.ne.s32.totalorder %s222, %s224
    %p231 = scmp.eq.s32.totalorder %s27, 1
    %p232 = por %p230, %p231
    %p233 = scmp.ne.s32.totalorder %s224, %s225
    %p234 = scmp.eq.s32.totalorder %s27, 0
    %p235 = por %p233, %p234
    %p236 = scmp.ne.s32.totalorder %s224, %s225
    %p237 = scmp.eq.s32.totalorder %s28, 1
    %p238 = por %p236, %p237
    %p240 = scmp.ne.s32.totalorder %s225, %s239
    %p241 = scmp.eq.s32.totalorder %s28, 0
    %p242 = por %p240, %p241
    %s244 = sadd.s32 %s243, 1
    %p247 = scmp.eq.s32.totalorder %s22, 1
    %p248 = scmp.ne.s32.totalorder %s243, %s245
    %p249 = scmp.eq.s32.totalorder %s22, 0
    %p250 = por %p248, %p249
    %p251 = scmp.ne.s32.totalorder %s243, %s245
    %p252 = scmp.eq.s32.totalorder %s27, 1
    %p253 = por %p251, %p252
    %p254 = scmp.ne.s32.totalorder %s245, %s246
    %p255 = scmp.eq.s32.totalorder %s27, 0
    %p256 = por %p254, %p255
    %p257 = scmp.ne.s32.totalorder %s245, %s246
    %p258 = scmp.eq.s32.totalorder %s28, 1
    %p259 = por %p257, %p258
    %p261 = scmp.ne.s32.totalorder %s246, %s260
    %p262 = scmp.eq.s32.totalorder %s28, 0
    %p263 = por %p261, %p262
    %s265 = sadd.s32 %s264, 1
    %p268 = scmp.eq.s32.totalorder %s22, 1
    %p269 = scmp.ne.s32.totalorder %s264, %s266
    %p270 = scmp.eq.s32.totalorder %s22, 0
    %p271 = por %p269, %p270
    %p272 = scmp.ne.s32.totalorder %s264, %s266
    %p273 = scmp.eq.s32.totalorder %s27, 1
    %p274 = por %p272, %p273
    %p275 = scmp.ne.s32.totalorder %s266, %s267
    %p276 = scmp.eq.s32.totalorder %s27, 0
    %p277 = por %p275, %p276
    %p278 = scmp.ne.s32.totalorder %s266, %s267
    %p279 = scmp.eq.s32.totalorder %s28, 1
    %p280 = por %p278, %p279
    %p282 = scmp.ne.s32.totalorder %s267, %s281
    %p283 = scmp.eq.s32.totalorder %s28, 0
    %p284 = por %p282, %p283
    %s286 = sadd.s32 %s285, 1
    %p289 = scmp.eq.s32.totalorder %s22, 1
    %p290 = scmp.ne.s32.totalorder %s285, %s287
    %p291 = scmp.eq.s32.totalorder %s22, 0
    %p292 = por %p290, %p291
    %p293 = scmp.ne.s32.totalorder %s285, %s287
    %p294 = scmp.eq.s32.totalorder %s27, 1
    %p295 = por %p293, %p294
    %p296 = scmp.ne.s32.totalorder %s287, %s288
    %p297 = scmp.eq.s32.totalorder %s27, 0
    %p298 = por %p296, %p297
    %p299 = scmp.ne.s32.totalorder %s287, %s288
    %p300 = scmp.eq.s32.totalorder %s28, 1
    %p301 = por %p299, %p300
    %p303 = scmp.ne.s32.totalorder %s288, %s302
    %p304 = scmp.eq.s32.totalorder %s28, 0
    %p305 = por %p303, %p304
    %s307 = sadd.s32 %s306, 1
    %p310 = scmp.eq.s32.totalorder %s22, 1
    %p311 = scmp.ne.s32.totalorder %s306, %s308
    %p312 = scmp.eq.s32.totalorder %s22, 0
    %p313 = por %p311, %p312
    %p314 = scmp.ne.s32.totalorder %s306, %s308
    %p315 = scmp.eq.s32.totalorder %s27, 1
    %p316 = por %p314, %p315
    %p317 = scmp.ne.s32.totalorder %s308, %s309
    %p318 = scmp.eq.s32.totalorder %s27, 0
    %p319 = por %p317, %p318
    %p320 = scmp.ne.s32.totalorder %s308, %s309
    %p321 = scmp.eq.s32.totalorder %s28, 1
    %p322 = por %p320, %p321
    %p324 = scmp.ne.s32.totalorder %s309, %s323
    %p325 = scmp.eq.s32.totalorder %s28, 0
    %p326 = por %p324, %p325
    %s328 = sadd.s32 %s327, 1
    %p331 = scmp.eq.s32.totalorder %s22, 1
    %p332 = scmp.ne.s32.totalorder %s327, %s329
    %p333 = scmp.eq.s32.totalorder %s22, 0
    %p334 = por %p332, %p333
    %p335 = scmp.ne.s32.totalorder %s327, %s329
    %p336 = scmp.eq.s32.totalorder %s27, 1
    %p337 = por %p335, %p336
    %p338 = scmp.ne.s32.totalorder %s329, %s330
    %p339 = scmp.eq.s32.totalorder %s27, 0
    %p340 = por %p338, %p339
    %p341 = scmp.ne.s32.totalorder %s329, %s330
    %p342 = scmp.eq.s32.totalorder %s28, 1
    %p343 = por %p341, %p342
    %p345 = scmp.ne.s32.totalorder %s330, %s344
    %p346 = scmp.eq.s32.totalorder %s28, 0
    %p347 = por %p345, %p346
    %s349 = sadd.s32 %s348, 1
    %p352 = scmp.eq.s32.totalorder %s22, 1
    %p353 = scmp.ne.s32.totalorder %s348, %s350
    %p354 = scmp.eq.s32.totalorder %s22, 0
    %p355 = por %p353, %p354
    %p356 = scmp.ne.s32.totalorder %s348, %s350
    %p357 = scmp.eq.s32.totalorder %s27, 1
    %p358 = por %p356, %p357
    %p359 = scmp.ne.s32.totalorder %s350, %s351
    %p360 = scmp.eq.s32.totalorder %s27, 0
    %p361 = por %p359, %p360
    %p362 = scmp.ne.s32.totalorder %s350, %s351
    %p363 = scmp.eq.s32.totalorder %s28, 1
    %p364 = por %p362, %p363
    %p366 = scmp.ne.s32.totalorder %s351, %s365
    %p367 = scmp.eq.s32.totalorder %s28, 0
    %p368 = por %p366, %p367
    %s370 = sadd.s32 %s369, 1
    %p373 = scmp.eq.s32.totalorder %s22, 1
    %p374 = scmp.ne.s32.totalorder %s369, %s371
    %p375 = scmp.eq.s32.totalorder %s22, 0
    %p376 = por %p374, %p375
    %p377 = scmp.ne.s32.totalorder %s369, %s371
    %p378 = scmp.eq.s32.totalorder %s27, 1
    %p379 = por %p377, %p378
    %p380 = scmp.ne.s32.totalorder %s371, %s372
    %p381 = scmp.eq.s32.totalorder %s27, 0
    %p382 = por %p380, %p381
    %p383 = scmp.ne.s32.totalorder %s371, %s372
    %p384 = scmp.eq.s32.totalorder %s28, 1
    %p385 = por %p383, %p384
    %p387 = scmp.ne.s32.totalorder %s372, %s386
    %p388 = scmp.eq.s32.totalorder %s28, 0
    %p389 = por %p387, %p388
    %s390 = ssub.s32 %s29, %s41
    %s391 = ssub.s32 %s30, %s37
    %s392 = sor.u32 %s390, %s391
    %p393 = scmp.eq.s32.totalorder %s392, 0
    %s395 = sadd.s32 %s394, 1
    %s396 = scalar_select %p393, %s394, %s395
    %p399 = pneg %p393
    %p400 = scmp.eq.s32.totalorder %s22, 1
    %p401 = por %p399, %p400
    %p402 = scmp.ne.s32.totalorder %s394, %s397
    %p403 = scmp.eq.s32.totalorder %s22, 0
    %p404 = por %p402, %p403
    %p405 = scmp.ne.s32.totalorder %s394, %s397
    %p406 = scmp.eq.s32.totalorder %s27, 1
    %p407 = por %p405, %p406
    %p408 = scmp.ne.s32.totalorder %s397, %s398
    %p409 = scmp.eq.s32.totalorder %s27, 0
    %p410 = por %p408, %p409
    %p411 = scmp.ne.s32.totalorder %s397, %s398
    %p412 = scmp.eq.s32.totalorder %s28, 1
    %p413 = por %p411, %p412
    %p415 = scmp.ne.s32.totalorder %s398, %s414
    %p416 = scmp.eq.s32.totalorder %s28, 0
    %p417 = por %p415, %p416
    %p418 = scmp.le.s32.totalorder 1, %s22
    %p419 = scmp.lt.s32.totalorder %s22, 3
    %p420 = pnand %p418, %p419
    %p421 = pneg %p420
    // Predicated region
    $region9: #{ldtunet_forward.11} parent=5 // pred_check
      _
    $region10: #{ldtunet_forward.11} parent=5 // pred_check_branch
      %423 = sbr.rel (%p420) target = $region12
    $region11: #{ldtunet_forward.11} parent=5 // pred_region
      %s424 = ssub.s32 %s22, 1
      // Predicated region
      $region13: #{ldtunet_forward.11} parent=11 // pred_check
        %p425 = pneg %p109
      $region14: #{ldtunet_forward.11} parent=11 // pred_check_branch
        %427 = sbr.rel (%p425) target = $region16
      $region15: #{ldtunet_forward.11} parent=11 // pred_region
        _
      $region16: #{ldtunet_forward.11} parent=11 // pred_fallthru
        _
      // Predicated region
      $region17: #{ldtunet_forward.11} parent=11 // pred_check
        %p428 = pneg %p130
      $region18: #{ldtunet_forward.11} parent=11 // pred_check_branch
        %430 = sbr.rel (%p428) target = $region20
      $region19: #{ldtunet_forward.11} parent=11 // pred_region
        _
      $region20: #{ldtunet_forward.11} parent=11 // pred_fallthru
        _
      // Predicated region
      $region21: #{ldtunet_forward.11} parent=11 // pred_check
        %p431 = pneg %p151
      $region22: #{ldtunet_forward.11} parent=11 // pred_check_branch
        %433 = sbr.rel (%p431) target = $region24
      $region23: #{ldtunet_forward.11} parent=11 // pred_region
        _
      $region24: #{ldtunet_forward.11} parent=11 // pred_fallthru
        _
      // Predicated region
      $region25: #{ldtunet_forward.11} parent=11 // pred_check
        %p434 = pneg %p172
      $region26: #{ldtunet_forward.11} parent=11 // pred_check_branch
        %436 = sbr.rel (%p434) target = $region28
      $region27: #{ldtunet_forward.11} parent=11 // pred_region
        _
      $region28: #{ldtunet_forward.11} parent=11 // pred_fallthru
        _
      // Predicated region
      $region29: #{ldtunet_forward.11} parent=11 // pred_check
        %p437 = pneg %p193
      $region30: #{ldtunet_forward.11} parent=11 // pred_check_branch
        %439 = sbr.rel (%p437) target = $region32
      $region31: #{ldtunet_forward.11} parent=11 // pred_region
        _
      $region32: #{ldtunet_forward.11} parent=11 // pred_fallthru
        _
      // Predicated region
      $region33: #{ldtunet_forward.11} parent=11 // pred_check
        %p440 = pneg %p214
      $region34: #{ldtunet_forward.11} parent=11 // pred_check_branch
        %442 = sbr.rel (%p440) target = $region36
      $region35: #{ldtunet_forward.11} parent=11 // pred_region
        _
      $region36: #{ldtunet_forward.11} parent=11 // pred_fallthru
        _
      // Predicated region
      $region37: #{ldtunet_forward.11} parent=11 // pred_check
        %p443 = pneg %p235
      $region38: #{ldtunet_forward.11} parent=11 // pred_check_branch
        %445 = sbr.rel (%p443) target = $region40
      $region39: #{ldtunet_forward.11} parent=11 // pred_region
        _
      $region40: #{ldtunet_forward.11} parent=11 // pred_fallthru
        _
      // Predicated region
      $region41: #{ldtunet_forward.11} parent=11 // pred_check
        %p446 = pneg %p256
      $region42: #{ldtunet_forward.11} parent=11 // pred_check_branch
        %448 = sbr.rel (%p446) target = $region44
      $region43: #{ldtunet_forward.11} parent=11 // pred_region
        _
      $region44: #{ldtunet_forward.11} parent=11 // pred_fallthru
        _
      // Predicated region
      $region45: #{ldtunet_forward.11} parent=11 // pred_check
        %p449 = pneg %p277
      $region46: #{ldtunet_forward.11} parent=11 // pred_check_branch
        %451 = sbr.rel (%p449) target = $region48
      $region47: #{ldtunet_forward.11} parent=11 // pred_region
        _
      $region48: #{ldtunet_forward.11} parent=11 // pred_fallthru
        _
      // Predicated region
      $region49: #{ldtunet_forward.11} parent=11 // pred_check
        %p452 = pneg %p298
      $region50: #{ldtunet_forward.11} parent=11 // pred_check_branch
        %454 = sbr.rel (%p452) target = $region52
      $region51: #{ldtunet_forward.11} parent=11 // pred_region
        _
      $region52: #{ldtunet_forward.11} parent=11 // pred_fallthru
        _
      // Predicated region
      $region53: #{ldtunet_forward.11} parent=11 // pred_check
        %p455 = pneg %p319
      $region54: #{ldtunet_forward.11} parent=11 // pred_check_branch
        %457 = sbr.rel (%p455) target = $region56
      $region55: #{ldtunet_forward.11} parent=11 // pred_region
        _
      $region56: #{ldtunet_forward.11} parent=11 // pred_fallthru
        _
      // Predicated region
      $region57: #{ldtunet_forward.11} parent=11 // pred_check
        %p458 = pneg %p340
      $region58: #{ldtunet_forward.11} parent=11 // pred_check_branch
        %460 = sbr.rel (%p458) target = $region60
      $region59: #{ldtunet_forward.11} parent=11 // pred_region
        _
      $region60: #{ldtunet_forward.11} parent=11 // pred_fallthru
        _
      // Predicated region
      $region61: #{ldtunet_forward.11} parent=11 // pred_check
        %p461 = pneg %p361
      $region62: #{ldtunet_forward.11} parent=11 // pred_check_branch
        %463 = sbr.rel (%p461) target = $region64
      $region63: #{ldtunet_forward.11} parent=11 // pred_region
        _
      $region64: #{ldtunet_forward.11} parent=11 // pred_fallthru
        _
      // Predicated region
      $region65: #{ldtunet_forward.11} parent=11 // pred_check
        %p464 = pneg %p382
      $region66: #{ldtunet_forward.11} parent=11 // pred_check_branch
        %466 = sbr.rel (%p464) target = $region68
      $region67: #{ldtunet_forward.11} parent=11 // pred_region
        _
      $region68: #{ldtunet_forward.11} parent=11 // pred_fallthru
        _
    $region12: #{ldtunet_forward.11} parent=5 // pred_fallthru
      _
    %p467 = scmp.lt.s32.totalorder %s22, 2
    // Predicated region
    $region69: #{ldtunet_forward.11} parent=5 // pred_check
      %p468 = pneg %p467
    $region70: #{ldtunet_forward.11} parent=5 // pred_check_branch
      %470 = sbr.rel (%p468) target = $region72
    $region71: #{ldtunet_forward.11} parent=5 // pred_region
      // Predicated region
      $region73: #{ldtunet_forward.11} parent=71 // pred_check
        %p471 = pneg %p56
      $region74: #{ldtunet_forward.11} parent=71 // pred_check_branch
        %473 = sbr.rel (%p471) target = $region76
      $region75: #{ldtunet_forward.11} parent=71 // pred_region
        %p474 = scmp.lt.s32.totalorder %s29, 1
        %s475 = scalar_select %p474, %s29, 1
        %p476 = scmp.lt.s32.totalorder %s30, 0
        %s477 = scalar_select %p476, %s30, 0
        %s478 = sadd.s32 %s477, %s475
        %s479 = smul.addr %s478, 2
        %s480 = scalar_lea.vmem %s0, %s479
      $region76: #{ldtunet_forward.11} parent=71 // pred_fallthru
        _
      // Predicated region
      $region77: #{ldtunet_forward.11} parent=71 // pred_check
        %p481 = pneg %p82
      $region78: #{ldtunet_forward.11} parent=71 // pred_check_branch
        %483 = sbr.rel (%p481) target = $region80
      $region79: #{ldtunet_forward.11} parent=71 // pred_region
        %p484 = scmp.lt.s32.totalorder %s29, 1
        %s485 = scalar_select %p484, %s29, 1
        %s486 = smul.addr %s485, 2
        %s487 = scalar_lea.vmem %s1, %s486
      $region80: #{ldtunet_forward.11} parent=71 // pred_fallthru
        _
    $region72: #{ldtunet_forward.11} parent=5 // pred_fallthru
      _
    %p488 = scmp.le.s32.totalorder 1, %s22
    %p489 = scmp.lt.s32.totalorder %s22, 3
    %p490 = pnand %p488, %p489
    %p491 = pneg %p490
    // Predicated region
    $region81: #{ldtunet_forward.11} parent=5 // pred_check
      _
    $region82: #{ldtunet_forward.11} parent=5 // pred_check_branch
      %493 = sbr.rel (%p490) target = $region84
    $region83: #{ldtunet_forward.11} parent=5 // pred_region
      %s494 = ssub.s32 %s22, 1
      %p495 = scmp.lt.s32.totalorder %s31, 1
      %s496 = scalar_select %p495, %s31, 1
      %p497 = scmp.lt.s32.totalorder %s32, 0
      %s498 = scalar_select %p497, %s32, 0
      %s499 = sadd.s32 %s498, %s496
      %s500 = smul.addr %s499, 2
      %s501 = scalar_lea.vmem %s0, %s500
      %p502 = pneg %p62
      %p503 = pneg %p59
      %p504 = scmp.lt.s32.totalorder %s31, 1
      %s505 = scalar_select %p504, %s31, 1
      %s506 = smul.addr %s505, 2
      %s507 = scalar_lea.vmem %s1, %s506
      %p508 = pneg %p88
      %p509 = pneg %p85
      %p510 = pneg %p109
      %p511 = pneg %p106
      %p512 = pneg %p130
      %p513 = pneg %p127
      %p514 = pneg %p151
      %p515 = pneg %p148
      %p516 = pneg %p172
      %p517 = pneg %p169
      %p518 = pneg %p193
      %p519 = pneg %p190
      %p520 = pneg %p214
      %p521 = pneg %p211
      %p522 = pneg %p235
      %p523 = pneg %p232
      %p524 = pneg %p256
      %p525 = pneg %p253
      %p526 = pneg %p277
      %p527 = pneg %p274
      %p528 = pneg %p298
      %p529 = pneg %p295
      %p530 = pneg %p319
      %p531 = pneg %p316
      %p532 = pneg %p340
      %p533 = pneg %p337
      %p534 = pneg %p361
      %p535 = pneg %p358
      %p536 = pneg %p382
      %p537 = pneg %p379
      %p538 = pneg %p410
      %p539 = pneg %p407
      %p540 = scmp.lt.s32.totalorder %s31, 1
      %s541 = scalar_select %p540, %s31, 1
      %p542 = scmp.lt.s32.totalorder %s32, 0
      %s543 = scalar_select %p542, %s32, 0
      %s544 = sadd.s32 %s543, %s541
      %s545 = smul.addr %s544, 2
      %s546 = scalar_lea.vmem %s16, %s545
      %p547 = scmp.lt.s32.totalorder %s31, 1
      %s548 = scalar_select %p547, %s31, 1
      %p549 = scmp.lt.s32.totalorder %s32, 0
      %s550 = scalar_select %p549, %s32, 0
      %s551 = sadd.s32 %s550, %s548
      %s552 = smul.addr %s551, 2
      %s553 = scalar_lea.vmem %s0, %s552
      %p554 = scmp.lt.s32.totalorder %s31, 1
      %s555 = scalar_select %p554, %s31, 1
      %s556 = smul.addr %s555, 2
      %s557 = scalar_lea.vmem %s1, %s556
      %p558 = scmp.lt.s32.totalorder %s31, 1
      %s559 = scalar_select %p558, %s31, 1
      %p560 = scmp.lt.s32.totalorder %s32, 0
      %s561 = scalar_select %p560, %s32, 0
      %s562 = sadd.s32 %s561, %s559
      %s563 = smul.addr %s562, 2
      %s564 = scalar_lea.vmem %s16, %s563
      %v566 = vld [vmem:[%s553] sm:$0x3]
      %v567 = vunpack.c.l.bf16 %v566
      %v568 = vld [vmem:[%s557] sm:$0x3]
      %v569 = vunpack.c.l.bf16 %v568
      %v570 = vld [vmem:[%s2] sm:$0x1]
      %v571 = vld [vmem:[%s3] sm:$0x1]
      %vm572 = vcmask 519168
      %v573 = vsel %vm572, %v567, 0.0
      %574 = vadd.xlane.f32.xlu0 %v573
      %v575 = vpop.xlane.xlu0 %574
      %v576 = vrcp.pop 64.0
      %v577 = vmul.f32 %v575, %v576
      %v578 = vsub.f32 %v567, %v577
      %v579 = vmul.f32 %v578, %v578
      %v580 = vsel %vm572, %v579, 0.0
      %581 = vadd.xlane.f32.xlu0 %v580
      %v582 = vpop.xlane.xlu0 %581
      %v583 = vmul.f32 %v582, %v576
      %v584 = vadd.f32 %v583, 1e-05
      %v585 = vrsqrt.pop %v584
      %v586 = vmul.f32 %v578, %v585
      %v588 = vlaneseq
      %v589 = vshrl.u32 %v588, 7
      %v590 = vsub.s32 0, %v589
      %v591 = vrot.slane %v570, %v590
      %v593 = vmul.f32 %v586, %v591
      %v595 = vlaneseq
      %v596 = vshrl.u32 %v595, 7
      %v597 = vsub.s32 0, %v596
      %v598 = vrot.slane %v571, %v597
      %v600 = vadd.f32 %v593, %v598
      %v601 = vpack.c.bf16 %v600, %v600
      %v602 = vsel %vm572, %v569, 0.0
      %603 = vadd.xlane.f32.xlu0 %v602
      %v604 = vpop.xlane.xlu0 %603
      %v605 = vmul.f32 %v604, %v576
      %v606 = vsub.f32 %v569, %v605
      %v607 = vmul.f32 %v606, %v606
      %v608 = vsel %vm572, %v607, 0.0
      %609 = vadd.xlane.f32.xlu0 %v608
      %v610 = vpop.xlane.xlu0 %609
      %v611 = vmul.f32 %v610, %v576
      %v612 = vadd.f32 %v611, 1e-05
      %v613 = vrsqrt.pop %v612
      %v614 = vmul.f32 %v606, %v613
      %v615 = vmul.f32 %v614, %v591
      %v616 = vadd.f32 %v615, %v598
      %v617 = vpack.c.bf16 %v616, %v616
      %v618 = vld [vmem:[%s4] sm:$0xf]
      %v619 = vld [vmem:[%s4 + $0x4] sm:$0xf]
      %v620 = vld [vmem:[%s4 + $0x8] sm:$0xf]
      %v621 = vld [vmem:[%s4 + $0xc] sm:$0xf]
      %v622 = vld [vmem:[%s4 + $0x10] sm:$0xf]
      %v623 = vld [vmem:[%s4 + $0x14] sm:$0xf]
      %v624 = vld [vmem:[%s4 + $0x18] sm:$0xf]
      %v625 = vld [vmem:[%s4 + $0x1c] sm:$0xf]
      %v626 = vld [vmem:[%s5] sm:$0x1]
      %v628 = vlaneseq
      %v629 = vshrl.u32 %v628, 7
      %v630 = vsub.s32 0, %v629
      %v631 = vrot.slane %v626, %v630
      %v641 = vunpack.c.l.b16 %v618
      %v642 = vunpack.c.l.b16 %v619
      %v643 = vunpack.c.l.b16 %v620
      %v644 = vunpack.c.l.b16 %v621
      %v645 = vunpack.c.l.b16 %v622
      %v646 = vunpack.c.l.b16 %v623
      %v647 = vunpack.c.l.b16 %v624
      %v648 = vunpack.c.l.b16 %v625
      %v649 = vpack.c.b16 %v642, %v641
      %v650 = vpack.c.b16 %v644, %v643
      %v651 = vpack.c.b16 %v646, %v645
      %v652 = vpack.c.b16 %v648, %v647
      %vm657 = vcmask 523264
      %v659 = vsel %vm657, %v601, 0
      %661 = vmatprep.subr.bf16.mxu0 0
      %662 = vmatpush1.bf16.msra.mxu0 %v649
      %663 = vmatprep.subr.bf16.mxu0 0
      %664 = vmatpush1.bf16.msra.mxu0 %v650
      %665 = vmatprep.subr.bf16.mxu0 0
      %666 = vmatpush1.bf16.msra.mxu0 %v651
      %667 = vmatprep.subr.bf16.mxu0 0
      %668 = vmatpush1.bf16.msra.mxu0 %v652
      %669 = vmatprep.subr.bf16.mxu0 0
      %670 = vmatpush1.bf16.msra.mxu0 0
      %671 = vmatprep.subr.bf16.mxu0 0
      %672 = vmatpush1.bf16.msra.mxu0 0
      %673 = vmatprep.subr.bf16.mxu0 0
      %674 = vmatpush1.bf16.msra.mxu0 0
      %675 = vmatprep.subr.bf16.mxu0 0
      %676 = vmatpush1.bf16.msra.mxu0 0
      %677 = vmatprep.subr.bf16.mxu0 0
      %678 = vmatpush1.bf16.msra.mxu0 0
      %679 = vmatprep.subr.bf16.mxu0 0
      %680 = vmatpush1.bf16.msra.mxu0 0
      %681 = vmatprep.subr.bf16.mxu0 0
      %682 = vmatpush1.bf16.msra.mxu0 0
      %683 = vmatprep.subr.bf16.mxu0 0
      %684 = vmatpush1.bf16.msra.mxu0 0
      %685 = vmatprep.subr.bf16.mxu0 0
      %686 = vmatpush1.bf16.msra.mxu0 0
      %687 = vmatprep.subr.bf16.mxu0 0
      %688 = vmatpush1.bf16.msra.mxu0 0
      %689 = vmatprep.subr.bf16.mxu0 0
      %690 = vmatpush1.bf16.msra.mxu0 0
      %691 = vmatprep.subr.bf16.mxu0 0
      %692 = vmatpush1.bf16.msra.mxu0 0
      %693 = vmatprep.mubr.bf16.mxu0 0
      %694 = vmatmul.mubr.bf16.gmra.mrb[0].mxu0 %v659
      %v695 = vpop.f32.mrb[0].mxu0
      %v696 = vadd.f32 %v631, %v695
      %v697 = vpop.f32.mrb[0].mxu0
      %v698 = vpop.f32.mrb[0].mxu0
      %v699 = vpop.f32.mrb[0].mxu0
      %700 = vdwg.mxu0
      %v701 = vld [vmem:[%s6] sm:$0xf]
      %v702 = vld [vmem:[%s6 + $0x4] sm:$0xf]
      %v703 = vld [vmem:[%s6 + $0x8] sm:$0xf]
      %v704 = vld [vmem:[%s6 + $0xc] sm:$0xf]
      %v705 = vld [vmem:[%s6 + $0x10] sm:$0xf]
      %v706 = vld [vmem:[%s6 + $0x14] sm:$0xf]
      %v707 = vld [vmem:[%s6 + $0x18] sm:$0xf]
      %v708 = vld [vmem:[%s6 + $0x1c] sm:$0xf]
      %v709 = vld [vmem:[%s7] sm:$0x1]
      %v711 = vlaneseq
      %v712 = vshrl.u32 %v711, 7
      %v713 = vsub.s32 0, %v712
      %v714 = vrot.slane %v709, %v713
      %v724 = vunpack.c.l.b16 %v701
      %v725 = vunpack.c.l.b16 %v702
      %v726 = vunpack.c.l.b16 %v703
      %v727 = vunpack.c.l.b16 %v704
      %v728 = vunpack.c.l.b16 %v705
      %v729 = vunpack.c.l.b16 %v706
      %v730 = vunpack.c.l.b16 %v707
      %v731 = vunpack.c.l.b16 %v708
      %v732 = vpack.c.b16 %v725, %v724
      %v733 = vpack.c.b16 %v727, %v726
      %v734 = vpack.c.b16 %v729, %v728
      %v735 = vpack.c.b16 %v731, %v730
      %v741 = vsel %vm657, %v617, 0
      %743 = vmatprep.subr.bf16.mxu0 0
      %744 = vmatpush1.bf16.msra.mxu0 %v732
      %745 = vmatprep.subr.bf16.mxu0 0
      %746 = vmatpush1.bf16.msra.mxu0 %v733
      %747 = vmatprep.subr.bf16.mxu0 0
      %748 = vmatpush1.bf16.msra.mxu0 %v734
      %749 = vmatprep.subr.bf16.mxu0 0
      %750 = vmatpush1.bf16.msra.mxu0 %v735
      %751 = vmatprep.subr.bf16.mxu0 0
      %752 = vmatpush1.bf16.msra.mxu0 0
      %753 = vmatprep.subr.bf16.mxu0 0
      %754 = vmatpush1.bf16.msra.mxu0 0
      %755 = vmatprep.subr.bf16.mxu0 0
      %756 = vmatpush1.bf16.msra.mxu0 0
      %757 = vmatprep.subr.bf16.mxu0 0
      %758 = vmatpush1.bf16.msra.mxu0 0
      %759 = vmatprep.subr.bf16.mxu0 0
      %760 = vmatpush1.bf16.msra.mxu0 0
      %761 = vmatprep.subr.bf16.mxu0 0
      %762 = vmatpush1.bf16.msra.mxu0 0
      %763 = vmatprep.subr.bf16.mxu0 0
      %764 = vmatpush1.bf16.msra.mxu0 0
      %765 = vmatprep.subr.bf16.mxu0 0
      %766 = vmatpush1.bf16.msra.mxu0 0
      %767 = vmatprep.subr.bf16.mxu0 0
      %768 = vmatpush1.bf16.msra.mxu0 0
      %769 = vmatprep.subr.bf16.mxu0 0
      %770 = vmatpush1.bf16.msra.mxu0 0
      %771 = vmatprep.subr.bf16.mxu0 0
      %772 = vmatpush1.bf16.msra.mxu0 0
      %773 = vmatprep.subr.bf16.mxu0 0
      %774 = vmatpush1.bf16.msra.mxu0 0
      %775 = vmatprep.mubr.bf16.mxu0 0
      %776 = vmatmul.mubr.bf16.gmra.mrb[0].mxu0 %v741
      %v777 = vpop.f32.mrb[0].mxu0
      %v778 = vadd.f32 %v714, %v777
      %v779 = vpop.f32.mrb[0].mxu0
      %v780 = vpop.f32.mrb[0].mxu0
      %v781 = vpop.f32.mrb[0].mxu0
      %782 = vdwg.mxu0
      %784 = vrot.lane.b32.xlu0 %v696, 112
      %v785 = vpop.permute.xlu0 %784
      %787 = vrot.lane.b32.xlu0 %v696, 96
      %v788 = vpop.permute.xlu0 %787
      %790 = vrot.lane.b32.xlu0 %v696, 80
      %v791 = vpop.permute.xlu0 %790
      %v793 = vpack.c.bf16 %v696, %v696
      %v794 = vpack.c.bf16 %v785, %v785
      %v795 = vpack.c.bf16 %v788, %v788
      %v796 = vpack.c.bf16 %v791, %v791
      %798 = vrot.lane.b32.xlu0 %v778, 112
      %v799 = vpop.permute.xlu0 %798
      %801 = vrot.lane.b32.xlu0 %v778, 96
      %v802 = vpop.permute.xlu0 %801
      %804 = vrot.lane.b32.xlu0 %v778, 80
      %v805 = vpop.permute.xlu0 %804
      %v807 = vpack.c.bf16 %v778, %v778
      %v808 = vpack.c.bf16 %v799, %v799
      %v809 = vpack.c.bf16 %v802, %v802
      %v810 = vpack.c.bf16 %v805, %v805
      %vm811 = vcmask 130048
      %v813 = vsel %vm811, %v793, 0
      %v816 = vsel %vm811, %v807, 0
      %818 = vmatprep.subr.bf16.mxu0 0
      %819 = vmatpush1.bf16.xpose.msra.mxu0 %v816
      %820 = vmatprep.subr.bf16.mxu0 0
      %821 = vmatpush1.bf16.xpose.msra.mxu0 0
      %822 = vmatprep.subr.bf16.mxu0 0
      %823 = vmatpush1.bf16.xpose.msra.mxu0 0
      %824 = vmatprep.subr.bf16.mxu0 0
      %825 = vmatpush1.bf16.xpose.msra.mxu0 0
      %826 = vmatprep.subr.bf16.mxu0 0
      %827 = vmatpush1.bf16.xpose.msra.mxu0 0
      %828 = vmatprep.subr.bf16.mxu0 0
      %829 = vmatpush1.bf16.xpose.msra.mxu0 0
      %830 = vmatprep.subr.bf16.mxu0 0
      %831 = vmatpush1.bf16.xpose.msra.mxu0 0
      %832 = vmatprep.subr.bf16.mxu0 0
      %833 = vmatpush1.bf16.xpose.msra.mxu0 0
      %834 = vmatprep.subr.bf16.mxu0 0
      %835 = vmatpush1.bf16.xpose.msra.mxu0 0
      %836 = vmatprep.subr.bf16.mxu0 0
      %837 = vmatpush1.bf16.xpose.msra.mxu0 0
      %838 = vmatprep.subr.bf16.mxu0 0
      %839 = vmatpush1.bf16.xpose.msra.mxu0 0
      %840 = vmatprep.subr.bf16.mxu0 0
      %841 = vmatpush1.bf16.xpose.msra.mxu0 0
      %842 = vmatprep.subr.bf16.mxu0 0
      %843 = vmatpush1.bf16.xpose.msra.mxu0 0
      %844 = vmatprep.subr.bf16.mxu0 0
      %845 = vmatpush1.bf16.xpose.msra.mxu0 0
      %846 = vmatprep.subr.bf16.mxu0 0
      %847 = vmatpush1.bf16.xpose.msra.mxu0 0
      %848 = vmatprep.subr.bf16.mxu0 0
      %849 = vmatpush1.bf16.xpose.msra.mxu0 0
      %850 = vmatprep.mubr.bf16.mxu0 0
      %851 = vmatmul.mubr.bf16.gmra.mrb[0].mxu0 %v813
      %v852 = vpop.f32.mrb[0].mxu0
      %v853 = vadd.f32 0.0, %v852
      %v854 = vpop.f32.mrb[0].mxu0
      %v855 = vpop.f32.mrb[0].mxu0
      %v856 = vpop.f32.mrb[0].mxu0
      %857 = vdwg.mxu0
      %v859 = vsel %vm811, %v794, 0
      %v862 = vsel %vm811, %v808, 0
      %864 = vmatprep.subr.bf16.mxu0 0
      %865 = vmatpush1.bf16.xpose.msra.mxu0 %v862
      %866 = vmatprep.subr.bf16.mxu0 0
      %867 = vmatpush1.bf16.xpose.msra.mxu0 0
      %868 = vmatprep.subr.bf16.mxu0 0
      %869 = vmatpush1.bf16.xpose.msra.mxu0 0
      %870 = vmatprep.subr.bf16.mxu0 0
      %871 = vmatpush1.bf16.xpose.msra.mxu0 0
      %872 = vmatprep.subr.bf16.mxu0 0
      %873 = vmatpush1.bf16.xpose.msra.mxu0 0
      %874 = vmatprep.subr.bf16.mxu0 0
      %875 = vmatpush1.bf16.xpose.msra.mxu0 0
      %876 = vmatprep.subr.bf16.mxu0 0
      %877 = vmatpush1.bf16.xpose.msra.mxu0 0
      %878 = vmatprep.subr.bf16.mxu0 0
      %879 = vmatpush1.bf16.xpose.msra.mxu0 0
      %880 = vmatprep.subr.bf16.mxu0 0
      %881 = vmatpush1.bf16.xpose.msra.mxu0 0
      %882 = vmatprep.subr.bf16.mxu0 0
      %883 = vmatpush1.bf16.xpose.msra.mxu0 0
      %884 = vmatprep.subr.bf16.mxu0 0
      %885 = vmatpush1.bf16.xpose.msra.mxu0 0
      %886 = vmatprep.subr.bf16.mxu0 0
      %887 = vmatpush1.bf16.xpose.msra.mxu0 0
      %888 = vmatprep.subr.bf16.mxu0 0
      %889 = vmatpush1.bf16.xpose.msra.mxu0 0
      %890 = vmatprep.subr.bf16.mxu0 0
      %891 = vmatpush1.bf16.xpose.msra.mxu0 0
      %892 = vmatprep.subr.bf16.mxu0 0
      %893 = vmatpush1.bf16.xpose.msra.mxu0 0
      %894 = vmatprep.subr.bf16.mxu0 0
      %895 = vmatpush1.bf16.xpose.msra.mxu0 0
      %896 = vmatprep.mubr.bf16.mxu0 0
      %897 = vmatmul.mubr.bf16.gmra.mrb[0].mxu0 %v859
      %v898 = vpop.f32.mrb[0].mxu0
      %v899 = vadd.f32 0.0, %v898
      %v900 = vpop.f32.mrb[0].mxu0
      %v901 = vpop.f32.mrb[0].mxu0
      %v902 = vpop.f32.mrb[0].mxu0
      %903 = vdwg.mxu0
      %v905 = vsel %vm811, %v795, 0
      %v908 = vsel %vm811, %v809, 0
      %910 = vmatprep.subr.bf16.mxu0 0
      %911 = vmatpush1.bf16.xpose.msra.mxu0 %v908
      %912 = vmatprep.subr.bf16.mxu0 0
      %913 = vmatpush1.bf16.xpose.msra.mxu0 0
      %914 = vmatprep.subr.bf16.mxu0 0
      %915 = vmatpush1.bf16.xpose.msra.mxu0 0
      %916 = vmatprep.subr.bf16.mxu0 0
      %917 = vmatpush1.bf16.xpose.msra.mxu0 0
      %918 = vmatprep.subr.bf16.mxu0 0
      %919 = vmatpush1.bf16.xpose.msra.mxu0 0
      %920 = vmatprep.subr.bf16.mxu0 0
      %921 = vmatpush1.bf16.xpose.msra.mxu0 0
      %922 = vmatprep.subr.bf16.mxu0 0
      %923 = vmatpush1.bf16.xpose.msra.mxu0 0
      %924 = vmatprep.subr.bf16.mxu0 0
      %925 = vmatpush1.bf16.xpose.msra.mxu0 0
      %926 = vmatprep.subr.bf16.mxu0 0
      %927 = vmatpush1.bf16.xpose.msra.mxu0 0
      %928 = vmatprep.subr.bf16.mxu0 0
      %929 = vmatpush1.bf16.xpose.msra.mxu0 0
      %930 = vmatprep.subr.bf16.mxu0 0
      %931 = vmatpush1.bf16.xpose.msra.mxu0 0
      %932 = vmatprep.subr.bf16.mxu0 0
      %933 = vmatpush1.bf16.xpose.msra.mxu0 0
      %934 = vmatprep.subr.bf16.mxu0 0
      %935 = vmatpush1.bf16.xpose.msra.mxu0 0
      %936 = vmatprep.subr.bf16.mxu0 0
      %937 = vmatpush1.bf16.xpose.msra.mxu0 0
      %938 = vmatprep.subr.bf16.mxu0 0
      %939 = vmatpush1.bf16.xpose.msra.mxu0 0
      %940 = vmatprep.subr.bf16.mxu0 0
      %941 = vmatpush1.bf16.xpose.msra.mxu0 0
      %942 = vmatprep.mubr.bf16.mxu0 0
      %943 = vmatmul.mubr.bf16.gmra.mrb[0].mxu0 %v905
      %v944 = vpop.f32.mrb[0].mxu0
      %v945 = vadd.f32 0.0, %v944
      %v946 = vpop.f32.mrb[0].mxu0
      %v947 = vpop.f32.mrb[0].mxu0
      %v948 = vpop.f32.mrb[0].mxu0
      %949 = vdwg.mxu0
      %v951 = vsel %vm811, %v796, 0
      %v954 = vsel %vm811, %v810, 0
      %956 = vmatprep.subr.bf16.mxu0 0
      %957 = vmatpush1.bf16.xpose.msra.mxu0 %v954
      %958 = vmatprep.subr.bf16.mxu0 0
      %959 = vmatpush1.bf16.xpose.msra.mxu0 0
      %960 = vmatprep.subr.bf16.mxu0 0
      %961 = vmatpush1.bf16.xpose.msra.mxu0 0
      %962 = vmatprep.subr.bf16.mxu0 0
      %963 = vmatpush1.bf16.xpose.msra.mxu0 0
      %964 = vmatprep.subr.bf16.mxu0 0
      %965 = vmatpush1.bf16.xpose.msra.mxu0 0
      %966 = vmatprep.subr.bf16.mxu0 0
      %967 = vmatpush1.bf16.xpose.msra.mxu0 0
      %968 = vmatprep.subr.bf16.mxu0 0
      %969 = vmatpush1.bf16.xpose.msra.mxu0 0
      %970 = vmatprep.subr.bf16.mxu0 0
      %971 = vmatpush1.bf16.xpose.msra.mxu0 0
      %972 = vmatprep.subr.bf16.mxu0 0
      %973 = vmatpush1.bf16.xpose.msra.mxu0 0
      %974 = vmatprep.subr.bf16.mxu0 0
      %975 = vmatpush1.bf16.xpose.msra.mxu0 0
      %976 = vmatprep.subr.bf16.mxu0 0
      %977 = vmatpush1.bf16.xpose.msra.mxu0 0
      %978 = vmatprep.subr.bf16.mxu0 0
      %979 = vmatpush1.bf16.xpose.msra.mxu0 0
      %980 = vmatprep.subr.bf16.mxu0 0
      %981 = vmatpush1.bf16.xpose.msra.mxu0 0
      %982 = vmatprep.subr.bf16.mxu0 0
      %983 = vmatpush1.bf16.xpose.msra.mxu0 0
      %984 = vmatprep.subr.bf16.mxu0 0
      %985 = vmatpush1.bf16.xpose.msra.mxu0 0
      %986 = vmatprep.subr.bf16.mxu0 0
      %987 = vmatpush1.bf16.xpose.msra.mxu0 0
      %988 = vmatprep.mubr.bf16.mxu0 0
      %989 = vmatmul.mubr.bf16.gmra.mrb[0].mxu0 %v951
      %v990 = vpop.f32.mrb[0].mxu0
      %v991 = vadd.f32 0.0, %v990
      %v992 = vpop.f32.mrb[0].mxu0
      %v993 = vpop.f32.mrb[0].mxu0
      %v994 = vpop.f32.mrb[0].mxu0
      %995 = vdwg.mxu0
      %v996 = vmul.f32 %v853, 0.25
      %v997 = vmul.f32 %v899, 0.25
      %v998 = vmul.f32 %v945, 0.25
      %v999 = vmul.f32 %v991, 0.25
      %vm1000 = vcmask 27648
      %v1001 = vsel %vm1000, %v996, -inf
      %1002 = vmax.xlane.f32.xlu0 %v1001
      %v1003 = vpop.xlane.xlu0 %1002
      %v1004 = vsel %vm1000, %v997, -inf
      %1005 = vmax.xlane.f32.xlu0 %v1004
      %v1006 = vpop.xlane.xlu0 %1005
      %v1007 = vsel %vm1000, %v998, -inf
      %1008 = vmax.xlane.f32.xlu0 %v1007
      %v1009 = vpop.xlane.xlu0 %1008
      %v1010 = vsel %vm1000, %v999, -inf
      %1011 = vmax.xlane.f32.xlu0 %v1010
      %v1012 = vpop.xlane.xlu0 %1011
      %v1013 = vsub.f32 %v996, %v1003
      %v1014 = vsub.f32 %v997, %v1006
      %v1015 = vsub.f32 %v998, %v1009
      %v1016 = vsub.f32 %v999, %v1012
      %v1017 = vmul.f32 %v1013, 1.442695
      %v1018 = vpow.pop %v1017
      %v1019 = vmul.f32 %v1014, 1.442695
      %v1020 = vpow.pop %v1019
      %v1021 = vmul.f32 %v1015, 1.442695
      %v1022 = vpow.pop %v1021
      %v1023 = vmul.f32 %v1016, 1.442695
      %v1024 = vpow.pop %v1023
      %v1025 = vsel %vm1000, %v1018, 0.0
      %1026 = vadd.xlane.f32.xlu0 %v1025
      %v1027 = vpop.xlane.xlu0 %1026
      %v1028 = vsel %vm1000, %v1020, 0.0
      %1029 = vadd.xlane.f32.xlu0 %v1028
      %v1030 = vpop.xlane.xlu0 %1029
      %v1031 = vsel %vm1000, %v1022, 0.0
      %1032 = vadd.xlane.f32.xlu0 %v1031
      %v1033 = vpop.xlane.xlu0 %1032
      %v1034 = vsel %vm1000, %v1024, 0.0
      %1035 = vadd.xlane.f32.xlu0 %v1034
      %v1036 = vpop.xlane.xlu0 %1035
      %v1037 = vrcp.pop %v1027
      %v1038 = vmul.f32 %v1018, %v1037
      %v1039 = vrcp.pop %v1030
      %v1040 = vmul.f32 %v1020, %v1039
      %v1041 = vrcp.pop %v1033
      %v1042 = vmul.f32 %v1022, %v1041
      %v1043 = vrcp.pop %v1036
      %v1044 = vmul.f32 %v1024, %v1043
      %v1045 = vpack.c.bf16 %v1038, %v1038
      %v1046 = vpack.c.bf16 %v1040, %v1040
      %v1047 = vpack.c.bf16 %v1042, %v1042
      %v1048 = vpack.c.bf16 %v1044, %v1044
      %1050 = vrot.lane.b32.xlu0 %v807, 64
      %v1051 = vpop.permute.xlu0 %1050
      %vm1052 = vcmask 31744
      %v1054 = vsel %vm1052, %v1045, 0
      %vm1056 = vcmask 1041408
      %v1058 = vsel %vm1056, %v1051, 0
      %1060 = vmatprep.subr.bf16.mxu0 0
      %1061 = vmatpush1.bf16.msra.mxu0 %v1058
      %1062 = vmatprep.subr.bf16.mxu0 0
      %1063 = vmatpush1.bf16.msra.mxu0 0
      %1064 = vmatprep.subr.bf16.mxu0 0
      %1065 = vmatpush1.bf16.msra.mxu0 0
      %1066 = vmatprep.subr.bf16.mxu0 0
      %1067 = vmatpush1.bf16.msra.mxu0 0
      %1068 = vmatprep.subr.bf16.mxu0 0
      %1069 = vmatpush1.bf16.msra.mxu0 0
      %1070 = vmatprep.subr.bf16.mxu0 0
      %1071 = vmatpush1.bf16.msra.mxu0 0
      %1072 = vmatprep.subr.bf16.mxu0 0
      %1073 = vmatpush1.bf16.msra.mxu0 0
      %1074 = vmatprep.subr.bf16.mxu0 0
      %1075 = vmatpush1.bf16.msra.mxu0 0
      %1076 = vmatprep.subr.bf16.mxu0 0
      %1077 = vmatpush1.bf16.msra.mxu0 0
      %1078 = vmatprep.subr.bf16.mxu0 0
      %1079 = vmatpush1.bf16.msra.mxu0 0
      %1080 = vmatprep.subr.bf16.mxu0 0
      %1081 = vmatpush1.bf16.msra.mxu0 0
      %1082 = vmatprep.subr.bf16.mxu0 0
      %1083 = vmatpush1.bf16.msra.mxu0 0
      %1084 = vmatprep.subr.bf16.mxu0 0
      %1085 = vmatpush1.bf16.msra.mxu0 0
      %1086 = vmatprep.subr.bf16.mxu0 0
      %1087 = vmatpush1.bf16.msra.mxu0 0
      %1088 = vmatprep.subr.bf16.mxu0 0
      %1089 = vmatpush1.bf16.msra.mxu0 0
      %1090 = vmatprep.subr.bf16.mxu0 0
      %1091 = vmatpush1.bf16.msra.mxu0 0
      %1092 = vmatprep.mubr.bf16.mxu0 0
      %1093 = vmatmul.mubr.bf16.gmra.mrb[0].mxu0 %v1054
      %v1094 = vpop.f32.mrb[0].mxu0
      %v1095 = vadd.f32 0.0, %v1094
      %v1096 = vpop.f32.mrb[0].mxu0
      %v1097 = vpop.f32.mrb[0].mxu0
      %v1098 = vpop.f32.mrb[0].mxu0
      %1099 = vdwg.mxu0
      %1101 = vrot.lane.b32.xlu0 %v808, 64
      %v1102 = vpop.permute.xlu0 %1101
      %v1104 = vsel %vm1052, %v1046, 0
      %v1107 = vsel %vm1056, %v1102, 0
      %1109 = vmatprep.subr.bf16.mxu0 0
      %1110 = vmatpush1.bf16.msra.mxu0 %v1107
      %1111 = vmatprep.subr.bf16.mxu0 0
      %1112 = vmatpush1.bf16.msra.mxu0 0
      %1113 = vmatprep.subr.bf16.mxu0 0
      %1114 = vmatpush1.bf16.msra.mxu0 0
      %1115 = vmatprep.subr.bf16.mxu0 0
      %1116 = vmatpush1.bf16.msra.mxu0 0
      %1117 = vmatprep.subr.bf16.mxu0 0
      %1118 = vmatpush1.bf16.msra.mxu0 0
      %1119 = vmatprep.subr.bf16.mxu0 0
      %1120 = vmatpush1.bf16.msra.mxu0 0
      %1121 = vmatprep.subr.bf16.mxu0 0
      %1122 = vmatpush1.bf16.msra.mxu0 0
      %1123 = vmatprep.subr.bf16.mxu0 0
      %1124 = vmatpush1.bf16.msra.mxu0 0
      %1125 = vmatprep.subr.bf16.mxu0 0
      %1126 = vmatpush1.bf16.msra.mxu0 0
      %1127 = vmatprep.subr.bf16.mxu0 0
      %1128 = vmatpush1.bf16.msra.mxu0 0
      %1129 = vmatprep.subr.bf16.mxu0 0
      %1130 = vmatpush1.bf16.msra.mxu0 0
      %1131 = vmatprep.subr.bf16.mxu0 0
      %1132 = vmatpush1.bf16.msra.mxu0 0
      %1133 = vmatprep.subr.bf16.mxu0 0
      %1134 = vmatpush1.bf16.msra.mxu0 0
      %1135 = vmatprep.subr.bf16.mxu0 0
      %1136 = vmatpush1.bf16.msra.mxu0 0
      %1137 = vmatprep.subr.bf16.mxu0 0
      %1138 = vmatpush1.bf16.msra.mxu0 0
      %1139 = vmatprep.subr.bf16.mxu0 0
      %1140 = vmatpush1.bf16.msra.mxu0 0
      %1141 = vmatprep.mubr.bf16.mxu0 0
      %1142 = vmatmul.mubr.bf16.gmra.mrb[0].mxu0 %v1104
      %v1143 = vpop.f32.mrb[0].mxu0
      %v1144 = vadd.f32 0.0, %v1143
      %v1145 = vpop.f32.mrb[0].mxu0
      %v1146 = vpop.f32.mrb[0].mxu0
      %v1147 = vpop.f32.mrb[0].mxu0
      %1148 = vdwg.mxu0
      %1150 = vrot.lane.b32.xlu0 %v809, 64
      %v1151 = vpop.permute.xlu0 %1150
      %v1153 = vsel %vm1052, %v1047, 0
      %v1156 = vsel %vm1056, %v1151, 0
      %1158 = vmatprep.subr.bf16.mxu0 0
      %1159 = vmatpush1.bf16.msra.mxu0 %v1156
      %1160 = vmatprep.subr.bf16.mxu0 0
      %1161 = vmatpush1.bf16.msra.mxu0 0
      %1162 = vmatprep.subr.bf16.mxu0 0
      %1163 = vmatpush1.bf16.msra.mxu0 0
      %1164 = vmatprep.subr.bf16.mxu0 0
      %1165 = vmatpush1.bf16.msra.mxu0 0
      %1166 = vmatprep.subr.bf16.mxu0 0
      %1167 = vmatpush1.bf16.msra.mxu0 0
      %1168 = vmatprep.subr.bf16.mxu0 0
      %1169 = vmatpush1.bf16.msra.mxu0 0
      %1170 = vmatprep.subr.bf16.mxu0 0
      %1171 = vmatpush1.bf16.msra.mxu0 0
      %1172 = vmatprep.subr.bf16.mxu0 0
      %1173 = vmatpush1.bf16.msra.mxu0 0
      %1174 = vmatprep.subr.bf16.mxu0 0
      %1175 = vmatpush1.bf16.msra.mxu0 0
      %1176 = vmatprep.subr.bf16.mxu0 0
      %1177 = vmatpush1.bf16.msra.mxu0 0
      %1178 = vmatprep.subr.bf16.mxu0 0
      %1179 = vmatpush1.bf16.msra.mxu0 0
      %1180 = vmatprep.subr.bf16.mxu0 0
      %1181 = vmatpush1.bf16.msra.mxu0 0
      %1182 = vmatprep.subr.bf16.mxu0 0
      %1183 = vmatpush1.bf16.msra.mxu0 0
      %1184 = vmatprep.subr.bf16.mxu0 0
      %1185 = vmatpush1.bf16.msra.mxu0 0
      %1186 = vmatprep.subr.bf16.mxu0 0
      %1187 = vmatpush1.bf16.msra.mxu0 0
      %1188 = vmatprep.subr.bf16.mxu0 0
      %1189 = vmatpush1.bf16.msra.mxu0 0
      %1190 = vmatprep.mubr.bf16.mxu0 0
      %1191 = vmatmul.mubr.bf16.gmra.mrb[0].mxu0 %v1153
      %v1192 = vpop.f32.mrb[0].mxu0
      %v1193 = vadd.f32 0.0, %v1192
      %v1194 = vpop.f32.mrb[0].mxu0
      %v1195 = vpop.f32.mrb[0].mxu0
      %v1196 = vpop.f32.mrb[0].mxu0
      %1197 = vdwg.mxu0
      %1199 = vrot.lane.b32.xlu0 %v810, 64
      %v1200 = vpop.permute.xlu0 %1199
      %v1202 = vsel %vm1052, %v1048, 0
      %v1205 = vsel %vm1056, %v1200, 0
      %1207 = vmatprep.subr.bf16.mxu0 0
      %1208 = vmatpush1.bf16.msra.mxu0 %v1205
      %1209 = vmatprep.subr.bf16.mxu0 0
      %1210 = vmatpush1.bf16.msra.mxu0 0
      %1211 = vmatprep.subr.bf16.mxu0 0
      %1212 = vmatpush1.bf16.msra.mxu0 0
      %1213 = vmatprep.subr.bf16.mxu0 0
      %1214 = vmatpush1.bf16.msra.mxu0 0
      %1215 = vmatprep.subr.bf16.mxu0 0
      %1216 = vmatpush1.bf16.msra.mxu0 0
      %1217 = vmatprep.subr.bf16.mxu0 0
      %1218 = vmatpush1.bf16.msra.mxu0 0
      %1219 = vmatprep.subr.bf16.mxu0 0
      %1220 = vmatpush1.bf16.msra.mxu0 0
      %1221 = vmatprep.subr.bf16.mxu0 0
      %1222 = vmatpush1.bf16.msra.mxu0 0
      %1223 = vmatprep.subr.bf16.mxu0 0
      %1224 = vmatpush1.bf16.msra.mxu0 0
      %1225 = vmatprep.subr.bf16.mxu0 0
      %1226 = vmatpush1.bf16.msra.mxu0 0
      %1227 = vmatprep.subr.bf16.mxu0 0
      %1228 = vmatpush1.bf16.msra.mxu0 0
      %1229 = vmatprep.subr.bf16.mxu0 0
      %1230 = vmatpush1.bf16.msra.mxu0 0
      %1231 = vmatprep.subr.bf16.mxu0 0
      %1232 = vmatpush1.bf16.msra.mxu0 0
      %1233 = vmatprep.subr.bf16.mxu0 0
      %1234 = vmatpush1.bf16.msra.mxu0 0
      %1235 = vmatprep.subr.bf16.mxu0 0
      %1236 = vmatpush1.bf16.msra.mxu0 0
      %1237 = vmatprep.subr.bf16.mxu0 0
      %1238 = vmatpush1.bf16.msra.mxu0 0
      %1239 = vmatprep.mubr.bf16.mxu0 0
      %1240 = vmatmul.mubr.bf16.gmra.mrb[0].mxu0 %v1202
      %v1241 = vpop.f32.mrb[0].mxu0
      %v1242 = vadd.f32 0.0, %v1241
      %v1243 = vpop.f32.mrb[0].mxu0
      %v1244 = vpop.f32.mrb[0].mxu0
      %v1245 = vpop.f32.mrb[0].mxu0
      %1246 = vdwg.mxu0
      %1248 = vrot.lane.b32.xlu0 %v1144, 16
      %v1249 = vpop.permute.xlu0 %1248
      %1252 = vrot.lane.b32.xlu0 %v1193, 32
      %v1253 = vpop.permute.xlu0 %1252
      %1256 = vrot.lane.b32.xlu0 %v1242, 48
      %v1257 = vpop.permute.xlu0 %1256
      %v1259 = vsel %vm811, %v1095, %v1249
      %vm1260 = vcmask 261120
      %v1261 = vsel %vm1260, %v1259, %v1253
      %vm1262 = vcmask 392192
      %v1263 = vsel %vm1262, %v1261, %v1257
      %v1264 = vpack.c.bf16 %v1263, %v1263
      %v1265 = vld [vmem:[%s8] sm:$0xf]
      %v1266 = vld [vmem:[%s8 + $0x4] sm:$0xf]
      %v1267 = vld [vmem:[%s8 + $0x8] sm:$0xf]
      %v1268 = vld [vmem:[%s8 + $0xc] sm:$0xf]
      %v1269 = vld [vmem:[%s8 + $0x10] sm:$0xf]
      %v1270 = vld [vmem:[%s8 + $0x14] sm:$0xf]
      %v1271 = vld [vmem:[%s8 + $0x18] sm:$0xf]
      %v1272 = vld [vmem:[%s8 + $0x1c] sm:$0xf]
      %v1281 = vunpack.c.l.b16 %v1265
      %v1282 = vunpack.c.l.b16 %v1266
      %v1283 = vunpack.c.l.b16 %v1267
      %v1284 = vunpack.c.l.b16 %v1268
      %v1285 = vunpack.c.l.b16 %v1269
      %v1286 = vunpack.c.l.b16 %v1270
      %v1287 = vunpack.c.l.b16 %v1271
      %v1288 = vunpack.c.l.b16 %v1272
      %v1289 = vpack.c.b16 %v1282, %v1281
      %v1290 = vpack.c.b16 %v1284, %v1283
      %v1291 = vpack.c.b16 %v1286, %v1285
      %v1292 = vpack.c.b16 %v1288, %v1287
      %v1298 = vsel %vm657, %v1264, 0
      %1300 = vmatprep.subr.bf16.mxu0 0
      %1301 = vmatpush1.bf16.msra.mxu0 %v1289
      %1302 = vmatprep.subr.bf16.mxu0 0
      %1303 = vmatpush1.bf16.msra.mxu0 %v1290
      %1304 = vmatprep.subr.bf16.mxu0 0
      %1305 = vmatpush1.bf16.msra.mxu0 %v1291
      %1306 = vmatprep.subr.bf16.mxu0 0
      %1307 = vmatpush1.bf16.msra.mxu0 %v1292
      %1308 = vmatprep.subr.bf16.mxu0 0
      %1309 = vmatpush1.bf16.msra.mxu0 0
      %1310 = vmatprep.subr.bf16.mxu0 0
      %1311 = vmatpush1.bf16.msra.mxu0 0
      %1312 = vmatprep.subr.bf16.mxu0 0
      %1313 = vmatpush1.bf16.msra.mxu0 0
      %1314 = vmatprep.subr.bf16.mxu0 0
      %1315 = vmatpush1.bf16.msra.mxu0 0
      %1316 = vmatprep.subr.bf16.mxu0 0
      %1317 = vmatpush1.bf16.msra.mxu0 0
      %1318 = vmatprep.subr.bf16.mxu0 0
      %1319 = vmatpush1.bf16.msra.mxu0 0
      %1320 = vmatprep.subr.bf16.mxu0 0
      %1321 = vmatpush1.bf16.msra.mxu0 0
      %1322 = vmatprep.subr.bf16.mxu0 0
      %1323 = vmatpush1.bf16.msra.mxu0 0
      %1324 = vmatprep.subr.bf16.mxu0 0
      %1325 = vmatpush1.bf16.msra.mxu0 0
      %1326 = vmatprep.subr.bf16.mxu0 0
      %1327 = vmatpush1.bf16.msra.mxu0 0
      %1328 = vmatprep.subr.bf16.mxu0 0
      %1329 = vmatpush1.bf16.msra.mxu0 0
      %1330 = vmatprep.subr.bf16.mxu0 0
      %1331 = vmatpush1.bf16.msra.mxu0 0
      %1332 = vmatprep.mubr.bf16.mxu0 0
      %1333 = vmatmul.mubr.bf16.gmra.mrb[0].mxu0 %v1298
      %v1334 = vpop.f32.mrb[0].mxu0
      %v1335 = vadd.f32 0.0, %v1334
      %v1336 = vpop.f32.mrb[0].mxu0
      %v1337 = vpop.f32.mrb[0].mxu0
      %v1338 = vpop.f32.mrb[0].mxu0
      %1339 = vdwg.mxu0
      %v1340 = vadd.f32 %v567, %v1335
      %v1341 = vld [vmem:[%s9] sm:$0x1]
      %v1343 = vlaneseq
      %v1344 = vshrl.u32 %v1343, 7
      %v1345 = vsub.s32 0, %v1344
      %v1346 = vrot.slane %v1341, %v1345
      %v1348 = vadd.f32 %v1340, %v1346
      %v1349 = vld [vmem:[%s10] sm:$0x1]
      %v1350 = vld [vmem:[%s11] sm:$0x1]
      %v1351 = vsel %vm572, %v1348, 0.0
      %1352 = vadd.xlane.f32.xlu0 %v1351
      %v1353 = vpop.xlane.xlu0 %1352
      %v1354 = vmul.f32 %v1353, %v576
      %v1355 = vsub.f32 %v1348, %v1354
      %v1356 = vmul.f32 %v1355, %v1355
      %v1357 = vsel %vm572, %v1356, 0.0
      %1358 = vadd.xlane.f32.xlu0 %v1357
      %v1359 = vpop.xlane.xlu0 %1358
      %v1360 = vmul.f32 %v1359, %v576
      %v1361 = vadd.f32 %v1360, 1e-05
      %v1362 = vrsqrt.pop %v1361
      %v1363 = vmul.f32 %v1355, %v1362
      %v1365 = vlaneseq
      %v1366 = vshrl.u32 %v1365, 7
      %v1367 = vsub.s32 0, %v1366
      %v1368 = vrot.slane %v1349, %v1367
      %v1370 = vmul.f32 %v1363, %v1368
      %v1372 = vlaneseq
      %v1373 = vshrl.u32 %v1372, 7
      %v1374 = vsub.s32 0, %v1373
      %v1375 = vrot.slane %v1350, %v1374
      %v1377 = vadd.f32 %v1370, %v1375
      %v1378 = vpack.c.bf16 %v1377, %v1377
      %v1379 = vld [vmem:[%s12] sm:$0xff]
      %v1380 = vld [vmem:[%s12 + $0x8] sm:$0xff]
      %v1381 = vld [vmem:[%s12 + $0x10] sm:$0xff]
      %v1382 = vld [vmem:[%s12 + $0x18] sm:$0xff]
      %v1383 = vld [vmem:[%s12 + $0x20] sm:$0xff]
      %v1384 = vld [vmem:[%s12 + $0x28] sm:$0xff]
      %v1385 = vld [vmem:[%s12 + $0x30] sm:$0xff]
      %v1386 = vld [vmem:[%s12 + $0x38] sm:$0xff]
      %v1387 = vld [vmem:[%s13] sm:$0x3]
      %v1389 = vlaneseq
      %v1390 = vshrl.u32 %v1389, 7
      %v1391 = vsub.s32 0, %v1390
      %v1392 = vrot.slane %v1387, %v1391
      %v1393 = vlaneseq
      %v1394 = vshrl.u32 %v1393, 7
      %v1395 = vsub.s32 1, %v1394
      %v1396 = vrot.slane %v1387, %v1395
      %v1407 = vunpack.c.l.b16 %v1379
      %v1408 = vunpack.c.h.b16 %v1379
      %v1409 = vunpack.c.l.b16 %v1380
      %v1410 = vunpack.c.h.b16 %v1380
      %v1411 = vunpack.c.l.b16 %v1381
      %v1412 = vunpack.c.h.b16 %v1381
      %v1413 = vunpack.c.l.b16 %v1382
      %v1414 = vunpack.c.h.b16 %v1382
      %v1415 = vunpack.c.l.b16 %v1383
      %v1416 = vunpack.c.h.b16 %v1383
      %v1417 = vunpack.c.l.b16 %v1384
      %v1418 = vunpack.c.h.b16 %v1384
      %v1419 = vunpack.c.l.b16 %v1385
      %v1420 = vunpack.c.h.b16 %v1385
      %v1421 = vunpack.c.l.b16 %v1386
      %v1422 = vunpack.c.h.b16 %v1386
      %v1423 = vpack.c.b16 %v1409, %v1407
      %v1424 = vpack.c.b16 %v1410, %v1408
      %v1425 = vpack.c.b16 %v1413, %v1411
      %v1426 = vpack.c.b16 %v1414, %v1412
      %v1427 = vpack.c.b16 %v1417, %v1415
      %v1428 = vpack.c.b16 %v1418, %v1416
      %v1429 = vpack.c.b16 %v1421, %v1419
      %v1430 = vpack.c.b16 %v1422, %v1420
      %v1440 = vsel %vm657, %v1378, 0
      %1442 = vmatprep.subr.bf16.mxu0 %v1424
      %1443 = vmatpush1.bf16.msra.mxu0 %v1423
      %1444 = vmatprep.subr.bf16.mxu0 %v1426
      %1445 = vmatpush1.bf16.msra.mxu0 %v1425
      %1446 = vmatprep.subr.bf16.mxu0 %v1428
      %1447 = vmatpush1.bf16.msra.mxu0 %v1427
      %1448 = vmatprep.subr.bf16.mxu0 %v1430
      %1449 = vmatpush1.bf16.msra.mxu0 %v1429
      %1450 = vmatprep.subr.bf16.mxu0 0
      %1451 = vmatpush1.bf16.msra.mxu0 0
      %1452 = vmatprep.subr.bf16.mxu0 0
      %1453 = vmatpush1.bf16.msra.mxu0 0
      %1454 = vmatprep.subr.bf16.mxu0 0
      %1455 = vmatpush1.bf16.msra.mxu0 0
      %1456 = vmatprep.subr.bf16.mxu0 0
      %1457 = vmatpush1.bf16.msra.mxu0 0
      %1458 = vmatprep.subr.bf16.mxu0 0
      %1459 = vmatpush1.bf16.msra.mxu0 0
      %1460 = vmatprep.subr.bf16.mxu0 0
      %1461 = vmatpush1.bf16.msra.mxu0 0
      %1462 = vmatprep.subr.bf16.mxu0 0
      %1463 = vmatpush1.bf16.msra.mxu0 0
      %1464 = vmatprep.subr.bf16.mxu0 0
      %1465 = vmatpush1.bf16.msra.mxu0 0
      %1466 = vmatprep.subr.bf16.mxu0 0
      %1467 = vmatpush1.bf16.msra.mxu0 0
      %1468 = vmatprep.subr.bf16.mxu0 0
      %1469 = vmatpush1.bf16.msra.mxu0 0
      %1470 = vmatprep.subr.bf16.mxu0 0
      %1471 = vmatpush1.bf16.msra.mxu0 0
      %1472 = vmatprep.subr.bf16.mxu0 0
      %1473 = vmatpush1.bf16.msra.mxu0 0
      %1474 = vmatprep.mubr.bf16.mxu0 0
      %1475 = vmatmul.mubr.bf16.gmra.mrb[0].mxu0 %v1440
      %v1476 = vpop.f32.mrb[0].mxu0
      %v1477 = vadd.f32 %v1392, %v1476
      %v1478 = vpop.f32.mrb[0].mxu0
      %v1479 = vadd.f32 %v1396, %v1478
      %v1480 = vpop.f32.mrb[0].mxu0
      %v1481 = vpop.f32.mrb[0].mxu0
      %1482 = vdwg.mxu0
      %v1483 = vmul.f32 %v1477, %v1477
      %v1484 = vmul.f32 %v1479, %v1479
      %v1485 = vmul.f32 %v1477, %v1483
      %v1486 = vmul.f32 %v1479, %v1484
      %v1487 = vmul.f32 %v1485, 0.044715
      %v1488 = vmul.f32 %v1486, 0.044715
      %v1489 = vadd.f32 %v1477, %v1487
      %v1490 = vadd.f32 %v1479, %v1488
      %v1491 = vmul.f32 %v1489, 0.7978846
      %v1492 = vmul.f32 %v1490, 0.7978846
      %v1493 = vtanh.pop %v1491
      %v1494 = vtanh.pop %v1492
      %v1495 = vadd.f32 %v1493, 1.0
      %v1496 = vadd.f32 %v1494, 1.0
      %v1497 = vmul.f32 %v1495, 0.5
      %v1498 = vmul.f32 %v1496, 0.5
      %v1499 = vmul.f32 %v1477, %v1497
      %v1500 = vmul.f32 %v1479, %v1498
      %v1501 = vpack.c.bf16 %v1499, %v1499
      %v1502 = vpack.c.bf16 %v1500, %v1500
      %v1503 = vld [vmem:[%s14] sm:$0xf]
      %v1504 = vld [vmem:[%s14 + $0x4] sm:$0xf]
      %v1505 = vld [vmem:[%s14 + $0x8] sm:$0xf]
      %v1506 = vld [vmem:[%s14 + $0xc] sm:$0xf]
      %v1507 = vld [vmem:[%s14 + $0x10] sm:$0xf]
      %v1508 = vld [vmem:[%s14 + $0x14] sm:$0xf]
      %v1509 = vld [vmem:[%s14 + $0x18] sm:$0xf]
      %v1510 = vld [vmem:[%s14 + $0x1c] sm:$0xf]
      %v1511 = vld [vmem:[%s14 + $0x20] sm:$0xf]
      %v1512 = vld [vmem:[%s14 + $0x24] sm:$0xf]
      %v1513 = vld [vmem:[%s14 + $0x28] sm:$0xf]
      %v1514 = vld [vmem:[%s14 + $0x2c] sm:$0xf]
      %v1515 = vld [vmem:[%s14 + $0x30] sm:$0xf]
      %v1516 = vld [vmem:[%s14 + $0x34] sm:$0xf]
      %v1517 = vld [vmem:[%s14 + $0x38] sm:$0xf]
      %v1518 = vld [vmem:[%s14 + $0x3c] sm:$0xf]
      %v1519 = vld [vmem:[%s14 + $0x40] sm:$0xf]
      %v1520 = vld [vmem:[%s14 + $0x44] sm:$0xf]
      %v1521 = vld [vmem:[%s14 + $0x48] sm:$0xf]
      %v1522 = vld [vmem:[%s14 + $0x4c] sm:$0xf]
      %v1523 = vld [vmem:[%s14 + $0x50] sm:$0xf]
      %v1524 = vld [vmem:[%s14 + $0x54] sm:$0xf]
      %v1525 = vld [vmem:[%s14 + $0x58] sm:$0xf]
      %v1526 = vld [vmem:[%s14 + $0x5c] sm:$0xf]
      %v1527 = vld [vmem:[%s14 + $0x60] sm:$0xf]
      %v1528 = vld [vmem:[%s14 + $0x64] sm:$0xf]
      %v1529 = vld [vmem:[%s14 + $0x68] sm:$0xf]
      %v1530 = vld [vmem:[%s14 + $0x6c] sm:$0xf]
      %v1531 = vld [vmem:[%s14 + $0x70] sm:$0xf]
      %v1532 = vld [vmem:[%s14 + $0x74] sm:$0xf]
      %v1533 = vld [vmem:[%s14 + $0x78] sm:$0xf]
      %v1534 = vld [vmem:[%s14 + $0x7c] sm:$0xf]
      %v1567 = vunpack.c.l.b16 %v1503
      %v1568 = vunpack.c.l.b16 %v1504
      %v1569 = vunpack.c.l.b16 %v1505
      %v1570 = vunpack.c.l.b16 %v1506
      %v1571 = vunpack.c.l.b16 %v1507
      %v1572 = vunpack.c.l.b16 %v1508
      %v1573 = vunpack.c.l.b16 %v1509
      %v1574 = vunpack.c.l.b16 %v1510
      %v1575 = vunpack.c.l.b16 %v1511
      %v1576 = vunpack.c.l.b16 %v1512
      %v1577 = vunpack.c.l.b16 %v1513
      %v1578 = vunpack.c.l.b16 %v1514
      %v1579 = vunpack.c.l.b16 %v1515
      %v1580 = vunpack.c.l.b16 %v1516
      %v1581 = vunpack.c.l.b16 %v1517
      %v1582 = vunpack.c.l.b16 %v1518
      %v1583 = vunpack.c.l.b16 %v1519
      %v1584 = vunpack.c.l.b16 %v1520
      %v1585 = vunpack.c.l.b16 %v1521
      %v1586 = vunpack.c.l.b16 %v1522
      %v1587 = vunpack.c.l.b16 %v1523
      %v1588 = vunpack.c.l.b16 %v1524
      %v1589 = vunpack.c.l.b16 %v1525
      %v1590 = vunpack.c.l.b16 %v1526
      %v1591 = vunpack.c.l.b16 %v1527
      %v1592 = vunpack.c.l.b16 %v1528
      %v1593 = vunpack.c.l.b16 %v1529
      %v1594 = vunpack.c.l.b16 %v1530
      %v1595 = vunpack.c.l.b16 %v1531
      %v1596 = vunpack.c.l.b16 %v1532
      %v1597 = vunpack.c.l.b16 %v1533
      %v1598 = vunpack.c.l.b16 %v1534
      %v1599 = vpack.c.b16 %v1568, %v1567
      %v1600 = vpack.c.b16 %v1570, %v1569
      %v1601 = vpack.c.b16 %v1572, %v1571
      %v1602 = vpack.c.b16 %v1574, %v1573
      %v1603 = vpack.c.b16 %v1576, %v1575
      %v1604 = vpack.c.b16 %v1578, %v1577
      %v1605 = vpack.c.b16 %v1580, %v1579
      %v1606 = vpack.c.b16 %v1582, %v1581
      %v1607 = vpack.c.b16 %v1584, %v1583
      %v1608 = vpack.c.b16 %v1586, %v1585
      %v1609 = vpack.c.b16 %v1588, %v1587
      %v1610 = vpack.c.b16 %v1590, %v1589
      %v1611 = vpack.c.b16 %v1592, %v1591
      %v1612 = vpack.c.b16 %v1594, %v1593
      %v1613 = vpack.c.b16 %v1596, %v1595
      %v1614 = vpack.c.b16 %v1598, %v1597
      %1631 = vmatprep.subr.bf16.mxu0 0
      %1632 = vmatpush1.bf16.msra.mxu0 %v1599
      %1633 = vmatprep.subr.bf16.mxu0 0
      %1634 = vmatpush1.bf16.msra.mxu0 %v1600
      %1635 = vmatprep.subr.bf16.mxu0 0
      %1636 = vmatpush1.bf16.msra.mxu0 %v1601
      %1637 = vmatprep.subr.bf16.mxu0 0
      %1638 = vmatpush1.bf16.msra.mxu0 %v1602
      %1639 = vmatprep.subr.bf16.mxu0 0
      %1640 = vmatpush1.bf16.msra.mxu0 %v1603
      %1641 = vmatprep.subr.bf16.mxu0 0
      %1642 = vmatpush1.bf16.msra.mxu0 %v1604
      %1643 = vmatprep.subr.bf16.mxu0 0
      %1644 = vmatpush1.bf16.msra.mxu0 %v1605
      %1645 = vmatprep.subr.bf16.mxu0 0
      %1646 = vmatpush1.bf16.msra.mxu0 %v1606
      %1647 = vmatprep.subr.bf16.mxu0 0
      %1648 = vmatpush1.bf16.msra.mxu0 %v1607
      %1649 = vmatprep.subr.bf16.mxu0 0
      %1650 = vmatpush1.bf16.msra.mxu0 %v1608
      %1651 = vmatprep.subr.bf16.mxu0 0
      %1652 = vmatpush1.bf16.msra.mxu0 %v1609
      %1653 = vmatprep.subr.bf16.mxu0 0
      %1654 = vmatpush1.bf16.msra.mxu0 %v1610
      %1655 = vmatprep.subr.bf16.mxu0 0
      %1656 = vmatpush1.bf16.msra.mxu0 %v1611
      %1657 = vmatprep.subr.bf16.mxu0 0
      %1658 = vmatpush1.bf16.msra.mxu0 %v1612
      %1659 = vmatprep.subr.bf16.mxu0 0
      %1660 = vmatpush1.bf16.msra.mxu0 %v1613
      %1661 = vmatprep.subr.bf16.mxu0 0
      %1662 = vmatpush1.bf16.msra.mxu0 %v1614
      %1663 = vmatprep.mubr.bf16.mxu0 %v1502
      %1664 = vmatmul.mubr.bf16.gmra.mrb[0].mxu0 %v1501
      %v1665 = vpop.f32.mrb[0].mxu0
      %v1666 = vadd.f32 0.0, %v1665
      %v1667 = vpop.f32.mrb[0].mxu0
      %v1668 = vpop.f32.mrb[0].mxu0
      %v1669 = vpop.f32.mrb[0].mxu0
      %1670 = vdwg.mxu0
      %v1671 = vadd.f32 %v1348, %v1666
      %v1672 = vld [vmem:[%s15] sm:$0x1]
      %v1674 = vlaneseq
      %v1675 = vshrl.u32 %v1674, 7
      %v1676 = vsub.s32 0, %v1675
      %v1677 = vrot.slane %v1672, %v1676
      %v1679 = vadd.f32 %v1671, %v1677
      %v1680 = vpack.c.bf16 %v1679, %v1679
      %vm1681 = vcmask 517120
      %1682 = vst.msk [vmem:[%s564] sm:$0x3] %vm1681, %v1680
      %p1683 = scmp.lt.s32.totalorder %s31, 1
      %s1684 = scalar_select %p1683, %s31, 1
      %p1685 = scmp.lt.s32.totalorder %s32, 0
      %s1686 = scalar_select %p1685, %s32, 0
      %s1687 = sadd.s32 %s1686, %s1684
      %s1688 = smul.addr %s1687, 2
      %s1689 = scalar_lea.vmem %s16, %s1688
      // Predicated region
      $region85: #{ldtunet_forward.11} parent=83 // pred_check
        %p1690 = pneg %p407
      $region86: #{ldtunet_forward.11} parent=83 // pred_check_branch
        %1692 = sbr.rel (%p1690) target = $region88
      $region87: #{ldtunet_forward.11} parent=83 // pred_region
        _
      $region88: #{ldtunet_forward.11} parent=83 // pred_fallthru
        _
    $region84: #{ldtunet_forward.11} parent=5 // pred_fallthru
      _
    %p1693 = scmp.le.s32.totalorder 2, %s22
    // Predicated region
    $region89: #{ldtunet_forward.11} parent=5 // pred_check
      %p1694 = pneg %p1693
    $region90: #{ldtunet_forward.11} parent=5 // pred_check_branch
      %1696 = sbr.rel (%p1694) target = $region92
    $region91: #{ldtunet_forward.11} parent=5 // pred_region
      %s1697 = ssub.s32 %s22, 2
      // Predicated region
      $region93: #{ldtunet_forward.11} parent=91 // pred_check
        %p1698 = pneg %p413
      $region94: #{ldtunet_forward.11} parent=91 // pred_check_branch
        %1700 = sbr.rel (%p1698) target = $region96
      $region95: #{ldtunet_forward.11} parent=91 // pred_region
        %p1701 = scmp.lt.s32.totalorder %s33, 1
        %s1702 = scalar_select %p1701, %s33, 1
        %p1703 = scmp.lt.s32.totalorder %s34, 0
        %s1704 = scalar_select %p1703, %s34, 0
        %s1705 = sadd.s32 %s1704, %s1702
        %s1706 = smul.addr %s1705, 2
        %s1707 = scalar_lea.vmem %s16, %s1706
      $region96: #{ldtunet_forward.11} parent=91 // pred_fallthru
        _
    $region92: #{ldtunet_forward.11} parent=5 // pred_fallthru
      _
  $region6: #{ldtunet_forward.11} parent=0 // loop_footer
    %s26 = sadd.s32 1, %s22
  $region7: #{ldtunet_forward.11} parent=0 // loop_footer_branch
    %21 = sbr.rel target = $region3
  $region8: #{ldtunet_forward.11} parent=0 // loop_exit
    _

// kernel: ldtunet_forward.12
$region0: #{ldtunet_forward.12}
  #allocation0 [shape = 'u32[]', space=smem, size = 0x4, offset = 0x4, fixed_abs, tag = 'smem constant byte address 0x4 - core index']
  #allocation1 [shape = 'u32[144,128]{1,0:T(1,128)}', space=vmem, size = 0x12000, scoped, tag = 'internal scratch']
  %s0 = inlined_call_operand.vmem [shape: bf16[8,64], index: 0, kind: input, shape index: {}]
  %s1 = inlined_call_operand.vmem [shape: bf16[64,128], index: 1, kind: input, shape index: {}]
  %s2 = inlined_call_operand.vmem [shape: f32[1,128], index: 2, kind: input, shape index: {}]
  %s3 = inlined_call_operand.vmem [shape: bf16[8,128], index: 3, kind: output, shape index: {}]
  %s4 = sld [smem:[#allocation0]]
  $region22: #{ldtunet_forward.12} parent=0
    _
  %s6 = ssub.s32 1, %s4
  %s7 = scalar_select 0, %s6, %s4
  // Predicated region
  $region2: #{ldtunet_forward.12} parent=0 // pred_check
    _
  $region3: #{ldtunet_forward.12} parent=0 // pred_check_branch
    %9 = sbr.rel (0) target = $region5
  $region4: #{ldtunet_forward.12} parent=0 // pred_region
    _
  $region5: #{ldtunet_forward.12} parent=0 // pred_fallthru
    _
  // Predicated region
  $region6: #{ldtunet_forward.12} parent=0 // pred_check
    _
  $region7: #{ldtunet_forward.12} parent=0 // pred_check_branch
    %11 = sbr.rel (0) target = $region9
  $region8: #{ldtunet_forward.12} parent=0 // pred_region
    _
  $region9: #{ldtunet_forward.12} parent=0 // pred_fallthru
    _
  // Predicated region
  $region10: #{ldtunet_forward.12} parent=0 // pred_check
    _
  $region11: #{ldtunet_forward.12} parent=0 // pred_check_branch
    %13 = sbr.rel (0) target = $region13
  $region12: #{ldtunet_forward.12} parent=0 // pred_region
    _
  $region13: #{ldtunet_forward.12} parent=0 // pred_fallthru
    _
  %v15 = vld [vmem:[%s0] sm:$0xf]
  %v16 = vld [vmem:[%s1] sm:$0xf]
  %v17 = vld [vmem:[%s1 + $0x4] sm:$0xf]
  %v18 = vld [vmem:[%s1 + $0x8] sm:$0xf]
  %v19 = vld [vmem:[%s1 + $0xc] sm:$0xf]
  %v20 = vld [vmem:[%s1 + $0x10] sm:$0xf]
  %v21 = vld [vmem:[%s1 + $0x14] sm:$0xf]
  %v22 = vld [vmem:[%s1 + $0x18] sm:$0xf]
  %v23 = vld [vmem:[%s1 + $0x1c] sm:$0xf]
  %v24 = vld [vmem:[%s2] sm:$0x1]
  %v26 = vlaneseq
  %v27 = vshrl.u32 %v26, 7
  %v28 = vsub.s32 0, %v27
  %v29 = vrot.slane %v24, %v28
  %v39 = vunpack.c.l.b16 %v16
  %v40 = vunpack.c.l.b16 %v17
  %v41 = vunpack.c.l.b16 %v18
  %v42 = vunpack.c.l.b16 %v19
  %v43 = vunpack.c.l.b16 %v20
  %v44 = vunpack.c.l.b16 %v21
  %v45 = vunpack.c.l.b16 %v22
  %v46 = vunpack.c.l.b16 %v23
  %v47 = vpack.c.b16 %v40, %v39
  %v48 = vpack.c.b16 %v42, %v41
  %v49 = vpack.c.b16 %v44, %v43
  %v50 = vpack.c.b16 %v46, %v45
  %vm55 = vcmask 523264
  %v57 = vsel %vm55, %v15, 0
  %59 = vmatprep.subr.bf16.mxu0 0
  %60 = vmatpush1.bf16.msra.mxu0 %v47
  %61 = vmatprep.subr.bf16.mxu0 0
  %62 = vmatpush1.bf16.msra.mxu0 %v48
  %63 = vmatprep.subr.bf16.mxu0 0
  %64 = vmatpush1.bf16.msra.mxu0 %v49
  %65 = vmatprep.subr.bf16.mxu0 0
  %66 = vmatpush1.bf16.msra.mxu0 %v50
  %67 = vmatprep.subr.bf16.mxu0 0
  %68 = vmatpush1.bf16.msra.mxu0 0
  %69 = vmatprep.subr.bf16.mxu0 0
  %70 = vmatpush1.bf16.msra.mxu0 0
  %71 = vmatprep.subr.bf16.mxu0 0
  %72 = vmatpush1.bf16.msra.mxu0 0
  %73 = vmatprep.subr.bf16.mxu0 0
  %74 = vmatpush1.bf16.msra.mxu0 0
  %75 = vmatprep.subr.bf16.mxu0 0
  %76 = vmatpush1.bf16.msra.mxu0 0
  %77 = vmatprep.subr.bf16.mxu0 0
  %78 = vmatpush1.bf16.msra.mxu0 0
  %79 = vmatprep.subr.bf16.mxu0 0
  %80 = vmatpush1.bf16.msra.mxu0 0
  %81 = vmatprep.subr.bf16.mxu0 0
  %82 = vmatpush1.bf16.msra.mxu0 0
  %83 = vmatprep.subr.bf16.mxu0 0
  %84 = vmatpush1.bf16.msra.mxu0 0
  %85 = vmatprep.subr.bf16.mxu0 0
  %86 = vmatpush1.bf16.msra.mxu0 0
  %87 = vmatprep.subr.bf16.mxu0 0
  %88 = vmatpush1.bf16.msra.mxu0 0
  %89 = vmatprep.subr.bf16.mxu0 0
  %90 = vmatpush1.bf16.msra.mxu0 0
  %91 = vmatprep.mubr.bf16.mxu0 0
  %92 = vmatmul.mubr.bf16.gmra.mrb[0].mxu0 %v57
  %v93 = vpop.f32.mrb[0].mxu0
  %v94 = vadd.f32 %v29, %v93
  %v95 = vpop.f32.mrb[0].mxu0
  %v96 = vpop.f32.mrb[0].mxu0
  %v97 = vpop.f32.mrb[0].mxu0
  %98 = vdwg.mxu0
  %v99 = vpack.c.bf16 %v94, %v94
  %100 = vst [vmem:[%s3] sm:$0xf] %v99
  // Predicated region
  $region14: #{ldtunet_forward.12} parent=0 // pred_check
    _
  $region15: #{ldtunet_forward.12} parent=0 // pred_check_branch
    %102 = sbr.rel (0) target = $region17
  $region16: #{ldtunet_forward.12} parent=0 // pred_region
    _
  $region17: #{ldtunet_forward.12} parent=0 // pred_fallthru
    _
  // Predicated region
  $region18: #{ldtunet_forward.12} parent=0 // pred_check
    _
  $region19: #{ldtunet_forward.12} parent=0 // pred_check_branch
    %104 = sbr.rel (0) target = $region21
  $region20: #{ldtunet_forward.12} parent=0 // pred_region
    _
  $region21: #{ldtunet_forward.12} parent=0 // pred_fallthru
    _

// kernel: ldtunet_forward.13
$region0: #{ldtunet_forward.13}
  #allocation0 [shape = 'u32[]', space=smem, size = 0x4, offset = 0x4, fixed_abs, tag = 'smem constant byte address 0x4 - core index']
  #allocation1 [shape = 'u32[144,128]{1,0:T(1,128)}', space=vmem, size = 0x12000, scoped, tag = 'internal scratch']
  %s0 = inlined_call_operand.vmem [shape: bf16[32,32], index: 0, kind: input, shape index: {}]
  %s1 = inlined_call_operand.vmem [shape: bf16[32,32], index: 1, kind: input, shape index: {}]
  %s2 = inlined_call_operand.vmem [shape: f32[1,32], index: 2, kind: input, shape index: {}]
  %s3 = inlined_call_operand.vmem [shape: f32[1,32], index: 3, kind: input, shape index: {}]
  %s4 = inlined_call_operand.vmem [shape: bf16[32,32], index: 4, kind: input, shape index: {}]
  %s5 = inlined_call_operand.vmem [shape: bf16[32,32], index: 5, kind: input, shape index: {}]
  %s6 = inlined_call_operand.vmem [shape: f32[1,32], index: 6, kind: input, shape index: {}]
  %s7 = inlined_call_operand.vmem [shape: bf16[32,32], index: 7, kind: output, shape index: {}]
  %s8 = sld [smem:[#allocation0]]
  $region38: #{ldtunet_forward.13} parent=0
    _
  %s10 = ssub.s32 1, %s8
  %s11 = scalar_select 0, %s10, %s8
  // Predicated region
  $region2: #{ldtunet_forward.13} parent=0 // pred_check
    _
  $region3: #{ldtunet_forward.13} parent=0 // pred_check_branch
    %13 = sbr.rel (0) target = $region5
  $region4: #{ldtunet_forward.13} parent=0 // pred_region
    _
  $region5: #{ldtunet_forward.13} parent=0 // pred_fallthru
    _
  // Predicated region
  $region6: #{ldtunet_forward.13} parent=0 // pred_check
    _
  $region7: #{ldtunet_forward.13} parent=0 // pred_check_branch
    %15 = sbr.rel (0) target = $region9
  $region8: #{ldtunet_forward.13} parent=0 // pred_region
    _
  $region9: #{ldtunet_forward.13} parent=0 // pred_fallthru
    _
  // Predicated region
  $region10: #{ldtunet_forward.13} parent=0 // pred_check
    _
  $region11: #{ldtunet_forward.13} parent=0 // pred_check_branch
    %17 = sbr.rel (0) target = $region13
  $region12: #{ldtunet_forward.13} parent=0 // pred_region
    _
  $region13: #{ldtunet_forward.13} parent=0 // pred_fallthru
    _
  // Predicated region
  $region14: #{ldtunet_forward.13} parent=0 // pred_check
    _
  $region15: #{ldtunet_forward.13} parent=0 // pred_check_branch
    %19 = sbr.rel (0) target = $region17
  $region16: #{ldtunet_forward.13} parent=0 // pred_region
    _
  $region17: #{ldtunet_forward.13} parent=0 // pred_fallthru
    _
  // Predicated region
  $region18: #{ldtunet_forward.13} parent=0 // pred_check
    _
  $region19: #{ldtunet_forward.13} parent=0 // pred_check_branch
    %21 = sbr.rel (0) target = $region21
  $region20: #{ldtunet_forward.13} parent=0 // pred_region
    _
  $region21: #{ldtunet_forward.13} parent=0 // pred_fallthru
    _
  // Predicated region
  $region22: #{ldtunet_forward.13} parent=0 // pred_check
    _
  $region23: #{ldtunet_forward.13} parent=0 // pred_check_branch
    %23 = sbr.rel (0) target = $region25
  $region24: #{ldtunet_forward.13} parent=0 // pred_region
    _
  $region25: #{ldtunet_forward.13} parent=0 // pred_fallthru
    _
  // Predicated region
  $region26: #{ldtunet_forward.13} parent=0 // pred_check
    _
  $region27: #{ldtunet_forward.13} parent=0 // pred_check_branch
    %25 = sbr.rel (0) target = $region29
  $region28: #{ldtunet_forward.13} parent=0 // pred_region
    _
  $region29: #{ldtunet_forward.13} parent=0 // pred_fallthru
    _
  %v27 = vld [vmem:[%s0] sm:$0xf]
  %v28 = vld [vmem:[%s0 + $0x4] sm:$0xf]
  %v29 = vld [vmem:[%s0 + $0x8] sm:$0xf]
  %v30 = vld [vmem:[%s0 + $0xc] sm:$0xf]
  %v31 = vunpack.c.l.bf16 %v27
  %v32 = vunpack.c.l.bf16 %v28
  %v33 = vunpack.c.l.bf16 %v29
  %v34 = vunpack.c.l.bf16 %v30
  %v35 = vld [vmem:[%s2] sm:$0x1]
  %v36 = vld [vmem:[%s3] sm:$0x1]
  %vm37 = vcmask 261120
  %v38 = vsel %vm37, %v31, 0.0
  %39 = vadd.xlane.f32.xlu0 %v38
  %v40 = vpop.xlane.xlu0 %39
  %v41 = vsel %vm37, %v32, 0.0
  %42 = vadd.xlane.f32.xlu0 %v41
  %v43 = vpop.xlane.xlu0 %42
  %v44 = vsel %vm37, %v33, 0.0
  %45 = vadd.xlane.f32.xlu0 %v44
  %v46 = vpop.xlane.xlu0 %45
  %v47 = vsel %vm37, %v34, 0.0
  %48 = vadd.xlane.f32.xlu0 %v47
  %v49 = vpop.xlane.xlu0 %48
  %v50 = vrcp.pop 32.0
  %v51 = vmul.f32 %v40, %v50
  %v52 = vmul.f32 %v43, %v50
  %v53 = vmul.f32 %v46, %v50
  %v54 = vmul.f32 %v49, %v50
  %v55 = vsub.f32 %v31, %v51
  %v56 = vsub.f32 %v32, %v52
  %v57 = vsub.f32 %v33, %v53
  %v58 = vsub.f32 %v34, %v54
  %v59 = vmul.f32 %v55, %v55
  %v60 = vmul.f32 %v56, %v56
  %v61 = vmul.f32 %v57, %v57
  %v62 = vmul.f32 %v58, %v58
  %v63 = vsel %vm37, %v59, 0.0
  %64 = vadd.xlane.f32.xlu0 %v63
  %v65 = vpop.xlane.xlu0 %64
  %v66 = vsel %vm37, %v60, 0.0
  %67 = vadd.xlane.f32.xlu0 %v66
  %v68 = vpop.xlane.xlu0 %67
  %v69 = vsel %vm37, %v61, 0.0
  %70 = vadd.xlane.f32.xlu0 %v69
  %v71 = vpop.xlane.xlu0 %70
  %v72 = vsel %vm37, %v62, 0.0
  %73 = vadd.xlane.f32.xlu0 %v72
  %v74 = vpop.xlane.xlu0 %73
  %v75 = vmul.f32 %v65, %v50
  %v76 = vmul.f32 %v68, %v50
  %v77 = vmul.f32 %v71, %v50
  %v78 = vmul.f32 %v74, %v50
  %v79 = vadd.f32 %v75, 1e-05
  %v80 = vadd.f32 %v76, 1e-05
  %v81 = vadd.f32 %v77, 1e-05
  %v82 = vadd.f32 %v78, 1e-05
  %v83 = vrsqrt.pop %v79
  %v84 = vrsqrt.pop %v80
  %v85 = vrsqrt.pop %v81
  %v86 = vrsqrt.pop %v82
  %v87 = vmul.f32 %v55, %v83
  %v88 = vmul.f32 %v56, %v84
  %v89 = vmul.f32 %v57, %v85
  %v90 = vmul.f32 %v58, %v86
  %v92 = vlaneseq
  %v93 = vshrl.u32 %v92, 7
  %v94 = vsub.s32 0, %v93
  %v95 = vrot.slane %v35, %v94
  %v97 = vmul.f32 %v87, %v95
  %v98 = vmul.f32 %v88, %v95
  %v99 = vmul.f32 %v89, %v95
  %v100 = vmul.f32 %v90, %v95
  %v102 = vlaneseq
  %v103 = vshrl.u32 %v102, 7
  %v104 = vsub.s32 0, %v103
  %v105 = vrot.slane %v36, %v104
  %v107 = vadd.f32 %v97, %v105
  %v108 = vadd.f32 %v98, %v105
  %v109 = vadd.f32 %v99, %v105
  %v110 = vadd.f32 %v100, %v105
  %v111 = vpack.c.bf16 %v108, %v107
  %v112 = vpack.c.bf16 %v110, %v109
  %v113 = vld [vmem:[%s1] sm:$0xf]
  %v114 = vld [vmem:[%s1 + $0x4] sm:$0xf]
  %v115 = vld [vmem:[%s1 + $0x8] sm:$0xf]
  %v116 = vld [vmem:[%s1 + $0xc] sm:$0xf]
  %v117 = vld [vmem:[%s4] sm:$0xf]
  %v118 = vld [vmem:[%s4 + $0x4] sm:$0xf]
  %v119 = vld [vmem:[%s4 + $0x8] sm:$0xf]
  %v120 = vld [vmem:[%s4 + $0xc] sm:$0xf]
  %v121 = vld [vmem:[%s5] sm:$0xf]
  %v122 = vld [vmem:[%s5 + $0x4] sm:$0xf]
  %v123 = vld [vmem:[%s5 + $0x8] sm:$0xf]
  %v124 = vld [vmem:[%s5 + $0xc] sm:$0xf]
  %v129 = vunpack.c.l.b16 %v113
  %v130 = vunpack.c.l.b16 %v114
  %v131 = vunpack.c.l.b16 %v115
  %v132 = vunpack.c.l.b16 %v116
  %v133 = vpack.c.b16 %v130, %v129
  %v134 = vpack.c.b16 %v132, %v131
  %v139 = vunpack.c.l.b16 %v121
  %v140 = vunpack.c.l.b16 %v122
  %v141 = vunpack.c.l.b16 %v123
  %v142 = vunpack.c.l.b16 %v124
  %v143 = vpack.c.b16 %v140, %v139
  %v144 = vpack.c.b16 %v142, %v141
  %v148 = vsel %vm37, %v133, 0
  %v151 = vsel %vm37, %v134, 0
  %153 = vmatprep.subr.bf16.mxu0 0
  %154 = vmatpush1.bf16.msra.mxu0 %v143
  %155 = vmatprep.subr.bf16.mxu0 0
  %156 = vmatpush1.bf16.msra.mxu0 %v144
  %157 = vmatprep.subr.bf16.mxu0 0
  %158 = vmatpush1.bf16.msra.mxu0 0
  %159 = vmatprep.subr.bf16.mxu0 0
  %160 = vmatpush1.bf16.msra.mxu0 0
  %161 = vmatprep.subr.bf16.mxu0 0
  %162 = vmatpush1.bf16.msra.mxu0 0
  %163 = vmatprep.subr.bf16.mxu0 0
  %164 = vmatpush1.bf16.msra.mxu0 0
  %165 = vmatprep.subr.bf16.mxu0 0
  %166 = vmatpush1.bf16.msra.mxu0 0
  %167 = vmatprep.subr.bf16.mxu0 0
  %168 = vmatpush1.bf16.msra.mxu0 0
  %169 = vmatprep.subr.bf16.mxu0 0
  %170 = vmatpush1.bf16.msra.mxu0 0
  %171 = vmatprep.subr.bf16.mxu0 0
  %172 = vmatpush1.bf16.msra.mxu0 0
  %173 = vmatprep.subr.bf16.mxu0 0
  %174 = vmatpush1.bf16.msra.mxu0 0
  %175 = vmatprep.subr.bf16.mxu0 0
  %176 = vmatpush1.bf16.msra.mxu0 0
  %177 = vmatprep.subr.bf16.mxu0 0
  %178 = vmatpush1.bf16.msra.mxu0 0
  %179 = vmatprep.subr.bf16.mxu0 0
  %180 = vmatpush1.bf16.msra.mxu0 0
  %181 = vmatprep.subr.bf16.mxu0 0
  %182 = vmatpush1.bf16.msra.mxu0 0
  %183 = vmatprep.subr.bf16.mxu0 0
  %184 = vmatpush1.bf16.msra.mxu0 0
  %185 = vmatprep.mubr.bf16.mxu0 0
  %186 = vmatmul.mubr.bf16.gmra.mrb[0].mxu0 %v148
  %v187 = vpop.f32.mrb[0].mxu0
  %v188 = vadd.f32 0.0, %v187
  %v189 = vpop.f32.mrb[0].mxu0
  %v190 = vpop.f32.mrb[0].mxu0
  %v191 = vadd.f32 0.0, %v190
  %v192 = vpop.f32.mrb[0].mxu0
  %193 = vmatprep.mubr.bf16.mxu0 0
  %194 = vmatmul.mubr.bf16.gmra.mrb[0].mxu0 %v151
  %v195 = vpop.f32.mrb[0].mxu0
  %v196 = vadd.f32 0.0, %v195
  %v197 = vpop.f32.mrb[0].mxu0
  %v198 = vpop.f32.mrb[0].mxu0
  %v199 = vadd.f32 0.0, %v198
  %v200 = vpop.f32.mrb[0].mxu0
  %201 = vdwg.mxu0
  %v206 = vunpack.c.l.b16 %v117
  %v207 = vunpack.c.l.b16 %v118
  %v208 = vunpack.c.l.b16 %v119
  %v209 = vunpack.c.l.b16 %v120
  %v210 = vpack.c.b16 %v207, %v206
  %v211 = vpack.c.b16 %v209, %v208
  %v215 = vsel %vm37, %v111, 0
  %v218 = vsel %vm37, %v112, 0
  %220 = vmatprep.subr.bf16.mxu0 0
  %221 = vmatpush1.bf16.msra.mxu0 %v210
  %222 = vmatprep.subr.bf16.mxu0 0
  %223 = vmatpush1.bf16.msra.mxu0 %v211
  %224 = vmatprep.subr.bf16.mxu0 0
  %225 = vmatpush1.bf16.msra.mxu0 0
  %226 = vmatprep.subr.bf16.mxu0 0
  %227 = vmatpush1.bf16.msra.mxu0 0
  %228 = vmatprep.subr.bf16.mxu0 0
  %229 = vmatpush1.bf16.msra.mxu0 0
  %230 = vmatprep.subr.bf16.mxu0 0
  %231 = vmatpush1.bf16.msra.mxu0 0
  %232 = vmatprep.subr.bf16.mxu0 0
  %233 = vmatpush1.bf16.msra.mxu0 0
  %234 = vmatprep.subr.bf16.mxu0 0
  %235 = vmatpush1.bf16.msra.mxu0 0
  %236 = vmatprep.subr.bf16.mxu0 0
  %237 = vmatpush1.bf16.msra.mxu0 0
  %238 = vmatprep.subr.bf16.mxu0 0
  %239 = vmatpush1.bf16.msra.mxu0 0
  %240 = vmatprep.subr.bf16.mxu0 0
  %241 = vmatpush1.bf16.msra.mxu0 0
  %242 = vmatprep.subr.bf16.mxu0 0
  %243 = vmatpush1.bf16.msra.mxu0 0
  %244 = vmatprep.subr.bf16.mxu0 0
  %245 = vmatpush1.bf16.msra.mxu0 0
  %246 = vmatprep.subr.bf16.mxu0 0
  %247 = vmatpush1.bf16.msra.mxu0 0
  %248 = vmatprep.subr.bf16.mxu0 0
  %249 = vmatpush1.bf16.msra.mxu0 0
  %250 = vmatprep.subr.bf16.mxu0 0
  %251 = vmatpush1.bf16.msra.mxu0 0
  %252 = vmatprep.mubr.bf16.mxu0 0
  %253 = vmatmul.mubr.bf16.gmra.mrb[0].mxu0 %v215
  %v254 = vpop.f32.mrb[0].mxu0
  %v255 = vadd.f32 %v188, %v254
  %v256 = vpop.f32.mrb[0].mxu0
  %v257 = vpop.f32.mrb[0].mxu0
  %v258 = vadd.f32 %v191, %v257
  %v259 = vpop.f32.mrb[0].mxu0
  %260 = vmatprep.mubr.bf16.mxu0 0
  %261 = vmatmul.mubr.bf16.gmra.mrb[0].mxu0 %v218
  %v262 = vpop.f32.mrb[0].mxu0
  %v263 = vadd.f32 %v196, %v262
  %v264 = vpop.f32.mrb[0].mxu0
  %v265 = vpop.f32.mrb[0].mxu0
  %v266 = vadd.f32 %v199, %v265
  %v267 = vpop.f32.mrb[0].mxu0
  %268 = vdwg.mxu0
  %v269 = vld [vmem:[%s6] sm:$0x1]
  %v271 = vlaneseq
  %v272 = vshrl.u32 %v271, 7
  %v273 = vsub.s32 0, %v272
  %v274 = vrot.slane %v269, %v273
  %v276 = vadd.f32 %v255, %v274
  %v277 = vadd.f32 %v258, %v274
  %v278 = vadd.f32 %v263, %v274
  %v279 = vadd.f32 %v266, %v274
  %v280 = vpack.c.bf16 %v277, %v276
  %v281 = vpack.c.bf16 %v279, %v278
  %v284 = vunpack.c.l.b16 %v280
  %v285 = vunpack.c.h.b16 %v280
  %v286 = vunpack.c.l.b16 %v281
  %v287 = vunpack.c.h.b16 %v281
  %v288 = vpack.c.b16 %v284, %v284
  %v289 = vpack.c.b16 %v285, %v285
  %v290 = vpack.c.b16 %v286, %v286
  %v291 = vpack.c.b16 %v287, %v287
  %vm296 = vcmask 257024
  %297 = vst.msk [vmem:[%s7] sm:$0xf] %vm296, %v288
  %298 = vst.msk [vmem:[%s7 + $0x4] sm:$0xf] %vm296, %v289
  %299 = vst.msk [vmem:[%s7 + $0x8] sm:$0xf] %vm296, %v290
  %300 = vst.msk [vmem:[%s7 + $0xc] sm:$0xf] %vm296, %v291
  // Predicated region
  $region30: #{ldtunet_forward.13} parent=0 // pred_check
    _
  $region31: #{ldtunet_forward.13} parent=0 // pred_check_branch
    %302 = sbr.rel (0) target = $region33
  $region32: #{ldtunet_forward.13} parent=0 // pred_region
    _
  $region33: #{ldtunet_forward.13} parent=0 // pred_fallthru
    _
  // Predicated region
  $region34: #{ldtunet_forward.13} parent=0 // pred_check
    _
  $region35: #{ldtunet_forward.13} parent=0 // pred_check_branch
    %304 = sbr.rel (0) target = $region37
  $region36: #{ldtunet_forward.13} parent=0 // pred_region
    _
  $region37: #{ldtunet_forward.13} parent=0 // pred_fallthru
    _

// kernel: ldtunet_forward.15
$region0: #{ldtunet_forward.15}
  #allocation0 [shape = 'u32[]', space=smem, size = 0x4, offset = 0x4, fixed_abs, tag = 'smem constant byte address 0x4 - core index']
  #allocation1 [shape = 'u32[144,128]{1,0:T(1,128)}', space=vmem, size = 0x12000, scoped, tag = 'internal scratch']
  %s0 = inlined_call_operand.vmem [shape: bf16[32,32], index: 0, kind: input, shape index: {}]
  %s1 = inlined_call_operand.vmem [shape: bf16[16,32,32], index: 1, kind: input, shape index: {}]
  %s2 = inlined_call_operand.vmem [shape: f32[16,1,32], index: 2, kind: input, shape index: {}]
  %s3 = inlined_call_operand.vmem [shape: f32[1,32], index: 3, kind: input, shape index: {}]
  %s4 = inlined_call_operand.vmem [shape: f32[1,32], index: 4, kind: input, shape index: {}]
  %s5 = inlined_call_operand.vmem [shape: bf16[32,4], index: 5, kind: input, shape index: {}]
  %s6 = inlined_call_operand.vmem [shape: f32[1,4], index: 6, kind: input, shape index: {}]
  %s7 = inlined_call_operand.vmem [shape: f32[32,64], index: 7, kind: output, shape index: {}]
  %s8 = sld [smem:[#allocation0]]
  $region38: #{ldtunet_forward.15} parent=0
    _
  %s10 = ssub.s32 1, %s8
  %s11 = scalar_select 0, %s10, %s8
  // Predicated region
  $region2: #{ldtunet_forward.15} parent=0 // pred_check
    _
  $region3: #{ldtunet_forward.15} parent=0 // pred_check_branch
    %13 = sbr.rel (0) target = $region5
  $region4: #{ldtunet_forward.15} parent=0 // pred_region
    _
  $region5: #{ldtunet_forward.15} parent=0 // pred_fallthru
    _
  // Predicated region
  $region6: #{ldtunet_forward.15} parent=0 // pred_check
    _
  $region7: #{ldtunet_forward.15} parent=0 // pred_check_branch
    %15 = sbr.rel (0) target = $region9
  $region8: #{ldtunet_forward.15} parent=0 // pred_region
    _
  $region9: #{ldtunet_forward.15} parent=0 // pred_fallthru
    _
  // Predicated region
  $region10: #{ldtunet_forward.15} parent=0 // pred_check
    _
  $region11: #{ldtunet_forward.15} parent=0 // pred_check_branch
    %17 = sbr.rel (0) target = $region13
  $region12: #{ldtunet_forward.15} parent=0 // pred_region
    _
  $region13: #{ldtunet_forward.15} parent=0 // pred_fallthru
    _
  // Predicated region
  $region14: #{ldtunet_forward.15} parent=0 // pred_check
    _
  $region15: #{ldtunet_forward.15} parent=0 // pred_check_branch
    %19 = sbr.rel (0) target = $region17
  $region16: #{ldtunet_forward.15} parent=0 // pred_region
    _
  $region17: #{ldtunet_forward.15} parent=0 // pred_fallthru
    _
  // Predicated region
  $region18: #{ldtunet_forward.15} parent=0 // pred_check
    _
  $region19: #{ldtunet_forward.15} parent=0 // pred_check_branch
    %21 = sbr.rel (0) target = $region21
  $region20: #{ldtunet_forward.15} parent=0 // pred_region
    _
  $region21: #{ldtunet_forward.15} parent=0 // pred_fallthru
    _
  // Predicated region
  $region22: #{ldtunet_forward.15} parent=0 // pred_check
    _
  $region23: #{ldtunet_forward.15} parent=0 // pred_check_branch
    %23 = sbr.rel (0) target = $region25
  $region24: #{ldtunet_forward.15} parent=0 // pred_region
    _
  $region25: #{ldtunet_forward.15} parent=0 // pred_fallthru
    _
  // Predicated region
  $region26: #{ldtunet_forward.15} parent=0 // pred_check
    _
  $region27: #{ldtunet_forward.15} parent=0 // pred_check_branch
    %25 = sbr.rel (0) target = $region29
  $region28: #{ldtunet_forward.15} parent=0 // pred_region
    _
  $region29: #{ldtunet_forward.15} parent=0 // pred_fallthru
    _
  %v27 = vld [vmem:[%s0] sm:$0xf]
  %v28 = vld [vmem:[%s0 + $0x4] sm:$0xf]
  %v29 = vld [vmem:[%s0 + $0x8] sm:$0xf]
  %v30 = vld [vmem:[%s0 + $0xc] sm:$0xf]
  %v31 = vld [vmem:[%s3] sm:$0x1]
  %v32 = vld [vmem:[%s4] sm:$0x1]
  %v33 = vld [vmem:[%s5] sm:$0xf]
  %v34 = vld [vmem:[%s5 + $0x4] sm:$0xf]
  %v35 = vld [vmem:[%s5 + $0x8] sm:$0xf]
  %v36 = vld [vmem:[%s5 + $0xc] sm:$0xf]
  %v37 = vld [vmem:[%s6] sm:$0x1]
  %v38 = vld [vmem:[%s1] sm:$0xf]
  %v39 = vld [vmem:[%s1 + $0x4] sm:$0xf]
  %v40 = vld [vmem:[%s1 + $0x8] sm:$0xf]
  %v41 = vld [vmem:[%s1 + $0xc] sm:$0xf]
  %v42 = vld [vmem:[%s2] sm:$0x1]
  %v44 = vlaneseq
  %v45 = vshrl.u32 %v44, 7
  %v46 = vsub.s32 0, %v45
  %v47 = vrot.slane %v42, %v46
  %v53 = vunpack.c.l.b16 %v27
  %v54 = vunpack.c.l.b16 %v28
  %v55 = vunpack.c.l.b16 %v29
  %v56 = vunpack.c.l.b16 %v30
  %v57 = vpack.c.b16 %v54, %v53
  %v58 = vpack.c.b16 %v56, %v55
  %v63 = vunpack.c.l.b16 %v38
  %v64 = vunpack.c.l.b16 %v39
  %v65 = vunpack.c.l.b16 %v40
  %v66 = vunpack.c.l.b16 %v41
  %v67 = vpack.c.b16 %v64, %v63
  %v68 = vpack.c.b16 %v66, %v65
  %vm71 = vcmask 261120
  %v73 = vsel %vm71, %v57, 0
  %v76 = vsel %vm71, %v58, 0
  %78 = vmatprep.subr.bf16.mxu0 0
  %79 = vmatpush1.bf16.msra.mxu0 %v67
  %80 = vmatprep.subr.bf16.mxu0 0
  %81 = vmatpush1.bf16.msra.mxu0 %v68
  %82 = vmatprep.subr.bf16.mxu0 0
  %83 = vmatpush1.bf16.msra.mxu0 0
  %84 = vmatprep.subr.bf16.mxu0 0
  %85 = vmatpush1.bf16.msra.mxu0 0
  %86 = vmatprep.subr.bf16.mxu0 0
  %87 = vmatpush1.bf16.msra.mxu0 0
  %88 = vmatprep.subr.bf16.mxu0 0
  %89 = vmatpush1.bf16.msra.mxu0 0
  %90 = vmatprep.subr.bf16.mxu0 0
  %91 = vmatpush1.bf16.msra.mxu0 0
  %92 = vmatprep.subr.bf16.mxu0 0
  %93 = vmatpush1.bf16.msra.mxu0 0
  %94 = vmatprep.subr.bf16.mxu0 0
  %95 = vmatpush1.bf16.msra.mxu0 0
  %96 = vmatprep.subr.bf16.mxu0 0
  %97 = vmatpush1.bf16.msra.mxu0 0
  %98 = vmatprep.subr.bf16.mxu0 0
  %99 = vmatpush1.bf16.msra.mxu0 0
  %100 = vmatprep.subr.bf16.mxu0 0
  %101 = vmatpush1.bf16.msra.mxu0 0
  %102 = vmatprep.subr.bf16.mxu0 0
  %103 = vmatpush1.bf16.msra.mxu0 0
  %104 = vmatprep.subr.bf16.mxu0 0
  %105 = vmatpush1.bf16.msra.mxu0 0
  %106 = vmatprep.subr.bf16.mxu0 0
  %107 = vmatpush1.bf16.msra.mxu0 0
  %108 = vmatprep.subr.bf16.mxu0 0
  %109 = vmatpush1.bf16.msra.mxu0 0
  %110 = vmatprep.mubr.bf16.mxu0 0
  %111 = vmatmul.mubr.bf16.gmra.mrb[0].mxu0 %v73
  %v112 = vpop.f32.mrb[0].mxu0
  %v113 = vadd.f32 %v47, %v112
  %v114 = vpop.f32.mrb[0].mxu0
  %v115 = vpop.f32.mrb[0].mxu0
  %v116 = vadd.f32 %v47, %v115
  %v117 = vpop.f32.mrb[0].mxu0
  %118 = vmatprep.mubr.bf16.mxu0 0
  %119 = vmatmul.mubr.bf16.gmra.mrb[0].mxu0 %v76
  %v120 = vpop.f32.mrb[0].mxu0
  %v121 = vadd.f32 %v47, %v120
  %v122 = vpop.f32.mrb[0].mxu0
  %v123 = vpop.f32.mrb[0].mxu0
  %v124 = vadd.f32 %v47, %v123
  %v125 = vpop.f32.mrb[0].mxu0
  %126 = vdwg.mxu0
  %v127 = vsel %vm71, %v113, 0.0
  %128 = vadd.xlane.f32.xlu0 %v127
  %v129 = vpop.xlane.xlu0 %128
  %v130 = vsel %vm71, %v116, 0.0
  %131 = vadd.xlane.f32.xlu0 %v130
  %v132 = vpop.xlane.xlu0 %131
  %v133 = vsel %vm71, %v121, 0.0
  %134 = vadd.xlane.f32.xlu0 %v133
  %v135 = vpop.xlane.xlu0 %134
  %v136 = vsel %vm71, %v124, 0.0
  %137 = vadd.xlane.f32.xlu0 %v136
  %v138 = vpop.xlane.xlu0 %137
  %v139 = vrcp.pop 32.0
  %v140 = vmul.f32 %v129, %v139
  %v141 = vmul.f32 %v132, %v139
  %v142 = vmul.f32 %v135, %v139
  %v143 = vmul.f32 %v138, %v139
  %v144 = vsub.f32 %v113, %v140
  %v145 = vsub.f32 %v116, %v141
  %v146 = vsub.f32 %v121, %v142
  %v147 = vsub.f32 %v124, %v143
  %v148 = vmul.f32 %v144, %v144
  %v149 = vmul.f32 %v145, %v145
  %v150 = vmul.f32 %v146, %v146
  %v151 = vmul.f32 %v147, %v147
  %v152 = vsel %vm71, %v148, 0.0
  %153 = vadd.xlane.f32.xlu0 %v152
  %v154 = vpop.xlane.xlu0 %153
  %v155 = vsel %vm71, %v149, 0.0
  %156 = vadd.xlane.f32.xlu0 %v155
  %v157 = vpop.xlane.xlu0 %156
  %v158 = vsel %vm71, %v150, 0.0
  %159 = vadd.xlane.f32.xlu0 %v158
  %v160 = vpop.xlane.xlu0 %159
  %v161 = vsel %vm71, %v151, 0.0
  %162 = vadd.xlane.f32.xlu0 %v161
  %v163 = vpop.xlane.xlu0 %162
  %v164 = vmul.f32 %v154, %v139
  %v165 = vmul.f32 %v157, %v139
  %v166 = vmul.f32 %v160, %v139
  %v167 = vmul.f32 %v163, %v139
  %v168 = vadd.f32 %v164, 1e-05
  %v169 = vadd.f32 %v165, 1e-05
  %v170 = vadd.f32 %v166, 1e-05
  %v171 = vadd.f32 %v167, 1e-05
  %v172 = vrsqrt.pop %v168
  %v173 = vrsqrt.pop %v169
  %v174 = vrsqrt.pop %v170
  %v175 = vrsqrt.pop %v171
  %v176 = vmul.f32 %v144, %v172
  %v177 = vmul.f32 %v145, %v173
  %v178 = vmul.f32 %v146, %v174
  %v179 = vmul.f32 %v147, %v175
  %v181 = vlaneseq
  %v182 = vshrl.u32 %v181, 7
  %v183 = vsub.s32 0, %v182
  %v184 = vrot.slane %v31, %v183
  %v186 = vmul.f32 %v176, %v184
  %v187 = vmul.f32 %v177, %v184
  %v188 = vmul.f32 %v178, %v184
  %v189 = vmul.f32 %v179, %v184
  %v191 = vlaneseq
  %v192 = vshrl.u32 %v191, 7
  %v193 = vsub.s32 0, %v192
  %v194 = vrot.slane %v32, %v193
  %v196 = vadd.f32 %v186, %v194
  %v197 = vadd.f32 %v187, %v194
  %v198 = vadd.f32 %v188, %v194
  %v199 = vadd.f32 %v189, %v194
  %v200 = vpack.c.bf16 %v197, %v196
  %v201 = vpack.c.bf16 %v199, %v198
  %v203 = vlaneseq
  %v204 = vshrl.u32 %v203, 7
  %v205 = vsub.s32 0, %v204
  %v206 = vrot.slane %v37, %v205
  %v212 = vunpack.c.l.b16 %v33
  %v213 = vunpack.c.l.b16 %v34
  %v214 = vunpack.c.l.b16 %v35
  %v215 = vunpack.c.l.b16 %v36
  %v216 = vpack.c.b16 %v213, %v212
  %v217 = vpack.c.b16 %v215, %v214
  %v221 = vsel %vm71, %v200, 0
  %v224 = vsel %vm71, %v201, 0
  %226 = vmatprep.subr.bf16.mxu0 0
  %227 = vmatpush1.bf16.msra.mxu0 %v216
  %228 = vmatprep.subr.bf16.mxu0 0
  %229 = vmatpush1.bf16.msra.mxu0 %v217
  %230 = vmatprep.subr.bf16.mxu0 0
  %231 = vmatpush1.bf16.msra.mxu0 0
  %232 = vmatprep.subr.bf16.mxu0 0
  %233 = vmatpush1.bf16.msra.mxu0 0
  %234 = vmatprep.subr.bf16.mxu0 0
  %235 = vmatpush1.bf16.msra.mxu0 0
  %236 = vmatprep.subr.bf16.mxu0 0
  %237 = vmatpush1.bf16.msra.mxu0 0
  %238 = vmatprep.subr.bf16.mxu0 0
  %239 = vmatpush1.bf16.msra.mxu0 0
  %240 = vmatprep.subr.bf16.mxu0 0
  %241 = vmatpush1.bf16.msra.mxu0 0
  %242 = vmatprep.subr.bf16.mxu0 0
  %243 = vmatpush1.bf16.msra.mxu0 0
  %244 = vmatprep.subr.bf16.mxu0 0
  %245 = vmatpush1.bf16.msra.mxu0 0
  %246 = vmatprep.subr.bf16.mxu0 0
  %247 = vmatpush1.bf16.msra.mxu0 0
  %248 = vmatprep.subr.bf16.mxu0 0
  %249 = vmatpush1.bf16.msra.mxu0 0
  %250 = vmatprep.subr.bf16.mxu0 0
  %251 = vmatpush1.bf16.msra.mxu0 0
  %252 = vmatprep.subr.bf16.mxu0 0
  %253 = vmatpush1.bf16.msra.mxu0 0
  %254 = vmatprep.subr.bf16.mxu0 0
  %255 = vmatpush1.bf16.msra.mxu0 0
  %256 = vmatprep.subr.bf16.mxu0 0
  %257 = vmatpush1.bf16.msra.mxu0 0
  %258 = vmatprep.mubr.bf16.mxu0 0
  %259 = vmatmul.mubr.bf16.gmra.mrb[0].mxu0 %v221
  %v260 = vpop.f32.mrb[0].mxu0
  %v261 = vadd.f32 %v206, %v260
  %v262 = vpop.f32.mrb[0].mxu0
  %v263 = vpop.f32.mrb[0].mxu0
  %v264 = vadd.f32 %v206, %v263
  %v265 = vpop.f32.mrb[0].mxu0
  %266 = vmatprep.mubr.bf16.mxu0 0
  %267 = vmatmul.mubr.bf16.gmra.mrb[0].mxu0 %v224
  %v268 = vpop.f32.mrb[0].mxu0
  %v269 = vadd.f32 %v206, %v268
  %v270 = vpop.f32.mrb[0].mxu0
  %v271 = vpop.f32.mrb[0].mxu0
  %v272 = vadd.f32 %v206, %v271
  %v273 = vpop.f32.mrb[0].mxu0
  %274 = vdwg.mxu0
  %s275 = scalar_lea.vmem %s1, 16
  %v276 = vld [vmem:[%s275] sm:$0xf]
  %v277 = vld [vmem:[%s275 + $0x4] sm:$0xf]
  %v278 = vld [vmem:[%s275 + $0x8] sm:$0xf]
  %v279 = vld [vmem:[%s275 + $0xc] sm:$0xf]
  %s280 = scalar_lea.vmem %s2, 1
  %v281 = vld [vmem:[%s280] sm:$0x1]
  %v283 = vlaneseq
  %v284 = vshrl.u32 %v283, 7
  %v285 = vsub.s32 0, %v284
  %v286 = vrot.slane %v281, %v285
  %v292 = vunpack.c.l.b16 %v276
  %v293 = vunpack.c.l.b16 %v277
  %v294 = vunpack.c.l.b16 %v278
  %v295 = vunpack.c.l.b16 %v279
  %v296 = vpack.c.b16 %v293, %v292
  %v297 = vpack.c.b16 %v295, %v294
  %300 = vmatprep.subr.bf16.mxu0 0
  %301 = vmatpush1.bf16.msra.mxu0 %v296
  %302 = vmatprep.subr.bf16.mxu0 0
  %303 = vmatpush1.bf16.msra.mxu0 %v297
  %304 = vmatprep.subr.bf16.mxu0 0
  %305 = vmatpush1.bf16.msra.mxu0 0
  %306 = vmatprep.subr.bf16.mxu0 0
  %307 = vmatpush1.bf16.msra.mxu0 0
  %308 = vmatprep.subr.bf16.mxu0 0
  %309 = vmatpush1.bf16.msra.mxu0 0
  %310 = vmatprep.subr.bf16.mxu0 0
  %311 = vmatpush1.bf16.msra.mxu0 0
  %312 = vmatprep.subr.bf16.mxu0 0
  %313 = vmatpush1.bf16.msra.mxu0 0
  %314 = vmatprep.subr.bf16.mxu0 0
  %315 = vmatpush1.bf16.msra.mxu0 0
  %316 = vmatprep.subr.bf16.mxu0 0
  %317 = vmatpush1.bf16.msra.mxu0 0
  %318 = vmatprep.subr.bf16.mxu0 0
  %319 = vmatpush1.bf16.msra.mxu0 0
  %320 = vmatprep.subr.bf16.mxu0 0
  %321 = vmatpush1.bf16.msra.mxu0 0
  %322 = vmatprep.subr.bf16.mxu0 0
  %323 = vmatpush1.bf16.msra.mxu0 0
  %324 = vmatprep.subr.bf16.mxu0 0
  %325 = vmatpush1.bf16.msra.mxu0 0
  %326 = vmatprep.subr.bf16.mxu0 0
  %327 = vmatpush1.bf16.msra.mxu0 0
  %328 = vmatprep.subr.bf16.mxu0 0
  %329 = vmatpush1.bf16.msra.mxu0 0
  %330 = vmatprep.subr.bf16.mxu0 0
  %331 = vmatpush1.bf16.msra.mxu0 0
  %332 = vmatprep.mubr.bf16.mxu0 0
  %333 = vmatmul.mubr.bf16.gmra.mrb[0].mxu0 %v73
  %v334 = vpop.f32.mrb[0].mxu0
  %v335 = vadd.f32 %v286, %v334
  %v336 = vpop.f32.mrb[0].mxu0
  %v337 = vpop.f32.mrb[0].mxu0
  %v338 = vadd.f32 %v286, %v337
  %v339 = vpop.f32.mrb[0].mxu0
  %340 = vmatprep.mubr.bf16.mxu0 0
  %341 = vmatmul.mubr.bf16.gmra.mrb[0].mxu0 %v76
  %v342 = vpop.f32.mrb[0].mxu0
  %v343 = vadd.f32 %v286, %v342
  %v344 = vpop.f32.mrb[0].mxu0
  %v345 = vpop.f32.mrb[0].mxu0
  %v346 = vadd.f32 %v286, %v345
  %v347 = vpop.f32.mrb[0].mxu0
  %348 = vdwg.mxu0
  %v349 = vsel %vm71, %v335, 0.0
  %350 = vadd.xlane.f32.xlu0 %v349
  %v351 = vpop.xlane.xlu0 %350
  %v352 = vsel %vm71, %v338, 0.0
  %353 = vadd.xlane.f32.xlu0 %v352
  %v354 = vpop.xlane.xlu0 %353
  %v355 = vsel %vm71, %v343, 0.0
  %356 = vadd.xlane.f32.xlu0 %v355
  %v357 = vpop.xlane.xlu0 %356
  %v358 = vsel %vm71, %v346, 0.0
  %359 = vadd.xlane.f32.xlu0 %v358
  %v360 = vpop.xlane.xlu0 %359
  %v361 = vmul.f32 %v351, %v139
  %v362 = vmul.f32 %v354, %v139
  %v363 = vmul.f32 %v357, %v139
  %v364 = vmul.f32 %v360, %v139
  %v365 = vsub.f32 %v335, %v361
  %v366 = vsub.f32 %v338, %v362
  %v367 = vsub.f32 %v343, %v363
  %v368 = vsub.f32 %v346, %v364
  %v369 = vmul.f32 %v365, %v365
  %v370 = vmul.f32 %v366, %v366
  %v371 = vmul.f32 %v367, %v367
  %v372 = vmul.f32 %v368, %v368
  %v373 = vsel %vm71, %v369, 0.0
  %374 = vadd.xlane.f32.xlu0 %v373
  %v375 = vpop.xlane.xlu0 %374
  %v376 = vsel %vm71, %v370, 0.0
  %377 = vadd.xlane.f32.xlu0 %v376
  %v378 = vpop.xlane.xlu0 %377
  %v379 = vsel %vm71, %v371, 0.0
  %380 = vadd.xlane.f32.xlu0 %v379
  %v381 = vpop.xlane.xlu0 %380
  %v382 = vsel %vm71, %v372, 0.0
  %383 = vadd.xlane.f32.xlu0 %v382
  %v384 = vpop.xlane.xlu0 %383
  %v385 = vmul.f32 %v375, %v139
  %v386 = vmul.f32 %v378, %v139
  %v387 = vmul.f32 %v381, %v139
  %v388 = vmul.f32 %v384, %v139
  %v389 = vadd.f32 %v385, 1e-05
  %v390 = vadd.f32 %v386, 1e-05
  %v391 = vadd.f32 %v387, 1e-05
  %v392 = vadd.f32 %v388, 1e-05
  %v393 = vrsqrt.pop %v389
  %v394 = vrsqrt.pop %v390
  %v395 = vrsqrt.pop %v391
  %v396 = vrsqrt.pop %v392
  %v397 = vmul.f32 %v365, %v393
  %v398 = vmul.f32 %v366, %v394
  %v399 = vmul.f32 %v367, %v395
  %v400 = vmul.f32 %v368, %v396
  %v401 = vmul.f32 %v397, %v184
  %v402 = vmul.f32 %v398, %v184
  %v403 = vmul.f32 %v399, %v184
  %v404 = vmul.f32 %v400, %v184
  %v405 = vadd.f32 %v401, %v194
  %v406 = vadd.f32 %v402, %v194
  %v407 = vadd.f32 %v403, %v194
  %v408 = vadd.f32 %v404, %v194
  %v409 = vpack.c.bf16 %v406, %v405
  %v410 = vpack.c.bf16 %v408, %v407
  %v412 = vsel %vm71, %v409, 0
  %v415 = vsel %vm71, %v410, 0
  %417 = vmatprep.subr.bf16.mxu0 0
  %418 = vmatpush1.bf16.msra.mxu0 %v216
  %419 = vmatprep.subr.bf16.mxu0 0
  %420 = vmatpush1.bf16.msra.mxu0 %v217
  %421 = vmatprep.subr.bf16.mxu0 0
  %422 = vmatpush1.bf16.msra.mxu0 0
  %423 = vmatprep.subr.bf16.mxu0 0
  %424 = vmatpush1.bf16.msra.mxu0 0
  %425 = vmatprep.subr.bf16.mxu0 0
  %426 = vmatpush1.bf16.msra.mxu0 0
  %427 = vmatprep.subr.bf16.mxu0 0
  %428 = vmatpush1.bf16.msra.mxu0 0
  %429 = vmatprep.subr.bf16.mxu0 0
  %430 = vmatpush1.bf16.msra.mxu0 0
  %431 = vmatprep.subr.bf16.mxu0 0
  %432 = vmatpush1.bf16.msra.mxu0 0
  %433 = vmatprep.subr.bf16.mxu0 0
  %434 = vmatpush1.bf16.msra.mxu0 0
  %435 = vmatprep.subr.bf16.mxu0 0
  %436 = vmatpush1.bf16.msra.mxu0 0
  %437 = vmatprep.subr.bf16.mxu0 0
  %438 = vmatpush1.bf16.msra.mxu0 0
  %439 = vmatprep.subr.bf16.mxu0 0
  %440 = vmatpush1.bf16.msra.mxu0 0
  %441 = vmatprep.subr.bf16.mxu0 0
  %442 = vmatpush1.bf16.msra.mxu0 0
  %443 = vmatprep.subr.bf16.mxu0 0
  %444 = vmatpush1.bf16.msra.mxu0 0
  %445 = vmatprep.subr.bf16.mxu0 0
  %446 = vmatpush1.bf16.msra.mxu0 0
  %447 = vmatprep.subr.bf16.mxu0 0
  %448 = vmatpush1.bf16.msra.mxu0 0
  %449 = vmatprep.mubr.bf16.mxu0 0
  %450 = vmatmul.mubr.bf16.gmra.mrb[0].mxu0 %v412
  %v451 = vpop.f32.mrb[0].mxu0
  %v452 = vadd.f32 %v206, %v451
  %v453 = vpop.f32.mrb[0].mxu0
  %v454 = vpop.f32.mrb[0].mxu0
  %v455 = vadd.f32 %v206, %v454
  %v456 = vpop.f32.mrb[0].mxu0
  %457 = vmatprep.mubr.bf16.mxu0 0
  %458 = vmatmul.mubr.bf16.gmra.mrb[0].mxu0 %v415
  %v459 = vpop.f32.mrb[0].mxu0
  %v460 = vadd.f32 %v206, %v459
  %v461 = vpop.f32.mrb[0].mxu0
  %v462 = vpop.f32.mrb[0].mxu0
  %v463 = vadd.f32 %v206, %v462
  %v464 = vpop.f32.mrb[0].mxu0
  %465 = vdwg.mxu0
  %s466 = scalar_lea.vmem %s1, 32
  %v467 = vld [vmem:[%s466] sm:$0xf]
  %v468 = vld [vmem:[%s466 + $0x4] sm:$0xf]
  %v469 = vld [vmem:[%s466 + $0x8] sm:$0xf]
  %v470 = vld [vmem:[%s466 + $0xc] sm:$0xf]
  %s471 = scalar_lea.vmem %s2, 2
  %v472 = vld [vmem:[%s471] sm:$0x1]
  %v474 = vlaneseq
  %v475 = vshrl.u32 %v474, 7
  %v476 = vsub.s32 0, %v475
  %v477 = vrot.slane %v472, %v476
  %v483 = vunpack.c.l.b16 %v467
  %v484 = vunpack.c.l.b16 %v468
  %v485 = vunpack.c.l.b16 %v469
  %v486 = vunpack.c.l.b16 %v470
  %v487 = vpack.c.b16 %v484, %v483
  %v488 = vpack.c.b16 %v486, %v485
  %491 = vmatprep.subr.bf16.mxu0 0
  %492 = vmatpush1.bf16.msra.mxu0 %v487
  %493 = vmatprep.subr.bf16.mxu0 0
  %494 = vmatpush1.bf16.msra.mxu0 %v488
  %495 = vmatprep.subr.bf16.mxu0 0
  %496 = vmatpush1.bf16.msra.mxu0 0
  %497 = vmatprep.subr.bf16.mxu0 0
  %498 = vmatpush1.bf16.msra.mxu0 0
  %499 = vmatprep.subr.bf16.mxu0 0
  %500 = vmatpush1.bf16.msra.mxu0 0
  %501 = vmatprep.subr.bf16.mxu0 0
  %502 = vmatpush1.bf16.msra.mxu0 0
  %503 = vmatprep.subr.bf16.mxu0 0
  %504 = vmatpush1.bf16.msra.mxu0 0
  %505 = vmatprep.subr.bf16.mxu0 0
  %506 = vmatpush1.bf16.msra.mxu0 0
  %507 = vmatprep.subr.bf16.mxu0 0
  %508 = vmatpush1.bf16.msra.mxu0 0
  %509 = vmatprep.subr.bf16.mxu0 0
  %510 = vmatpush1.bf16.msra.mxu0 0
  %511 = vmatprep.subr.bf16.mxu0 0
  %512 = vmatpush1.bf16.msra.mxu0 0
  %513 = vmatprep.subr.bf16.mxu0 0
  %514 = vmatpush1.bf16.msra.mxu0 0
  %515 = vmatprep.subr.bf16.mxu0 0
  %516 = vmatpush1.bf16.msra.mxu0 0
  %517 = vmatprep.subr.bf16.mxu0 0
  %518 = vmatpush1.bf16.msra.mxu0 0
  %519 = vmatprep.subr.bf16.mxu0 0
  %520 = vmatpush1.bf16.msra.mxu0 0
  %521 = vmatprep.subr.bf16.mxu0 0
  %522 = vmatpush1.bf16.msra.mxu0 0
  %523 = vmatprep.mubr.bf16.mxu0 0
  %524 = vmatmul.mubr.bf16.gmra.mrb[0].mxu0 %v73
  %v525 = vpop.f32.mrb[0].mxu0
  %v526 = vadd.f32 %v477, %v525
  %v527 = vpop.f32.mrb[0].mxu0
  %v528 = vpop.f32.mrb[0].mxu0
  %v529 = vadd.f32 %v477, %v528
  %v530 = vpop.f32.mrb[0].mxu0
  %531 = vmatprep.mubr.bf16.mxu0 0
  %532 = vmatmul.mubr.bf16.gmra.mrb[0].mxu0 %v76
  %v533 = vpop.f32.mrb[0].mxu0
  %v534 = vadd.f32 %v477, %v533
  %v535 = vpop.f32.mrb[0].mxu0
  %v536 = vpop.f32.mrb[0].mxu0
  %v537 = vadd.f32 %v477, %v536
  %v538 = vpop.f32.mrb[0].mxu0
  %539 = vdwg.mxu0
  %v540 = vsel %vm71, %v526, 0.0
  %541 = vadd.xlane.f32.xlu0 %v540
  %v542 = vpop.xlane.xlu0 %541
  %v543 = vsel %vm71, %v529, 0.0
  %544 = vadd.xlane.f32.xlu0 %v543
  %v545 = vpop.xlane.xlu0 %544
  %v546 = vsel %vm71, %v534, 0.0
  %547 = vadd.xlane.f32.xlu0 %v546
  %v548 = vpop.xlane.xlu0 %547
  %v549 = vsel %vm71, %v537, 0.0
  %550 = vadd.xlane.f32.xlu0 %v549
  %v551 = vpop.xlane.xlu0 %550
  %v552 = vmul.f32 %v542, %v139
  %v553 = vmul.f32 %v545, %v139
  %v554 = vmul.f32 %v548, %v139
  %v555 = vmul.f32 %v551, %v139
  %v556 = vsub.f32 %v526, %v552
  %v557 = vsub.f32 %v529, %v553
  %v558 = vsub.f32 %v534, %v554
  %v559 = vsub.f32 %v537, %v555
  %v560 = vmul.f32 %v556, %v556
  %v561 = vmul.f32 %v557, %v557
  %v562 = vmul.f32 %v558, %v558
  %v563 = vmul.f32 %v559, %v559
  %v564 = vsel %vm71, %v560, 0.0
  %565 = vadd.xlane.f32.xlu0 %v564
  %v566 = vpop.xlane.xlu0 %565
  %v567 = vsel %vm71, %v561, 0.0
  %568 = vadd.xlane.f32.xlu0 %v567
  %v569 = vpop.xlane.xlu0 %568
  %v570 = vsel %vm71, %v562, 0.0
  %571 = vadd.xlane.f32.xlu0 %v570
  %v572 = vpop.xlane.xlu0 %571
  %v573 = vsel %vm71, %v563, 0.0
  %574 = vadd.xlane.f32.xlu0 %v573
  %v575 = vpop.xlane.xlu0 %574
  %v576 = vmul.f32 %v566, %v139
  %v577 = vmul.f32 %v569, %v139
  %v578 = vmul.f32 %v572, %v139
  %v579 = vmul.f32 %v575, %v139
  %v580 = vadd.f32 %v576, 1e-05
  %v581 = vadd.f32 %v577, 1e-05
  %v582 = vadd.f32 %v578, 1e-05
  %v583 = vadd.f32 %v579, 1e-05
  %v584 = vrsqrt.pop %v580
  %v585 = vrsqrt.pop %v581
  %v586 = vrsqrt.pop %v582
  %v587 = vrsqrt.pop %v583
  %v588 = vmul.f32 %v556, %v584
  %v589 = vmul.f32 %v557, %v585
  %v590 = vmul.f32 %v558, %v586
  %v591 = vmul.f32 %v559, %v587
  %v592 = vmul.f32 %v588, %v184
  %v593 = vmul.f32 %v589, %v184
  %v594 = vmul.f32 %v590, %v184
  %v595 = vmul.f32 %v591, %v184
  %v596 = vadd.f32 %v592, %v194
  %v597 = vadd.f32 %v593, %v194
  %v598 = vadd.f32 %v594, %v194
  %v599 = vadd.f32 %v595, %v194
  %v600 = vpack.c.bf16 %v597, %v596
  %v601 = vpack.c.bf16 %v599, %v598
  %v603 = vsel %vm71, %v600, 0
  %v606 = vsel %vm71, %v601, 0
  %608 = vmatprep.subr.bf16.mxu0 0
  %609 = vmatpush1.bf16.msra.mxu0 %v216
  %610 = vmatprep.subr.bf16.mxu0 0
  %611 = vmatpush1.bf16.msra.mxu0 %v217
  %612 = vmatprep.subr.bf16.mxu0 0
  %613 = vmatpush1.bf16.msra.mxu0 0
  %614 = vmatprep.subr.bf16.mxu0 0
  %615 = vmatpush1.bf16.msra.mxu0 0
  %616 = vmatprep.subr.bf16.mxu0 0
  %617 = vmatpush1.bf16.msra.mxu0 0
  %618 = vmatprep.subr.bf16.mxu0 0
  %619 = vmatpush1.bf16.msra.mxu0 0
  %620 = vmatprep.subr.bf16.mxu0 0
  %621 = vmatpush1.bf16.msra.mxu0 0
  %622 = vmatprep.subr.bf16.mxu0 0
  %623 = vmatpush1.bf16.msra.mxu0 0
  %624 = vmatprep.subr.bf16.mxu0 0
  %625 = vmatpush1.bf16.msra.mxu0 0
  %626 = vmatprep.subr.bf16.mxu0 0
  %627 = vmatpush1.bf16.msra.mxu0 0
  %628 = vmatprep.subr.bf16.mxu0 0
  %629 = vmatpush1.bf16.msra.mxu0 0
  %630 = vmatprep.subr.bf16.mxu0 0
  %631 = vmatpush1.bf16.msra.mxu0 0
  %632 = vmatprep.subr.bf16.mxu0 0
  %633 = vmatpush1.bf16.msra.mxu0 0
  %634 = vmatprep.subr.bf16.mxu0 0
  %635 = vmatpush1.bf16.msra.mxu0 0
  %636 = vmatprep.subr.bf16.mxu0 0
  %637 = vmatpush1.bf16.msra.mxu0 0
  %638 = vmatprep.subr.bf16.mxu0 0
  %639 = vmatpush1.bf16.msra.mxu0 0
  %640 = vmatprep.mubr.bf16.mxu0 0
  %641 = vmatmul.mubr.bf16.gmra.mrb[0].mxu0 %v603
  %v642 = vpop.f32.mrb[0].mxu0
  %v643 = vadd.f32 %v206, %v642
  %v644 = vpop.f32.mrb[0].mxu0
  %v645 = vpop.f32.mrb[0].mxu0
  %v646 = vadd.f32 %v206, %v645
  %v647 = vpop.f32.mrb[0].mxu0
  %648 = vmatprep.mubr.bf16.mxu0 0
  %649 = vmatmul.mubr.bf16.gmra.mrb[0].mxu0 %v606
  %v650 = vpop.f32.mrb[0].mxu0
  %v651 = vadd.f32 %v206, %v650
  %v652 = vpop.f32.mrb[0].mxu0
  %v653 = vpop.f32.mrb[0].mxu0
  %v654 = vadd.f32 %v206, %v653
  %v655 = vpop.f32.mrb[0].mxu0
  %656 = vdwg.mxu0
  %s657 = scalar_lea.vmem %s1, 48
  %v658 = vld [vmem:[%s657] sm:$0xf]
  %v659 = vld [vmem:[%s657 + $0x4] sm:$0xf]
  %v660 = vld [vmem:[%s657 + $0x8] sm:$0xf]
  %v661 = vld [vmem:[%s657 + $0xc] sm:$0xf]
  %s662 = scalar_lea.vmem %s2, 3
  %v663 = vld [vmem:[%s662] sm:$0x1]
  %v665 = vlaneseq
  %v666 = vshrl.u32 %v665, 7
  %v667 = vsub.s32 0, %v666
  %v668 = vrot.slane %v663, %v667
  %v674 = vunpack.c.l.b16 %v658
  %v675 = vunpack.c.l.b16 %v659
  %v676 = vunpack.c.l.b16 %v660
  %v677 = vunpack.c.l.b16 %v661
  %v678 = vpack.c.b16 %v675, %v674
  %v679 = vpack.c.b16 %v677, %v676
  %682 = vmatprep.subr.bf16.mxu0 0
  %683 = vmatpush1.bf16.msra.mxu0 %v678
  %684 = vmatprep.subr.bf16.mxu0 0
  %685 = vmatpush1.bf16.msra.mxu0 %v679
  %686 = vmatprep.subr.bf16.mxu0 0
  %687 = vmatpush1.bf16.msra.mxu0 0
  %688 = vmatprep.subr.bf16.mxu0 0
  %689 = vmatpush1.bf16.msra.mxu0 0
  %690 = vmatprep.subr.bf16.mxu0 0
  %691 = vmatpush1.bf16.msra.mxu0 0
  %692 = vmatprep.subr.bf16.mxu0 0
  %693 = vmatpush1.bf16.msra.mxu0 0
  %694 = vmatprep.subr.bf16.mxu0 0
  %695 = vmatpush1.bf16.msra.mxu0 0
  %696 = vmatprep.subr.bf16.mxu0 0
  %697 = vmatpush1.bf16.msra.mxu0 0
  %698 = vmatprep.subr.bf16.mxu0 0
  %699 = vmatpush1.bf16.msra.mxu0 0
  %700 = vmatprep.subr.bf16.mxu0 0
  %701 = vmatpush1.bf16.msra.mxu0 0
  %702 = vmatprep.subr.bf16.mxu0 0
  %703 = vmatpush1.bf16.msra.mxu0 0
  %704 = vmatprep.subr.bf16.mxu0 0
  %705 = vmatpush1.bf16.msra.mxu0 0
  %706 = vmatprep.subr.bf16.mxu0 0
  %707 = vmatpush1.bf16.msra.mxu0 0
  %708 = vmatprep.subr.bf16.mxu0 0
  %709 = vmatpush1.bf16.msra.mxu0 0
  %710 = vmatprep.subr.bf16.mxu0 0
  %711 = vmatpush1.bf16.msra.mxu0 0
  %712 = vmatprep.subr.bf16.mxu0 0
  %713 = vmatpush1.bf16.msra.mxu0 0
  %714 = vmatprep.mubr.bf16.mxu0 0
  %715 = vmatmul.mubr.bf16.gmra.mrb[0].mxu0 %v73
  %v716 = vpop.f32.mrb[0].mxu0
  %v717 = vadd.f32 %v668, %v716
  %v718 = vpop.f32.mrb[0].mxu0
  %v719 = vpop.f32.mrb[0].mxu0
  %v720 = vadd.f32 %v668, %v719
  %v721 = vpop.f32.mrb[0].mxu0
  %722 = vmatprep.mubr.bf16.mxu0 0
  %723 = vmatmul.mubr.bf16.gmra.mrb[0].mxu0 %v76
  %v724 = vpop.f32.mrb[0].mxu0
  %v725 = vadd.f32 %v668, %v724
  %v726 = vpop.f32.mrb[0].mxu0
  %v727 = vpop.f32.mrb[0].mxu0
  %v728 = vadd.f32 %v668, %v727
  %v729 = vpop.f32.mrb[0].mxu0
  %730 = vdwg.mxu0
  %v731 = vsel %vm71, %v717, 0.0
  %732 = vadd.xlane.f32.xlu0 %v731
  %v733 = vpop.xlane.xlu0 %732
  %v734 = vsel %vm71, %v720, 0.0
  %735 = vadd.xlane.f32.xlu0 %v734
  %v736 = vpop.xlane.xlu0 %735
  %v737 = vsel %vm71, %v725, 0.0
  %738 = vadd.xlane.f32.xlu0 %v737
  %v739 = vpop.xlane.xlu0 %738
  %v740 = vsel %vm71, %v728, 0.0
  %741 = vadd.xlane.f32.xlu0 %v740
  %v742 = vpop.xlane.xlu0 %741
  %v743 = vmul.f32 %v733, %v139
  %v744 = vmul.f32 %v736, %v139
  %v745 = vmul.f32 %v739, %v139
  %v746 = vmul.f32 %v742, %v139
  %v747 = vsub.f32 %v717, %v743
  %v748 = vsub.f32 %v720, %v744
  %v749 = vsub.f32 %v725, %v745
  %v750 = vsub.f32 %v728, %v746
  %v751 = vmul.f32 %v747, %v747
  %v752 = vmul.f32 %v748, %v748
  %v753 = vmul.f32 %v749, %v749
  %v754 = vmul.f32 %v750, %v750
  %v755 = vsel %vm71, %v751, 0.0
  %756 = vadd.xlane.f32.xlu0 %v755
  %v757 = vpop.xlane.xlu0 %756
  %v758 = vsel %vm71, %v752, 0.0
  %759 = vadd.xlane.f32.xlu0 %v758
  %v760 = vpop.xlane.xlu0 %759
  %v761 = vsel %vm71, %v753, 0.0
  %762 = vadd.xlane.f32.xlu0 %v761
  %v763 = vpop.xlane.xlu0 %762
  %v764 = vsel %vm71, %v754, 0.0
  %765 = vadd.xlane.f32.xlu0 %v764
  %v766 = vpop.xlane.xlu0 %765
  %v767 = vmul.f32 %v757, %v139
  %v768 = vmul.f32 %v760, %v139
  %v769 = vmul.f32 %v763, %v139
  %v770 = vmul.f32 %v766, %v139
  %v771 = vadd.f32 %v767, 1e-05
  %v772 = vadd.f32 %v768, 1e-05
  %v773 = vadd.f32 %v769, 1e-05
  %v774 = vadd.f32 %v770, 1e-05
  %v775 = vrsqrt.pop %v771
  %v776 = vrsqrt.pop %v772
  %v777 = vrsqrt.pop %v773
  %v778 = vrsqrt.pop %v774
  %v779 = vmul.f32 %v747, %v775
  %v780 = vmul.f32 %v748, %v776
  %v781 = vmul.f32 %v749, %v777
  %v782 = vmul.f32 %v750, %v778
  %v783 = vmul.f32 %v779, %v184
  %v784 = vmul.f32 %v780, %v184
  %v785 = vmul.f32 %v781, %v184
  %v786 = vmul.f32 %v782, %v184
  %v787 = vadd.f32 %v783, %v194
  %v788 = vadd.f32 %v784, %v194
  %v789 = vadd.f32 %v785, %v194
  %v790 = vadd.f32 %v786, %v194
  %v791 = vpack.c.bf16 %v788, %v787
  %v792 = vpack.c.bf16 %v790, %v789
  %v794 = vsel %vm71, %v791, 0
  %v797 = vsel %vm71, %v792, 0
  %799 = vmatprep.subr.bf16.mxu0 0
  %800 = vmatpush1.bf16.msra.mxu0 %v216
  %801 = vmatprep.subr.bf16.mxu0 0
  %802 = vmatpush1.bf16.msra.mxu0 %v217
  %803 = vmatprep.subr.bf16.mxu0 0
  %804 = vmatpush1.bf16.msra.mxu0 0
  %805 = vmatprep.subr.bf16.mxu0 0
  %806 = vmatpush1.bf16.msra.mxu0 0
  %807 = vmatprep.subr.bf16.mxu0 0
  %808 = vmatpush1.bf16.msra.mxu0 0
  %809 = vmatprep.subr.bf16.mxu0 0
  %810 = vmatpush1.bf16.msra.mxu0 0
  %811 = vmatprep.subr.bf16.mxu0 0
  %812 = vmatpush1.bf16.msra.mxu0 0
  %813 = vmatprep.subr.bf16.mxu0 0
  %814 = vmatpush1.bf16.msra.mxu0 0
  %815 = vmatprep.subr.bf16.mxu0 0
  %816 = vmatpush1.bf16.msra.mxu0 0
  %817 = vmatprep.subr.bf16.mxu0 0
  %818 = vmatpush1.bf16.msra.mxu0 0
  %819 = vmatprep.subr.bf16.mxu0 0
  %820 = vmatpush1.bf16.msra.mxu0 0
  %821 = vmatprep.subr.bf16.mxu0 0
  %822 = vmatpush1.bf16.msra.mxu0 0
  %823 = vmatprep.subr.bf16.mxu0 0
  %824 = vmatpush1.bf16.msra.mxu0 0
  %825 = vmatprep.subr.bf16.mxu0 0
  %826 = vmatpush1.bf16.msra.mxu0 0
  %827 = vmatprep.subr.bf16.mxu0 0
  %828 = vmatpush1.bf16.msra.mxu0 0
  %829 = vmatprep.subr.bf16.mxu0 0
  %830 = vmatpush1.bf16.msra.mxu0 0
  %831 = vmatprep.mubr.bf16.mxu0 0
  %832 = vmatmul.mubr.bf16.gmra.mrb[0].mxu0 %v794
  %v833 = vpop.f32.mrb[0].mxu0
  %v834 = vadd.f32 %v206, %v833
  %v835 = vpop.f32.mrb[0].mxu0
  %v836 = vpop.f32.mrb[0].mxu0
  %v837 = vadd.f32 %v206, %v836
  %v838 = vpop.f32.mrb[0].mxu0
  %839 = vmatprep.mubr.bf16.mxu0 0
  %840 = vmatmul.mubr.bf16.gmra.mrb[0].mxu0 %v797
  %v841 = vpop.f32.mrb[0].mxu0
  %v842 = vadd.f32 %v206, %v841
  %v843 = vpop.f32.mrb[0].mxu0
  %v844 = vpop.f32.mrb[0].mxu0
  %v845 = vadd.f32 %v206, %v844
  %v846 = vpop.f32.mrb[0].mxu0
  %847 = vdwg.mxu0
  %s848 = scalar_lea.vmem %s1, 64
  %v849 = vld [vmem:[%s848] sm:$0xf]
  %v850 = vld [vmem:[%s848 + $0x4] sm:$0xf]
  %v851 = vld [vmem:[%s848 + $0x8] sm:$0xf]
  %v852 = vld [vmem:[%s848 + $0xc] sm:$0xf]
  %s853 = scalar_lea.vmem %s2, 4
  %v854 = vld [vmem:[%s853] sm:$0x1]
  %v856 = vlaneseq
  %v857 = vshrl.u32 %v856, 7
  %v858 = vsub.s32 0, %v857
  %v859 = vrot.slane %v854, %v858
  %v865 = vunpack.c.l.b16 %v849
  %v866 = vunpack.c.l.b16 %v850
  %v867 = vunpack.c.l.b16 %v851
  %v868 = vunpack.c.l.b16 %v852
  %v869 = vpack.c.b16 %v866, %v865
  %v870 = vpack.c.b16 %v868, %v867
  %873 = vmatprep.subr.bf16.mxu0 0
  %874 = vmatpush1.bf16.msra.mxu0 %v869
  %875 = vmatprep.subr.bf16.mxu0 0
  %876 = vmatpush1.bf16.msra.mxu0 %v870
  %877 = vmatprep.subr.bf16.mxu0 0
  %878 = vmatpush1.bf16.msra.mxu0 0
  %879 = vmatprep.subr.bf16.mxu0 0
  %880 = vmatpush1.bf16.msra.mxu0 0
  %881 = vmatprep.subr.bf16.mxu0 0
  %882 = vmatpush1.bf16.msra.mxu0 0
  %883 = vmatprep.subr.bf16.mxu0 0
  %884 = vmatpush1.bf16.msra.mxu0 0
  %885 = vmatprep.subr.bf16.mxu0 0
  %886 = vmatpush1.bf16.msra.mxu0 0
  %887 = vmatprep.subr.bf16.mxu0 0
  %888 = vmatpush1.bf16.msra.mxu0 0
  %889 = vmatprep.subr.bf16.mxu0 0
  %890 = vmatpush1.bf16.msra.mxu0 0
  %891 = vmatprep.subr.bf16.mxu0 0
  %892 = vmatpush1.bf16.msra.mxu0 0
  %893 = vmatprep.subr.bf16.mxu0 0
  %894 = vmatpush1.bf16.msra.mxu0 0
  %895 = vmatprep.subr.bf16.mxu0 0
  %896 = vmatpush1.bf16.msra.mxu0 0
  %897 = vmatprep.subr.bf16.mxu0 0
  %898 = vmatpush1.bf16.msra.mxu0 0
  %899 = vmatprep.subr.bf16.mxu0 0
  %900 = vmatpush1.bf16.msra.mxu0 0
  %901 = vmatprep.subr.bf16.mxu0 0
  %902 = vmatpush1.bf16.msra.mxu0 0
  %903 = vmatprep.subr.bf16.mxu0 0
  %904 = vmatpush1.bf16.msra.mxu0 0
  %905 = vmatprep.mubr.bf16.mxu0 0
  %906 = vmatmul.mubr.bf16.gmra.mrb[0].mxu0 %v73
  %v907 = vpop.f32.mrb[0].mxu0
  %v908 = vadd.f32 %v859, %v907
  %v909 = vpop.f32.mrb[0].mxu0
  %v910 = vpop.f32.mrb[0].mxu0
  %v911 = vadd.f32 %v859, %v910
  %v912 = vpop.f32.mrb[0].mxu0
  %913 = vmatprep.mubr.bf16.mxu0 0
  %914 = vmatmul.mubr.bf16.gmra.mrb[0].mxu0 %v76
  %v915 = vpop.f32.mrb[0].mxu0
  %v916 = vadd.f32 %v859, %v915
  %v917 = vpop.f32.mrb[0].mxu0
  %v918 = vpop.f32.mrb[0].mxu0
  %v919 = vadd.f32 %v859, %v918
  %v920 = vpop.f32.mrb[0].mxu0
  %921 = vdwg.mxu0
  %v922 = vsel %vm71, %v908, 0.0
  %923 = vadd.xlane.f32.xlu0 %v922
  %v924 = vpop.xlane.xlu0 %923
  %v925 = vsel %vm71, %v911, 0.0
  %926 = vadd.xlane.f32.xlu0 %v925
  %v927 = vpop.xlane.xlu0 %926
  %v928 = vsel %vm71, %v916, 0.0
  %929 = vadd.xlane.f32.xlu0 %v928
  %v930 = vpop.xlane.xlu0 %929
  %v931 = vsel %vm71, %v919, 0.0
  %932 = vadd.xlane.f32.xlu0 %v931
  %v933 = vpop.xlane.xlu0 %932
  %v934 = vmul.f32 %v924, %v139
  %v935 = vmul.f32 %v927, %v139
  %v936 = vmul.f32 %v930, %v139
  %v937 = vmul.f32 %v933, %v139
  %v938 = vsub.f32 %v908, %v934
  %v939 = vsub.f32 %v911, %v935
  %v940 = vsub.f32 %v916, %v936
  %v941 = vsub.f32 %v919, %v937
  %v942 = vmul.f32 %v938, %v938
  %v943 = vmul.f32 %v939, %v939
  %v944 = vmul.f32 %v940, %v940
  %v945 = vmul.f32 %v941, %v941
  %v946 = vsel %vm71, %v942, 0.0
  %947 = vadd.xlane.f32.xlu0 %v946
  %v948 = vpop.xlane.xlu0 %947
  %v949 = vsel %vm71, %v943, 0.0
  %950 = vadd.xlane.f32.xlu0 %v949
  %v951 = vpop.xlane.xlu0 %950
  %v952 = vsel %vm71, %v944, 0.0
  %953 = vadd.xlane.f32.xlu0 %v952
  %v954 = vpop.xlane.xlu0 %953
  %v955 = vsel %vm71, %v945, 0.0
  %956 = vadd.xlane.f32.xlu0 %v955
  %v957 = vpop.xlane.xlu0 %956
  %v958 = vmul.f32 %v948, %v139
  %v959 = vmul.f32 %v951, %v139
  %v960 = vmul.f32 %v954, %v139
  %v961 = vmul.f32 %v957, %v139
  %v962 = vadd.f32 %v958, 1e-05
  %v963 = vadd.f32 %v959, 1e-05
  %v964 = vadd.f32 %v960, 1e-05
  %v965 = vadd.f32 %v961, 1e-05
  %v966 = vrsqrt.pop %v962
  %v967 = vrsqrt.pop %v963
  %v968 = vrsqrt.pop %v964
  %v969 = vrsqrt.pop %v965
  %v970 = vmul.f32 %v938, %v966
  %v971 = vmul.f32 %v939, %v967
  %v972 = vmul.f32 %v940, %v968
  %v973 = vmul.f32 %v941, %v969
  %v974 = vmul.f32 %v970, %v184
  %v975 = vmul.f32 %v971, %v184
  %v976 = vmul.f32 %v972, %v184
  %v977 = vmul.f32 %v973, %v184
  %v978 = vadd.f32 %v974, %v194
  %v979 = vadd.f32 %v975, %v194
  %v980 = vadd.f32 %v976, %v194
  %v981 = vadd.f32 %v977, %v194
  %v982 = vpack.c.bf16 %v979, %v978
  %v983 = vpack.c.bf16 %v981, %v980
  %v985 = vsel %vm71, %v982, 0
  %v988 = vsel %vm71, %v983, 0
  %990 = vmatprep.subr.bf16.mxu0 0
  %991 = vmatpush1.bf16.msra.mxu0 %v216
  %992 = vmatprep.subr.bf16.mxu0 0
  %993 = vmatpush1.bf16.msra.mxu0 %v217
  %994 = vmatprep.subr.bf16.mxu0 0
  %995 = vmatpush1.bf16.msra.mxu0 0
  %996 = vmatprep.subr.bf16.mxu0 0
  %997 = vmatpush1.bf16.msra.mxu0 0
  %998 = vmatprep.subr.bf16.mxu0 0
  %999 = vmatpush1.bf16.msra.mxu0 0
  %1000 = vmatprep.subr.bf16.mxu0 0
  %1001 = vmatpush1.bf16.msra.mxu0 0
  %1002 = vmatprep.subr.bf16.mxu0 0
  %1003 = vmatpush1.bf16.msra.mxu0 0
  %1004 = vmatprep.subr.bf16.mxu0 0
  %1005 = vmatpush1.bf16.msra.mxu0 0
  %1006 = vmatprep.subr.bf16.mxu0 0
  %1007 = vmatpush1.bf16.msra.mxu0 0
  %1008 = vmatprep.subr.bf16.mxu0 0
  %1009 = vmatpush1.bf16.msra.mxu0 0
  %1010 = vmatprep.subr.bf16.mxu0 0
  %1011 = vmatpush1.bf16.msra.mxu0 0
  %1012 = vmatprep.subr.bf16.mxu0 0
  %1013 = vmatpush1.bf16.msra.mxu0 0
  %1014 = vmatprep.subr.bf16.mxu0 0
  %1015 = vmatpush1.bf16.msra.mxu0 0
  %1016 = vmatprep.subr.bf16.mxu0 0
  %1017 = vmatpush1.bf16.msra.mxu0 0
  %1018 = vmatprep.subr.bf16.mxu0 0
  %1019 = vmatpush1.bf16.msra.mxu0 0
  %1020 = vmatprep.subr.bf16.mxu0 0
  %1021 = vmatpush1.bf16.msra.mxu0 0
  %1022 = vmatprep.mubr.bf16.mxu0 0
  %1023 = vmatmul.mubr.bf16.gmra.mrb[0].mxu0 %v985
  %v1024 = vpop.f32.mrb[0].mxu0
  %v1025 = vadd.f32 %v206, %v1024
  %v1026 = vpop.f32.mrb[0].mxu0
  %v1027 = vpop.f32.mrb[0].mxu0
  %v1028 = vadd.f32 %v206, %v1027
  %v1029 = vpop.f32.mrb[0].mxu0
  %1030 = vmatprep.mubr.bf16.mxu0 0
  %1031 = vmatmul.mubr.bf16.gmra.mrb[0].mxu0 %v988
  %v1032 = vpop.f32.mrb[0].mxu0
  %v1033 = vadd.f32 %v206, %v1032
  %v1034 = vpop.f32.mrb[0].mxu0
  %v1035 = vpop.f32.mrb[0].mxu0
  %v1036 = vadd.f32 %v206, %v1035
  %v1037 = vpop.f32.mrb[0].mxu0
  %1038 = vdwg.mxu0
  %s1039 = scalar_lea.vmem %s1, 80
  %v1040 = vld [vmem:[%s1039] sm:$0xf]
  %v1041 = vld [vmem:[%s1039 + $0x4] sm:$0xf]
  %v1042 = vld [vmem:[%s1039 + $0x8] sm:$0xf]
  %v1043 = vld [vmem:[%s1039 + $0xc] sm:$0xf]
  %s1044 = scalar_lea.vmem %s2, 5
  %v1045 = vld [vmem:[%s1044] sm:$0x1]
  %v1047 = vlaneseq
  %v1048 = vshrl.u32 %v1047, 7
  %v1049 = vsub.s32 0, %v1048
  %v1050 = vrot.slane %v1045, %v1049
  %v1056 = vunpack.c.l.b16 %v1040
  %v1057 = vunpack.c.l.b16 %v1041
  %v1058 = vunpack.c.l.b16 %v1042
  %v1059 = vunpack.c.l.b16 %v1043
  %v1060 = vpack.c.b16 %v1057, %v1056
  %v1061 = vpack.c.b16 %v1059, %v1058
  %1064 = vmatprep.subr.bf16.mxu0 0
  %1065 = vmatpush1.bf16.msra.mxu0 %v1060
  %1066 = vmatprep.subr.bf16.mxu0 0
  %1067 = vmatpush1.bf16.msra.mxu0 %v1061
  %1068 = vmatprep.subr.bf16.mxu0 0
  %1069 = vmatpush1.bf16.msra.mxu0 0
  %1070 = vmatprep.subr.bf16.mxu0 0
  %1071 = vmatpush1.bf16.msra.mxu0 0
  %1072 = vmatprep.subr.bf16.mxu0 0
  %1073 = vmatpush1.bf16.msra.mxu0 0
  %1074 = vmatprep.subr.bf16.mxu0 0
  %1075 = vmatpush1.bf16.msra.mxu0 0
  %1076 = vmatprep.subr.bf16.mxu0 0
  %1077 = vmatpush1.bf16.msra.mxu0 0
  %1078 = vmatprep.subr.bf16.mxu0 0
  %1079 = vmatpush1.bf16.msra.mxu0 0
  %1080 = vmatprep.subr.bf16.mxu0 0
  %1081 = vmatpush1.bf16.msra.mxu0 0
  %1082 = vmatprep.subr.bf16.mxu0 0
  %1083 = vmatpush1.bf16.msra.mxu0 0
  %1084 = vmatprep.subr.bf16.mxu0 0
  %1085 = vmatpush1.bf16.msra.mxu0 0
  %1086 = vmatprep.subr.bf16.mxu0 0
  %1087 = vmatpush1.bf16.msra.mxu0 0
  %1088 = vmatprep.subr.bf16.mxu0 0
  %1089 = vmatpush1.bf16.msra.mxu0 0
  %1090 = vmatprep.subr.bf16.mxu0 0
  %1091 = vmatpush1.bf16.msra.mxu0 0
  %1092 = vmatprep.subr.bf16.mxu0 0
  %1093 = vmatpush1.bf16.msra.mxu0 0
  %1094 = vmatprep.subr.bf16.mxu0 0
  %1095 = vmatpush1.bf16.msra.mxu0 0
  %1096 = vmatprep.mubr.bf16.mxu0 0
  %1097 = vmatmul.mubr.bf16.gmra.mrb[0].mxu0 %v73
  %v1098 = vpop.f32.mrb[0].mxu0
  %v1099 = vadd.f32 %v1050, %v1098
  %v1100 = vpop.f32.mrb[0].mxu0
  %v1101 = vpop.f32.mrb[0].mxu0
  %v1102 = vadd.f32 %v1050, %v1101
  %v1103 = vpop.f32.mrb[0].mxu0
  %1104 = vmatprep.mubr.bf16.mxu0 0
  %1105 = vmatmul.mubr.bf16.gmra.mrb[0].mxu0 %v76
  %v1106 = vpop.f32.mrb[0].mxu0
  %v1107 = vadd.f32 %v1050, %v1106
  %v1108 = vpop.f32.mrb[0].mxu0
  %v1109 = vpop.f32.mrb[0].mxu0
  %v1110 = vadd.f32 %v1050, %v1109
  %v1111 = vpop.f32.mrb[0].mxu0
  %1112 = vdwg.mxu0
  %v1113 = vsel %vm71, %v1099, 0.0
  %1114 = vadd.xlane.f32.xlu0 %v1113
  %v1115 = vpop.xlane.xlu0 %1114
  %v1116 = vsel %vm71, %v1102, 0.0
  %1117 = vadd.xlane.f32.xlu0 %v1116
  %v1118 = vpop.xlane.xlu0 %1117
  %v1119 = vsel %vm71, %v1107, 0.0
  %1120 = vadd.xlane.f32.xlu0 %v1119
  %v1121 = vpop.xlane.xlu0 %1120
  %v1122 = vsel %vm71, %v1110, 0.0
  %1123 = vadd.xlane.f32.xlu0 %v1122
  %v1124 = vpop.xlane.xlu0 %1123
  %v1125 = vmul.f32 %v1115, %v139
  %v1126 = vmul.f32 %v1118, %v139
  %v1127 = vmul.f32 %v1121, %v139
  %v1128 = vmul.f32 %v1124, %v139
  %v1129 = vsub.f32 %v1099, %v1125
  %v1130 = vsub.f32 %v1102, %v1126
  %v1131 = vsub.f32 %v1107, %v1127
  %v1132 = vsub.f32 %v1110, %v1128
  %v1133 = vmul.f32 %v1129, %v1129
  %v1134 = vmul.f32 %v1130, %v1130
  %v1135 = vmul.f32 %v1131, %v1131
  %v1136 = vmul.f32 %v1132, %v1132
  %v1137 = vsel %vm71, %v1133, 0.0
  %1138 = vadd.xlane.f32.xlu0 %v1137
  %v1139 = vpop.xlane.xlu0 %1138
  %v1140 = vsel %vm71, %v1134, 0.0
  %1141 = vadd.xlane.f32.xlu0 %v1140
  %v1142 = vpop.xlane.xlu0 %1141
  %v1143 = vsel %vm71, %v1135, 0.0
  %1144 = vadd.xlane.f32.xlu0 %v1143
  %v1145 = vpop.xlane.xlu0 %1144
  %v1146 = vsel %vm71, %v1136, 0.0
  %1147 = vadd.xlane.f32.xlu0 %v1146
  %v1148 = vpop.xlane.xlu0 %1147
  %v1149 = vmul.f32 %v1139, %v139
  %v1150 = vmul.f32 %v1142, %v139
  %v1151 = vmul.f32 %v1145, %v139
  %v1152 = vmul.f32 %v1148, %v139
  %v1153 = vadd.f32 %v1149, 1e-05
  %v1154 = vadd.f32 %v1150, 1e-05
  %v1155 = vadd.f32 %v1151, 1e-05
  %v1156 = vadd.f32 %v1152, 1e-05
  %v1157 = vrsqrt.pop %v1153
  %v1158 = vrsqrt.pop %v1154
  %v1159 = vrsqrt.pop %v1155
  %v1160 = vrsqrt.pop %v1156
  %v1161 = vmul.f32 %v1129, %v1157
  %v1162 = vmul.f32 %v1130, %v1158
  %v1163 = vmul.f32 %v1131, %v1159
  %v1164 = vmul.f32 %v1132, %v1160
  %v1165 = vmul.f32 %v1161, %v184
  %v1166 = vmul.f32 %v1162, %v184
  %v1167 = vmul.f32 %v1163, %v184
  %v1168 = vmul.f32 %v1164, %v184
  %v1169 = vadd.f32 %v1165, %v194
  %v1170 = vadd.f32 %v1166, %v194
  %v1171 = vadd.f32 %v1167, %v194
  %v1172 = vadd.f32 %v1168, %v194
  %v1173 = vpack.c.bf16 %v1170, %v1169
  %v1174 = vpack.c.bf16 %v1172, %v1171
  %v1176 = vsel %vm71, %v1173, 0
  %v1179 = vsel %vm71, %v1174, 0
  %1181 = vmatprep.subr.bf16.mxu0 0
  %1182 = vmatpush1.bf16.msra.mxu0 %v216
  %1183 = vmatprep.subr.bf16.mxu0 0
  %1184 = vmatpush1.bf16.msra.mxu0 %v217
  %1185 = vmatprep.subr.bf16.mxu0 0
  %1186 = vmatpush1.bf16.msra.mxu0 0
  %1187 = vmatprep.subr.bf16.mxu0 0
  %1188 = vmatpush1.bf16.msra.mxu0 0
  %1189 = vmatprep.subr.bf16.mxu0 0
  %1190 = vmatpush1.bf16.msra.mxu0 0
  %1191 = vmatprep.subr.bf16.mxu0 0
  %1192 = vmatpush1.bf16.msra.mxu0 0
  %1193 = vmatprep.subr.bf16.mxu0 0
  %1194 = vmatpush1.bf16.msra.mxu0 0
  %1195 = vmatprep.subr.bf16.mxu0 0
  %1196 = vmatpush1.bf16.msra.mxu0 0
  %1197 = vmatprep.subr.bf16.mxu0 0
  %1198 = vmatpush1.bf16.msra.mxu0 0
  %1199 = vmatprep.subr.bf16.mxu0 0
  %1200 = vmatpush1.bf16.msra.mxu0 0
  %1201 = vmatprep.subr.bf16.mxu0 0
  %1202 = vmatpush1.bf16.msra.mxu0 0
  %1203 = vmatprep.subr.bf16.mxu0 0
  %1204 = vmatpush1.bf16.msra.mxu0 0
  %1205 = vmatprep.subr.bf16.mxu0 0
  %1206 = vmatpush1.bf16.msra.mxu0 0
  %1207 = vmatprep.subr.bf16.mxu0 0
  %1208 = vmatpush1.bf16.msra.mxu0 0
  %1209 = vmatprep.subr.bf16.mxu0 0
  %1210 = vmatpush1.bf16.msra.mxu0 0
  %1211 = vmatprep.subr.bf16.mxu0 0
  %1212 = vmatpush1.bf16.msra.mxu0 0
  %1213 = vmatprep.mubr.bf16.mxu0 0
  %1214 = vmatmul.mubr.bf16.gmra.mrb[0].mxu0 %v1176
  %v1215 = vpop.f32.mrb[0].mxu0
  %v1216 = vadd.f32 %v206, %v1215
  %v1217 = vpop.f32.mrb[0].mxu0
  %v1218 = vpop.f32.mrb[0].mxu0
  %v1219 = vadd.f32 %v206, %v1218
  %v1220 = vpop.f32.mrb[0].mxu0
  %1221 = vmatprep.mubr.bf16.mxu0 0
  %1222 = vmatmul.mubr.bf16.gmra.mrb[0].mxu0 %v1179
  %v1223 = vpop.f32.mrb[0].mxu0
  %v1224 = vadd.f32 %v206, %v1223
  %v1225 = vpop.f32.mrb[0].mxu0
  %v1226 = vpop.f32.mrb[0].mxu0
  %v1227 = vadd.f32 %v206, %v1226
  %v1228 = vpop.f32.mrb[0].mxu0
  %1229 = vdwg.mxu0
  %s1230 = scalar_lea.vmem %s1, 96
  %v1231 = vld [vmem:[%s1230] sm:$0xf]
  %v1232 = vld [vmem:[%s1230 + $0x4] sm:$0xf]
  %v1233 = vld [vmem:[%s1230 + $0x8] sm:$0xf]
  %v1234 = vld [vmem:[%s1230 + $0xc] sm:$0xf]
  %s1235 = scalar_lea.vmem %s2, 6
  %v1236 = vld [vmem:[%s1235] sm:$0x1]
  %v1238 = vlaneseq
  %v1239 = vshrl.u32 %v1238, 7
  %v1240 = vsub.s32 0, %v1239
  %v1241 = vrot.slane %v1236, %v1240
  %v1247 = vunpack.c.l.b16 %v1231
  %v1248 = vunpack.c.l.b16 %v1232
  %v1249 = vunpack.c.l.b16 %v1233
  %v1250 = vunpack.c.l.b16 %v1234
  %v1251 = vpack.c.b16 %v1248, %v1247
  %v1252 = vpack.c.b16 %v1250, %v1249
  %1255 = vmatprep.subr.bf16.mxu0 0
  %1256 = vmatpush1.bf16.msra.mxu0 %v1251
  %1257 = vmatprep.subr.bf16.mxu0 0
  %1258 = vmatpush1.bf16.msra.mxu0 %v1252
  %1259 = vmatprep.subr.bf16.mxu0 0
  %1260 = vmatpush1.bf16.msra.mxu0 0
  %1261 = vmatprep.subr.bf16.mxu0 0
  %1262 = vmatpush1.bf16.msra.mxu0 0
  %1263 = vmatprep.subr.bf16.mxu0 0
  %1264 = vmatpush1.bf16.msra.mxu0 0
  %1265 = vmatprep.subr.bf16.mxu0 0
  %1266 = vmatpush1.bf16.msra.mxu0 0
  %1267 = vmatprep.subr.bf16.mxu0 0
  %1268 = vmatpush1.bf16.msra.mxu0 0
  %1269 = vmatprep.subr.bf16.mxu0 0
  %1270 = vmatpush1.bf16.msra.mxu0 0
  %1271 = vmatprep.subr.bf16.mxu0 0
  %1272 = vmatpush1.bf16.msra.mxu0 0
  %1273 = vmatprep.subr.bf16.mxu0 0
  %1274 = vmatpush1.bf16.msra.mxu0 0
  %1275 = vmatprep.subr.bf16.mxu0 0
  %1276 = vmatpush1.bf16.msra.mxu0 0
  %1277 = vmatprep.subr.bf16.mxu0 0
  %1278 = vmatpush1.bf16.msra.mxu0 0
  %1279 = vmatprep.subr.bf16.mxu0 0
  %1280 = vmatpush1.bf16.msra.mxu0 0
  %1281 = vmatprep.subr.bf16.mxu0 0
  %1282 = vmatpush1.bf16.msra.mxu0 0
  %1283 = vmatprep.subr.bf16.mxu0 0
  %1284 = vmatpush1.bf16.msra.mxu0 0
  %1285 = vmatprep.subr.bf16.mxu0 0
  %1286 = vmatpush1.bf16.msra.mxu0 0
  %1287 = vmatprep.mubr.bf16.mxu0 0
  %1288 = vmatmul.mubr.bf16.gmra.mrb[0].mxu0 %v73
  %v1289 = vpop.f32.mrb[0].mxu0
  %v1290 = vadd.f32 %v1241, %v1289
  %v1291 = vpop.f32.mrb[0].mxu0
  %v1292 = vpop.f32.mrb[0].mxu0
  %v1293 = vadd.f32 %v1241, %v1292
  %v1294 = vpop.f32.mrb[0].mxu0
  %1295 = vmatprep.mubr.bf16.mxu0 0
  %1296 = vmatmul.mubr.bf16.gmra.mrb[0].mxu0 %v76
  %v1297 = vpop.f32.mrb[0].mxu0
  %v1298 = vadd.f32 %v1241, %v1297
  %v1299 = vpop.f32.mrb[0].mxu0
  %v1300 = vpop.f32.mrb[0].mxu0
  %v1301 = vadd.f32 %v1241, %v1300
  %v1302 = vpop.f32.mrb[0].mxu0
  %1303 = vdwg.mxu0
  %v1304 = vsel %vm71, %v1290, 0.0
  %1305 = vadd.xlane.f32.xlu0 %v1304
  %v1306 = vpop.xlane.xlu0 %1305
  %v1307 = vsel %vm71, %v1293, 0.0
  %1308 = vadd.xlane.f32.xlu0 %v1307
  %v1309 = vpop.xlane.xlu0 %1308
  %v1310 = vsel %vm71, %v1298, 0.0
  %1311 = vadd.xlane.f32.xlu0 %v1310
  %v1312 = vpop.xlane.xlu0 %1311
  %v1313 = vsel %vm71, %v1301, 0.0
  %1314 = vadd.xlane.f32.xlu0 %v1313
  %v1315 = vpop.xlane.xlu0 %1314
  %v1316 = vmul.f32 %v1306, %v139
  %v1317 = vmul.f32 %v1309, %v139
  %v1318 = vmul.f32 %v1312, %v139
  %v1319 = vmul.f32 %v1315, %v139
  %v1320 = vsub.f32 %v1290, %v1316
  %v1321 = vsub.f32 %v1293, %v1317
  %v1322 = vsub.f32 %v1298, %v1318
  %v1323 = vsub.f32 %v1301, %v1319
  %v1324 = vmul.f32 %v1320, %v1320
  %v1325 = vmul.f32 %v1321, %v1321
  %v1326 = vmul.f32 %v1322, %v1322
  %v1327 = vmul.f32 %v1323, %v1323
  %v1328 = vsel %vm71, %v1324, 0.0
  %1329 = vadd.xlane.f32.xlu0 %v1328
  %v1330 = vpop.xlane.xlu0 %1329
  %v1331 = vsel %vm71, %v1325, 0.0
  %1332 = vadd.xlane.f32.xlu0 %v1331
  %v1333 = vpop.xlane.xlu0 %1332
  %v1334 = vsel %vm71, %v1326, 0.0
  %1335 = vadd.xlane.f32.xlu0 %v1334
  %v1336 = vpop.xlane.xlu0 %1335
  %v1337 = vsel %vm71, %v1327, 0.0
  %1338 = vadd.xlane.f32.xlu0 %v1337
  %v1339 = vpop.xlane.xlu0 %1338
  %v1340 = vmul.f32 %v1330, %v139
  %v1341 = vmul.f32 %v1333, %v139
  %v1342 = vmul.f32 %v1336, %v139
  %v1343 = vmul.f32 %v1339, %v139
  %v1344 = vadd.f32 %v1340, 1e-05
  %v1345 = vadd.f32 %v1341, 1e-05
  %v1346 = vadd.f32 %v1342, 1e-05
  %v1347 = vadd.f32 %v1343, 1e-05
  %v1348 = vrsqrt.pop %v1344
  %v1349 = vrsqrt.pop %v1345
  %v1350 = vrsqrt.pop %v1346
  %v1351 = vrsqrt.pop %v1347
  %v1352 = vmul.f32 %v1320, %v1348
  %v1353 = vmul.f32 %v1321, %v1349
  %v1354 = vmul.f32 %v1322, %v1350
  %v1355 = vmul.f32 %v1323, %v1351
  %v1356 = vmul.f32 %v1352, %v184
  %v1357 = vmul.f32 %v1353, %v184
  %v1358 = vmul.f32 %v1354, %v184
  %v1359 = vmul.f32 %v1355, %v184
  %v1360 = vadd.f32 %v1356, %v194
  %v1361 = vadd.f32 %v1357, %v194
  %v1362 = vadd.f32 %v1358, %v194
  %v1363 = vadd.f32 %v1359, %v194
  %v1364 = vpack.c.bf16 %v1361, %v1360
  %v1365 = vpack.c.bf16 %v1363, %v1362
  %v1367 = vsel %vm71, %v1364, 0
  %v1370 = vsel %vm71, %v1365, 0
  %1372 = vmatprep.subr.bf16.mxu0 0
  %1373 = vmatpush1.bf16.msra.mxu0 %v216
  %1374 = vmatprep.subr.bf16.mxu0 0
  %1375 = vmatpush1.bf16.msra.mxu0 %v217
  %1376 = vmatprep.subr.bf16.mxu0 0
  %1377 = vmatpush1.bf16.msra.mxu0 0
  %1378 = vmatprep.subr.bf16.mxu0 0
  %1379 = vmatpush1.bf16.msra.mxu0 0
  %1380 = vmatprep.subr.bf16.mxu0 0
  %1381 = vmatpush1.bf16.msra.mxu0 0
  %1382 = vmatprep.subr.bf16.mxu0 0
  %1383 = vmatpush1.bf16.msra.mxu0 0
  %1384 = vmatprep.subr.bf16.mxu0 0
  %1385 = vmatpush1.bf16.msra.mxu0 0
  %1386 = vmatprep.subr.bf16.mxu0 0
  %1387 = vmatpush1.bf16.msra.mxu0 0
  %1388 = vmatprep.subr.bf16.mxu0 0
  %1389 = vmatpush1.bf16.msra.mxu0 0
  %1390 = vmatprep.subr.bf16.mxu0 0
  %1391 = vmatpush1.bf16.msra.mxu0 0
  %1392 = vmatprep.subr.bf16.mxu0 0
  %1393 = vmatpush1.bf16.msra.mxu0 0
  %1394 = vmatprep.subr.bf16.mxu0 0
  %1395 = vmatpush1.bf16.msra.mxu0 0
  %1396 = vmatprep.subr.bf16.mxu0 0
  %1397 = vmatpush1.bf16.msra.mxu0 0
  %1398 = vmatprep.subr.bf16.mxu0 0
  %1399 = vmatpush1.bf16.msra.mxu0 0
  %1400 = vmatprep.subr.bf16.mxu0 0
  %1401 = vmatpush1.bf16.msra.mxu0 0
  %1402 = vmatprep.subr.bf16.mxu0 0
  %1403 = vmatpush1.bf16.msra.mxu0 0
  %1404 = vmatprep.mubr.bf16.mxu0 0
  %1405 = vmatmul.mubr.bf16.gmra.mrb[0].mxu0 %v1367
  %v1406 = vpop.f32.mrb[0].mxu0
  %v1407 = vadd.f32 %v206, %v1406
  %v1408 = vpop.f32.mrb[0].mxu0
  %v1409 = vpop.f32.mrb[0].mxu0
  %v1410 = vadd.f32 %v206, %v1409
  %v1411 = vpop.f32.mrb[0].mxu0
  %1412 = vmatprep.mubr.bf16.mxu0 0
  %1413 = vmatmul.mubr.bf16.gmra.mrb[0].mxu0 %v1370
  %v1414 = vpop.f32.mrb[0].mxu0
  %v1415 = vadd.f32 %v206, %v1414
  %v1416 = vpop.f32.mrb[0].mxu0
  %v1417 = vpop.f32.mrb[0].mxu0
  %v1418 = vadd.f32 %v206, %v1417
  %v1419 = vpop.f32.mrb[0].mxu0
  %1420 = vdwg.mxu0
  %s1421 = scalar_lea.vmem %s1, 112
  %v1422 = vld [vmem:[%s1421] sm:$0xf]
  %v1423 = vld [vmem:[%s1421 + $0x4] sm:$0xf]
  %v1424 = vld [vmem:[%s1421 + $0x8] sm:$0xf]
  %v1425 = vld [vmem:[%s1421 + $0xc] sm:$0xf]
  %s1426 = scalar_lea.vmem %s2, 7
  %v1427 = vld [vmem:[%s1426] sm:$0x1]
  %v1429 = vlaneseq
  %v1430 = vshrl.u32 %v1429, 7
  %v1431 = vsub.s32 0, %v1430
  %v1432 = vrot.slane %v1427, %v1431
  %v1438 = vunpack.c.l.b16 %v1422
  %v1439 = vunpack.c.l.b16 %v1423
  %v1440 = vunpack.c.l.b16 %v1424
  %v1441 = vunpack.c.l.b16 %v1425
  %v1442 = vpack.c.b16 %v1439, %v1438
  %v1443 = vpack.c.b16 %v1441, %v1440
  %1446 = vmatprep.subr.bf16.mxu0 0
  %1447 = vmatpush1.bf16.msra.mxu0 %v1442
  %1448 = vmatprep.subr.bf16.mxu0 0
  %1449 = vmatpush1.bf16.msra.mxu0 %v1443
  %1450 = vmatprep.subr.bf16.mxu0 0
  %1451 = vmatpush1.bf16.msra.mxu0 0
  %1452 = vmatprep.subr.bf16.mxu0 0
  %1453 = vmatpush1.bf16.msra.mxu0 0
  %1454 = vmatprep.subr.bf16.mxu0 0
  %1455 = vmatpush1.bf16.msra.mxu0 0
  %1456 = vmatprep.subr.bf16.mxu0 0
  %1457 = vmatpush1.bf16.msra.mxu0 0
  %1458 = vmatprep.subr.bf16.mxu0 0
  %1459 = vmatpush1.bf16.msra.mxu0 0
  %1460 = vmatprep.subr.bf16.mxu0 0
  %1461 = vmatpush1.bf16.msra.mxu0 0
  %1462 = vmatprep.subr.bf16.mxu0 0
  %1463 = vmatpush1.bf16.msra.mxu0 0
  %1464 = vmatprep.subr.bf16.mxu0 0
  %1465 = vmatpush1.bf16.msra.mxu0 0
  %1466 = vmatprep.subr.bf16.mxu0 0
  %1467 = vmatpush1.bf16.msra.mxu0 0
  %1468 = vmatprep.subr.bf16.mxu0 0
  %1469 = vmatpush1.bf16.msra.mxu0 0
  %1470 = vmatprep.subr.bf16.mxu0 0
  %1471 = vmatpush1.bf16.msra.mxu0 0
  %1472 = vmatprep.subr.bf16.mxu0 0
  %1473 = vmatpush1.bf16.msra.mxu0 0
  %1474 = vmatprep.subr.bf16.mxu0 0
  %1475 = vmatpush1.bf16.msra.mxu0 0
  %1476 = vmatprep.subr.bf16.mxu0 0
  %1477 = vmatpush1.bf16.msra.mxu0 0
  %1478 = vmatprep.mubr.bf16.mxu0 0
  %1479 = vmatmul.mubr.bf16.gmra.mrb[0].mxu0 %v73
  %v1480 = vpop.f32.mrb[0].mxu0
  %v1481 = vadd.f32 %v1432, %v1480
  %v1482 = vpop.f32.mrb[0].mxu0
  %v1483 = vpop.f32.mrb[0].mxu0
  %v1484 = vadd.f32 %v1432, %v1483
  %v1485 = vpop.f32.mrb[0].mxu0
  %1486 = vmatprep.mubr.bf16.mxu0 0
  %1487 = vmatmul.mubr.bf16.gmra.mrb[0].mxu0 %v76
  %v1488 = vpop.f32.mrb[0].mxu0
  %v1489 = vadd.f32 %v1432, %v1488
  %v1490 = vpop.f32.mrb[0].mxu0
  %v1491 = vpop.f32.mrb[0].mxu0
  %v1492 = vadd.f32 %v1432, %v1491
  %v1493 = vpop.f32.mrb[0].mxu0
  %1494 = vdwg.mxu0
  %v1495 = vsel %vm71, %v1481, 0.0
  %1496 = vadd.xlane.f32.xlu0 %v1495
  %v1497 = vpop.xlane.xlu0 %1496
  %v1498 = vsel %vm71, %v1484, 0.0
  %1499 = vadd.xlane.f32.xlu0 %v1498
  %v1500 = vpop.xlane.xlu0 %1499
  %v1501 = vsel %vm71, %v1489, 0.0
  %1502 = vadd.xlane.f32.xlu0 %v1501
  %v1503 = vpop.xlane.xlu0 %1502
  %v1504 = vsel %vm71, %v1492, 0.0
  %1505 = vadd.xlane.f32.xlu0 %v1504
  %v1506 = vpop.xlane.xlu0 %1505
  %v1507 = vmul.f32 %v1497, %v139
  %v1508 = vmul.f32 %v1500, %v139
  %v1509 = vmul.f32 %v1503, %v139
  %v1510 = vmul.f32 %v1506, %v139
  %v1511 = vsub.f32 %v1481, %v1507
  %v1512 = vsub.f32 %v1484, %v1508
  %v1513 = vsub.f32 %v1489, %v1509
  %v1514 = vsub.f32 %v1492, %v1510
  %v1515 = vmul.f32 %v1511, %v1511
  %v1516 = vmul.f32 %v1512, %v1512
  %v1517 = vmul.f32 %v1513, %v1513
  %v1518 = vmul.f32 %v1514, %v1514
  %v1519 = vsel %vm71, %v1515, 0.0
  %1520 = vadd.xlane.f32.xlu0 %v1519
  %v1521 = vpop.xlane.xlu0 %1520
  %v1522 = vsel %vm71, %v1516, 0.0
  %1523 = vadd.xlane.f32.xlu0 %v1522
  %v1524 = vpop.xlane.xlu0 %1523
  %v1525 = vsel %vm71, %v1517, 0.0
  %1526 = vadd.xlane.f32.xlu0 %v1525
  %v1527 = vpop.xlane.xlu0 %1526
  %v1528 = vsel %vm71, %v1518, 0.0
  %1529 = vadd.xlane.f32.xlu0 %v1528
  %v1530 = vpop.xlane.xlu0 %1529
  %v1531 = vmul.f32 %v1521, %v139
  %v1532 = vmul.f32 %v1524, %v139
  %v1533 = vmul.f32 %v1527, %v139
  %v1534 = vmul.f32 %v1530, %v139
  %v1535 = vadd.f32 %v1531, 1e-05
  %v1536 = vadd.f32 %v1532, 1e-05
  %v1537 = vadd.f32 %v1533, 1e-05
  %v1538 = vadd.f32 %v1534, 1e-05
  %v1539 = vrsqrt.pop %v1535
  %v1540 = vrsqrt.pop %v1536
  %v1541 = vrsqrt.pop %v1537
  %v1542 = vrsqrt.pop %v1538
  %v1543 = vmul.f32 %v1511, %v1539
  %v1544 = vmul.f32 %v1512, %v1540
  %v1545 = vmul.f32 %v1513, %v1541
  %v1546 = vmul.f32 %v1514, %v1542
  %v1547 = vmul.f32 %v1543, %v184
  %v1548 = vmul.f32 %v1544, %v184
  %v1549 = vmul.f32 %v1545, %v184
  %v1550 = vmul.f32 %v1546, %v184
  %v1551 = vadd.f32 %v1547, %v194
  %v1552 = vadd.f32 %v1548, %v194
  %v1553 = vadd.f32 %v1549, %v194
  %v1554 = vadd.f32 %v1550, %v194
  %v1555 = vpack.c.bf16 %v1552, %v1551
  %v1556 = vpack.c.bf16 %v1554, %v1553
  %v1558 = vsel %vm71, %v1555, 0
  %v1561 = vsel %vm71, %v1556, 0
  %1563 = vmatprep.subr.bf16.mxu0 0
  %1564 = vmatpush1.bf16.msra.mxu0 %v216
  %1565 = vmatprep.subr.bf16.mxu0 0
  %1566 = vmatpush1.bf16.msra.mxu0 %v217
  %1567 = vmatprep.subr.bf16.mxu0 0
  %1568 = vmatpush1.bf16.msra.mxu0 0
  %1569 = vmatprep.subr.bf16.mxu0 0
  %1570 = vmatpush1.bf16.msra.mxu0 0
  %1571 = vmatprep.subr.bf16.mxu0 0
  %1572 = vmatpush1.bf16.msra.mxu0 0
  %1573 = vmatprep.subr.bf16.mxu0 0
  %1574 = vmatpush1.bf16.msra.mxu0 0
  %1575 = vmatprep.subr.bf16.mxu0 0
  %1576 = vmatpush1.bf16.msra.mxu0 0
  %1577 = vmatprep.subr.bf16.mxu0 0
  %1578 = vmatpush1.bf16.msra.mxu0 0
  %1579 = vmatprep.subr.bf16.mxu0 0
  %1580 = vmatpush1.bf16.msra.mxu0 0
  %1581 = vmatprep.subr.bf16.mxu0 0
  %1582 = vmatpush1.bf16.msra.mxu0 0
  %1583 = vmatprep.subr.bf16.mxu0 0
  %1584 = vmatpush1.bf16.msra.mxu0 0
  %1585 = vmatprep.subr.bf16.mxu0 0
  %1586 = vmatpush1.bf16.msra.mxu0 0
  %1587 = vmatprep.subr.bf16.mxu0 0
  %1588 = vmatpush1.bf16.msra.mxu0 0
  %1589 = vmatprep.subr.bf16.mxu0 0
  %1590 = vmatpush1.bf16.msra.mxu0 0
  %1591 = vmatprep.subr.bf16.mxu0 0
  %1592 = vmatpush1.bf16.msra.mxu0 0
  %1593 = vmatprep.subr.bf16.mxu0 0
  %1594 = vmatpush1.bf16.msra.mxu0 0
  %1595 = vmatprep.mubr.bf16.mxu0 0
  %1596 = vmatmul.mubr.bf16.gmra.mrb[0].mxu0 %v1558
  %v1597 = vpop.f32.mrb[0].mxu0
  %v1598 = vadd.f32 %v206, %v1597
  %v1599 = vpop.f32.mrb[0].mxu0
  %v1600 = vpop.f32.mrb[0].mxu0
  %v1601 = vadd.f32 %v206, %v1600
  %v1602 = vpop.f32.mrb[0].mxu0
  %1603 = vmatprep.mubr.bf16.mxu0 0
  %1604 = vmatmul.mubr.bf16.gmra.mrb[0].mxu0 %v1561
  %v1605 = vpop.f32.mrb[0].mxu0
  %v1606 = vadd.f32 %v206, %v1605
  %v1607 = vpop.f32.mrb[0].mxu0
  %v1608 = vpop.f32.mrb[0].mxu0
  %v1609 = vadd.f32 %v206, %v1608
  %v1610 = vpop.f32.mrb[0].mxu0
  %1611 = vdwg.mxu0
  %s1612 = scalar_lea.vmem %s1, 128
  %v1613 = vld [vmem:[%s1612] sm:$0xf]
  %v1614 = vld [vmem:[%s1612 + $0x4] sm:$0xf]
  %v1615 = vld [vmem:[%s1612 + $0x8] sm:$0xf]
  %v1616 = vld [vmem:[%s1612 + $0xc] sm:$0xf]
  %s1617 = scalar_lea.vmem %s2, 8
  %v1618 = vld [vmem:[%s1617] sm:$0x1]
  %v1620 = vlaneseq
  %v1621 = vshrl.u32 %v1620, 7
  %v1622 = vsub.s32 0, %v1621
  %v1623 = vrot.slane %v1618, %v1622
  %v1629 = vunpack.c.l.b16 %v1613
  %v1630 = vunpack.c.l.b16 %v1614
  %v1631 = vunpack.c.l.b16 %v1615
  %v1632 = vunpack.c.l.b16 %v1616
  %v1633 = vpack.c.b16 %v1630, %v1629
  %v1634 = vpack.c.b16 %v1632, %v1631
  %1637 = vmatprep.subr.bf16.mxu0 0
  %1638 = vmatpush1.bf16.msra.mxu0 %v1633
  %1639 = vmatprep.subr.bf16.mxu0 0
  %1640 = vmatpush1.bf16.msra.mxu0 %v1634
  %1641 = vmatprep.subr.bf16.mxu0 0
  %1642 = vmatpush1.bf16.msra.mxu0 0
  %1643 = vmatprep.subr.bf16.mxu0 0
  %1644 = vmatpush1.bf16.msra.mxu0 0
  %1645 = vmatprep.subr.bf16.mxu0 0
  %1646 = vmatpush1.bf16.msra.mxu0 0
  %1647 = vmatprep.subr.bf16.mxu0 0
  %1648 = vmatpush1.bf16.msra.mxu0 0
  %1649 = vmatprep.subr.bf16.mxu0 0
  %1650 = vmatpush1.bf16.msra.mxu0 0
  %1651 = vmatprep.subr.bf16.mxu0 0
  %1652 = vmatpush1.bf16.msra.mxu0 0
  %1653 = vmatprep.subr.bf16.mxu0 0
  %1654 = vmatpush1.bf16.msra.mxu0 0
  %1655 = vmatprep.subr.bf16.mxu0 0
  %1656 = vmatpush1.bf16.msra.mxu0 0
  %1657 = vmatprep.subr.bf16.mxu0 0
  %1658 = vmatpush1.bf16.msra.mxu0 0
  %1659 = vmatprep.subr.bf16.mxu0 0
  %1660 = vmatpush1.bf16.msra.mxu0 0
  %1661 = vmatprep.subr.bf16.mxu0 0
  %1662 = vmatpush1.bf16.msra.mxu0 0
  %1663 = vmatprep.subr.bf16.mxu0 0
  %1664 = vmatpush1.bf16.msra.mxu0 0
  %1665 = vmatprep.subr.bf16.mxu0 0
  %1666 = vmatpush1.bf16.msra.mxu0 0
  %1667 = vmatprep.subr.bf16.mxu0 0
  %1668 = vmatpush1.bf16.msra.mxu0 0
  %1669 = vmatprep.mubr.bf16.mxu0 0
  %1670 = vmatmul.mubr.bf16.gmra.mrb[0].mxu0 %v73
  %v1671 = vpop.f32.mrb[0].mxu0
  %v1672 = vadd.f32 %v1623, %v1671
  %v1673 = vpop.f32.mrb[0].mxu0
  %v1674 = vpop.f32.mrb[0].mxu0
  %v1675 = vadd.f32 %v1623, %v1674
  %v1676 = vpop.f32.mrb[0].mxu0
  %1677 = vmatprep.mubr.bf16.mxu0 0
  %1678 = vmatmul.mubr.bf16.gmra.mrb[0].mxu0 %v76
  %v1679 = vpop.f32.mrb[0].mxu0
  %v1680 = vadd.f32 %v1623, %v1679
  %v1681 = vpop.f32.mrb[0].mxu0
  %v1682 = vpop.f32.mrb[0].mxu0
  %v1683 = vadd.f32 %v1623, %v1682
  %v1684 = vpop.f32.mrb[0].mxu0
  %1685 = vdwg.mxu0
  %v1686 = vsel %vm71, %v1672, 0.0
  %1687 = vadd.xlane.f32.xlu0 %v1686
  %v1688 = vpop.xlane.xlu0 %1687
  %v1689 = vsel %vm71, %v1675, 0.0
  %1690 = vadd.xlane.f32.xlu0 %v1689
  %v1691 = vpop.xlane.xlu0 %1690
  %v1692 = vsel %vm71, %v1680, 0.0
  %1693 = vadd.xlane.f32.xlu0 %v1692
  %v1694 = vpop.xlane.xlu0 %1693
  %v1695 = vsel %vm71, %v1683, 0.0
  %1696 = vadd.xlane.f32.xlu0 %v1695
  %v1697 = vpop.xlane.xlu0 %1696
  %v1698 = vmul.f32 %v1688, %v139
  %v1699 = vmul.f32 %v1691, %v139
  %v1700 = vmul.f32 %v1694, %v139
  %v1701 = vmul.f32 %v1697, %v139
  %v1702 = vsub.f32 %v1672, %v1698
  %v1703 = vsub.f32 %v1675, %v1699
  %v1704 = vsub.f32 %v1680, %v1700
  %v1705 = vsub.f32 %v1683, %v1701
  %v1706 = vmul.f32 %v1702, %v1702
  %v1707 = vmul.f32 %v1703, %v1703
  %v1708 = vmul.f32 %v1704, %v1704
  %v1709 = vmul.f32 %v1705, %v1705
  %v1710 = vsel %vm71, %v1706, 0.0
  %1711 = vadd.xlane.f32.xlu0 %v1710
  %v1712 = vpop.xlane.xlu0 %1711
  %v1713 = vsel %vm71, %v1707, 0.0
  %1714 = vadd.xlane.f32.xlu0 %v1713
  %v1715 = vpop.xlane.xlu0 %1714
  %v1716 = vsel %vm71, %v1708, 0.0
  %1717 = vadd.xlane.f32.xlu0 %v1716
  %v1718 = vpop.xlane.xlu0 %1717
  %v1719 = vsel %vm71, %v1709, 0.0
  %1720 = vadd.xlane.f32.xlu0 %v1719
  %v1721 = vpop.xlane.xlu0 %1720
  %v1722 = vmul.f32 %v1712, %v139
  %v1723 = vmul.f32 %v1715, %v139
  %v1724 = vmul.f32 %v1718, %v139
  %v1725 = vmul.f32 %v1721, %v139
  %v1726 = vadd.f32 %v1722, 1e-05
  %v1727 = vadd.f32 %v1723, 1e-05
  %v1728 = vadd.f32 %v1724, 1e-05
  %v1729 = vadd.f32 %v1725, 1e-05
  %v1730 = vrsqrt.pop %v1726
  %v1731 = vrsqrt.pop %v1727
  %v1732 = vrsqrt.pop %v1728
  %v1733 = vrsqrt.pop %v1729
  %v1734 = vmul.f32 %v1702, %v1730
  %v1735 = vmul.f32 %v1703, %v1731
  %v1736 = vmul.f32 %v1704, %v1732
  %v1737 = vmul.f32 %v1705, %v1733
  %v1738 = vmul.f32 %v1734, %v184
  %v1739 = vmul.f32 %v1735, %v184
  %v1740 = vmul.f32 %v1736, %v184
  %v1741 = vmul.f32 %v1737, %v184
  %v1742 = vadd.f32 %v1738, %v194
  %v1743 = vadd.f32 %v1739, %v194
  %v1744 = vadd.f32 %v1740, %v194
  %v1745 = vadd.f32 %v1741, %v194
  %v1746 = vpack.c.bf16 %v1743, %v1742
  %v1747 = vpack.c.bf16 %v1745, %v1744
  %v1749 = vsel %vm71, %v1746, 0
  %v1752 = vsel %vm71, %v1747, 0
  %1754 = vmatprep.subr.bf16.mxu0 0
  %1755 = vmatpush1.bf16.msra.mxu0 %v216
  %1756 = vmatprep.subr.bf16.mxu0 0
  %1757 = vmatpush1.bf16.msra.mxu0 %v217
  %1758 = vmatprep.subr.bf16.mxu0 0
  %1759 = vmatpush1.bf16.msra.mxu0 0
  %1760 = vmatprep.subr.bf16.mxu0 0
  %1761 = vmatpush1.bf16.msra.mxu0 0
  %1762 = vmatprep.subr.bf16.mxu0 0
  %1763 = vmatpush1.bf16.msra.mxu0 0
  %1764 = vmatprep.subr.bf16.mxu0 0
  %1765 = vmatpush1.bf16.msra.mxu0 0
  %1766 = vmatprep.subr.bf16.mxu0 0
  %1767 = vmatpush1.bf16.msra.mxu0 0
  %1768 = vmatprep.subr.bf16.mxu0 0
  %1769 = vmatpush1.bf16.msra.mxu0 0
  %1770 = vmatprep.subr.bf16.mxu0 0
  %1771 = vmatpush1.bf16.msra.mxu0 0
  %1772 = vmatprep.subr.bf16.mxu0 0
  %1773 = vmatpush1.bf16.msra.mxu0 0
  %1774 = vmatprep.subr.bf16.mxu0 0
  %1775 = vmatpush1.bf16.msra.mxu0 0
  %1776 = vmatprep.subr.bf16.mxu0 0
  %1777 = vmatpush1.bf16.msra.mxu0 0
  %1778 = vmatprep.subr.bf16.mxu0 0
  %1779 = vmatpush1.bf16.msra.mxu0 0
  %1780 = vmatprep.subr.bf16.mxu0 0
  %1781 = vmatpush1.bf16.msra.mxu0 0
  %1782 = vmatprep.subr.bf16.mxu0 0
  %1783 = vmatpush1.bf16.msra.mxu0 0
  %1784 = vmatprep.subr.bf16.mxu0 0
  %1785 = vmatpush1.bf16.msra.mxu0 0
  %1786 = vmatprep.mubr.bf16.mxu0 0
  %1787 = vmatmul.mubr.bf16.gmra.mrb[0].mxu0 %v1749
  %v1788 = vpop.f32.mrb[0].mxu0
  %v1789 = vadd.f32 %v206, %v1788
  %v1790 = vpop.f32.mrb[0].mxu0
  %v1791 = vpop.f32.mrb[0].mxu0
  %v1792 = vadd.f32 %v206, %v1791
  %v1793 = vpop.f32.mrb[0].mxu0
  %1794 = vmatprep.mubr.bf16.mxu0 0
  %1795 = vmatmul.mubr.bf16.gmra.mrb[0].mxu0 %v1752
  %v1796 = vpop.f32.mrb[0].mxu0
  %v1797 = vadd.f32 %v206, %v1796
  %v1798 = vpop.f32.mrb[0].mxu0
  %v1799 = vpop.f32.mrb[0].mxu0
  %v1800 = vadd.f32 %v206, %v1799
  %v1801 = vpop.f32.mrb[0].mxu0
  %1802 = vdwg.mxu0
  %s1803 = scalar_lea.vmem %s1, 144
  %v1804 = vld [vmem:[%s1803] sm:$0xf]
  %v1805 = vld [vmem:[%s1803 + $0x4] sm:$0xf]
  %v1806 = vld [vmem:[%s1803 + $0x8] sm:$0xf]
  %v1807 = vld [vmem:[%s1803 + $0xc] sm:$0xf]
  %s1808 = scalar_lea.vmem %s2, 9
  %v1809 = vld [vmem:[%s1808] sm:$0x1]
  %v1811 = vlaneseq
  %v1812 = vshrl.u32 %v1811, 7
  %v1813 = vsub.s32 0, %v1812
  %v1814 = vrot.slane %v1809, %v1813
  %v1820 = vunpack.c.l.b16 %v1804
  %v1821 = vunpack.c.l.b16 %v1805
  %v1822 = vunpack.c.l.b16 %v1806
  %v1823 = vunpack.c.l.b16 %v1807
  %v1824 = vpack.c.b16 %v1821, %v1820
  %v1825 = vpack.c.b16 %v1823, %v1822
  %1828 = vmatprep.subr.bf16.mxu0 0
  %1829 = vmatpush1.bf16.msra.mxu0 %v1824
  %1830 = vmatprep.subr.bf16.mxu0 0
  %1831 = vmatpush1.bf16.msra.mxu0 %v1825
  %1832 = vmatprep.subr.bf16.mxu0 0
  %1833 = vmatpush1.bf16.msra.mxu0 0
  %1834 = vmatprep.subr.bf16.mxu0 0
  %1835 = vmatpush1.bf16.msra.mxu0 0
  %1836 = vmatprep.subr.bf16.mxu0 0
  %1837 = vmatpush1.bf16.msra.mxu0 0
  %1838 = vmatprep.subr.bf16.mxu0 0
  %1839 = vmatpush1.bf16.msra.mxu0 0
  %1840 = vmatprep.subr.bf16.mxu0 0
  %1841 = vmatpush1.bf16.msra.mxu0 0
  %1842 = vmatprep.subr.bf16.mxu0 0
  %1843 = vmatpush1.bf16.msra.mxu0 0
  %1844 = vmatprep.subr.bf16.mxu0 0
  %1845 = vmatpush1.bf16.msra.mxu0 0
  %1846 = vmatprep.subr.bf16.mxu0 0
  %1847 = vmatpush1.bf16.msra.mxu0 0
  %1848 = vmatprep.subr.bf16.mxu0 0
  %1849 = vmatpush1.bf16.msra.mxu0 0
  %1850 = vmatprep.subr.bf16.mxu0 0
  %1851 = vmatpush1.bf16.msra.mxu0 0
  %1852 = vmatprep.subr.bf16.mxu0 0
  %1853 = vmatpush1.bf16.msra.mxu0 0
  %1854 = vmatprep.subr.bf16.mxu0 0
  %1855 = vmatpush1.bf16.msra.mxu0 0
  %1856 = vmatprep.subr.bf16.mxu0 0
  %1857 = vmatpush1.bf16.msra.mxu0 0
  %1858 = vmatprep.subr.bf16.mxu0 0
  %1859 = vmatpush1.bf16.msra.mxu0 0
  %1860 = vmatprep.mubr.bf16.mxu0 0
  %1861 = vmatmul.mubr.bf16.gmra.mrb[0].mxu0 %v73
  %v1862 = vpop.f32.mrb[0].mxu0
  %v1863 = vadd.f32 %v1814, %v1862
  %v1864 = vpop.f32.mrb[0].mxu0
  %v1865 = vpop.f32.mrb[0].mxu0
  %v1866 = vadd.f32 %v1814, %v1865
  %v1867 = vpop.f32.mrb[0].mxu0
  %1868 = vmatprep.mubr.bf16.mxu0 0
  %1869 = vmatmul.mubr.bf16.gmra.mrb[0].mxu0 %v76
  %v1870 = vpop.f32.mrb[0].mxu0
  %v1871 = vadd.f32 %v1814, %v1870
  %v1872 = vpop.f32.mrb[0].mxu0
  %v1873 = vpop.f32.mrb[0].mxu0
  %v1874 = vadd.f32 %v1814, %v1873
  %v1875 = vpop.f32.mrb[0].mxu0
  %1876 = vdwg.mxu0
  %v1877 = vsel %vm71, %v1863, 0.0
  %1878 = vadd.xlane.f32.xlu0 %v1877
  %v1879 = vpop.xlane.xlu0 %1878
  %v1880 = vsel %vm71, %v1866, 0.0
  %1881 = vadd.xlane.f32.xlu0 %v1880
  %v1882 = vpop.xlane.xlu0 %1881
  %v1883 = vsel %vm71, %v1871, 0.0
  %1884 = vadd.xlane.f32.xlu0 %v1883
  %v1885 = vpop.xlane.xlu0 %1884
  %v1886 = vsel %vm71, %v1874, 0.0
  %1887 = vadd.xlane.f32.xlu0 %v1886
  %v1888 = vpop.xlane.xlu0 %1887
  %v1889 = vmul.f32 %v1879, %v139
  %v1890 = vmul.f32 %v1882, %v139
  %v1891 = vmul.f32 %v1885, %v139
  %v1892 = vmul.f32 %v1888, %v139
  %v1893 = vsub.f32 %v1863, %v1889
  %v1894 = vsub.f32 %v1866, %v1890
  %v1895 = vsub.f32 %v1871, %v1891
  %v1896 = vsub.f32 %v1874, %v1892
  %v1897 = vmul.f32 %v1893, %v1893
  %v1898 = vmul.f32 %v1894, %v1894
  %v1899 = vmul.f32 %v1895, %v1895
  %v1900 = vmul.f32 %v1896, %v1896
  %v1901 = vsel %vm71, %v1897, 0.0
  %1902 = vadd.xlane.f32.xlu0 %v1901
  %v1903 = vpop.xlane.xlu0 %1902
  %v1904 = vsel %vm71, %v1898, 0.0
  %1905 = vadd.xlane.f32.xlu0 %v1904
  %v1906 = vpop.xlane.xlu0 %1905
  %v1907 = vsel %vm71, %v1899, 0.0
  %1908 = vadd.xlane.f32.xlu0 %v1907
  %v1909 = vpop.xlane.xlu0 %1908
  %v1910 = vsel %vm71, %v1900, 0.0
  %1911 = vadd.xlane.f32.xlu0 %v1910
  %v1912 = vpop.xlane.xlu0 %1911
  %v1913 = vmul.f32 %v1903, %v139
  %v1914 = vmul.f32 %v1906, %v139
  %v1915 = vmul.f32 %v1909, %v139
  %v1916 = vmul.f32 %v1912, %v139
  %v1917 = vadd.f32 %v1913, 1e-05
  %v1918 = vadd.f32 %v1914, 1e-05
  %v1919 = vadd.f32 %v1915, 1e-05
  %v1920 = vadd.f32 %v1916, 1e-05
  %v1921 = vrsqrt.pop %v1917
  %v1922 = vrsqrt.pop %v1918
  %v1923 = vrsqrt.pop %v1919
  %v1924 = vrsqrt.pop %v1920
  %v1925 = vmul.f32 %v1893, %v1921
  %v1926 = vmul.f32 %v1894, %v1922
  %v1927 = vmul.f32 %v1895, %v1923
  %v1928 = vmul.f32 %v1896, %v1924
  %v1929 = vmul.f32 %v1925, %v184
  %v1930 = vmul.f32 %v1926, %v184
  %v1931 = vmul.f32 %v1927, %v184
  %v1932 = vmul.f32 %v1928, %v184
  %v1933 = vadd.f32 %v1929, %v194
  %v1934 = vadd.f32 %v1930, %v194
  %v1935 = vadd.f32 %v1931, %v194
  %v1936 = vadd.f32 %v1932, %v194
  %v1937 = vpack.c.bf16 %v1934, %v1933
  %v1938 = vpack.c.bf16 %v1936, %v1935
  %v1940 = vsel %vm71, %v1937, 0
  %v1943 = vsel %vm71, %v1938, 0
  %1945 = vmatprep.subr.bf16.mxu0 0
  %1946 = vmatpush1.bf16.msra.mxu0 %v216
  %1947 = vmatprep.subr.bf16.mxu0 0
  %1948 = vmatpush1.bf16.msra.mxu0 %v217
  %1949 = vmatprep.subr.bf16.mxu0 0
  %1950 = vmatpush1.bf16.msra.mxu0 0
  %1951 = vmatprep.subr.bf16.mxu0 0
  %1952 = vmatpush1.bf16.msra.mxu0 0
  %1953 = vmatprep.subr.bf16.mxu0 0
  %1954 = vmatpush1.bf16.msra.mxu0 0
  %1955 = vmatprep.subr.bf16.mxu0 0
  %1956 = vmatpush1.bf16.msra.mxu0 0
  %1957 = vmatprep.subr.bf16.mxu0 0
  %1958 = vmatpush1.bf16.msra.mxu0 0
  %1959 = vmatprep.subr.bf16.mxu0 0
  %1960 = vmatpush1.bf16.msra.mxu0 0
  %1961 = vmatprep.subr.bf16.mxu0 0
  %1962 = vmatpush1.bf16.msra.mxu0 0
  %1963 = vmatprep.subr.bf16.mxu0 0
  %1964 = vmatpush1.bf16.msra.mxu0 0
  %1965 = vmatprep.subr.bf16.mxu0 0
  %1966 = vmatpush1.bf16.msra.mxu0 0
  %1967 = vmatprep.subr.bf16.mxu0 0
  %1968 = vmatpush1.bf16.msra.mxu0 0
  %1969 = vmatprep.subr.bf16.mxu0 0
  %1970 = vmatpush1.bf16.msra.mxu0 0
  %1971 = vmatprep.subr.bf16.mxu0 0
  %1972 = vmatpush1.bf16.msra.mxu0 0
  %1973 = vmatprep.subr.bf16.mxu0 0
  %1974 = vmatpush1.bf16.msra.mxu0 0
  %1975 = vmatprep.subr.bf16.mxu0 0
  %1976 = vmatpush1.bf16.msra.mxu0 0
  %1977 = vmatprep.mubr.bf16.mxu0 0
  %1978 = vmatmul.mubr.bf16.gmra.mrb[0].mxu0 %v1940
  %v1979 = vpop.f32.mrb[0].mxu0
  %v1980 = vadd.f32 %v206, %v1979
  %v1981 = vpop.f32.mrb[0].mxu0
  %v1982 = vpop.f32.mrb[0].mxu0
  %v1983 = vadd.f32 %v206, %v1982
  %v1984 = vpop.f32.mrb[0].mxu0
  %1985 = vmatprep.mubr.bf16.mxu0 0
  %1986 = vmatmul.mubr.bf16.gmra.mrb[0].mxu0 %v1943
  %v1987 = vpop.f32.mrb[0].mxu0
  %v1988 = vadd.f32 %v206, %v1987
  %v1989 = vpop.f32.mrb[0].mxu0
  %v1990 = vpop.f32.mrb[0].mxu0
  %v1991 = vadd.f32 %v206, %v1990
  %v1992 = vpop.f32.mrb[0].mxu0
  %1993 = vdwg.mxu0
  %s1994 = scalar_lea.vmem %s1, 160
  %v1995 = vld [vmem:[%s1994] sm:$0xf]
  %v1996 = vld [vmem:[%s1994 + $0x4] sm:$0xf]
  %v1997 = vld [vmem:[%s1994 + $0x8] sm:$0xf]
  %v1998 = vld [vmem:[%s1994 + $0xc] sm:$0xf]
  %s1999 = scalar_lea.vmem %s2, 10
  %v2000 = vld [vmem:[%s1999] sm:$0x1]
  %v2002 = vlaneseq
  %v2003 = vshrl.u32 %v2002, 7
  %v2004 = vsub.s32 0, %v2003
  %v2005 = vrot.slane %v2000, %v2004
  %v2011 = vunpack.c.l.b16 %v1995
  %v2012 = vunpack.c.l.b16 %v1996
  %v2013 = vunpack.c.l.b16 %v1997
  %v2014 = vunpack.c.l.b16 %v1998
  %v2015 = vpack.c.b16 %v2012, %v2011
  %v2016 = vpack.c.b16 %v2014, %v2013
  %2019 = vmatprep.subr.bf16.mxu0 0
  %2020 = vmatpush1.bf16.msra.mxu0 %v2015
  %2021 = vmatprep.subr.bf16.mxu0 0
  %2022 = vmatpush1.bf16.msra.mxu0 %v2016
  %2023 = vmatprep.subr.bf16.mxu0 0
  %2024 = vmatpush1.bf16.msra.mxu0 0
  %2025 = vmatprep.subr.bf16.mxu0 0
  %2026 = vmatpush1.bf16.msra.mxu0 0
  %2027 = vmatprep.subr.bf16.mxu0 0
  %2028 = vmatpush1.bf16.msra.mxu0 0
  %2029 = vmatprep.subr.bf16.mxu0 0
  %2030 = vmatpush1.bf16.msra.mxu0 0
  %2031 = vmatprep.subr.bf16.mxu0 0
  %2032 = vmatpush1.bf16.msra.mxu0 0
  %2033 = vmatprep.subr.bf16.mxu0 0
  %2034 = vmatpush1.bf16.msra.mxu0 0
  %2035 = vmatprep.subr.bf16.mxu0 0
  %2036 = vmatpush1.bf16.msra.mxu0 0
  %2037 = vmatprep.subr.bf16.mxu0 0
  %2038 = vmatpush1.bf16.msra.mxu0 0
  %2039 = vmatprep.subr.bf16.mxu0 0
  %2040 = vmatpush1.bf16.msra.mxu0 0
  %2041 = vmatprep.subr.bf16.mxu0 0
  %2042 = vmatpush1.bf16.msra.mxu0 0
  %2043 = vmatprep.subr.bf16.mxu0 0
  %2044 = vmatpush1.bf16.msra.mxu0 0
  %2045 = vmatprep.subr.bf16.mxu0 0
  %2046 = vmatpush1.bf16.msra.mxu0 0
  %2047 = vmatprep.subr.bf16.mxu0 0
  %2048 = vmatpush1.bf16.msra.mxu0 0
  %2049 = vmatprep.subr.bf16.mxu0 0
  %2050 = vmatpush1.bf16.msra.mxu0 0
  %2051 = vmatprep.mubr.bf16.mxu0 0
  %2052 = vmatmul.mubr.bf16.gmra.mrb[0].mxu0 %v73
  %v2053 = vpop.f32.mrb[0].mxu0
  %v2054 = vadd.f32 %v2005, %v2053
  %v2055 = vpop.f32.mrb[0].mxu0
  %v2056 = vpop.f32.mrb[0].mxu0
  %v2057 = vadd.f32 %v2005, %v2056
  %v2058 = vpop.f32.mrb[0].mxu0
  %2059 = vmatprep.mubr.bf16.mxu0 0
  %2060 = vmatmul.mubr.bf16.gmra.mrb[0].mxu0 %v76
  %v2061 = vpop.f32.mrb[0].mxu0
  %v2062 = vadd.f32 %v2005, %v2061
  %v2063 = vpop.f32.mrb[0].mxu0
  %v2064 = vpop.f32.mrb[0].mxu0
  %v2065 = vadd.f32 %v2005, %v2064
  %v2066 = vpop.f32.mrb[0].mxu0
  %2067 = vdwg.mxu0
  %v2068 = vsel %vm71, %v2054, 0.0
  %2069 = vadd.xlane.f32.xlu0 %v2068
  %v2070 = vpop.xlane.xlu0 %2069
  %v2071 = vsel %vm71, %v2057, 0.0
  %2072 = vadd.xlane.f32.xlu0 %v2071
  %v2073 = vpop.xlane.xlu0 %2072
  %v2074 = vsel %vm71, %v2062, 0.0
  %2075 = vadd.xlane.f32.xlu0 %v2074
  %v2076 = vpop.xlane.xlu0 %2075
  %v2077 = vsel %vm71, %v2065, 0.0
  %2078 = vadd.xlane.f32.xlu0 %v2077
  %v2079 = vpop.xlane.xlu0 %2078
  %v2080 = vmul.f32 %v2070, %v139
  %v2081 = vmul.f32 %v2073, %v139
  %v2082 = vmul.f32 %v2076, %v139
  %v2083 = vmul.f32 %v2079, %v139
  %v2084 = vsub.f32 %v2054, %v2080
  %v2085 = vsub.f32 %v2057, %v2081
  %v2086 = vsub.f32 %v2062, %v2082
  %v2087 = vsub.f32 %v2065, %v2083
  %v2088 = vmul.f32 %v2084, %v2084
  %v2089 = vmul.f32 %v2085, %v2085
  %v2090 = vmul.f32 %v2086, %v2086
  %v2091 = vmul.f32 %v2087, %v2087
  %v2092 = vsel %vm71, %v2088, 0.0
  %2093 = vadd.xlane.f32.xlu0 %v2092
  %v2094 = vpop.xlane.xlu0 %2093
  %v2095 = vsel %vm71, %v2089, 0.0
  %2096 = vadd.xlane.f32.xlu0 %v2095
  %v2097 = vpop.xlane.xlu0 %2096
  %v2098 = vsel %vm71, %v2090, 0.0
  %2099 = vadd.xlane.f32.xlu0 %v2098
  %v2100 = vpop.xlane.xlu0 %2099
  %v2101 = vsel %vm71, %v2091, 0.0
  %2102 = vadd.xlane.f32.xlu0 %v2101
  %v2103 = vpop.xlane.xlu0 %2102
  %v2104 = vmul.f32 %v2094, %v139
  %v2105 = vmul.f32 %v2097, %v139
  %v2106 = vmul.f32 %v2100, %v139
  %v2107 = vmul.f32 %v2103, %v139
  %v2108 = vadd.f32 %v2104, 1e-05
  %v2109 = vadd.f32 %v2105, 1e-05
  %v2110 = vadd.f32 %v2106, 1e-05
  %v2111 = vadd.f32 %v2107, 1e-05
  %v2112 = vrsqrt.pop %v2108
  %v2113 = vrsqrt.pop %v2109
  %v2114 = vrsqrt.pop %v2110
  %v2115 = vrsqrt.pop %v2111
  %v2116 = vmul.f32 %v2084, %v2112
  %v2117 = vmul.f32 %v2085, %v2113
  %v2118 = vmul.f32 %v2086, %v2114
  %v2119 = vmul.f32 %v2087, %v2115
  %v2120 = vmul.f32 %v2116, %v184
  %v2121 = vmul.f32 %v2117, %v184
  %v2122 = vmul.f32 %v2118, %v184
  %v2123 = vmul.f32 %v2119, %v184
  %v2124 = vadd.f32 %v2120, %v194
  %v2125 = vadd.f32 %v2121, %v194
  %v2126 = vadd.f32 %v2122, %v194
  %v2127 = vadd.f32 %v2123, %v194
  %v2128 = vpack.c.bf16 %v2125, %v2124
  %v2129 = vpack.c.bf16 %v2127, %v2126
  %v2131 = vsel %vm71, %v2128, 0
  %v2134 = vsel %vm71, %v2129, 0
  %2136 = vmatprep.subr.bf16.mxu0 0
  %2137 = vmatpush1.bf16.msra.mxu0 %v216
  %2138 = vmatprep.subr.bf16.mxu0 0
  %2139 = vmatpush1.bf16.msra.mxu0 %v217
  %2140 = vmatprep.subr.bf16.mxu0 0
  %2141 = vmatpush1.bf16.msra.mxu0 0
  %2142 = vmatprep.subr.bf16.mxu0 0
  %2143 = vmatpush1.bf16.msra.mxu0 0
  %2144 = vmatprep.subr.bf16.mxu0 0
  %2145 = vmatpush1.bf16.msra.mxu0 0
  %2146 = vmatprep.subr.bf16.mxu0 0
  %2147 = vmatpush1.bf16.msra.mxu0 0
  %2148 = vmatprep.subr.bf16.mxu0 0
  %2149 = vmatpush1.bf16.msra.mxu0 0
  %2150 = vmatprep.subr.bf16.mxu0 0
  %2151 = vmatpush1.bf16.msra.mxu0 0
  %2152 = vmatprep.subr.bf16.mxu0 0
  %2153 = vmatpush1.bf16.msra.mxu0 0
  %2154 = vmatprep.subr.bf16.mxu0 0
  %2155 = vmatpush1.bf16.msra.mxu0 0
  %2156 = vmatprep.subr.bf16.mxu0 0
  %2157 = vmatpush1.bf16.msra.mxu0 0
  %2158 = vmatprep.subr.bf16.mxu0 0
  %2159 = vmatpush1.bf16.msra.mxu0 0
  %2160 = vmatprep.subr.bf16.mxu0 0
  %2161 = vmatpush1.bf16.msra.mxu0 0
  %2162 = vmatprep.subr.bf16.mxu0 0
  %2163 = vmatpush1.bf16.msra.mxu0 0
  %2164 = vmatprep.subr.bf16.mxu0 0
  %2165 = vmatpush1.bf16.msra.mxu0 0
  %2166 = vmatprep.subr.bf16.mxu0 0
  %2167 = vmatpush1.bf16.msra.mxu0 0
  %2168 = vmatprep.mubr.bf16.mxu0 0
  %2169 = vmatmul.mubr.bf16.gmra.mrb[0].mxu0 %v2131
  %v2170 = vpop.f32.mrb[0].mxu0
  %v2171 = vadd.f32 %v206, %v2170
  %v2172 = vpop.f32.mrb[0].mxu0
  %v2173 = vpop.f32.mrb[0].mxu0
  %v2174 = vadd.f32 %v206, %v2173
  %v2175 = vpop.f32.mrb[0].mxu0
  %2176 = vmatprep.mubr.bf16.mxu0 0
  %2177 = vmatmul.mubr.bf16.gmra.mrb[0].mxu0 %v2134
  %v2178 = vpop.f32.mrb[0].mxu0
  %v2179 = vadd.f32 %v206, %v2178
  %v2180 = vpop.f32.mrb[0].mxu0
  %v2181 = vpop.f32.mrb[0].mxu0
  %v2182 = vadd.f32 %v206, %v2181
  %v2183 = vpop.f32.mrb[0].mxu0
  %2184 = vdwg.mxu0
  %s2185 = scalar_lea.vmem %s1, 176
  %v2186 = vld [vmem:[%s2185] sm:$0xf]
  %v2187 = vld [vmem:[%s2185 + $0x4] sm:$0xf]
  %v2188 = vld [vmem:[%s2185 + $0x8] sm:$0xf]
  %v2189 = vld [vmem:[%s2185 + $0xc] sm:$0xf]
  %s2190 = scalar_lea.vmem %s2, 11
  %v2191 = vld [vmem:[%s2190] sm:$0x1]
  %v2193 = vlaneseq
  %v2194 = vshrl.u32 %v2193, 7
  %v2195 = vsub.s32 0, %v2194
  %v2196 = vrot.slane %v2191, %v2195
  %v2202 = vunpack.c.l.b16 %v2186
  %v2203 = vunpack.c.l.b16 %v2187
  %v2204 = vunpack.c.l.b16 %v2188
  %v2205 = vunpack.c.l.b16 %v2189
  %v2206 = vpack.c.b16 %v2203, %v2202
  %v2207 = vpack.c.b16 %v2205, %v2204
  %2210 = vmatprep.subr.bf16.mxu0 0
  %2211 = vmatpush1.bf16.msra.mxu0 %v2206
  %2212 = vmatprep.subr.bf16.mxu0 0
  %2213 = vmatpush1.bf16.msra.mxu0 %v2207
  %2214 = vmatprep.subr.bf16.mxu0 0
  %2215 = vmatpush1.bf16.msra.mxu0 0
  %2216 = vmatprep.subr.bf16.mxu0 0
  %2217 = vmatpush1.bf16.msra.mxu0 0
  %2218 = vmatprep.subr.bf16.mxu0 0
  %2219 = vmatpush1.bf16.msra.mxu0 0
  %2220 = vmatprep.subr.bf16.mxu0 0
  %2221 = vmatpush1.bf16.msra.mxu0 0
  %2222 = vmatprep.subr.bf16.mxu0 0
  %2223 = vmatpush1.bf16.msra.mxu0 0
  %2224 = vmatprep.subr.bf16.mxu0 0
  %2225 = vmatpush1.bf16.msra.mxu0 0
  %2226 = vmatprep.subr.bf16.mxu0 0
  %2227 = vmatpush1.bf16.msra.mxu0 0
  %2228 = vmatprep.subr.bf16.mxu0 0
  %2229 = vmatpush1.bf16.msra.mxu0 0
  %2230 = vmatprep.subr.bf16.mxu0 0
  %2231 = vmatpush1.bf16.msra.mxu0 0
  %2232 = vmatprep.subr.bf16.mxu0 0
  %2233 = vmatpush1.bf16.msra.mxu0 0
  %2234 = vmatprep.subr.bf16.mxu0 0
  %2235 = vmatpush1.bf16.msra.mxu0 0
  %2236 = vmatprep.subr.bf16.mxu0 0
  %2237 = vmatpush1.bf16.msra.mxu0 0
  %2238 = vmatprep.subr.bf16.mxu0 0
  %2239 = vmatpush1.bf16.msra.mxu0 0
  %2240 = vmatprep.subr.bf16.mxu0 0
  %2241 = vmatpush1.bf16.msra.mxu0 0
  %2242 = vmatprep.mubr.bf16.mxu0 0
  %2243 = vmatmul.mubr.bf16.gmra.mrb[0].mxu0 %v73
  %v2244 = vpop.f32.mrb[0].mxu0
  %v2245 = vadd.f32 %v2196, %v2244
  %v2246 = vpop.f32.mrb[0].mxu0
  %v2247 = vpop.f32.mrb[0].mxu0
  %v2248 = vadd.f32 %v2196, %v2247
  %v2249 = vpop.f32.mrb[0].mxu0
  %2250 = vmatprep.mubr.bf16.mxu0 0
  %2251 = vmatmul.mubr.bf16.gmra.mrb[0].mxu0 %v76
  %v2252 = vpop.f32.mrb[0].mxu0
  %v2253 = vadd.f32 %v2196, %v2252
  %v2254 = vpop.f32.mrb[0].mxu0
  %v2255 = vpop.f32.mrb[0].mxu0
  %v2256 = vadd.f32 %v2196, %v2255
  %v2257 = vpop.f32.mrb[0].mxu0
  %2258 = vdwg.mxu0
  %v2259 = vsel %vm71, %v2245, 0.0
  %2260 = vadd.xlane.f32.xlu0 %v2259
  %v2261 = vpop.xlane.xlu0 %2260
  %v2262 = vsel %vm71, %v2248, 0.0
  %2263 = vadd.xlane.f32.xlu0 %v2262
  %v2264 = vpop.xlane.xlu0 %2263
  %v2265 = vsel %vm71, %v2253, 0.0
  %2266 = vadd.xlane.f32.xlu0 %v2265
  %v2267 = vpop.xlane.xlu0 %2266
  %v2268 = vsel %vm71, %v2256, 0.0
  %2269 = vadd.xlane.f32.xlu0 %v2268
  %v2270 = vpop.xlane.xlu0 %2269
  %v2271 = vmul.f32 %v2261, %v139
  %v2272 = vmul.f32 %v2264, %v139
  %v2273 = vmul.f32 %v2267, %v139
  %v2274 = vmul.f32 %v2270, %v139
  %v2275 = vsub.f32 %v2245, %v2271
  %v2276 = vsub.f32 %v2248, %v2272
  %v2277 = vsub.f32 %v2253, %v2273
  %v2278 = vsub.f32 %v2256, %v2274
  %v2279 = vmul.f32 %v2275, %v2275
  %v2280 = vmul.f32 %v2276, %v2276
  %v2281 = vmul.f32 %v2277, %v2277
  %v2282 = vmul.f32 %v2278, %v2278
  %v2283 = vsel %vm71, %v2279, 0.0
  %2284 = vadd.xlane.f32.xlu0 %v2283
  %v2285 = vpop.xlane.xlu0 %2284
  %v2286 = vsel %vm71, %v2280, 0.0
  %2287 = vadd.xlane.f32.xlu0 %v2286
  %v2288 = vpop.xlane.xlu0 %2287
  %v2289 = vsel %vm71, %v2281, 0.0
  %2290 = vadd.xlane.f32.xlu0 %v2289
  %v2291 = vpop.xlane.xlu0 %2290
  %v2292 = vsel %vm71, %v2282, 0.0
  %2293 = vadd.xlane.f32.xlu0 %v2292
  %v2294 = vpop.xlane.xlu0 %2293
  %v2295 = vmul.f32 %v2285, %v139
  %v2296 = vmul.f32 %v2288, %v139
  %v2297 = vmul.f32 %v2291, %v139
  %v2298 = vmul.f32 %v2294, %v139
  %v2299 = vadd.f32 %v2295, 1e-05
  %v2300 = vadd.f32 %v2296, 1e-05
  %v2301 = vadd.f32 %v2297, 1e-05
  %v2302 = vadd.f32 %v2298, 1e-05
  %v2303 = vrsqrt.pop %v2299
  %v2304 = vrsqrt.pop %v2300
  %v2305 = vrsqrt.pop %v2301
  %v2306 = vrsqrt.pop %v2302
  %v2307 = vmul.f32 %v2275, %v2303
  %v2308 = vmul.f32 %v2276, %v2304
  %v2309 = vmul.f32 %v2277, %v2305
  %v2310 = vmul.f32 %v2278, %v2306
  %v2311 = vmul.f32 %v2307, %v184
  %v2312 = vmul.f32 %v2308, %v184
  %v2313 = vmul.f32 %v2309, %v184
  %v2314 = vmul.f32 %v2310, %v184
  %v2315 = vadd.f32 %v2311, %v194
  %v2316 = vadd.f32 %v2312, %v194
  %v2317 = vadd.f32 %v2313, %v194
  %v2318 = vadd.f32 %v2314, %v194
  %v2319 = vpack.c.bf16 %v2316, %v2315
  %v2320 = vpack.c.bf16 %v2318, %v2317
  %v2322 = vsel %vm71, %v2319, 0
  %v2325 = vsel %vm71, %v2320, 0
  %2327 = vmatprep.subr.bf16.mxu0 0
  %2328 = vmatpush1.bf16.msra.mxu0 %v216
  %2329 = vmatprep.subr.bf16.mxu0 0
  %2330 = vmatpush1.bf16.msra.mxu0 %v217
  %2331 = vmatprep.subr.bf16.mxu0 0
  %2332 = vmatpush1.bf16.msra.mxu0 0
  %2333 = vmatprep.subr.bf16.mxu0 0
  %2334 = vmatpush1.bf16.msra.mxu0 0
  %2335 = vmatprep.subr.bf16.mxu0 0
  %2336 = vmatpush1.bf16.msra.mxu0 0
  %2337 = vmatprep.subr.bf16.mxu0 0
  %2338 = vmatpush1.bf16.msra.mxu0 0
  %2339 = vmatprep.subr.bf16.mxu0 0
  %2340 = vmatpush1.bf16.msra.mxu0 0
  %2341 = vmatprep.subr.bf16.mxu0 0
  %2342 = vmatpush1.bf16.msra.mxu0 0
  %2343 = vmatprep.subr.bf16.mxu0 0
  %2344 = vmatpush1.bf16.msra.mxu0 0
  %2345 = vmatprep.subr.bf16.mxu0 0
  %2346 = vmatpush1.bf16.msra.mxu0 0
  %2347 = vmatprep.subr.bf16.mxu0 0
  %2348 = vmatpush1.bf16.msra.mxu0 0
  %2349 = vmatprep.subr.bf16.mxu0 0
  %2350 = vmatpush1.bf16.msra.mxu0 0
  %2351 = vmatprep.subr.bf16.mxu0 0
  %2352 = vmatpush1.bf16.msra.mxu0 0
  %2353 = vmatprep.subr.bf16.mxu0 0
  %2354 = vmatpush1.bf16.msra.mxu0 0
  %2355 = vmatprep.subr.bf16.mxu0 0
  %2356 = vmatpush1.bf16.msra.mxu0 0
  %2357 = vmatprep.subr.bf16.mxu0 0
  %2358 = vmatpush1.bf16.msra.mxu0 0
  %2359 = vmatprep.mubr.bf16.mxu0 0
  %2360 = vmatmul.mubr.bf16.gmra.mrb[0].mxu0 %v2322
  %v2361 = vpop.f32.mrb[0].mxu0
  %v2362 = vadd.f32 %v206, %v2361
  %v2363 = vpop.f32.mrb[0].mxu0
  %v2364 = vpop.f32.mrb[0].mxu0
  %v2365 = vadd.f32 %v206, %v2364
  %v2366 = vpop.f32.mrb[0].mxu0
  %2367 = vmatprep.mubr.bf16.mxu0 0
  %2368 = vmatmul.mubr.bf16.gmra.mrb[0].mxu0 %v2325
  %v2369 = vpop.f32.mrb[0].mxu0
  %v2370 = vadd.f32 %v206, %v2369
  %v2371 = vpop.f32.mrb[0].mxu0
  %v2372 = vpop.f32.mrb[0].mxu0
  %v2373 = vadd.f32 %v206, %v2372
  %v2374 = vpop.f32.mrb[0].mxu0
  %2375 = vdwg.mxu0
  %s2376 = scalar_lea.vmem %s1, 192
  %v2377 = vld [vmem:[%s2376] sm:$0xf]
  %v2378 = vld [vmem:[%s2376 + $0x4] sm:$0xf]
  %v2379 = vld [vmem:[%s2376 + $0x8] sm:$0xf]
  %v2380 = vld [vmem:[%s2376 + $0xc] sm:$0xf]
  %s2381 = scalar_lea.vmem %s2, 12
  %v2382 = vld [vmem:[%s2381] sm:$0x1]
  %v2384 = vlaneseq
  %v2385 = vshrl.u32 %v2384, 7
  %v2386 = vsub.s32 0, %v2385
  %v2387 = vrot.slane %v2382, %v2386
  %v2393 = vunpack.c.l.b16 %v2377
  %v2394 = vunpack.c.l.b16 %v2378
  %v2395 = vunpack.c.l.b16 %v2379
  %v2396 = vunpack.c.l.b16 %v2380
  %v2397 = vpack.c.b16 %v2394, %v2393
  %v2398 = vpack.c.b16 %v2396, %v2395
  %2401 = vmatprep.subr.bf16.mxu0 0
  %2402 = vmatpush1.bf16.msra.mxu0 %v2397
  %2403 = vmatprep.subr.bf16.mxu0 0
  %2404 = vmatpush1.bf16.msra.mxu0 %v2398
  %2405 = vmatprep.subr.bf16.mxu0 0
  %2406 = vmatpush1.bf16.msra.mxu0 0
  %2407 = vmatprep.subr.bf16.mxu0 0
  %2408 = vmatpush1.bf16.msra.mxu0 0
  %2409 = vmatprep.subr.bf16.mxu0 0
  %2410 = vmatpush1.bf16.msra.mxu0 0
  %2411 = vmatprep.subr.bf16.mxu0 0
  %2412 = vmatpush1.bf16.msra.mxu0 0
  %2413 = vmatprep.subr.bf16.mxu0 0
  %2414 = vmatpush1.bf16.msra.mxu0 0
  %2415 = vmatprep.subr.bf16.mxu0 0
  %2416 = vmatpush1.bf16.msra.mxu0 0
  %2417 = vmatprep.subr.bf16.mxu0 0
  %2418 = vmatpush1.bf16.msra.mxu0 0
  %2419 = vmatprep.subr.bf16.mxu0 0
  %2420 = vmatpush1.bf16.msra.mxu0 0
  %2421 = vmatprep.subr.bf16.mxu0 0
  %2422 = vmatpush1.bf16.msra.mxu0 0
  %2423 = vmatprep.subr.bf16.mxu0 0
  %2424 = vmatpush1.bf16.msra.mxu0 0
  %2425 = vmatprep.subr.bf16.mxu0 0
  %2426 = vmatpush1.bf16.msra.mxu0 0
  %2427 = vmatprep.subr.bf16.mxu0 0
  %2428 = vmatpush1.bf16.msra.mxu0 0
  %2429 = vmatprep.subr.bf16.mxu0 0
  %2430 = vmatpush1.bf16.msra.mxu0 0
  %2431 = vmatprep.subr.bf16.mxu0 0
  %2432 = vmatpush1.bf16.msra.mxu0 0
  %2433 = vmatprep.mubr.bf16.mxu0 0
  %2434 = vmatmul.mubr.bf16.gmra.mrb[0].mxu0 %v73
  %v2435 = vpop.f32.mrb[0].mxu0
  %v2436 = vadd.f32 %v2387, %v2435
  %v2437 = vpop.f32.mrb[0].mxu0
  %v2438 = vpop.f32.mrb[0].mxu0
  %v2439 = vadd.f32 %v2387, %v2438
  %v2440 = vpop.f32.mrb[0].mxu0
  %2441 = vmatprep.mubr.bf16.mxu0 0
  %2442 = vmatmul.mubr.bf16.gmra.mrb[0].mxu0 %v76
  %v2443 = vpop.f32.mrb[0].mxu0
  %v2444 = vadd.f32 %v2387, %v2443
  %v2445 = vpop.f32.mrb[0].mxu0
  %v2446 = vpop.f32.mrb[0].mxu0
  %v2447 = vadd.f32 %v2387, %v2446
  %v2448 = vpop.f32.mrb[0].mxu0
  %2449 = vdwg.mxu0
  %v2450 = vsel %vm71, %v2436, 0.0
  %2451 = vadd.xlane.f32.xlu0 %v2450
  %v2452 = vpop.xlane.xlu0 %2451
  %v2453 = vsel %vm71, %v2439, 0.0
  %2454 = vadd.xlane.f32.xlu0 %v2453
  %v2455 = vpop.xlane.xlu0 %2454
  %v2456 = vsel %vm71, %v2444, 0.0
  %2457 = vadd.xlane.f32.xlu0 %v2456
  %v2458 = vpop.xlane.xlu0 %2457
  %v2459 = vsel %vm71, %v2447, 0.0
  %2460 = vadd.xlane.f32.xlu0 %v2459
  %v2461 = vpop.xlane.xlu0 %2460
  %v2462 = vmul.f32 %v2452, %v139
  %v2463 = vmul.f32 %v2455, %v139
  %v2464 = vmul.f32 %v2458, %v139
  %v2465 = vmul.f32 %v2461, %v139
  %v2466 = vsub.f32 %v2436, %v2462
  %v2467 = vsub.f32 %v2439, %v2463
  %v2468 = vsub.f32 %v2444, %v2464
  %v2469 = vsub.f32 %v2447, %v2465
  %v2470 = vmul.f32 %v2466, %v2466
  %v2471 = vmul.f32 %v2467, %v2467
  %v2472 = vmul.f32 %v2468, %v2468
  %v2473 = vmul.f32 %v2469, %v2469
  %v2474 = vsel %vm71, %v2470, 0.0
  %2475 = vadd.xlane.f32.xlu0 %v2474
  %v2476 = vpop.xlane.xlu0 %2475
  %v2477 = vsel %vm71, %v2471, 0.0
  %2478 = vadd.xlane.f32.xlu0 %v2477
  %v2479 = vpop.xlane.xlu0 %2478
  %v2480 = vsel %vm71, %v2472, 0.0
  %2481 = vadd.xlane.f32.xlu0 %v2480
  %v2482 = vpop.xlane.xlu0 %2481
  %v2483 = vsel %vm71, %v2473, 0.0
  %2484 = vadd.xlane.f32.xlu0 %v2483
  %v2485 = vpop.xlane.xlu0 %2484
  %v2486 = vmul.f32 %v2476, %v139
  %v2487 = vmul.f32 %v2479, %v139
  %v2488 = vmul.f32 %v2482, %v139
  %v2489 = vmul.f32 %v2485, %v139
  %v2490 = vadd.f32 %v2486, 1e-05
  %v2491 = vadd.f32 %v2487, 1e-05
  %v2492 = vadd.f32 %v2488, 1e-05
  %v2493 = vadd.f32 %v2489, 1e-05
  %v2494 = vrsqrt.pop %v2490
  %v2495 = vrsqrt.pop %v2491
  %v2496 = vrsqrt.pop %v2492
  %v2497 = vrsqrt.pop %v2493
  %v2498 = vmul.f32 %v2466, %v2494
  %v2499 = vmul.f32 %v2467, %v2495
  %v2500 = vmul.f32 %v2468, %v2496
  %v2501 = vmul.f32 %v2469, %v2497
  %v2502 = vmul.f32 %v2498, %v184
  %v2503 = vmul.f32 %v2499, %v184
  %v2504 = vmul.f32 %v2500, %v184
  %v2505 = vmul.f32 %v2501, %v184
  %v2506 = vadd.f32 %v2502, %v194
  %v2507 = vadd.f32 %v2503, %v194
  %v2508 = vadd.f32 %v2504, %v194
  %v2509 = vadd.f32 %v2505, %v194
  %v2510 = vpack.c.bf16 %v2507, %v2506
  %v2511 = vpack.c.bf16 %v2509, %v2508
  %v2513 = vsel %vm71, %v2510, 0
  %v2516 = vsel %vm71, %v2511, 0
  %2518 = vmatprep.subr.bf16.mxu0 0
  %2519 = vmatpush1.bf16.msra.mxu0 %v216
  %2520 = vmatprep.subr.bf16.mxu0 0
  %2521 = vmatpush1.bf16.msra.mxu0 %v217
  %2522 = vmatprep.subr.bf16.mxu0 0
  %2523 = vmatpush1.bf16.msra.mxu0 0
  %2524 = vmatprep.subr.bf16.mxu0 0
  %2525 = vmatpush1.bf16.msra.mxu0 0
  %2526 = vmatprep.subr.bf16.mxu0 0
  %2527 = vmatpush1.bf16.msra.mxu0 0
  %2528 = vmatprep.subr.bf16.mxu0 0
  %2529 = vmatpush1.bf16.msra.mxu0 0
  %2530 = vmatprep.subr.bf16.mxu0 0
  %2531 = vmatpush1.bf16.msra.mxu0 0
  %2532 = vmatprep.subr.bf16.mxu0 0
  %2533 = vmatpush1.bf16.msra.mxu0 0
  %2534 = vmatprep.subr.bf16.mxu0 0
  %2535 = vmatpush1.bf16.msra.mxu0 0
  %2536 = vmatprep.subr.bf16.mxu0 0
  %2537 = vmatpush1.bf16.msra.mxu0 0
  %2538 = vmatprep.subr.bf16.mxu0 0
  %2539 = vmatpush1.bf16.msra.mxu0 0
  %2540 = vmatprep.subr.bf16.mxu0 0
  %2541 = vmatpush1.bf16.msra.mxu0 0
  %2542 = vmatprep.subr.bf16.mxu0 0
  %2543 = vmatpush1.bf16.msra.mxu0 0
  %2544 = vmatprep.subr.bf16.mxu0 0
  %2545 = vmatpush1.bf16.msra.mxu0 0
  %2546 = vmatprep.subr.bf16.mxu0 0
  %2547 = vmatpush1.bf16.msra.mxu0 0
  %2548 = vmatprep.subr.bf16.mxu0 0
  %2549 = vmatpush1.bf16.msra.mxu0 0
  %2550 = vmatprep.mubr.bf16.mxu0 0
  %2551 = vmatmul.mubr.bf16.gmra.mrb[0].mxu0 %v2513
  %v2552 = vpop.f32.mrb[0].mxu0
  %v2553 = vadd.f32 %v206, %v2552
  %v2554 = vpop.f32.mrb[0].mxu0
  %v2555 = vpop.f32.mrb[0].mxu0
  %v2556 = vadd.f32 %v206, %v2555
  %v2557 = vpop.f32.mrb[0].mxu0
  %2558 = vmatprep.mubr.bf16.mxu0 0
  %2559 = vmatmul.mubr.bf16.gmra.mrb[0].mxu0 %v2516
  %v2560 = vpop.f32.mrb[0].mxu0
  %v2561 = vadd.f32 %v206, %v2560
  %v2562 = vpop.f32.mrb[0].mxu0
  %v2563 = vpop.f32.mrb[0].mxu0
  %v2564 = vadd.f32 %v206, %v2563
  %v2565 = vpop.f32.mrb[0].mxu0
  %2566 = vdwg.mxu0
  %s2567 = scalar_lea.vmem %s1, 208
  %v2568 = vld [vmem:[%s2567] sm:$0xf]
  %v2569 = vld [vmem:[%s2567 + $0x4] sm:$0xf]
  %v2570 = vld [vmem:[%s2567 + $0x8] sm:$0xf]
  %v2571 = vld [vmem:[%s2567 + $0xc] sm:$0xf]
  %s2572 = scalar_lea.vmem %s2, 13
  %v2573 = vld [vmem:[%s2572] sm:$0x1]
  %v2575 = vlaneseq
  %v2576 = vshrl.u32 %v2575, 7
  %v2577 = vsub.s32 0, %v2576
  %v2578 = vrot.slane %v2573, %v2577
  %v2584 = vunpack.c.l.b16 %v2568
  %v2585 = vunpack.c.l.b16 %v2569
  %v2586 = vunpack.c.l.b16 %v2570
  %v2587 = vunpack.c.l.b16 %v2571
  %v2588 = vpack.c.b16 %v2585, %v2584
  %v2589 = vpack.c.b16 %v2587, %v2586
  %2592 = vmatprep.subr.bf16.mxu0 0
  %2593 = vmatpush1.bf16.msra.mxu0 %v2588
  %2594 = vmatprep.subr.bf16.mxu0 0
  %2595 = vmatpush1.bf16.msra.mxu0 %v2589
  %2596 = vmatprep.subr.bf16.mxu0 0
  %2597 = vmatpush1.bf16.msra.mxu0 0
  %2598 = vmatprep.subr.bf16.mxu0 0
  %2599 = vmatpush1.bf16.msra.mxu0 0
  %2600 = vmatprep.subr.bf16.mxu0 0
  %2601 = vmatpush1.bf16.msra.mxu0 0
  %2602 = vmatprep.subr.bf16.mxu0 0
  %2603 = vmatpush1.bf16.msra.mxu0 0
  %2604 = vmatprep.subr.bf16.mxu0 0
  %2605 = vmatpush1.bf16.msra.mxu0 0
  %2606 = vmatprep.subr.bf16.mxu0 0
  %2607 = vmatpush1.bf16.msra.mxu0 0
  %2608 = vmatprep.subr.bf16.mxu0 0
  %2609 = vmatpush1.bf16.msra.mxu0 0
  %2610 = vmatprep.subr.bf16.mxu0 0
  %2611 = vmatpush1.bf16.msra.mxu0 0
  %2612 = vmatprep.subr.bf16.mxu0 0
  %2613 = vmatpush1.bf16.msra.mxu0 0
  %2614 = vmatprep.subr.bf16.mxu0 0
  %2615 = vmatpush1.bf16.msra.mxu0 0
  %2616 = vmatprep.subr.bf16.mxu0 0
  %2617 = vmatpush1.bf16.msra.mxu0 0
  %2618 = vmatprep.subr.bf16.mxu0 0
  %2619 = vmatpush1.bf16.msra.mxu0 0
  %2620 = vmatprep.subr.bf16.mxu0 0
  %2621 = vmatpush1.bf16.msra.mxu0 0
  %2622 = vmatprep.subr.bf16.mxu0 0
  %2623 = vmatpush1.bf16.msra.mxu0 0
  %2624 = vmatprep.mubr.bf16.mxu0 0
  %2625 = vmatmul.mubr.bf16.gmra.mrb[0].mxu0 %v73
  %v2626 = vpop.f32.mrb[0].mxu0
  %v2627 = vadd.f32 %v2578, %v2626
  %v2628 = vpop.f32.mrb[0].mxu0
  %v2629 = vpop.f32.mrb[0].mxu0
  %v2630 = vadd.f32 %v2578, %v2629
  %v2631 = vpop.f32.mrb[0].mxu0
  %2632 = vmatprep.mubr.bf16.mxu0 0
  %2633 = vmatmul.mubr.bf16.gmra.mrb[0].mxu0 %v76
  %v2634 = vpop.f32.mrb[0].mxu0
  %v2635 = vadd.f32 %v2578, %v2634
  %v2636 = vpop.f32.mrb[0].mxu0
  %v2637 = vpop.f32.mrb[0].mxu0
  %v2638 = vadd.f32 %v2578, %v2637
  %v2639 = vpop.f32.mrb[0].mxu0
  %2640 = vdwg.mxu0
  %v2641 = vsel %vm71, %v2627, 0.0
  %2642 = vadd.xlane.f32.xlu0 %v2641
  %v2643 = vpop.xlane.xlu0 %2642
  %v2644 = vsel %vm71, %v2630, 0.0
  %2645 = vadd.xlane.f32.xlu0 %v2644
  %v2646 = vpop.xlane.xlu0 %2645
  %v2647 = vsel %vm71, %v2635, 0.0
  %2648 = vadd.xlane.f32.xlu0 %v2647
  %v2649 = vpop.xlane.xlu0 %2648
  %v2650 = vsel %vm71, %v2638, 0.0
  %2651 = vadd.xlane.f32.xlu0 %v2650
  %v2652 = vpop.xlane.xlu0 %2651
  %v2653 = vmul.f32 %v2643, %v139
  %v2654 = vmul.f32 %v2646, %v139
  %v2655 = vmul.f32 %v2649, %v139
  %v2656 = vmul.f32 %v2652, %v139
  %v2657 = vsub.f32 %v2627, %v2653
  %v2658 = vsub.f32 %v2630, %v2654
  %v2659 = vsub.f32 %v2635, %v2655
  %v2660 = vsub.f32 %v2638, %v2656
  %v2661 = vmul.f32 %v2657, %v2657
  %v2662 = vmul.f32 %v2658, %v2658
  %v2663 = vmul.f32 %v2659, %v2659
  %v2664 = vmul.f32 %v2660, %v2660
  %v2665 = vsel %vm71, %v2661, 0.0
  %2666 = vadd.xlane.f32.xlu0 %v2665
  %v2667 = vpop.xlane.xlu0 %2666
  %v2668 = vsel %vm71, %v2662, 0.0
  %2669 = vadd.xlane.f32.xlu0 %v2668
  %v2670 = vpop.xlane.xlu0 %2669
  %v2671 = vsel %vm71, %v2663, 0.0
  %2672 = vadd.xlane.f32.xlu0 %v2671
  %v2673 = vpop.xlane.xlu0 %2672
  %v2674 = vsel %vm71, %v2664, 0.0
  %2675 = vadd.xlane.f32.xlu0 %v2674
  %v2676 = vpop.xlane.xlu0 %2675
  %v2677 = vmul.f32 %v2667, %v139
  %v2678 = vmul.f32 %v2670, %v139
  %v2679 = vmul.f32 %v2673, %v139
  %v2680 = vmul.f32 %v2676, %v139
  %v2681 = vadd.f32 %v2677, 1e-05
  %v2682 = vadd.f32 %v2678, 1e-05
  %v2683 = vadd.f32 %v2679, 1e-05
  %v2684 = vadd.f32 %v2680, 1e-05
  %v2685 = vrsqrt.pop %v2681
  %v2686 = vrsqrt.pop %v2682
  %v2687 = vrsqrt.pop %v2683
  %v2688 = vrsqrt.pop %v2684
  %v2689 = vmul.f32 %v2657, %v2685
  %v2690 = vmul.f32 %v2658, %v2686
  %v2691 = vmul.f32 %v2659, %v2687
  %v2692 = vmul.f32 %v2660, %v2688
  %v2693 = vmul.f32 %v2689, %v184
  %v2694 = vmul.f32 %v2690, %v184
  %v2695 = vmul.f32 %v2691, %v184
  %v2696 = vmul.f32 %v2692, %v184
  %v2697 = vadd.f32 %v2693, %v194
  %v2698 = vadd.f32 %v2694, %v194
  %v2699 = vadd.f32 %v2695, %v194
  %v2700 = vadd.f32 %v2696, %v194
  %v2701 = vpack.c.bf16 %v2698, %v2697
  %v2702 = vpack.c.bf16 %v2700, %v2699
  %v2704 = vsel %vm71, %v2701, 0
  %v2707 = vsel %vm71, %v2702, 0
  %2709 = vmatprep.subr.bf16.mxu0 0
  %2710 = vmatpush1.bf16.msra.mxu0 %v216
  %2711 = vmatprep.subr.bf16.mxu0 0
  %2712 = vmatpush1.bf16.msra.mxu0 %v217
  %2713 = vmatprep.subr.bf16.mxu0 0
  %2714 = vmatpush1.bf16.msra.mxu0 0
  %2715 = vmatprep.subr.bf16.mxu0 0
  %2716 = vmatpush1.bf16.msra.mxu0 0
  %2717 = vmatprep.subr.bf16.mxu0 0
  %2718 = vmatpush1.bf16.msra.mxu0 0
  %2719 = vmatprep.subr.bf16.mxu0 0
  %2720 = vmatpush1.bf16.msra.mxu0 0
  %2721 = vmatprep.subr.bf16.mxu0 0
  %2722 = vmatpush1.bf16.msra.mxu0 0
  %2723 = vmatprep.subr.bf16.mxu0 0
  %2724 = vmatpush1.bf16.msra.mxu0 0
  %2725 = vmatprep.subr.bf16.mxu0 0
  %2726 = vmatpush1.bf16.msra.mxu0 0
  %2727 = vmatprep.subr.bf16.mxu0 0
  %2728 = vmatpush1.bf16.msra.mxu0 0
  %2729 = vmatprep.subr.bf16.mxu0 0
  %2730 = vmatpush1.bf16.msra.mxu0 0
  %2731 = vmatprep.subr.bf16.mxu0 0
  %2732 = vmatpush1.bf16.msra.mxu0 0
  %2733 = vmatprep.subr.bf16.mxu0 0
  %2734 = vmatpush1.bf16.msra.mxu0 0
  %2735 = vmatprep.subr.bf16.mxu0 0
  %2736 = vmatpush1.bf16.msra.mxu0 0
  %2737 = vmatprep.subr.bf16.mxu0 0
  %2738 = vmatpush1.bf16.msra.mxu0 0
  %2739 = vmatprep.subr.bf16.mxu0 0
  %2740 = vmatpush1.bf16.msra.mxu0 0
  %2741 = vmatprep.mubr.bf16.mxu0 0
  %2742 = vmatmul.mubr.bf16.gmra.mrb[0].mxu0 %v2704
  %v2743 = vpop.f32.mrb[0].mxu0
  %v2744 = vadd.f32 %v206, %v2743
  %v2745 = vpop.f32.mrb[0].mxu0
  %v2746 = vpop.f32.mrb[0].mxu0
  %v2747 = vadd.f32 %v206, %v2746
  %v2748 = vpop.f32.mrb[0].mxu0
  %2749 = vmatprep.mubr.bf16.mxu0 0
  %2750 = vmatmul.mubr.bf16.gmra.mrb[0].mxu0 %v2707
  %v2751 = vpop.f32.mrb[0].mxu0
  %v2752 = vadd.f32 %v206, %v2751
  %v2753 = vpop.f32.mrb[0].mxu0
  %v2754 = vpop.f32.mrb[0].mxu0
  %v2755 = vadd.f32 %v206, %v2754
  %v2756 = vpop.f32.mrb[0].mxu0
  %2757 = vdwg.mxu0
  %s2758 = scalar_lea.vmem %s1, 224
  %v2759 = vld [vmem:[%s2758] sm:$0xf]
  %v2760 = vld [vmem:[%s2758 + $0x4] sm:$0xf]
  %v2761 = vld [vmem:[%s2758 + $0x8] sm:$0xf]
  %v2762 = vld [vmem:[%s2758 + $0xc] sm:$0xf]
  %s2763 = scalar_lea.vmem %s2, 14
  %v2764 = vld [vmem:[%s2763] sm:$0x1]
  %v2766 = vlaneseq
  %v2767 = vshrl.u32 %v2766, 7
  %v2768 = vsub.s32 0, %v2767
  %v2769 = vrot.slane %v2764, %v2768
  %v2775 = vunpack.c.l.b16 %v2759
  %v2776 = vunpack.c.l.b16 %v2760
  %v2777 = vunpack.c.l.b16 %v2761
  %v2778 = vunpack.c.l.b16 %v2762
  %v2779 = vpack.c.b16 %v2776, %v2775
  %v2780 = vpack.c.b16 %v2778, %v2777
  %2783 = vmatprep.subr.bf16.mxu0 0
  %2784 = vmatpush1.bf16.msra.mxu0 %v2779
  %2785 = vmatprep.subr.bf16.mxu0 0
  %2786 = vmatpush1.bf16.msra.mxu0 %v2780
  %2787 = vmatprep.subr.bf16.mxu0 0
  %2788 = vmatpush1.bf16.msra.mxu0 0
  %2789 = vmatprep.subr.bf16.mxu0 0
  %2790 = vmatpush1.bf16.msra.mxu0 0
  %2791 = vmatprep.subr.bf16.mxu0 0
  %2792 = vmatpush1.bf16.msra.mxu0 0
  %2793 = vmatprep.subr.bf16.mxu0 0
  %2794 = vmatpush1.bf16.msra.mxu0 0
  %2795 = vmatprep.subr.bf16.mxu0 0
  %2796 = vmatpush1.bf16.msra.mxu0 0
  %2797 = vmatprep.subr.bf16.mxu0 0
  %2798 = vmatpush1.bf16.msra.mxu0 0
  %2799 = vmatprep.subr.bf16.mxu0 0
  %2800 = vmatpush1.bf16.msra.mxu0 0
  %2801 = vmatprep.subr.bf16.mxu0 0
  %2802 = vmatpush1.bf16.msra.mxu0 0
  %2803 = vmatprep.subr.bf16.mxu0 0
  %2804 = vmatpush1.bf16.msra.mxu0 0
  %2805 = vmatprep.subr.bf16.mxu0 0
  %2806 = vmatpush1.bf16.msra.mxu0 0
  %2807 = vmatprep.subr.bf16.mxu0 0
  %2808 = vmatpush1.bf16.msra.mxu0 0
  %2809 = vmatprep.subr.bf16.mxu0 0
  %2810 = vmatpush1.bf16.msra.mxu0 0
  %2811 = vmatprep.subr.bf16.mxu0 0
  %2812 = vmatpush1.bf16.msra.mxu0 0
  %2813 = vmatprep.subr.bf16.mxu0 0
  %2814 = vmatpush1.bf16.msra.mxu0 0
  %2815 = vmatprep.mubr.bf16.mxu0 0
  %2816 = vmatmul.mubr.bf16.gmra.mrb[0].mxu0 %v73
  %v2817 = vpop.f32.mrb[0].mxu0
  %v2818 = vadd.f32 %v2769, %v2817
  %v2819 = vpop.f32.mrb[0].mxu0
  %v2820 = vpop.f32.mrb[0].mxu0
  %v2821 = vadd.f32 %v2769, %v2820
  %v2822 = vpop.f32.mrb[0].mxu0
  %2823 = vmatprep.mubr.bf16.mxu0 0
  %2824 = vmatmul.mubr.bf16.gmra.mrb[0].mxu0 %v76
  %v2825 = vpop.f32.mrb[0].mxu0
  %v2826 = vadd.f32 %v2769, %v2825
  %v2827 = vpop.f32.mrb[0].mxu0
  %v2828 = vpop.f32.mrb[0].mxu0
  %v2829 = vadd.f32 %v2769, %v2828
  %v2830 = vpop.f32.mrb[0].mxu0
  %2831 = vdwg.mxu0
  %v2832 = vsel %vm71, %v2818, 0.0
  %2833 = vadd.xlane.f32.xlu0 %v2832
  %v2834 = vpop.xlane.xlu0 %2833
  %v2835 = vsel %vm71, %v2821, 0.0
  %2836 = vadd.xlane.f32.xlu0 %v2835
  %v2837 = vpop.xlane.xlu0 %2836
  %v2838 = vsel %vm71, %v2826, 0.0
  %2839 = vadd.xlane.f32.xlu0 %v2838
  %v2840 = vpop.xlane.xlu0 %2839
  %v2841 = vsel %vm71, %v2829, 0.0
  %2842 = vadd.xlane.f32.xlu0 %v2841
  %v2843 = vpop.xlane.xlu0 %2842
  %v2844 = vmul.f32 %v2834, %v139
  %v2845 = vmul.f32 %v2837, %v139
  %v2846 = vmul.f32 %v2840, %v139
  %v2847 = vmul.f32 %v2843, %v139
  %v2848 = vsub.f32 %v2818, %v2844
  %v2849 = vsub.f32 %v2821, %v2845
  %v2850 = vsub.f32 %v2826, %v2846
  %v2851 = vsub.f32 %v2829, %v2847
  %v2852 = vmul.f32 %v2848, %v2848
  %v2853 = vmul.f32 %v2849, %v2849
  %v2854 = vmul.f32 %v2850, %v2850
  %v2855 = vmul.f32 %v2851, %v2851
  %v2856 = vsel %vm71, %v2852, 0.0
  %2857 = vadd.xlane.f32.xlu0 %v2856
  %v2858 = vpop.xlane.xlu0 %2857
  %v2859 = vsel %vm71, %v2853, 0.0
  %2860 = vadd.xlane.f32.xlu0 %v2859
  %v2861 = vpop.xlane.xlu0 %2860
  %v2862 = vsel %vm71, %v2854, 0.0
  %2863 = vadd.xlane.f32.xlu0 %v2862
  %v2864 = vpop.xlane.xlu0 %2863
  %v2865 = vsel %vm71, %v2855, 0.0
  %2866 = vadd.xlane.f32.xlu0 %v2865
  %v2867 = vpop.xlane.xlu0 %2866
  %v2868 = vmul.f32 %v2858, %v139
  %v2869 = vmul.f32 %v2861, %v139
  %v2870 = vmul.f32 %v2864, %v139
  %v2871 = vmul.f32 %v2867, %v139
  %v2872 = vadd.f32 %v2868, 1e-05
  %v2873 = vadd.f32 %v2869, 1e-05
  %v2874 = vadd.f32 %v2870, 1e-05
  %v2875 = vadd.f32 %v2871, 1e-05
  %v2876 = vrsqrt.pop %v2872
  %v2877 = vrsqrt.pop %v2873
  %v2878 = vrsqrt.pop %v2874
  %v2879 = vrsqrt.pop %v2875
  %v2880 = vmul.f32 %v2848, %v2876
  %v2881 = vmul.f32 %v2849, %v2877
  %v2882 = vmul.f32 %v2850, %v2878
  %v2883 = vmul.f32 %v2851, %v2879
  %v2884 = vmul.f32 %v2880, %v184
  %v2885 = vmul.f32 %v2881, %v184
  %v2886 = vmul.f32 %v2882, %v184
  %v2887 = vmul.f32 %v2883, %v184
  %v2888 = vadd.f32 %v2884, %v194
  %v2889 = vadd.f32 %v2885, %v194
  %v2890 = vadd.f32 %v2886, %v194
  %v2891 = vadd.f32 %v2887, %v194
  %v2892 = vpack.c.bf16 %v2889, %v2888
  %v2893 = vpack.c.bf16 %v2891, %v2890
  %v2895 = vsel %vm71, %v2892, 0
  %v2898 = vsel %vm71, %v2893, 0
  %2900 = vmatprep.subr.bf16.mxu0 0
  %2901 = vmatpush1.bf16.msra.mxu0 %v216
  %2902 = vmatprep.subr.bf16.mxu0 0
  %2903 = vmatpush1.bf16.msra.mxu0 %v217
  %2904 = vmatprep.subr.bf16.mxu0 0
  %2905 = vmatpush1.bf16.msra.mxu0 0
  %2906 = vmatprep.subr.bf16.mxu0 0
  %2907 = vmatpush1.bf16.msra.mxu0 0
  %2908 = vmatprep.subr.bf16.mxu0 0
  %2909 = vmatpush1.bf16.msra.mxu0 0
  %2910 = vmatprep.subr.bf16.mxu0 0
  %2911 = vmatpush1.bf16.msra.mxu0 0
  %2912 = vmatprep.subr.bf16.mxu0 0
  %2913 = vmatpush1.bf16.msra.mxu0 0
  %2914 = vmatprep.subr.bf16.mxu0 0
  %2915 = vmatpush1.bf16.msra.mxu0 0
  %2916 = vmatprep.subr.bf16.mxu0 0
  %2917 = vmatpush1.bf16.msra.mxu0 0
  %2918 = vmatprep.subr.bf16.mxu0 0
  %2919 = vmatpush1.bf16.msra.mxu0 0
  %2920 = vmatprep.subr.bf16.mxu0 0
  %2921 = vmatpush1.bf16.msra.mxu0 0
  %2922 = vmatprep.subr.bf16.mxu0 0
  %2923 = vmatpush1.bf16.msra.mxu0 0
  %2924 = vmatprep.subr.bf16.mxu0 0
  %2925 = vmatpush1.bf16.msra.mxu0 0
  %2926 = vmatprep.subr.bf16.mxu0 0
  %2927 = vmatpush1.bf16.msra.mxu0 0
  %2928 = vmatprep.subr.bf16.mxu0 0
  %2929 = vmatpush1.bf16.msra.mxu0 0
  %2930 = vmatprep.subr.bf16.mxu0 0
  %2931 = vmatpush1.bf16.msra.mxu0 0
  %2932 = vmatprep.mubr.bf16.mxu0 0
  %2933 = vmatmul.mubr.bf16.gmra.mrb[0].mxu0 %v2895
  %v2934 = vpop.f32.mrb[0].mxu0
  %v2935 = vadd.f32 %v206, %v2934
  %v2936 = vpop.f32.mrb[0].mxu0
  %v2937 = vpop.f32.mrb[0].mxu0
  %v2938 = vadd.f32 %v206, %v2937
  %v2939 = vpop.f32.mrb[0].mxu0
  %2940 = vmatprep.mubr.bf16.mxu0 0
  %2941 = vmatmul.mubr.bf16.gmra.mrb[0].mxu0 %v2898
  %v2942 = vpop.f32.mrb[0].mxu0
  %v2943 = vadd.f32 %v206, %v2942
  %v2944 = vpop.f32.mrb[0].mxu0
  %v2945 = vpop.f32.mrb[0].mxu0
  %v2946 = vadd.f32 %v206, %v2945
  %v2947 = vpop.f32.mrb[0].mxu0
  %2948 = vdwg.mxu0
  %s2949 = scalar_lea.vmem %s1, 240
  %v2950 = vld [vmem:[%s2949] sm:$0xf]
  %v2951 = vld [vmem:[%s2949 + $0x4] sm:$0xf]
  %v2952 = vld [vmem:[%s2949 + $0x8] sm:$0xf]
  %v2953 = vld [vmem:[%s2949 + $0xc] sm:$0xf]
  %s2954 = scalar_lea.vmem %s2, 15
  %v2955 = vld [vmem:[%s2954] sm:$0x1]
  %v2957 = vlaneseq
  %v2958 = vshrl.u32 %v2957, 7
  %v2959 = vsub.s32 0, %v2958
  %v2960 = vrot.slane %v2955, %v2959
  %v2966 = vunpack.c.l.b16 %v2950
  %v2967 = vunpack.c.l.b16 %v2951
  %v2968 = vunpack.c.l.b16 %v2952
  %v2969 = vunpack.c.l.b16 %v2953
  %v2970 = vpack.c.b16 %v2967, %v2966
  %v2971 = vpack.c.b16 %v2969, %v2968
  %2974 = vmatprep.subr.bf16.mxu0 0
  %2975 = vmatpush1.bf16.msra.mxu0 %v2970
  %2976 = vmatprep.subr.bf16.mxu0 0
  %2977 = vmatpush1.bf16.msra.mxu0 %v2971
  %2978 = vmatprep.subr.bf16.mxu0 0
  %2979 = vmatpush1.bf16.msra.mxu0 0
  %2980 = vmatprep.subr.bf16.mxu0 0
  %2981 = vmatpush1.bf16.msra.mxu0 0
  %2982 = vmatprep.subr.bf16.mxu0 0
  %2983 = vmatpush1.bf16.msra.mxu0 0
  %2984 = vmatprep.subr.bf16.mxu0 0
  %2985 = vmatpush1.bf16.msra.mxu0 0
  %2986 = vmatprep.subr.bf16.mxu0 0
  %2987 = vmatpush1.bf16.msra.mxu0 0
  %2988 = vmatprep.subr.bf16.mxu0 0
  %2989 = vmatpush1.bf16.msra.mxu0 0
  %2990 = vmatprep.subr.bf16.mxu0 0
  %2991 = vmatpush1.bf16.msra.mxu0 0
  %2992 = vmatprep.subr.bf16.mxu0 0
  %2993 = vmatpush1.bf16.msra.mxu0 0
  %2994 = vmatprep.subr.bf16.mxu0 0
  %2995 = vmatpush1.bf16.msra.mxu0 0
  %2996 = vmatprep.subr.bf16.mxu0 0
  %2997 = vmatpush1.bf16.msra.mxu0 0
  %2998 = vmatprep.subr.bf16.mxu0 0
  %2999 = vmatpush1.bf16.msra.mxu0 0
  %3000 = vmatprep.subr.bf16.mxu0 0
  %3001 = vmatpush1.bf16.msra.mxu0 0
  %3002 = vmatprep.subr.bf16.mxu0 0
  %3003 = vmatpush1.bf16.msra.mxu0 0
  %3004 = vmatprep.subr.bf16.mxu0 0
  %3005 = vmatpush1.bf16.msra.mxu0 0
  %3006 = vmatprep.mubr.bf16.mxu0 0
  %3007 = vmatmul.mubr.bf16.gmra.mrb[0].mxu0 %v73
  %v3008 = vpop.f32.mrb[0].mxu0
  %v3009 = vadd.f32 %v2960, %v3008
  %v3010 = vpop.f32.mrb[0].mxu0
  %v3011 = vpop.f32.mrb[0].mxu0
  %v3012 = vadd.f32 %v2960, %v3011
  %v3013 = vpop.f32.mrb[0].mxu0
  %3014 = vmatprep.mubr.bf16.mxu0 0
  %3015 = vmatmul.mubr.bf16.gmra.mrb[0].mxu0 %v76
  %v3016 = vpop.f32.mrb[0].mxu0
  %v3017 = vadd.f32 %v2960, %v3016
  %v3018 = vpop.f32.mrb[0].mxu0
  %v3019 = vpop.f32.mrb[0].mxu0
  %v3020 = vadd.f32 %v2960, %v3019
  %v3021 = vpop.f32.mrb[0].mxu0
  %3022 = vdwg.mxu0
  %v3023 = vsel %vm71, %v3009, 0.0
  %3024 = vadd.xlane.f32.xlu0 %v3023
  %v3025 = vpop.xlane.xlu0 %3024
  %v3026 = vsel %vm71, %v3012, 0.0
  %3027 = vadd.xlane.f32.xlu0 %v3026
  %v3028 = vpop.xlane.xlu0 %3027
  %v3029 = vsel %vm71, %v3017, 0.0
  %3030 = vadd.xlane.f32.xlu0 %v3029
  %v3031 = vpop.xlane.xlu0 %3030
  %v3032 = vsel %vm71, %v3020, 0.0
  %3033 = vadd.xlane.f32.xlu0 %v3032
  %v3034 = vpop.xlane.xlu0 %3033
  %v3035 = vmul.f32 %v3025, %v139
  %v3036 = vmul.f32 %v3028, %v139
  %v3037 = vmul.f32 %v3031, %v139
  %v3038 = vmul.f32 %v3034, %v139
  %v3039 = vsub.f32 %v3009, %v3035
  %v3040 = vsub.f32 %v3012, %v3036
  %v3041 = vsub.f32 %v3017, %v3037
  %v3042 = vsub.f32 %v3020, %v3038
  %v3043 = vmul.f32 %v3039, %v3039
  %v3044 = vmul.f32 %v3040, %v3040
  %v3045 = vmul.f32 %v3041, %v3041
  %v3046 = vmul.f32 %v3042, %v3042
  %v3047 = vsel %vm71, %v3043, 0.0
  %3048 = vadd.xlane.f32.xlu0 %v3047
  %v3049 = vpop.xlane.xlu0 %3048
  %v3050 = vsel %vm71, %v3044, 0.0
  %3051 = vadd.xlane.f32.xlu0 %v3050
  %v3052 = vpop.xlane.xlu0 %3051
  %v3053 = vsel %vm71, %v3045, 0.0
  %3054 = vadd.xlane.f32.xlu0 %v3053
  %v3055 = vpop.xlane.xlu0 %3054
  %v3056 = vsel %vm71, %v3046, 0.0
  %3057 = vadd.xlane.f32.xlu0 %v3056
  %v3058 = vpop.xlane.xlu0 %3057
  %v3059 = vmul.f32 %v3049, %v139
  %v3060 = vmul.f32 %v3052, %v139
  %v3061 = vmul.f32 %v3055, %v139
  %v3062 = vmul.f32 %v3058, %v139
  %v3063 = vadd.f32 %v3059, 1e-05
  %v3064 = vadd.f32 %v3060, 1e-05
  %v3065 = vadd.f32 %v3061, 1e-05
  %v3066 = vadd.f32 %v3062, 1e-05
  %v3067 = vrsqrt.pop %v3063
  %v3068 = vrsqrt.pop %v3064
  %v3069 = vrsqrt.pop %v3065
  %v3070 = vrsqrt.pop %v3066
  %v3071 = vmul.f32 %v3039, %v3067
  %v3072 = vmul.f32 %v3040, %v3068
  %v3073 = vmul.f32 %v3041, %v3069
  %v3074 = vmul.f32 %v3042, %v3070
  %v3075 = vmul.f32 %v3071, %v184
  %v3076 = vmul.f32 %v3072, %v184
  %v3077 = vmul.f32 %v3073, %v184
  %v3078 = vmul.f32 %v3074, %v184
  %v3079 = vadd.f32 %v3075, %v194
  %v3080 = vadd.f32 %v3076, %v194
  %v3081 = vadd.f32 %v3077, %v194
  %v3082 = vadd.f32 %v3078, %v194
  %v3083 = vpack.c.bf16 %v3080, %v3079
  %v3084 = vpack.c.bf16 %v3082, %v3081
  %v3086 = vsel %vm71, %v3083, 0
  %v3089 = vsel %vm71, %v3084, 0
  %3091 = vmatprep.subr.bf16.mxu0 0
  %3092 = vmatpush1.bf16.msra.mxu0 %v216
  %3093 = vmatprep.subr.bf16.mxu0 0
  %3094 = vmatpush1.bf16.msra.mxu0 %v217
  %3095 = vmatprep.subr.bf16.mxu0 0
  %3096 = vmatpush1.bf16.msra.mxu0 0
  %3097 = vmatprep.subr.bf16.mxu0 0
  %3098 = vmatpush1.bf16.msra.mxu0 0
  %3099 = vmatprep.subr.bf16.mxu0 0
  %3100 = vmatpush1.bf16.msra.mxu0 0
  %3101 = vmatprep.subr.bf16.mxu0 0
  %3102 = vmatpush1.bf16.msra.mxu0 0
  %3103 = vmatprep.subr.bf16.mxu0 0
  %3104 = vmatpush1.bf16.msra.mxu0 0
  %3105 = vmatprep.subr.bf16.mxu0 0
  %3106 = vmatpush1.bf16.msra.mxu0 0
  %3107 = vmatprep.subr.bf16.mxu0 0
  %3108 = vmatpush1.bf16.msra.mxu0 0
  %3109 = vmatprep.subr.bf16.mxu0 0
  %3110 = vmatpush1.bf16.msra.mxu0 0
  %3111 = vmatprep.subr.bf16.mxu0 0
  %3112 = vmatpush1.bf16.msra.mxu0 0
  %3113 = vmatprep.subr.bf16.mxu0 0
  %3114 = vmatpush1.bf16.msra.mxu0 0
  %3115 = vmatprep.subr.bf16.mxu0 0
  %3116 = vmatpush1.bf16.msra.mxu0 0
  %3117 = vmatprep.subr.bf16.mxu0 0
  %3118 = vmatpush1.bf16.msra.mxu0 0
  %3119 = vmatprep.subr.bf16.mxu0 0
  %3120 = vmatpush1.bf16.msra.mxu0 0
  %3121 = vmatprep.subr.bf16.mxu0 0
  %3122 = vmatpush1.bf16.msra.mxu0 0
  %3123 = vmatprep.mubr.bf16.mxu0 0
  %3124 = vmatmul.mubr.bf16.gmra.mrb[0].mxu0 %v3086
  %v3125 = vpop.f32.mrb[0].mxu0
  %v3126 = vadd.f32 %v206, %v3125
  %v3127 = vpop.f32.mrb[0].mxu0
  %v3128 = vpop.f32.mrb[0].mxu0
  %v3129 = vadd.f32 %v206, %v3128
  %v3130 = vpop.f32.mrb[0].mxu0
  %3131 = vmatprep.mubr.bf16.mxu0 0
  %3132 = vmatmul.mubr.bf16.gmra.mrb[0].mxu0 %v3089
  %v3133 = vpop.f32.mrb[0].mxu0
  %v3134 = vadd.f32 %v206, %v3133
  %v3135 = vpop.f32.mrb[0].mxu0
  %v3136 = vpop.f32.mrb[0].mxu0
  %v3137 = vadd.f32 %v206, %v3136
  %v3138 = vpop.f32.mrb[0].mxu0
  %3139 = vdwg.mxu0
  %3144 = vrot.lane.b32.xlu0 %v452, 4
  %v3145 = vpop.permute.xlu0 %3144
  %3146 = vrot.lane.b32.xlu0 %v455, 4
  %v3147 = vpop.permute.xlu0 %3146
  %3148 = vrot.lane.b32.xlu0 %v460, 4
  %v3149 = vpop.permute.xlu0 %3148
  %3150 = vrot.lane.b32.xlu0 %v463, 4
  %v3151 = vpop.permute.xlu0 %3150
  %3160 = vrot.lane.b32.xlu0 %v643, 8
  %v3161 = vpop.permute.xlu0 %3160
  %3162 = vrot.lane.b32.xlu0 %v646, 8
  %v3163 = vpop.permute.xlu0 %3162
  %3164 = vrot.lane.b32.xlu0 %v651, 8
  %v3165 = vpop.permute.xlu0 %3164
  %3166 = vrot.lane.b32.xlu0 %v654, 8
  %v3167 = vpop.permute.xlu0 %3166
  %3176 = vrot.lane.b32.xlu0 %v834, 12
  %v3177 = vpop.permute.xlu0 %3176
  %3178 = vrot.lane.b32.xlu0 %v837, 12
  %v3179 = vpop.permute.xlu0 %3178
  %3180 = vrot.lane.b32.xlu0 %v842, 12
  %v3181 = vpop.permute.xlu0 %3180
  %3182 = vrot.lane.b32.xlu0 %v845, 12
  %v3183 = vpop.permute.xlu0 %3182
  %3192 = vrot.lane.b32.xlu0 %v1025, 16
  %v3193 = vpop.permute.xlu0 %3192
  %3194 = vrot.lane.b32.xlu0 %v1028, 16
  %v3195 = vpop.permute.xlu0 %3194
  %3196 = vrot.lane.b32.xlu0 %v1033, 16
  %v3197 = vpop.permute.xlu0 %3196
  %3198 = vrot.lane.b32.xlu0 %v1036, 16
  %v3199 = vpop.permute.xlu0 %3198
  %3208 = vrot.lane.b32.xlu0 %v1216, 20
  %v3209 = vpop.permute.xlu0 %3208
  %3210 = vrot.lane.b32.xlu0 %v1219, 20
  %v3211 = vpop.permute.xlu0 %3210
  %3212 = vrot.lane.b32.xlu0 %v1224, 20
  %v3213 = vpop.permute.xlu0 %3212
  %3214 = vrot.lane.b32.xlu0 %v1227, 20
  %v3215 = vpop.permute.xlu0 %3214
  %3224 = vrot.lane.b32.xlu0 %v1407, 24
  %v3225 = vpop.permute.xlu0 %3224
  %3226 = vrot.lane.b32.xlu0 %v1410, 24
  %v3227 = vpop.permute.xlu0 %3226
  %3228 = vrot.lane.b32.xlu0 %v1415, 24
  %v3229 = vpop.permute.xlu0 %3228
  %3230 = vrot.lane.b32.xlu0 %v1418, 24
  %v3231 = vpop.permute.xlu0 %3230
  %3240 = vrot.lane.b32.xlu0 %v1598, 28
  %v3241 = vpop.permute.xlu0 %3240
  %3242 = vrot.lane.b32.xlu0 %v1601, 28
  %v3243 = vpop.permute.xlu0 %3242
  %3244 = vrot.lane.b32.xlu0 %v1606, 28
  %v3245 = vpop.permute.xlu0 %3244
  %3246 = vrot.lane.b32.xlu0 %v1609, 28
  %v3247 = vpop.permute.xlu0 %3246
  %3256 = vrot.lane.b32.xlu0 %v1789, 32
  %v3257 = vpop.permute.xlu0 %3256
  %3258 = vrot.lane.b32.xlu0 %v1792, 32
  %v3259 = vpop.permute.xlu0 %3258
  %3260 = vrot.lane.b32.xlu0 %v1797, 32
  %v3261 = vpop.permute.xlu0 %3260
  %3262 = vrot.lane.b32.xlu0 %v1800, 32
  %v3263 = vpop.permute.xlu0 %3262
  %3272 = vrot.lane.b32.xlu0 %v1980, 36
  %v3273 = vpop.permute.xlu0 %3272
  %3274 = vrot.lane.b32.xlu0 %v1983, 36
  %v3275 = vpop.permute.xlu0 %3274
  %3276 = vrot.lane.b32.xlu0 %v1988, 36
  %v3277 = vpop.permute.xlu0 %3276
  %3278 = vrot.lane.b32.xlu0 %v1991, 36
  %v3279 = vpop.permute.xlu0 %3278
  %3288 = vrot.lane.b32.xlu0 %v2171, 40
  %v3289 = vpop.permute.xlu0 %3288
  %3290 = vrot.lane.b32.xlu0 %v2174, 40
  %v3291 = vpop.permute.xlu0 %3290
  %3292 = vrot.lane.b32.xlu0 %v2179, 40
  %v3293 = vpop.permute.xlu0 %3292
  %3294 = vrot.lane.b32.xlu0 %v2182, 40
  %v3295 = vpop.permute.xlu0 %3294
  %3304 = vrot.lane.b32.xlu0 %v2362, 44
  %v3305 = vpop.permute.xlu0 %3304
  %3306 = vrot.lane.b32.xlu0 %v2365, 44
  %v3307 = vpop.permute.xlu0 %3306
  %3308 = vrot.lane.b32.xlu0 %v2370, 44
  %v3309 = vpop.permute.xlu0 %3308
  %3310 = vrot.lane.b32.xlu0 %v2373, 44
  %v3311 = vpop.permute.xlu0 %3310
  %3320 = vrot.lane.b32.xlu0 %v2553, 48
  %v3321 = vpop.permute.xlu0 %3320
  %3322 = vrot.lane.b32.xlu0 %v2556, 48
  %v3323 = vpop.permute.xlu0 %3322
  %3324 = vrot.lane.b32.xlu0 %v2561, 48
  %v3325 = vpop.permute.xlu0 %3324
  %3326 = vrot.lane.b32.xlu0 %v2564, 48
  %v3327 = vpop.permute.xlu0 %3326
  %3336 = vrot.lane.b32.xlu0 %v2744, 52
  %v3337 = vpop.permute.xlu0 %3336
  %3338 = vrot.lane.b32.xlu0 %v2747, 52
  %v3339 = vpop.permute.xlu0 %3338
  %3340 = vrot.lane.b32.xlu0 %v2752, 52
  %v3341 = vpop.permute.xlu0 %3340
  %3342 = vrot.lane.b32.xlu0 %v2755, 52
  %v3343 = vpop.permute.xlu0 %3342
  %3352 = vrot.lane.b32.xlu0 %v2935, 56
  %v3353 = vpop.permute.xlu0 %3352
  %3354 = vrot.lane.b32.xlu0 %v2938, 56
  %v3355 = vpop.permute.xlu0 %3354
  %3356 = vrot.lane.b32.xlu0 %v2943, 56
  %v3357 = vpop.permute.xlu0 %3356
  %3358 = vrot.lane.b32.xlu0 %v2946, 56
  %v3359 = vpop.permute.xlu0 %3358
  %3368 = vrot.lane.b32.xlu0 %v3126, 60
  %v3369 = vpop.permute.xlu0 %3368
  %3370 = vrot.lane.b32.xlu0 %v3129, 60
  %v3371 = vpop.permute.xlu0 %3370
  %3372 = vrot.lane.b32.xlu0 %v3134, 60
  %v3373 = vpop.permute.xlu0 %3372
  %3374 = vrot.lane.b32.xlu0 %v3137, 60
  %v3375 = vpop.permute.xlu0 %3374
  %vm3380 = vcmask 31744
  %v3381 = vsel %vm3380, %v261, %v3145
  %v3382 = vsel %vm3380, %v264, %v3147
  %v3383 = vsel %vm3380, %v269, %v3149
  %v3384 = vsel %vm3380, %v272, %v3151
  %vm3385 = vcmask 64512
  %v3386 = vsel %vm3385, %v3381, %v3161
  %v3387 = vsel %vm3385, %v3382, %v3163
  %v3388 = vsel %vm3385, %v3383, %v3165
  %v3389 = vsel %vm3385, %v3384, %v3167
  %vm3390 = vcmask 97280
  %v3391 = vsel %vm3390, %v3386, %v3177
  %v3392 = vsel %vm3390, %v3387, %v3179
  %v3393 = vsel %vm3390, %v3388, %v3181
  %v3394 = vsel %vm3390, %v3389, %v3183
  %vm3395 = vcmask 130048
  %v3396 = vsel %vm3395, %v3391, %v3193
  %v3397 = vsel %vm3395, %v3392, %v3195
  %v3398 = vsel %vm3395, %v3393, %v3197
  %v3399 = vsel %vm3395, %v3394, %v3199
  %vm3400 = vcmask 162816
  %v3401 = vsel %vm3400, %v3396, %v3209
  %v3402 = vsel %vm3400, %v3397, %v3211
  %v3403 = vsel %vm3400, %v3398, %v3213
  %v3404 = vsel %vm3400, %v3399, %v3215
  %vm3405 = vcmask 195584
  %v3406 = vsel %vm3405, %v3401, %v3225
  %v3407 = vsel %vm3405, %v3402, %v3227
  %v3408 = vsel %vm3405, %v3403, %v3229
  %v3409 = vsel %vm3405, %v3404, %v3231
  %vm3410 = vcmask 228352
  %v3411 = vsel %vm3410, %v3406, %v3241
  %v3412 = vsel %vm3410, %v3407, %v3243
  %v3413 = vsel %vm3410, %v3408, %v3245
  %v3414 = vsel %vm3410, %v3409, %v3247
  %v3415 = vsel %vm71, %v3411, %v3257
  %v3416 = vsel %vm71, %v3412, %v3259
  %v3417 = vsel %vm71, %v3413, %v3261
  %v3418 = vsel %vm71, %v3414, %v3263
  %vm3419 = vcmask 293888
  %v3420 = vsel %vm3419, %v3415, %v3273
  %v3421 = vsel %vm3419, %v3416, %v3275
  %v3422 = vsel %vm3419, %v3417, %v3277
  %v3423 = vsel %vm3419, %v3418, %v3279
  %vm3424 = vcmask 326656
  %v3425 = vsel %vm3424, %v3420, %v3289
  %v3426 = vsel %vm3424, %v3421, %v3291
  %v3427 = vsel %vm3424, %v3422, %v3293
  %v3428 = vsel %vm3424, %v3423, %v3295
  %vm3429 = vcmask 359424
  %v3430 = vsel %vm3429, %v3425, %v3305
  %v3431 = vsel %vm3429, %v3426, %v3307
  %v3432 = vsel %vm3429, %v3427, %v3309
  %v3433 = vsel %vm3429, %v3428, %v3311
  %vm3434 = vcmask 392192
  %v3435 = vsel %vm3434, %v3430, %v3321
  %v3436 = vsel %vm3434, %v3431, %v3323
  %v3437 = vsel %vm3434, %v3432, %v3325
  %v3438 = vsel %vm3434, %v3433, %v3327
  %vm3439 = vcmask 424960
  %v3440 = vsel %vm3439, %v3435, %v3337
  %v3441 = vsel %vm3439, %v3436, %v3339
  %v3442 = vsel %vm3439, %v3437, %v3341
  %v3443 = vsel %vm3439, %v3438, %v3343
  %vm3444 = vcmask 457728
  %v3445 = vsel %vm3444, %v3440, %v3353
  %v3446 = vsel %vm3444, %v3441, %v3355
  %v3447 = vsel %vm3444, %v3442, %v3357
  %v3448 = vsel %vm3444, %v3443, %v3359
  %vm3449 = vcmask 490496
  %v3450 = vsel %vm3449, %v3445, %v3369
  %v3451 = vsel %vm3449, %v3446, %v3371
  %v3452 = vsel %vm3449, %v3447, %v3373
  %v3453 = vsel %vm3449, %v3448, %v3375
  %vm3454 = vcmask 523264
  %3455 = vst.msk [vmem:[%s7] sm:$0xff] %vm3454, %v3450
  %3456 = vst.msk [vmem:[%s7 + $0x8] sm:$0xff] %vm3454, %v3451
  %3457 = vst.msk [vmem:[%s7 + $0x10] sm:$0xff] %vm3454, %v3452
  %3458 = vst.msk [vmem:[%s7 + $0x18] sm:$0xff] %vm3454, %v3453
  // Predicated region
  $region30: #{ldtunet_forward.15} parent=0 // pred_check
    _
  $region31: #{ldtunet_forward.15} parent=0 // pred_check_branch
    %3460 = sbr.rel (0) target = $region33
  $region32: #{ldtunet_forward.15} parent=0 // pred_region
    _
  $region33: #{ldtunet_forward.15} parent=0 // pred_fallthru
    _
  // Predicated region
  $region34: #{ldtunet_forward.15} parent=0 // pred_check
    _
  $region35: #{ldtunet_forward.15} parent=0 // pred_check_branch
    %3462 = sbr.rel (0) target = $region37
  $region36: #{ldtunet_forward.15} parent=0 // pred_region
    _
  $region37: #{ldtunet_forward.15} parent=0 // pred_fallthru
    _

</llo_original>
